<compile_context>
chip_gen: v5e
topology: v5e:2x2
jax: 0.10.0
libtpu: 0.0.40
codegen_flags: <defaults>
</compile_context>

<pallas_src>
import functools

import jax
import jax.numpy as jnp
from jax.experimental import pallas as pl
from jax.experimental.pallas import tpu as pltpu


def _window_attn_kernel(x_ref, wqkv_ref, bqkv_ref, o_ref, *,
                        num_heads, win_tokens, block_windows):
    # x_ref:    (Bb*L, C)  bf16 token slab for Bb windows
    # wqkv_ref: (C, 3C)    bf16, q-scale already folded into the q columns
    # bqkv_ref: (1, 3C)    f32,  q-scale already folded into the q slice
    # o_ref:    (Bb*L, C)  output slab (original activation dtype)
    H = num_heads
    L = win_tokens
    Bb = block_windows
    BL, C = x_ref.shape                      # BL == Bb * L
    Dh = C // H

    # (1) Fused QKV projection: one large-M bf16 matmul, f32 accumulation,
    #     f32 bias add. No full bf16 copy of qkv is materialized afterwards.
    qkv = jnp.dot(x_ref[...], wqkv_ref[...],
                  preferred_element_type=jnp.float32)                    # (BL, 3C)
    qkv = qkv + bqkv_ref[...]

    # (2) Per-head attention, batched over the Bb windows in the block.
    #     Static lane slices + leading-dim reshapes only (no L<->H transpose);
    #     single-batch-dim einsums keep Mosaic's dot_general lowering happy.
    #     bf16 cast is fused into each slice (MXU operands), accumulation f32.
    # TODO(synk): head-fused block-diagonal matmuls (one (L,C)@(C,H*L) per
    #             window) would cut vmatmul push/pop count 4x on v5e/v6e; left
    #             out pending on-device measurement of the masking overhead.
    head_outs = []
    for h in range(H):
        q = qkv[:, 0 * C + h * Dh:0 * C + (h + 1) * Dh].astype(jnp.bfloat16)
        k = qkv[:, 1 * C + h * Dh:1 * C + (h + 1) * Dh].astype(jnp.bfloat16)
        v = qkv[:, 2 * C + h * Dh:2 * C + (h + 1) * Dh].astype(jnp.bfloat16)
        q = q.reshape(Bb, L, Dh)
        k = k.reshape(Bb, L, Dh)
        v = v.reshape(Bb, L, Dh)

        # attention scores (f32): (Bb, L, L)
        s = jnp.einsum("bld,bmd->blm", q, k, preferred_element_type=jnp.float32)

        # numerically-stable softmax over the last axis (f32).
        # Exact reciprocal: the denominator is only (Bb, L, 1), so the extra
        # precision over pl.reciprocal(approx=True) is essentially free.
        s = s - jnp.max(s, axis=-1, keepdims=True)
        p = jnp.exp(s)
        p = p * (1.0 / jnp.sum(p, axis=-1, keepdims=True))

        # weighted sum of values: (Bb, L, Dh), accumulated in f32
        o = jnp.einsum("blm,bmd->bld", p.astype(jnp.bfloat16), v,
                       preferred_element_type=jnp.float32)
        head_outs.append(o)

    # (3) Single consolidated store of the whole (BL, C) output slab.
    #     Lane concat of the head slices + a leading-dim-only reshape (free),
    #     then one full-block store instead of H narrow masked stores.
    # TODO(synk): a lane-dense (Bb, L*C) out layout (sublane->lane relayout on
    #             the otherwise-idle XLU) is the next lever; measure on HW.
    o_full = jnp.concatenate(head_outs, axis=-1)            # (Bb, L, C) f32
    o_ref[...] = o_full.reshape(BL, C).astype(o_ref.dtype)


def window_attention(x, w_qkv, b_qkv, num_heads, qk_scale=None,
                     max_block_windows=512, min_grid_steps=8):
    """x: (Bw, L, C); w_qkv: (C, 3C); b_qkv: (3C,). Returns (Bw, L, C) in x.dtype."""
    Bw, L, C = x.shape
    Dh = C // num_heads
    scale = qk_scale if qk_scale is not None else Dh ** (-0.5)
    out_dtype = x.dtype

    # Fold the q-scale into the q columns of the weight/bias (one-time).
    w = w_qkv.astype(jnp.float32)
    b = b_qkv.astype(jnp.float32)
    w_scaled = jnp.concatenate([w[:, :C] * scale, w[:, C:]], axis=1)
    b_scaled = jnp.concatenate([b[:C] * scale, b[C:]], axis=0)
    w_bf16 = w_scaled.astype(jnp.bfloat16)        # bf16 MXU operand, resident
    b2d = b_scaled.reshape(1, 3 * C)              # f32 bias, added post-accumulation

    # bf16 activations into the kernel: halves input DMA bytes. In a real model
    # feed bf16 end-to-end; here the wrapper casts once.
    x_in = x if x.dtype == jnp.bfloat16 else x.astype(jnp.bfloat16)

    # Block sizing: keep >= min_grid_steps grid steps (>=2 pipelined steps per
    # v7x TensorCore) while letting the block grow with Bw up to
    # max_block_windows (0.5-1 MB slabs for large Bw on v6e).
    Bb = max(1, min(max_block_windows, pl.cdiv(Bw, min_grid_steps)))
    while (Bb * L) % 8 != 0:          # satisfy the (8,128) sublane rule
        Bb += 1
    pad = (-Bw) % Bb
    if pad:
        x_in = jnp.concatenate(
            [x_in, jnp.zeros((pad, L, C), x_in.dtype)], axis=0)
    Bw_p = Bw + pad
    num_blocks = Bw_p // Bb

    # 2-D token slab; windows are contiguous L-row groups (free reshape in XLA).
    x2d = x_in.reshape(Bw_p * L, C)

    kernel = functools.partial(_window_attn_kernel, num_heads=num_heads,
                               win_tokens=L, block_windows=Bb)

    out2d = pl.pallas_call(
        kernel,
        out_shape=jax.ShapeDtypeStruct((Bw_p * L, C), out_dtype),
        grid_spec=pltpu.PrefetchScalarGridSpec(
            num_scalar_prefetch=0,
            grid=(num_blocks,),
            in_specs=[
                # x slab: one block per grid step.
                # (pipeline_mode=pl.Buffered(3) is a one-line tunable to sweep
                #  on HW once the grid has >=4 steps; default double-buffering
                #  already hides the ~16 KB/step bf16 DMA here.)
                pl.BlockSpec((Bb * L, C), lambda i: (i, 0)),
                # Grid-invariant (constant index_map) -> fetched once, resident.
                pl.BlockSpec((C, 3 * C), lambda i: (0, 0)),
                pl.BlockSpec((1, 3 * C), lambda i: (0, 0)),
            ],
            out_specs=pl.BlockSpec((Bb * L, C), lambda i: (i, 0)),
        ),
        compiler_params=pltpu.CompilerParams(
            dimension_semantics=("parallel",)),
    )(x2d, w_bf16, b2d)

    out = out2d.reshape(Bw_p, L, C)
    return out[:Bw] if pad else out


def window_attention_ref(x, w_qkv, b_qkv, num_heads, qk_scale=None):
    """Pure-JAX f32 reference mirroring the PyTorch forward."""
    Bw, L, C = x.shape
    H = num_heads
    Dh = C // H
    scale = qk_scale if qk_scale is not None else Dh ** (-0.5)
    qkv = x @ w_qkv + b_qkv                                      # (Bw, L, 3C)
    qkv = qkv.reshape(Bw, L, 3, H, Dh).transpose(2, 0, 3, 1, 4)  # (3, Bw, H, L, Dh)
    q, k, v = qkv[0], qkv[1], qkv[2]
    q = q * scale
    attn = q @ jnp.swapaxes(k, -2, -1)                           # (Bw, H, L, L)
    attn = jax.nn.softmax(attn, axis=-1)
    out = (attn @ v).transpose(0, 2, 1, 3).reshape(Bw, L, C)
    # proj / proj_drop results are discarded by the reference module.
    return out


if __name__ == "__main__":
    # hidden_dim=32, 4 heads, window_size=4 -> L=16 tokens/window.
    # B=2 images, 8x8 windows each -> Bw = 128 windows (8 grid steps of 16).
    Bw, L, C, H = 128, 16, 32, 4

    key = jax.random.PRNGKey(0)
    kx, kw, kb = jax.random.split(key, 3)
    x = jax.random.normal(kx, (Bw, L, C), dtype=jnp.float32)
    w_qkv = jax.random.normal(kw, (C, 3 * C), dtype=jnp.float32) * 0.05
    b_qkv = jax.random.normal(kb, (3 * C,), dtype=jnp.float32) * 0.05

    out = window_attention(x, w_qkv, b_qkv, num_heads=H)
    out = jax.block_until_ready(out)

    ref = window_attention_ref(x, w_qkv, b_qkv, num_heads=H)
    assert out.shape == (Bw, L, C)
    max_err = float(jnp.max(jnp.abs(out - ref)))
    # Tolerance loosened (vs 1e-4) for bf16 activations/MXU operands;
    # accumulation and softmax remain f32, so the error stays ~1e-3.
    assert jnp.allclose(out, ref, atol=2e-2, rtol=2e-2), (
        f"mismatch vs reference, max abs err={max_err}")

    print("KERNEL_OK")
</pallas_src>

<mosaic_0001>
module attributes {stable_mosaic.version = 11 : i64} {
  func.func @_window_attn_kernel(%arg0: i32, %arg1: memref<256x32xbf16, #tpu.memory_space<vmem>>, %arg2: memref<32x96xbf16, #tpu.memory_space<vmem>>, %arg3: memref<1x96xf32, #tpu.memory_space<vmem>>, %arg4: memref<256x32xf32, #tpu.memory_space<vmem>>) attributes {dimension_semantics = [#tpu.dimension_semantics<parallel>], iteration_bounds = array<i64: 8>, scalar_prefetch = 0 : i64, scratch_operands = 0 : i64, tpu.core_type = #tpu.core_type<tc>, window_params = [{transform_indices = @transform_0, window_bounds = array<i64: 256, 32>}, {pipeline_mode = #tpu.pipeline_mode<synchronous>, transform_indices = @transform_1, window_bounds = array<i64: 32, 96>}, {pipeline_mode = #tpu.pipeline_mode<synchronous>, transform_indices = @transform_2, window_bounds = array<i64: 1, 96>}, {transform_indices = @transform_3, window_bounds = array<i64: 256, 32>}]} {
    %c0 = arith.constant 0 : index
    %c0_0 = arith.constant 0 : index
    %0 = vector.load %arg1[%c0, %c0_0] : memref<256x32xbf16, #tpu.memory_space<vmem>>, vector<256x32xbf16>
    %c0_1 = arith.constant 0 : index
    %c0_2 = arith.constant 0 : index
    %1 = vector.load %arg2[%c0_1, %c0_2] : memref<32x96xbf16, #tpu.memory_space<vmem>>, vector<32x96xbf16>
    %cst = arith.constant dense<0.000000e+00> : vector<256x96xf32>
    %2 = tpu.matmul %0, %1, %cst {dimension_numbers = #tpu.dot_dimension_numbers<[1], [0], [0], [1], [0, 0, 1, 1], [], []>} : vector<256x32xbf16>, vector<32x96xbf16>, vector<256x96xf32> -> vector<256x96xf32>
    %c0_3 = arith.constant 0 : index
    %c0_4 = arith.constant 0 : index
    %3 = vector.load %arg3[%c0_3, %c0_4] : memref<1x96xf32, #tpu.memory_space<vmem>>, vector<1x96xf32>
    %4 = vector.broadcast %3 : vector<1x96xf32> to vector<256x96xf32>
    %5 = arith.addf %2, %4 : vector<256x96xf32>
    %6 = vector.extract_strided_slice %5 {offsets = [0, 0], sizes = [256, 8], strides = [1, 1]} : vector<256x96xf32> to vector<256x8xf32>
    %7 = arith.truncf %6 : vector<256x8xf32> to vector<256x8xbf16>
    %8 = vector.extract_strided_slice %5 {offsets = [0, 32], sizes = [256, 8], strides = [1, 1]} : vector<256x96xf32> to vector<256x8xf32>
    %9 = arith.truncf %8 : vector<256x8xf32> to vector<256x8xbf16>
    %10 = vector.extract_strided_slice %5 {offsets = [0, 64], sizes = [256, 8], strides = [1, 1]} : vector<256x96xf32> to vector<256x8xf32>
    %11 = arith.truncf %10 : vector<256x8xf32> to vector<256x8xbf16>
    %12 = vector.shape_cast %7 : vector<256x8xbf16> to vector<16x16x8xbf16>
    %13 = vector.shape_cast %9 : vector<256x8xbf16> to vector<16x16x8xbf16>
    %14 = vector.shape_cast %11 : vector<256x8xbf16> to vector<16x16x8xbf16>
    "tpu.trace_start"() <{level = 10 : i32, message = "bld,bmd->blm"}> : () -> ()
    %cst_5 = arith.constant dense<0.000000e+00> : vector<16x16x16xf32>
    %15 = tpu.matmul %12, %13, %cst_5 {dimension_numbers = #tpu.dot_dimension_numbers<[2], [2], [1], [1], [0, 0, 0, 1, 1, 1], [0], [0]>} : vector<16x16x8xbf16>, vector<16x16x8xbf16>, vector<16x16x16xf32> -> vector<16x16x16xf32>
    "tpu.trace_stop"() : () -> ()
    %cst_6 = arith.constant dense<0xFF800000> : vector<16x16xf32>
    %16 = vector.multi_reduction <maximumf>, %15, %cst_6 [2] : vector<16x16x16xf32> to vector<16x16xf32>
    %17 = vector.shape_cast %16 : vector<16x16xf32> to vector<16x16x1xf32>
    %18 = vector.broadcast %17 : vector<16x16x1xf32> to vector<16x16x16xf32>
    %19 = arith.subf %15, %18 : vector<16x16x16xf32>
    %20 = math.exp %19 : vector<16x16x16xf32>
    %cst_7 = arith.constant dense<0.000000e+00> : vector<16x16xf32>
    %21 = vector.multi_reduction <add>, %20, %cst_7 [2] : vector<16x16x16xf32> to vector<16x16xf32>
    %22 = vector.shape_cast %21 : vector<16x16xf32> to vector<16x16x1xf32>
    %cst_8 = arith.constant 1.000000e+00 : f32
    %23 = vector.broadcast %cst_8 : f32 to vector<16x16x1xf32>
    %24 = arith.divf %23, %22 : vector<16x16x1xf32>
    %25 = vector.broadcast %24 : vector<16x16x1xf32> to vector<16x16x16xf32>
    %26 = arith.mulf %20, %25 : vector<16x16x16xf32>
    %27 = arith.truncf %26 : vector<16x16x16xf32> to vector<16x16x16xbf16>
    "tpu.trace_start"() <{level = 10 : i32, message = "blm,bmd->bld"}> : () -> ()
    %cst_9 = arith.constant dense<0.000000e+00> : vector<16x16x8xf32>
    %28 = tpu.matmul %27, %14, %cst_9 {dimension_numbers = #tpu.dot_dimension_numbers<[2], [1], [1], [2], [0, 0, 0, 1, 1, 2], [0], [0]>} : vector<16x16x16xbf16>, vector<16x16x8xbf16>, vector<16x16x8xf32> -> vector<16x16x8xf32>
    "tpu.trace_stop"() : () -> ()
    %29 = vector.extract_strided_slice %5 {offsets = [0, 8], sizes = [256, 8], strides = [1, 1]} : vector<256x96xf32> to vector<256x8xf32>
    %30 = arith.truncf %29 : vector<256x8xf32> to vector<256x8xbf16>
    %31 = vector.extract_strided_slice %5 {offsets = [0, 40], sizes = [256, 8], strides = [1, 1]} : vector<256x96xf32> to vector<256x8xf32>
    %32 = arith.truncf %31 : vector<256x8xf32> to vector<256x8xbf16>
    %33 = vector.extract_strided_slice %5 {offsets = [0, 72], sizes = [256, 8], strides = [1, 1]} : vector<256x96xf32> to vector<256x8xf32>
    %34 = arith.truncf %33 : vector<256x8xf32> to vector<256x8xbf16>
    %35 = vector.shape_cast %30 : vector<256x8xbf16> to vector<16x16x8xbf16>
    %36 = vector.shape_cast %32 : vector<256x8xbf16> to vector<16x16x8xbf16>
    %37 = vector.shape_cast %34 : vector<256x8xbf16> to vector<16x16x8xbf16>
    "tpu.trace_start"() <{level = 10 : i32, message = "bld,bmd->blm"}> : () -> ()
    %cst_10 = arith.constant dense<0.000000e+00> : vector<16x16x16xf32>
    %38 = tpu.matmul %35, %36, %cst_10 {dimension_numbers = #tpu.dot_dimension_numbers<[2], [2], [1], [1], [0, 0, 0, 1, 1, 1], [0], [0]>} : vector<16x16x8xbf16>, vector<16x16x8xbf16>, vector<16x16x16xf32> -> vector<16x16x16xf32>
    "tpu.trace_stop"() : () -> ()
    %cst_11 = arith.constant dense<0xFF800000> : vector<16x16xf32>
    %39 = vector.multi_reduction <maximumf>, %38, %cst_11 [2] : vector<16x16x16xf32> to vector<16x16xf32>
    %40 = vector.shape_cast %39 : vector<16x16xf32> to vector<16x16x1xf32>
    %41 = vector.broadcast %40 : vector<16x16x1xf32> to vector<16x16x16xf32>
    %42 = arith.subf %38, %41 : vector<16x16x16xf32>
    %43 = math.exp %42 : vector<16x16x16xf32>
    %cst_12 = arith.constant dense<0.000000e+00> : vector<16x16xf32>
    %44 = vector.multi_reduction <add>, %43, %cst_12 [2] : vector<16x16x16xf32> to vector<16x16xf32>
    %45 = vector.shape_cast %44 : vector<16x16xf32> to vector<16x16x1xf32>
    %cst_13 = arith.constant 1.000000e+00 : f32
    %46 = vector.broadcast %cst_13 : f32 to vector<16x16x1xf32>
    %47 = arith.divf %46, %45 : vector<16x16x1xf32>
    %48 = vector.broadcast %47 : vector<16x16x1xf32> to vector<16x16x16xf32>
    %49 = arith.mulf %43, %48 : vector<16x16x16xf32>
    %50 = arith.truncf %49 : vector<16x16x16xf32> to vector<16x16x16xbf16>
    "tpu.trace_start"() <{level = 10 : i32, message = "blm,bmd->bld"}> : () -> ()
    %cst_14 = arith.constant dense<0.000000e+00> : vector<16x16x8xf32>
    %51 = tpu.matmul %50, %37, %cst_14 {dimension_numbers = #tpu.dot_dimension_numbers<[2], [1], [1], [2], [0, 0, 0, 1, 1, 2], [0], [0]>} : vector<16x16x16xbf16>, vector<16x16x8xbf16>, vector<16x16x8xf32> -> vector<16x16x8xf32>
    "tpu.trace_stop"() : () -> ()
    %52 = vector.extract_strided_slice %5 {offsets = [0, 16], sizes = [256, 8], strides = [1, 1]} : vector<256x96xf32> to vector<256x8xf32>
    %53 = arith.truncf %52 : vector<256x8xf32> to vector<256x8xbf16>
    %54 = vector.extract_strided_slice %5 {offsets = [0, 48], sizes = [256, 8], strides = [1, 1]} : vector<256x96xf32> to vector<256x8xf32>
    %55 = arith.truncf %54 : vector<256x8xf32> to vector<256x8xbf16>
    %56 = vector.extract_strided_slice %5 {offsets = [0, 80], sizes = [256, 8], strides = [1, 1]} : vector<256x96xf32> to vector<256x8xf32>
    %57 = arith.truncf %56 : vector<256x8xf32> to vector<256x8xbf16>
    %58 = vector.shape_cast %53 : vector<256x8xbf16> to vector<16x16x8xbf16>
    %59 = vector.shape_cast %55 : vector<256x8xbf16> to vector<16x16x8xbf16>
    %60 = vector.shape_cast %57 : vector<256x8xbf16> to vector<16x16x8xbf16>
    "tpu.trace_start"() <{level = 10 : i32, message = "bld,bmd->blm"}> : () -> ()
    %cst_15 = arith.constant dense<0.000000e+00> : vector<16x16x16xf32>
    %61 = tpu.matmul %58, %59, %cst_15 {dimension_numbers = #tpu.dot_dimension_numbers<[2], [2], [1], [1], [0, 0, 0, 1, 1, 1], [0], [0]>} : vector<16x16x8xbf16>, vector<16x16x8xbf16>, vector<16x16x16xf32> -> vector<16x16x16xf32>
    "tpu.trace_stop"() : () -> ()
    %cst_16 = arith.constant dense<0xFF800000> : vector<16x16xf32>
    %62 = vector.multi_reduction <maximumf>, %61, %cst_16 [2] : vector<16x16x16xf32> to vector<16x16xf32>
    %63 = vector.shape_cast %62 : vector<16x16xf32> to vector<16x16x1xf32>
    %64 = vector.broadcast %63 : vector<16x16x1xf32> to vector<16x16x16xf32>
    %65 = arith.subf %61, %64 : vector<16x16x16xf32>
    %66 = math.exp %65 : vector<16x16x16xf32>
    %cst_17 = arith.constant dense<0.000000e+00> : vector<16x16xf32>
    %67 = vector.multi_reduction <add>, %66, %cst_17 [2] : vector<16x16x16xf32> to vector<16x16xf32>
    %68 = vector.shape_cast %67 : vector<16x16xf32> to vector<16x16x1xf32>
    %cst_18 = arith.constant 1.000000e+00 : f32
    %69 = vector.broadcast %cst_18 : f32 to vector<16x16x1xf32>
    %70 = arith.divf %69, %68 : vector<16x16x1xf32>
    %71 = vector.broadcast %70 : vector<16x16x1xf32> to vector<16x16x16xf32>
    %72 = arith.mulf %66, %71 : vector<16x16x16xf32>
    %73 = arith.truncf %72 : vector<16x16x16xf32> to vector<16x16x16xbf16>
    "tpu.trace_start"() <{level = 10 : i32, message = "blm,bmd->bld"}> : () -> ()
    %cst_19 = arith.constant dense<0.000000e+00> : vector<16x16x8xf32>
    %74 = tpu.matmul %73, %60, %cst_19 {dimension_numbers = #tpu.dot_dimension_numbers<[2], [1], [1], [2], [0, 0, 0, 1, 1, 2], [0], [0]>} : vector<16x16x16xbf16>, vector<16x16x8xbf16>, vector<16x16x8xf32> -> vector<16x16x8xf32>
    "tpu.trace_stop"() : () -> ()
    %75 = vector.extract_strided_slice %5 {offsets = [0, 24], sizes = [256, 8], strides = [1, 1]} : vector<256x96xf32> to vector<256x8xf32>
    %76 = arith.truncf %75 : vector<256x8xf32> to vector<256x8xbf16>
    %77 = vector.extract_strided_slice %5 {offsets = [0, 56], sizes = [256, 8], strides = [1, 1]} : vector<256x96xf32> to vector<256x8xf32>
    %78 = arith.truncf %77 : vector<256x8xf32> to vector<256x8xbf16>
    %79 = vector.extract_strided_slice %5 {offsets = [0, 88], sizes = [256, 8], strides = [1, 1]} : vector<256x96xf32> to vector<256x8xf32>
    %80 = arith.truncf %79 : vector<256x8xf32> to vector<256x8xbf16>
    %81 = vector.shape_cast %76 : vector<256x8xbf16> to vector<16x16x8xbf16>
    %82 = vector.shape_cast %78 : vector<256x8xbf16> to vector<16x16x8xbf16>
    %83 = vector.shape_cast %80 : vector<256x8xbf16> to vector<16x16x8xbf16>
    "tpu.trace_start"() <{level = 10 : i32, message = "bld,bmd->blm"}> : () -> ()
    %cst_20 = arith.constant dense<0.000000e+00> : vector<16x16x16xf32>
    %84 = tpu.matmul %81, %82, %cst_20 {dimension_numbers = #tpu.dot_dimension_numbers<[2], [2], [1], [1], [0, 0, 0, 1, 1, 1], [0], [0]>} : vector<16x16x8xbf16>, vector<16x16x8xbf16>, vector<16x16x16xf32> -> vector<16x16x16xf32>
    "tpu.trace_stop"() : () -> ()
    %cst_21 = arith.constant dense<0xFF800000> : vector<16x16xf32>
    %85 = vector.multi_reduction <maximumf>, %84, %cst_21 [2] : vector<16x16x16xf32> to vector<16x16xf32>
    %86 = vector.shape_cast %85 : vector<16x16xf32> to vector<16x16x1xf32>
    %87 = vector.broadcast %86 : vector<16x16x1xf32> to vector<16x16x16xf32>
    %88 = arith.subf %84, %87 : vector<16x16x16xf32>
    %89 = math.exp %88 : vector<16x16x16xf32>
    %cst_22 = arith.constant dense<0.000000e+00> : vector<16x16xf32>
    %90 = vector.multi_reduction <add>, %89, %cst_22 [2] : vector<16x16x16xf32> to vector<16x16xf32>
    %91 = vector.shape_cast %90 : vector<16x16xf32> to vector<16x16x1xf32>
    %cst_23 = arith.constant 1.000000e+00 : f32
    %92 = vector.broadcast %cst_23 : f32 to vector<16x16x1xf32>
    %93 = arith.divf %92, %91 : vector<16x16x1xf32>
    %94 = vector.broadcast %93 : vector<16x16x1xf32> to vector<16x16x16xf32>
    %95 = arith.mulf %89, %94 : vector<16x16x16xf32>
    %96 = arith.truncf %95 : vector<16x16x16xf32> to vector<16x16x16xbf16>
    "tpu.trace_start"() <{level = 10 : i32, message = "blm,bmd->bld"}> : () -> ()
    %cst_24 = arith.constant dense<0.000000e+00> : vector<16x16x8xf32>
    %97 = tpu.matmul %96, %83, %cst_24 {dimension_numbers = #tpu.dot_dimension_numbers<[2], [1], [1], [2], [0, 0, 0, 1, 1, 2], [0], [0]>} : vector<16x16x16xbf16>, vector<16x16x8xbf16>, vector<16x16x8xf32> -> vector<16x16x8xf32>
    "tpu.trace_stop"() : () -> ()
    %98 = tpu.concatenate %28, %51, %74, %97 in 2 : vector<16x16x8xf32>, vector<16x16x8xf32>, vector<16x16x8xf32>, vector<16x16x8xf32> -> vector<16x16x32xf32>
    %99 = vector.shape_cast %98 : vector<16x16x32xf32> to vector<256x32xf32>
    %c0_25 = arith.constant 0 : index
    %c0_26 = arith.constant 0 : index
    %100 = vector.load %arg4[%c0_25, %c0_26] : memref<256x32xf32, #tpu.memory_space<vmem>>, vector<256x32xf32>
    tpu.vector_store %arg4[%c0_25, %c0_26], %99 {strides = array<i32>} : memref<256x32xf32, #tpu.memory_space<vmem>>, vector<256x32xf32>,
    return
  }
  func.func @transform_0(%arg0: i32) -> (i32, i32) {
    %c0_i32 = arith.constant 0 : i32
    %c0_i32_0 = arith.constant 0 : i32
    return %arg0, %c0_i32 : i32, i32
  }
  func.func @transform_1(%arg0: i32) -> (i32, i32) {
    %c0_i32 = arith.constant 0 : i32
    %c0_i32_0 = arith.constant 0 : i32
    %c0_i32_1 = arith.constant 0 : i32
    return %c0_i32, %c0_i32_0 : i32, i32
  }
  func.func @transform_2(%arg0: i32) -> (i32, i32) {
    %c0_i32 = arith.constant 0 : i32
    %c0_i32_0 = arith.constant 0 : i32
    %c0_i32_1 = arith.constant 0 : i32
    return %c0_i32, %c0_i32_0 : i32, i32
  }
  func.func @transform_3(%arg0: i32) -> (i32, i32) {
    %c0_i32 = arith.constant 0 : i32
    %c0_i32_0 = arith.constant 0 : i32
    return %arg0, %c0_i32 : i32, i32
  }
}

</mosaic_0001>

<llo_original>
// kernel: tpu_custom_call.1
$region0: #{tpu_custom_call.1}
  #allocation0 [shape = 'u32[]', space=smem, size = 0x4, offset = 0x4, fixed_abs, tag = 'smem constant byte address 0x4 - core index']
  #allocation1 [shape = 'u32[72,128]{1,0:T(1,128)}', space=vmem, size = 0x9000, scoped, tag = 'internal scratch']
  %s0 = inlined_call_operand.vmem [shape: bf16[2048,32], index: 0, kind: input, shape index: {}]
  %s1 = inlined_call_operand.vmem [shape: bf16[32,96], index: 1, kind: input, shape index: {}]
  %s2 = inlined_call_operand.vmem [shape: f32[1,96], index: 2, kind: input, shape index: {}]
  %s3 = inlined_call_operand.vmem [shape: f32[2048,32], index: 3, kind: output, shape index: {}]
  %s4 = sld [smem:[#allocation0]]
  $region45: #{tpu_custom_call.1} parent=0
    _
  %s6 = ssub.s32 1, %s4
  %s7 = scalar_select 0, %s6, %s4
  loop: start=0, step=1, limit=10
  $region2: #{tpu_custom_call.1} parent=0 // loop_pre_header
    _
  $region3: #{tpu_custom_call.1} parent=0 // loop_header
    %s9 = sphi 0, %s13
    %p10 = scmp.ge.s32.totalorder %s9, 10
    %s19 = sphi 0, %s21
    %s22 = sphi 0, %s19
    %s23 = sphi 0, %s22
    %s39 = sphi 0, %s23
    %s43 = sphi 0, %s43
    %s45 = sphi 0, %s43
    %s46 = sphi 0, %s45
    %s60 = sphi 0, %s46
    %s64 = sphi 0, %s64
    %s66 = sphi 0, %s64
    %s67 = sphi 0, %s66
    %s81 = sphi 0, %s67
    %s87 = sphi 0, %s89
    %s90 = sphi 0, %s87
    %s91 = sphi 0, %s90
    %s107 = sphi 0, %s91
  $region4: #{tpu_custom_call.1} parent=0 // loop_header_branch
    %12 = sbr.rel (%p10) target = $region8
  $region5: #{tpu_custom_call.1} parent=0 // loop_body
    %s14 = ssub.s32 %s9, 1
    %s15 = ssub.s32 %s9, 2
    %s16 = sadd.s32 %s9, 1
    %s17 = ssub.s32 %s9, %s16
    %p18 = scmp.eq.s32.totalorder %s17, 0
    %s20 = sadd.s32 %s19, 1
    %s21 = scalar_select %p18, %s19, %s20
    %p24 = pneg %p18
    %p25 = scmp.eq.s32.totalorder %s9, 7
    %p26 = por %p24, %p25
    %p27 = scmp.ne.s32.totalorder %s19, %s22
    %p28 = scmp.eq.s32.totalorder %s9, 0
    %p29 = por %p27, %p28
    %p30 = scmp.ne.s32.totalorder %s19, %s22
    %p31 = scmp.eq.s32.totalorder %s14, 7
    %p32 = por %p30, %p31
    %p33 = scmp.ne.s32.totalorder %s22, %s23
    %p34 = scmp.eq.s32.totalorder %s14, 0
    %p35 = por %p33, %p34
    %p36 = scmp.ne.s32.totalorder %s22, %s23
    %p37 = scmp.eq.s32.totalorder %s15, 7
    %p38 = por %p36, %p37
    %p40 = scmp.ne.s32.totalorder %s23, %s39
    %p41 = scmp.eq.s32.totalorder %s15, 0
    %p42 = por %p40, %p41
    %s44 = sadd.s32 %s43, 1
    %p47 = scmp.eq.s32.totalorder %s9, 7
    %p48 = scmp.ne.s32.totalorder %s43, %s45
    %p49 = scmp.eq.s32.totalorder %s9, 0
    %p50 = por %p48, %p49
    %p51 = scmp.ne.s32.totalorder %s43, %s45
    %p52 = scmp.eq.s32.totalorder %s14, 7
    %p53 = por %p51, %p52
    %p54 = scmp.ne.s32.totalorder %s45, %s46
    %p55 = scmp.eq.s32.totalorder %s14, 0
    %p56 = por %p54, %p55
    %p57 = scmp.ne.s32.totalorder %s45, %s46
    %p58 = scmp.eq.s32.totalorder %s15, 7
    %p59 = por %p57, %p58
    %p61 = scmp.ne.s32.totalorder %s46, %s60
    %p62 = scmp.eq.s32.totalorder %s15, 0
    %p63 = por %p61, %p62
    %s65 = sadd.s32 %s64, 1
    %p68 = scmp.eq.s32.totalorder %s9, 7
    %p69 = scmp.ne.s32.totalorder %s64, %s66
    %p70 = scmp.eq.s32.totalorder %s9, 0
    %p71 = por %p69, %p70
    %p72 = scmp.ne.s32.totalorder %s64, %s66
    %p73 = scmp.eq.s32.totalorder %s14, 7
    %p74 = por %p72, %p73
    %p75 = scmp.ne.s32.totalorder %s66, %s67
    %p76 = scmp.eq.s32.totalorder %s14, 0
    %p77 = por %p75, %p76
    %p78 = scmp.ne.s32.totalorder %s66, %s67
    %p79 = scmp.eq.s32.totalorder %s15, 7
    %p80 = por %p78, %p79
    %p82 = scmp.ne.s32.totalorder %s67, %s81
    %p83 = scmp.eq.s32.totalorder %s15, 0
    %p84 = por %p82, %p83
    %s85 = ssub.s32 %s9, %s16
    %p86 = scmp.eq.s32.totalorder %s85, 0
    %s88 = sadd.s32 %s87, 1
    %s89 = scalar_select %p86, %s87, %s88
    %p92 = pneg %p86
    %p93 = scmp.eq.s32.totalorder %s9, 7
    %p94 = por %p92, %p93
    %p95 = scmp.ne.s32.totalorder %s87, %s90
    %p96 = scmp.eq.s32.totalorder %s9, 0
    %p97 = por %p95, %p96
    %p98 = scmp.ne.s32.totalorder %s87, %s90
    %p99 = scmp.eq.s32.totalorder %s14, 7
    %p100 = por %p98, %p99
    %p101 = scmp.ne.s32.totalorder %s90, %s91
    %p102 = scmp.eq.s32.totalorder %s14, 0
    %p103 = por %p101, %p102
    %p104 = scmp.ne.s32.totalorder %s90, %s91
    %p105 = scmp.eq.s32.totalorder %s15, 7
    %p106 = por %p104, %p105
    %p108 = scmp.ne.s32.totalorder %s91, %s107
    %p109 = scmp.eq.s32.totalorder %s15, 0
    %p110 = por %p108, %p109
    %p111 = scmp.le.s32.totalorder 1, %s9
    %p112 = scmp.lt.s32.totalorder %s9, 9
    %p113 = pnand %p111, %p112
    %p114 = pneg %p113
    // Predicated region
    $region9: #{tpu_custom_call.1} parent=5 // pred_check
      _
    $region10: #{tpu_custom_call.1} parent=5 // pred_check_branch
      %116 = sbr.rel (%p113) target = $region12
    $region11: #{tpu_custom_call.1} parent=5 // pred_region
      %s117 = ssub.s32 %s9, 1
      // Predicated region
      $region13: #{tpu_custom_call.1} parent=11 // pred_check
        %p118 = pneg %p56
      $region14: #{tpu_custom_call.1} parent=11 // pred_check_branch
        %120 = sbr.rel (%p118) target = $region16
      $region15: #{tpu_custom_call.1} parent=11 // pred_region
        _
      $region16: #{tpu_custom_call.1} parent=11 // pred_fallthru
        _
      // Predicated region
      $region17: #{tpu_custom_call.1} parent=11 // pred_check
        %p121 = pneg %p77
      $region18: #{tpu_custom_call.1} parent=11 // pred_check_branch
        %123 = sbr.rel (%p121) target = $region20
      $region19: #{tpu_custom_call.1} parent=11 // pred_region
        _
      $region20: #{tpu_custom_call.1} parent=11 // pred_fallthru
        _
    $region12: #{tpu_custom_call.1} parent=5 // pred_fallthru
      _
    %p124 = scmp.lt.s32.totalorder %s9, 8
    // Predicated region
    $region21: #{tpu_custom_call.1} parent=5 // pred_check
      %p125 = pneg %p124
    $region22: #{tpu_custom_call.1} parent=5 // pred_check_branch
      %127 = sbr.rel (%p125) target = $region24
    $region23: #{tpu_custom_call.1} parent=5 // pred_region
      // Predicated region
      $region25: #{tpu_custom_call.1} parent=23 // pred_check
        %p128 = pneg %p29
      $region26: #{tpu_custom_call.1} parent=23 // pred_check_branch
        %130 = sbr.rel (%p128) target = $region28
      $region27: #{tpu_custom_call.1} parent=23 // pred_region
        %s131 = smul.u32 32, %s9
        %p132 = scmp.lt.s32.totalorder %s131, 255
        %s133 = scalar_select %p132, %s131, 255
        %s134 = smul.addr %s133, 4
        %s135 = scalar_lea.vmem %s0, %s134
        %s136 = smul.u32 32, %s9
      $region28: #{tpu_custom_call.1} parent=23 // pred_fallthru
        _
    $region24: #{tpu_custom_call.1} parent=5 // pred_fallthru
      _
    %p137 = scmp.le.s32.totalorder 1, %s9
    %p138 = scmp.lt.s32.totalorder %s9, 9
    %p139 = pnand %p137, %p138
    %p140 = pneg %p139
    // Predicated region
    $region29: #{tpu_custom_call.1} parent=5 // pred_check
      _
    $region30: #{tpu_custom_call.1} parent=5 // pred_check_branch
      %142 = sbr.rel (%p139) target = $region32
    $region31: #{tpu_custom_call.1} parent=5 // pred_region
      %s143 = ssub.s32 %s9, 1
      %s144 = smul.u32 32, %s14
      %p145 = scmp.lt.s32.totalorder %s144, 255
      %s146 = scalar_select %p145, %s144, 255
      %s147 = smul.addr %s146, 4
      %s148 = scalar_lea.vmem %s0, %s147
      %p149 = pneg %p35
      %p150 = pneg %p32
      %p151 = pneg %p56
      %p152 = pneg %p53
      %p153 = pneg %p77
      %p154 = pneg %p74
      %p155 = pneg %p103
      %p156 = pneg %p100
      %s157 = smul.u32 32, %s14
      %p158 = scmp.lt.s32.totalorder %s157, 255
      %s159 = scalar_select %p158, %s157, 255
      %s160 = smul.addr %s159, 8
      %s161 = scalar_lea.vmem %s3, %s160
      %s162 = smul.u32 32, %s14
      %p163 = scmp.lt.s32.totalorder %s162, 255
      %s164 = scalar_select %p163, %s162, 255
      %s165 = smul.addr %s164, 4
      %s166 = scalar_lea.vmem %s0, %s165
      %s167 = smul.u32 32, %s14
      %s168 = smul.u32 32, %s14
      %p169 = scmp.lt.s32.totalorder %s168, 255
      %s170 = scalar_select %p169, %s168, 255
      %s171 = smul.addr %s170, 8
      %s172 = scalar_lea.vmem %s3, %s171
      %s173 = smul.u32 32, %s14
      %v175 = vld [vmem:[%s166] sm:$0xf]
      %v176 = vld [vmem:[%s166 + $0x4] sm:$0xf]
      %v177 = vld [vmem:[%s166 + $0x8] sm:$0xf]
      %v178 = vld [vmem:[%s166 + $0xc] sm:$0xf]
      %v179 = vld [vmem:[%s166 + $0x10] sm:$0xf]
      %v180 = vld [vmem:[%s166 + $0x14] sm:$0xf]
      %v181 = vld [vmem:[%s166 + $0x18] sm:$0xf]
      %v182 = vld [vmem:[%s166 + $0x1c] sm:$0xf]
      %v183 = vld [vmem:[%s166 + $0x20] sm:$0xf]
      %v184 = vld [vmem:[%s166 + $0x24] sm:$0xf]
      %v185 = vld [vmem:[%s166 + $0x28] sm:$0xf]
      %v186 = vld [vmem:[%s166 + $0x2c] sm:$0xf]
      %v187 = vld [vmem:[%s166 + $0x30] sm:$0xf]
      %v188 = vld [vmem:[%s166 + $0x34] sm:$0xf]
      %v189 = vld [vmem:[%s166 + $0x38] sm:$0xf]
      %v190 = vld [vmem:[%s166 + $0x3c] sm:$0xf]
      %v191 = vld [vmem:[%s166 + $0x40] sm:$0xf]
      %v192 = vld [vmem:[%s166 + $0x44] sm:$0xf]
      %v193 = vld [vmem:[%s166 + $0x48] sm:$0xf]
      %v194 = vld [vmem:[%s166 + $0x4c] sm:$0xf]
      %v195 = vld [vmem:[%s166 + $0x50] sm:$0xf]
      %v196 = vld [vmem:[%s166 + $0x54] sm:$0xf]
      %v197 = vld [vmem:[%s166 + $0x58] sm:$0xf]
      %v198 = vld [vmem:[%s166 + $0x5c] sm:$0xf]
      %v199 = vld [vmem:[%s166 + $0x60] sm:$0xf]
      %v200 = vld [vmem:[%s166 + $0x64] sm:$0xf]
      %v201 = vld [vmem:[%s166 + $0x68] sm:$0xf]
      %v202 = vld [vmem:[%s166 + $0x6c] sm:$0xf]
      %v203 = vld [vmem:[%s166 + $0x70] sm:$0xf]
      %v204 = vld [vmem:[%s166 + $0x74] sm:$0xf]
      %v205 = vld [vmem:[%s166 + $0x78] sm:$0xf]
      %v206 = vld [vmem:[%s166 + $0x7c] sm:$0xf]
      %v207 = vld [vmem:[%s1] sm:$0xf]
      %v208 = vld [vmem:[%s1 + $0x4] sm:$0xf]
      %v209 = vld [vmem:[%s1 + $0x8] sm:$0xf]
      %v210 = vld [vmem:[%s1 + $0xc] sm:$0xf]
      %v211 = vld [vmem:[%s2] sm:$0x1]
      %v213 = vperm.slane %v211, 0
      %v247 = vunpack.c.l.b16 %v175
      %v248 = vunpack.c.l.b16 %v176
      %v249 = vunpack.c.l.b16 %v177
      %v250 = vunpack.c.l.b16 %v178
      %v251 = vunpack.c.l.b16 %v179
      %v252 = vunpack.c.l.b16 %v180
      %v253 = vunpack.c.l.b16 %v181
      %v254 = vunpack.c.l.b16 %v182
      %v255 = vunpack.c.l.b16 %v183
      %v256 = vunpack.c.l.b16 %v184
      %v257 = vunpack.c.l.b16 %v185
      %v258 = vunpack.c.l.b16 %v186
      %v259 = vunpack.c.l.b16 %v187
      %v260 = vunpack.c.l.b16 %v188
      %v261 = vunpack.c.l.b16 %v189
      %v262 = vunpack.c.l.b16 %v190
      %v263 = vunpack.c.l.b16 %v191
      %v264 = vunpack.c.l.b16 %v192
      %v265 = vunpack.c.l.b16 %v193
      %v266 = vunpack.c.l.b16 %v194
      %v267 = vunpack.c.l.b16 %v195
      %v268 = vunpack.c.l.b16 %v196
      %v269 = vunpack.c.l.b16 %v197
      %v270 = vunpack.c.l.b16 %v198
      %v271 = vunpack.c.l.b16 %v199
      %v272 = vunpack.c.l.b16 %v200
      %v273 = vunpack.c.l.b16 %v201
      %v274 = vunpack.c.l.b16 %v202
      %v275 = vunpack.c.l.b16 %v203
      %v276 = vunpack.c.l.b16 %v204
      %v277 = vunpack.c.l.b16 %v205
      %v278 = vunpack.c.l.b16 %v206
      %v279 = vpack.c.b16 %v248, %v247
      %v280 = vpack.c.b16 %v250, %v249
      %v281 = vpack.c.b16 %v252, %v251
      %v282 = vpack.c.b16 %v254, %v253
      %v283 = vpack.c.b16 %v256, %v255
      %v284 = vpack.c.b16 %v258, %v257
      %v285 = vpack.c.b16 %v260, %v259
      %v286 = vpack.c.b16 %v262, %v261
      %v287 = vpack.c.b16 %v264, %v263
      %v288 = vpack.c.b16 %v266, %v265
      %v289 = vpack.c.b16 %v268, %v267
      %v290 = vpack.c.b16 %v270, %v269
      %v291 = vpack.c.b16 %v272, %v271
      %v292 = vpack.c.b16 %v274, %v273
      %v293 = vpack.c.b16 %v276, %v275
      %v294 = vpack.c.b16 %v278, %v277
      %v299 = vunpack.c.l.b16 %v207
      %v300 = vunpack.c.l.b16 %v208
      %v301 = vunpack.c.l.b16 %v209
      %v302 = vunpack.c.l.b16 %v210
      %v303 = vpack.c.b16 %v300, %v299
      %v304 = vpack.c.b16 %v302, %v301
      %vm307 = vcmask 261120
      %v309 = vsel %vm307, %v279, 0
      %v312 = vsel %vm307, %v280, 0
      %v315 = vsel %vm307, %v281, 0
      %v318 = vsel %vm307, %v282, 0
      %v321 = vsel %vm307, %v283, 0
      %v324 = vsel %vm307, %v284, 0
      %v327 = vsel %vm307, %v285, 0
      %v330 = vsel %vm307, %v286, 0
      %v333 = vsel %vm307, %v287, 0
      %v336 = vsel %vm307, %v288, 0
      %v339 = vsel %vm307, %v289, 0
      %v342 = vsel %vm307, %v290, 0
      %v345 = vsel %vm307, %v291, 0
      %v348 = vsel %vm307, %v292, 0
      %v351 = vsel %vm307, %v293, 0
      %v354 = vsel %vm307, %v294, 0
      %356 = vmatpush.bf16.msra.mxu0 0
      %357 = vmatpush.bf16.msra.mxu0 0
      %358 = vmatpush.bf16.msra.mxu0 0
      %359 = vmatpush.bf16.msra.mxu0 0
      %360 = vmatpush.bf16.msra.mxu0 0
      %361 = vmatpush.bf16.msra.mxu0 0
      %362 = vmatpush.bf16.msra.mxu0 %v304
      %363 = vmatpush.bf16.msra.mxu0 %v303
      %364 = vmatmul.bf16.gmra.mxu0 %v309
      %v365 = vpop.f32.mrf.mxu0
      %v366 = vadd.f32 %v213, %v365
      %v367 = vpop.f32.mrf.mxu0
      %v368 = vadd.f32 %v213, %v367
      %369 = vmatmul.bf16.gmra.mxu0 %v312
      %v370 = vpop.f32.mrf.mxu0
      %v371 = vadd.f32 %v213, %v370
      %v372 = vpop.f32.mrf.mxu0
      %v373 = vadd.f32 %v213, %v372
      %374 = vmatmul.bf16.gmra.mxu0 %v315
      %v375 = vpop.f32.mrf.mxu0
      %v376 = vadd.f32 %v213, %v375
      %v377 = vpop.f32.mrf.mxu0
      %v378 = vadd.f32 %v213, %v377
      %379 = vmatmul.bf16.gmra.mxu0 %v318
      %v380 = vpop.f32.mrf.mxu0
      %v381 = vadd.f32 %v213, %v380
      %v382 = vpop.f32.mrf.mxu0
      %v383 = vadd.f32 %v213, %v382
      %384 = vmatmul.bf16.gmra.mxu0 %v321
      %v385 = vpop.f32.mrf.mxu0
      %v386 = vadd.f32 %v213, %v385
      %v387 = vpop.f32.mrf.mxu0
      %v388 = vadd.f32 %v213, %v387
      %389 = vmatmul.bf16.gmra.mxu0 %v324
      %v390 = vpop.f32.mrf.mxu0
      %v391 = vadd.f32 %v213, %v390
      %v392 = vpop.f32.mrf.mxu0
      %v393 = vadd.f32 %v213, %v392
      %394 = vmatmul.bf16.gmra.mxu0 %v327
      %v395 = vpop.f32.mrf.mxu0
      %v396 = vadd.f32 %v213, %v395
      %v397 = vpop.f32.mrf.mxu0
      %v398 = vadd.f32 %v213, %v397
      %399 = vmatmul.bf16.gmra.mxu0 %v330
      %v400 = vpop.f32.mrf.mxu0
      %v401 = vadd.f32 %v213, %v400
      %v402 = vpop.f32.mrf.mxu0
      %v403 = vadd.f32 %v213, %v402
      %404 = vmatmul.bf16.gmra.mxu0 %v333
      %v405 = vpop.f32.mrf.mxu0
      %v406 = vadd.f32 %v213, %v405
      %v407 = vpop.f32.mrf.mxu0
      %v408 = vadd.f32 %v213, %v407
      %409 = vmatmul.bf16.gmra.mxu0 %v336
      %v410 = vpop.f32.mrf.mxu0
      %v411 = vadd.f32 %v213, %v410
      %v412 = vpop.f32.mrf.mxu0
      %v413 = vadd.f32 %v213, %v412
      %414 = vmatmul.bf16.gmra.mxu0 %v339
      %v415 = vpop.f32.mrf.mxu0
      %v416 = vadd.f32 %v213, %v415
      %v417 = vpop.f32.mrf.mxu0
      %v418 = vadd.f32 %v213, %v417
      %419 = vmatmul.bf16.gmra.mxu0 %v342
      %v420 = vpop.f32.mrf.mxu0
      %v421 = vadd.f32 %v213, %v420
      %v422 = vpop.f32.mrf.mxu0
      %v423 = vadd.f32 %v213, %v422
      %424 = vmatmul.bf16.gmra.mxu0 %v345
      %v425 = vpop.f32.mrf.mxu0
      %v426 = vadd.f32 %v213, %v425
      %v427 = vpop.f32.mrf.mxu0
      %v428 = vadd.f32 %v213, %v427
      %429 = vmatmul.bf16.gmra.mxu0 %v348
      %v430 = vpop.f32.mrf.mxu0
      %v431 = vadd.f32 %v213, %v430
      %v432 = vpop.f32.mrf.mxu0
      %v433 = vadd.f32 %v213, %v432
      %434 = vmatmul.bf16.gmra.mxu0 %v351
      %v435 = vpop.f32.mrf.mxu0
      %v436 = vadd.f32 %v213, %v435
      %v437 = vpop.f32.mrf.mxu0
      %v438 = vadd.f32 %v213, %v437
      %439 = vmatmul.bf16.gmra.mxu0 %v354
      %v440 = vpop.f32.mrf.mxu0
      %v441 = vadd.f32 %v213, %v440
      %v442 = vpop.f32.mrf.mxu0
      %v443 = vadd.f32 %v213, %v442
      %444 = vdwg.mxu0
      %v445 = vpack.c.bf16 %v366, %v366
      %v446 = vpack.c.bf16 %v368, %v368
      %v447 = vpack.c.bf16 %v371, %v371
      %v448 = vpack.c.bf16 %v373, %v373
      %v449 = vpack.c.bf16 %v376, %v376
      %v450 = vpack.c.bf16 %v378, %v378
      %v451 = vpack.c.bf16 %v381, %v381
      %v452 = vpack.c.bf16 %v383, %v383
      %v453 = vpack.c.bf16 %v386, %v386
      %v454 = vpack.c.bf16 %v388, %v388
      %v455 = vpack.c.bf16 %v391, %v391
      %v456 = vpack.c.bf16 %v393, %v393
      %v457 = vpack.c.bf16 %v396, %v396
      %v458 = vpack.c.bf16 %v398, %v398
      %v459 = vpack.c.bf16 %v401, %v401
      %v460 = vpack.c.bf16 %v403, %v403
      %v461 = vpack.c.bf16 %v406, %v406
      %v462 = vpack.c.bf16 %v408, %v408
      %v463 = vpack.c.bf16 %v411, %v411
      %v464 = vpack.c.bf16 %v413, %v413
      %v465 = vpack.c.bf16 %v416, %v416
      %v466 = vpack.c.bf16 %v418, %v418
      %v467 = vpack.c.bf16 %v421, %v421
      %v468 = vpack.c.bf16 %v423, %v423
      %v469 = vpack.c.bf16 %v426, %v426
      %v470 = vpack.c.bf16 %v428, %v428
      %v471 = vpack.c.bf16 %v431, %v431
      %v472 = vpack.c.bf16 %v433, %v433
      %v473 = vpack.c.bf16 %v436, %v436
      %v474 = vpack.c.bf16 %v438, %v438
      %v475 = vpack.c.bf16 %v441, %v441
      %v476 = vpack.c.bf16 %v443, %v443
      %v479 = vunpack.c.l.b16 %v445
      %v480 = vunpack.c.l.b16 %v446
      %v481 = vpack.c.b16 %v480, %v479
      %482 = vrot.lane.b32.xlu0 %v481, 96
      %v483 = vpop.permute.xlu0 %482
      %vm484 = vcmask 64512
      %v486 = vsel %vm484, %v481, 0
      %v489 = vsel %vm484, %v483, 0
      %491 = vmatpush.bf16.xpose.msra.mxu0 0
      %492 = vmatpush.bf16.xpose.msra.mxu0 0
      %493 = vmatpush.bf16.xpose.msra.mxu0 0
      %494 = vmatpush.bf16.xpose.msra.mxu0 0
      %495 = vmatpush.bf16.xpose.msra.mxu0 0
      %496 = vmatpush.bf16.xpose.msra.mxu0 0
      %497 = vmatpush.bf16.xpose.msra.mxu0 0
      %498 = vmatpush.bf16.xpose.msra.mxu0 %v489
      %499 = vmatmul.bf16.gmra.mxu0 %v486
      %v500 = vpop.f32.mrf.mxu0
      %v501 = vadd.f32 0.0, %v500
      %v502 = vpop.f32.mrf.mxu0
      %v503 = vadd.f32 0.0, %v502
      %504 = vdwg.mxu0
      %v507 = vunpack.c.l.b16 %v447
      %v508 = vunpack.c.l.b16 %v448
      %v509 = vpack.c.b16 %v508, %v507
      %510 = vrot.lane.b32.xlu0 %v509, 96
      %v511 = vpop.permute.xlu0 %510
      %v513 = vsel %vm484, %v509, 0
      %v516 = vsel %vm484, %v511, 0
      %518 = vmatpush.bf16.xpose.msra.mxu0 0
      %519 = vmatpush.bf16.xpose.msra.mxu0 0
      %520 = vmatpush.bf16.xpose.msra.mxu0 0
      %521 = vmatpush.bf16.xpose.msra.mxu0 0
      %522 = vmatpush.bf16.xpose.msra.mxu0 0
      %523 = vmatpush.bf16.xpose.msra.mxu0 0
      %524 = vmatpush.bf16.xpose.msra.mxu0 0
      %525 = vmatpush.bf16.xpose.msra.mxu0 %v516
      %526 = vmatmul.bf16.gmra.mxu0 %v513
      %v527 = vpop.f32.mrf.mxu0
      %v528 = vadd.f32 0.0, %v527
      %v529 = vpop.f32.mrf.mxu0
      %v530 = vadd.f32 0.0, %v529
      %531 = vdwg.mxu0
      %v534 = vunpack.c.l.b16 %v449
      %v535 = vunpack.c.l.b16 %v450
      %v536 = vpack.c.b16 %v535, %v534
      %537 = vrot.lane.b32.xlu0 %v536, 96
      %v538 = vpop.permute.xlu0 %537
      %v540 = vsel %vm484, %v536, 0
      %v543 = vsel %vm484, %v538, 0
      %545 = vmatpush.bf16.xpose.msra.mxu0 0
      %546 = vmatpush.bf16.xpose.msra.mxu0 0
      %547 = vmatpush.bf16.xpose.msra.mxu0 0
      %548 = vmatpush.bf16.xpose.msra.mxu0 0
      %549 = vmatpush.bf16.xpose.msra.mxu0 0
      %550 = vmatpush.bf16.xpose.msra.mxu0 0
      %551 = vmatpush.bf16.xpose.msra.mxu0 0
      %552 = vmatpush.bf16.xpose.msra.mxu0 %v543
      %553 = vmatmul.bf16.gmra.mxu0 %v540
      %v554 = vpop.f32.mrf.mxu0
      %v555 = vadd.f32 0.0, %v554
      %v556 = vpop.f32.mrf.mxu0
      %v557 = vadd.f32 0.0, %v556
      %558 = vdwg.mxu0
      %v561 = vunpack.c.l.b16 %v451
      %v562 = vunpack.c.l.b16 %v452
      %v563 = vpack.c.b16 %v562, %v561
      %564 = vrot.lane.b32.xlu0 %v563, 96
      %v565 = vpop.permute.xlu0 %564
      %v567 = vsel %vm484, %v563, 0
      %v570 = vsel %vm484, %v565, 0
      %572 = vmatpush.bf16.xpose.msra.mxu0 0
      %573 = vmatpush.bf16.xpose.msra.mxu0 0
      %574 = vmatpush.bf16.xpose.msra.mxu0 0
      %575 = vmatpush.bf16.xpose.msra.mxu0 0
      %576 = vmatpush.bf16.xpose.msra.mxu0 0
      %577 = vmatpush.bf16.xpose.msra.mxu0 0
      %578 = vmatpush.bf16.xpose.msra.mxu0 0
      %579 = vmatpush.bf16.xpose.msra.mxu0 %v570
      %580 = vmatmul.bf16.gmra.mxu0 %v567
      %v581 = vpop.f32.mrf.mxu0
      %v582 = vadd.f32 0.0, %v581
      %v583 = vpop.f32.mrf.mxu0
      %v584 = vadd.f32 0.0, %v583
      %585 = vdwg.mxu0
      %v588 = vunpack.c.l.b16 %v453
      %v589 = vunpack.c.l.b16 %v454
      %v590 = vpack.c.b16 %v589, %v588
      %591 = vrot.lane.b32.xlu0 %v590, 96
      %v592 = vpop.permute.xlu0 %591
      %v594 = vsel %vm484, %v590, 0
      %v597 = vsel %vm484, %v592, 0
      %599 = vmatpush.bf16.xpose.msra.mxu0 0
      %600 = vmatpush.bf16.xpose.msra.mxu0 0
      %601 = vmatpush.bf16.xpose.msra.mxu0 0
      %602 = vmatpush.bf16.xpose.msra.mxu0 0
      %603 = vmatpush.bf16.xpose.msra.mxu0 0
      %604 = vmatpush.bf16.xpose.msra.mxu0 0
      %605 = vmatpush.bf16.xpose.msra.mxu0 0
      %606 = vmatpush.bf16.xpose.msra.mxu0 %v597
      %607 = vmatmul.bf16.gmra.mxu0 %v594
      %v608 = vpop.f32.mrf.mxu0
      %v609 = vadd.f32 0.0, %v608
      %v610 = vpop.f32.mrf.mxu0
      %v611 = vadd.f32 0.0, %v610
      %612 = vdwg.mxu0
      %v615 = vunpack.c.l.b16 %v455
      %v616 = vunpack.c.l.b16 %v456
      %v617 = vpack.c.b16 %v616, %v615
      %618 = vrot.lane.b32.xlu0 %v617, 96
      %v619 = vpop.permute.xlu0 %618
      %v621 = vsel %vm484, %v617, 0
      %v624 = vsel %vm484, %v619, 0
      %626 = vmatpush.bf16.xpose.msra.mxu0 0
      %627 = vmatpush.bf16.xpose.msra.mxu0 0
      %628 = vmatpush.bf16.xpose.msra.mxu0 0
      %629 = vmatpush.bf16.xpose.msra.mxu0 0
      %630 = vmatpush.bf16.xpose.msra.mxu0 0
      %631 = vmatpush.bf16.xpose.msra.mxu0 0
      %632 = vmatpush.bf16.xpose.msra.mxu0 0
      %633 = vmatpush.bf16.xpose.msra.mxu0 %v624
      %634 = vmatmul.bf16.gmra.mxu0 %v621
      %v635 = vpop.f32.mrf.mxu0
      %v636 = vadd.f32 0.0, %v635
      %v637 = vpop.f32.mrf.mxu0
      %v638 = vadd.f32 0.0, %v637
      %639 = vdwg.mxu0
      %v642 = vunpack.c.l.b16 %v457
      %v643 = vunpack.c.l.b16 %v458
      %v644 = vpack.c.b16 %v643, %v642
      %645 = vrot.lane.b32.xlu0 %v644, 96
      %v646 = vpop.permute.xlu0 %645
      %v648 = vsel %vm484, %v644, 0
      %v651 = vsel %vm484, %v646, 0
      %653 = vmatpush.bf16.xpose.msra.mxu0 0
      %654 = vmatpush.bf16.xpose.msra.mxu0 0
      %655 = vmatpush.bf16.xpose.msra.mxu0 0
      %656 = vmatpush.bf16.xpose.msra.mxu0 0
      %657 = vmatpush.bf16.xpose.msra.mxu0 0
      %658 = vmatpush.bf16.xpose.msra.mxu0 0
      %659 = vmatpush.bf16.xpose.msra.mxu0 0
      %660 = vmatpush.bf16.xpose.msra.mxu0 %v651
      %661 = vmatmul.bf16.gmra.mxu0 %v648
      %v662 = vpop.f32.mrf.mxu0
      %v663 = vadd.f32 0.0, %v662
      %v664 = vpop.f32.mrf.mxu0
      %v665 = vadd.f32 0.0, %v664
      %666 = vdwg.mxu0
      %v669 = vunpack.c.l.b16 %v459
      %v670 = vunpack.c.l.b16 %v460
      %v671 = vpack.c.b16 %v670, %v669
      %672 = vrot.lane.b32.xlu0 %v671, 96
      %v673 = vpop.permute.xlu0 %672
      %v675 = vsel %vm484, %v671, 0
      %v678 = vsel %vm484, %v673, 0
      %680 = vmatpush.bf16.xpose.msra.mxu0 0
      %681 = vmatpush.bf16.xpose.msra.mxu0 0
      %682 = vmatpush.bf16.xpose.msra.mxu0 0
      %683 = vmatpush.bf16.xpose.msra.mxu0 0
      %684 = vmatpush.bf16.xpose.msra.mxu0 0
      %685 = vmatpush.bf16.xpose.msra.mxu0 0
      %686 = vmatpush.bf16.xpose.msra.mxu0 0
      %687 = vmatpush.bf16.xpose.msra.mxu0 %v678
      %688 = vmatmul.bf16.gmra.mxu0 %v675
      %v689 = vpop.f32.mrf.mxu0
      %v690 = vadd.f32 0.0, %v689
      %v691 = vpop.f32.mrf.mxu0
      %v692 = vadd.f32 0.0, %v691
      %693 = vdwg.mxu0
      %v696 = vunpack.c.l.b16 %v461
      %v697 = vunpack.c.l.b16 %v462
      %v698 = vpack.c.b16 %v697, %v696
      %699 = vrot.lane.b32.xlu0 %v698, 96
      %v700 = vpop.permute.xlu0 %699
      %v702 = vsel %vm484, %v698, 0
      %v705 = vsel %vm484, %v700, 0
      %707 = vmatpush.bf16.xpose.msra.mxu0 0
      %708 = vmatpush.bf16.xpose.msra.mxu0 0
      %709 = vmatpush.bf16.xpose.msra.mxu0 0
      %710 = vmatpush.bf16.xpose.msra.mxu0 0
      %711 = vmatpush.bf16.xpose.msra.mxu0 0
      %712 = vmatpush.bf16.xpose.msra.mxu0 0
      %713 = vmatpush.bf16.xpose.msra.mxu0 0
      %714 = vmatpush.bf16.xpose.msra.mxu0 %v705
      %715 = vmatmul.bf16.gmra.mxu0 %v702
      %v716 = vpop.f32.mrf.mxu0
      %v717 = vadd.f32 0.0, %v716
      %v718 = vpop.f32.mrf.mxu0
      %v719 = vadd.f32 0.0, %v718
      %720 = vdwg.mxu0
      %v723 = vunpack.c.l.b16 %v463
      %v724 = vunpack.c.l.b16 %v464
      %v725 = vpack.c.b16 %v724, %v723
      %726 = vrot.lane.b32.xlu0 %v725, 96
      %v727 = vpop.permute.xlu0 %726
      %v729 = vsel %vm484, %v725, 0
      %v732 = vsel %vm484, %v727, 0
      %734 = vmatpush.bf16.xpose.msra.mxu0 0
      %735 = vmatpush.bf16.xpose.msra.mxu0 0
      %736 = vmatpush.bf16.xpose.msra.mxu0 0
      %737 = vmatpush.bf16.xpose.msra.mxu0 0
      %738 = vmatpush.bf16.xpose.msra.mxu0 0
      %739 = vmatpush.bf16.xpose.msra.mxu0 0
      %740 = vmatpush.bf16.xpose.msra.mxu0 0
      %741 = vmatpush.bf16.xpose.msra.mxu0 %v732
      %742 = vmatmul.bf16.gmra.mxu0 %v729
      %v743 = vpop.f32.mrf.mxu0
      %v744 = vadd.f32 0.0, %v743
      %v745 = vpop.f32.mrf.mxu0
      %v746 = vadd.f32 0.0, %v745
      %747 = vdwg.mxu0
      %v750 = vunpack.c.l.b16 %v465
      %v751 = vunpack.c.l.b16 %v466
      %v752 = vpack.c.b16 %v751, %v750
      %753 = vrot.lane.b32.xlu0 %v752, 96
      %v754 = vpop.permute.xlu0 %753
      %v756 = vsel %vm484, %v752, 0
      %v759 = vsel %vm484, %v754, 0
      %761 = vmatpush.bf16.xpose.msra.mxu0 0
      %762 = vmatpush.bf16.xpose.msra.mxu0 0
      %763 = vmatpush.bf16.xpose.msra.mxu0 0
      %764 = vmatpush.bf16.xpose.msra.mxu0 0
      %765 = vmatpush.bf16.xpose.msra.mxu0 0
      %766 = vmatpush.bf16.xpose.msra.mxu0 0
      %767 = vmatpush.bf16.xpose.msra.mxu0 0
      %768 = vmatpush.bf16.xpose.msra.mxu0 %v759
      %769 = vmatmul.bf16.gmra.mxu0 %v756
      %v770 = vpop.f32.mrf.mxu0
      %v771 = vadd.f32 0.0, %v770
      %v772 = vpop.f32.mrf.mxu0
      %v773 = vadd.f32 0.0, %v772
      %774 = vdwg.mxu0
      %v777 = vunpack.c.l.b16 %v467
      %v778 = vunpack.c.l.b16 %v468
      %v779 = vpack.c.b16 %v778, %v777
      %780 = vrot.lane.b32.xlu0 %v779, 96
      %v781 = vpop.permute.xlu0 %780
      %v783 = vsel %vm484, %v779, 0
      %v786 = vsel %vm484, %v781, 0
      %788 = vmatpush.bf16.xpose.msra.mxu0 0
      %789 = vmatpush.bf16.xpose.msra.mxu0 0
      %790 = vmatpush.bf16.xpose.msra.mxu0 0
      %791 = vmatpush.bf16.xpose.msra.mxu0 0
      %792 = vmatpush.bf16.xpose.msra.mxu0 0
      %793 = vmatpush.bf16.xpose.msra.mxu0 0
      %794 = vmatpush.bf16.xpose.msra.mxu0 0
      %795 = vmatpush.bf16.xpose.msra.mxu0 %v786
      %796 = vmatmul.bf16.gmra.mxu0 %v783
      %v797 = vpop.f32.mrf.mxu0
      %v798 = vadd.f32 0.0, %v797
      %v799 = vpop.f32.mrf.mxu0
      %v800 = vadd.f32 0.0, %v799
      %801 = vdwg.mxu0
      %v804 = vunpack.c.l.b16 %v469
      %v805 = vunpack.c.l.b16 %v470
      %v806 = vpack.c.b16 %v805, %v804
      %807 = vrot.lane.b32.xlu0 %v806, 96
      %v808 = vpop.permute.xlu0 %807
      %v810 = vsel %vm484, %v806, 0
      %v813 = vsel %vm484, %v808, 0
      %815 = vmatpush.bf16.xpose.msra.mxu0 0
      %816 = vmatpush.bf16.xpose.msra.mxu0 0
      %817 = vmatpush.bf16.xpose.msra.mxu0 0
      %818 = vmatpush.bf16.xpose.msra.mxu0 0
      %819 = vmatpush.bf16.xpose.msra.mxu0 0
      %820 = vmatpush.bf16.xpose.msra.mxu0 0
      %821 = vmatpush.bf16.xpose.msra.mxu0 0
      %822 = vmatpush.bf16.xpose.msra.mxu0 %v813
      %823 = vmatmul.bf16.gmra.mxu0 %v810
      %v824 = vpop.f32.mrf.mxu0
      %v825 = vadd.f32 0.0, %v824
      %v826 = vpop.f32.mrf.mxu0
      %v827 = vadd.f32 0.0, %v826
      %828 = vdwg.mxu0
      %v831 = vunpack.c.l.b16 %v471
      %v832 = vunpack.c.l.b16 %v472
      %v833 = vpack.c.b16 %v832, %v831
      %834 = vrot.lane.b32.xlu0 %v833, 96
      %v835 = vpop.permute.xlu0 %834
      %v837 = vsel %vm484, %v833, 0
      %v840 = vsel %vm484, %v835, 0
      %842 = vmatpush.bf16.xpose.msra.mxu0 0
      %843 = vmatpush.bf16.xpose.msra.mxu0 0
      %844 = vmatpush.bf16.xpose.msra.mxu0 0
      %845 = vmatpush.bf16.xpose.msra.mxu0 0
      %846 = vmatpush.bf16.xpose.msra.mxu0 0
      %847 = vmatpush.bf16.xpose.msra.mxu0 0
      %848 = vmatpush.bf16.xpose.msra.mxu0 0
      %849 = vmatpush.bf16.xpose.msra.mxu0 %v840
      %850 = vmatmul.bf16.gmra.mxu0 %v837
      %v851 = vpop.f32.mrf.mxu0
      %v852 = vadd.f32 0.0, %v851
      %v853 = vpop.f32.mrf.mxu0
      %v854 = vadd.f32 0.0, %v853
      %855 = vdwg.mxu0
      %v858 = vunpack.c.l.b16 %v473
      %v859 = vunpack.c.l.b16 %v474
      %v860 = vpack.c.b16 %v859, %v858
      %861 = vrot.lane.b32.xlu0 %v860, 96
      %v862 = vpop.permute.xlu0 %861
      %v864 = vsel %vm484, %v860, 0
      %v867 = vsel %vm484, %v862, 0
      %869 = vmatpush.bf16.xpose.msra.mxu0 0
      %870 = vmatpush.bf16.xpose.msra.mxu0 0
      %871 = vmatpush.bf16.xpose.msra.mxu0 0
      %872 = vmatpush.bf16.xpose.msra.mxu0 0
      %873 = vmatpush.bf16.xpose.msra.mxu0 0
      %874 = vmatpush.bf16.xpose.msra.mxu0 0
      %875 = vmatpush.bf16.xpose.msra.mxu0 0
      %876 = vmatpush.bf16.xpose.msra.mxu0 %v867
      %877 = vmatmul.bf16.gmra.mxu0 %v864
      %v878 = vpop.f32.mrf.mxu0
      %v879 = vadd.f32 0.0, %v878
      %v880 = vpop.f32.mrf.mxu0
      %v881 = vadd.f32 0.0, %v880
      %882 = vdwg.mxu0
      %v885 = vunpack.c.l.b16 %v475
      %v886 = vunpack.c.l.b16 %v476
      %v887 = vpack.c.b16 %v886, %v885
      %888 = vrot.lane.b32.xlu0 %v887, 96
      %v889 = vpop.permute.xlu0 %888
      %v891 = vsel %vm484, %v887, 0
      %v894 = vsel %vm484, %v889, 0
      %896 = vmatpush.bf16.xpose.msra.mxu0 0
      %897 = vmatpush.bf16.xpose.msra.mxu0 0
      %898 = vmatpush.bf16.xpose.msra.mxu0 0
      %899 = vmatpush.bf16.xpose.msra.mxu0 0
      %900 = vmatpush.bf16.xpose.msra.mxu0 0
      %901 = vmatpush.bf16.xpose.msra.mxu0 0
      %902 = vmatpush.bf16.xpose.msra.mxu0 0
      %903 = vmatpush.bf16.xpose.msra.mxu0 %v894
      %904 = vmatmul.bf16.gmra.mxu0 %v891
      %v905 = vpop.f32.mrf.mxu0
      %v906 = vadd.f32 0.0, %v905
      %v907 = vpop.f32.mrf.mxu0
      %v908 = vadd.f32 0.0, %v907
      %909 = vdwg.mxu0
      %vm910 = vcmask 130048
      %v911 = vsel %vm910, %v501, -inf
      %912 = vmax.xlane.f32.xlu0 %v911
      %v913 = vpop.xlane.xlu0 %912
      %v914 = vsel %vm910, %v503, -inf
      %915 = vmax.xlane.f32.xlu0 %v914
      %v916 = vpop.xlane.xlu0 %915
      %v917 = vsel %vm910, %v528, -inf
      %918 = vmax.xlane.f32.xlu0 %v917
      %v919 = vpop.xlane.xlu0 %918
      %v920 = vsel %vm910, %v530, -inf
      %921 = vmax.xlane.f32.xlu0 %v920
      %v922 = vpop.xlane.xlu0 %921
      %v923 = vsel %vm910, %v555, -inf
      %924 = vmax.xlane.f32.xlu0 %v923
      %v925 = vpop.xlane.xlu0 %924
      %v926 = vsel %vm910, %v557, -inf
      %927 = vmax.xlane.f32.xlu0 %v926
      %v928 = vpop.xlane.xlu0 %927
      %v929 = vsel %vm910, %v582, -inf
      %930 = vmax.xlane.f32.xlu0 %v929
      %v931 = vpop.xlane.xlu0 %930
      %v932 = vsel %vm910, %v584, -inf
      %933 = vmax.xlane.f32.xlu0 %v932
      %v934 = vpop.xlane.xlu0 %933
      %v935 = vsel %vm910, %v609, -inf
      %936 = vmax.xlane.f32.xlu0 %v935
      %v937 = vpop.xlane.xlu0 %936
      %v938 = vsel %vm910, %v611, -inf
      %939 = vmax.xlane.f32.xlu0 %v938
      %v940 = vpop.xlane.xlu0 %939
      %v941 = vsel %vm910, %v636, -inf
      %942 = vmax.xlane.f32.xlu0 %v941
      %v943 = vpop.xlane.xlu0 %942
      %v944 = vsel %vm910, %v638, -inf
      %945 = vmax.xlane.f32.xlu0 %v944
      %v946 = vpop.xlane.xlu0 %945
      %v947 = vsel %vm910, %v663, -inf
      %948 = vmax.xlane.f32.xlu0 %v947
      %v949 = vpop.xlane.xlu0 %948
      %v950 = vsel %vm910, %v665, -inf
      %951 = vmax.xlane.f32.xlu0 %v950
      %v952 = vpop.xlane.xlu0 %951
      %v953 = vsel %vm910, %v690, -inf
      %954 = vmax.xlane.f32.xlu0 %v953
      %v955 = vpop.xlane.xlu0 %954
      %v956 = vsel %vm910, %v692, -inf
      %957 = vmax.xlane.f32.xlu0 %v956
      %v958 = vpop.xlane.xlu0 %957
      %v959 = vsel %vm910, %v717, -inf
      %960 = vmax.xlane.f32.xlu0 %v959
      %v961 = vpop.xlane.xlu0 %960
      %v962 = vsel %vm910, %v719, -inf
      %963 = vmax.xlane.f32.xlu0 %v962
      %v964 = vpop.xlane.xlu0 %963
      %v965 = vsel %vm910, %v744, -inf
      %966 = vmax.xlane.f32.xlu0 %v965
      %v967 = vpop.xlane.xlu0 %966
      %v968 = vsel %vm910, %v746, -inf
      %969 = vmax.xlane.f32.xlu0 %v968
      %v970 = vpop.xlane.xlu0 %969
      %v971 = vsel %vm910, %v771, -inf
      %972 = vmax.xlane.f32.xlu0 %v971
      %v973 = vpop.xlane.xlu0 %972
      %v974 = vsel %vm910, %v773, -inf
      %975 = vmax.xlane.f32.xlu0 %v974
      %v976 = vpop.xlane.xlu0 %975
      %v977 = vsel %vm910, %v798, -inf
      %978 = vmax.xlane.f32.xlu0 %v977
      %v979 = vpop.xlane.xlu0 %978
      %v980 = vsel %vm910, %v800, -inf
      %981 = vmax.xlane.f32.xlu0 %v980
      %v982 = vpop.xlane.xlu0 %981
      %v983 = vsel %vm910, %v825, -inf
      %984 = vmax.xlane.f32.xlu0 %v983
      %v985 = vpop.xlane.xlu0 %984
      %v986 = vsel %vm910, %v827, -inf
      %987 = vmax.xlane.f32.xlu0 %v986
      %v988 = vpop.xlane.xlu0 %987
      %v989 = vsel %vm910, %v852, -inf
      %990 = vmax.xlane.f32.xlu0 %v989
      %v991 = vpop.xlane.xlu0 %990
      %v992 = vsel %vm910, %v854, -inf
      %993 = vmax.xlane.f32.xlu0 %v992
      %v994 = vpop.xlane.xlu0 %993
      %v995 = vsel %vm910, %v879, -inf
      %996 = vmax.xlane.f32.xlu0 %v995
      %v997 = vpop.xlane.xlu0 %996
      %v998 = vsel %vm910, %v881, -inf
      %999 = vmax.xlane.f32.xlu0 %v998
      %v1000 = vpop.xlane.xlu0 %999
      %v1001 = vsel %vm910, %v906, -inf
      %1002 = vmax.xlane.f32.xlu0 %v1001
      %v1003 = vpop.xlane.xlu0 %1002
      %v1004 = vsel %vm910, %v908, -inf
      %1005 = vmax.xlane.f32.xlu0 %v1004
      %v1006 = vpop.xlane.xlu0 %1005
      %v1007 = vsub.f32 %v501, %v913
      %v1008 = vsub.f32 %v503, %v916
      %v1009 = vsub.f32 %v528, %v919
      %v1010 = vsub.f32 %v530, %v922
      %v1011 = vsub.f32 %v555, %v925
      %v1012 = vsub.f32 %v557, %v928
      %v1013 = vsub.f32 %v582, %v931
      %v1014 = vsub.f32 %v584, %v934
      %v1015 = vsub.f32 %v609, %v937
      %v1016 = vsub.f32 %v611, %v940
      %v1017 = vsub.f32 %v636, %v943
      %v1018 = vsub.f32 %v638, %v946
      %v1019 = vsub.f32 %v663, %v949
      %v1020 = vsub.f32 %v665, %v952
      %v1021 = vsub.f32 %v690, %v955
      %v1022 = vsub.f32 %v692, %v958
      %v1023 = vsub.f32 %v717, %v961
      %v1024 = vsub.f32 %v719, %v964
      %v1025 = vsub.f32 %v744, %v967
      %v1026 = vsub.f32 %v746, %v970
      %v1027 = vsub.f32 %v771, %v973
      %v1028 = vsub.f32 %v773, %v976
      %v1029 = vsub.f32 %v798, %v979
      %v1030 = vsub.f32 %v800, %v982
      %v1031 = vsub.f32 %v825, %v985
      %v1032 = vsub.f32 %v827, %v988
      %v1033 = vsub.f32 %v852, %v991
      %v1034 = vsub.f32 %v854, %v994
      %v1035 = vsub.f32 %v879, %v997
      %v1036 = vsub.f32 %v881, %v1000
      %v1037 = vsub.f32 %v906, %v1003
      %v1038 = vsub.f32 %v908, %v1006
      %v1039 = vmul.f32 %v1007, 1.442695
      %v1040 = vpow.pop %v1039
      %v1041 = vmul.f32 %v1008, 1.442695
      %v1042 = vpow.pop %v1041
      %v1043 = vmul.f32 %v1009, 1.442695
      %v1044 = vpow.pop %v1043
      %v1045 = vmul.f32 %v1010, 1.442695
      %v1046 = vpow.pop %v1045
      %v1047 = vmul.f32 %v1011, 1.442695
      %v1048 = vpow.pop %v1047
      %v1049 = vmul.f32 %v1012, 1.442695
      %v1050 = vpow.pop %v1049
      %v1051 = vmul.f32 %v1013, 1.442695
      %v1052 = vpow.pop %v1051
      %v1053 = vmul.f32 %v1014, 1.442695
      %v1054 = vpow.pop %v1053
      %v1055 = vmul.f32 %v1015, 1.442695
      %v1056 = vpow.pop %v1055
      %v1057 = vmul.f32 %v1016, 1.442695
      %v1058 = vpow.pop %v1057
      %v1059 = vmul.f32 %v1017, 1.442695
      %v1060 = vpow.pop %v1059
      %v1061 = vmul.f32 %v1018, 1.442695
      %v1062 = vpow.pop %v1061
      %v1063 = vmul.f32 %v1019, 1.442695
      %v1064 = vpow.pop %v1063
      %v1065 = vmul.f32 %v1020, 1.442695
      %v1066 = vpow.pop %v1065
      %v1067 = vmul.f32 %v1021, 1.442695
      %v1068 = vpow.pop %v1067
      %v1069 = vmul.f32 %v1022, 1.442695
      %v1070 = vpow.pop %v1069
      %v1071 = vmul.f32 %v1023, 1.442695
      %v1072 = vpow.pop %v1071
      %v1073 = vmul.f32 %v1024, 1.442695
      %v1074 = vpow.pop %v1073
      %v1075 = vmul.f32 %v1025, 1.442695
      %v1076 = vpow.pop %v1075
      %v1077 = vmul.f32 %v1026, 1.442695
      %v1078 = vpow.pop %v1077
      %v1079 = vmul.f32 %v1027, 1.442695
      %v1080 = vpow.pop %v1079
      %v1081 = vmul.f32 %v1028, 1.442695
      %v1082 = vpow.pop %v1081
      %v1083 = vmul.f32 %v1029, 1.442695
      %v1084 = vpow.pop %v1083
      %v1085 = vmul.f32 %v1030, 1.442695
      %v1086 = vpow.pop %v1085
      %v1087 = vmul.f32 %v1031, 1.442695
      %v1088 = vpow.pop %v1087
      %v1089 = vmul.f32 %v1032, 1.442695
      %v1090 = vpow.pop %v1089
      %v1091 = vmul.f32 %v1033, 1.442695
      %v1092 = vpow.pop %v1091
      %v1093 = vmul.f32 %v1034, 1.442695
      %v1094 = vpow.pop %v1093
      %v1095 = vmul.f32 %v1035, 1.442695
      %v1096 = vpow.pop %v1095
      %v1097 = vmul.f32 %v1036, 1.442695
      %v1098 = vpow.pop %v1097
      %v1099 = vmul.f32 %v1037, 1.442695
      %v1100 = vpow.pop %v1099
      %v1101 = vmul.f32 %v1038, 1.442695
      %v1102 = vpow.pop %v1101
      %v1103 = vsel %vm910, %v1040, 0.0
      %1104 = vadd.xlane.f32.xlu0 %v1103
      %v1105 = vpop.xlane.xlu0 %1104
      %v1106 = vsel %vm910, %v1042, 0.0
      %1107 = vadd.xlane.f32.xlu0 %v1106
      %v1108 = vpop.xlane.xlu0 %1107
      %v1109 = vsel %vm910, %v1044, 0.0
      %1110 = vadd.xlane.f32.xlu0 %v1109
      %v1111 = vpop.xlane.xlu0 %1110
      %v1112 = vsel %vm910, %v1046, 0.0
      %1113 = vadd.xlane.f32.xlu0 %v1112
      %v1114 = vpop.xlane.xlu0 %1113
      %v1115 = vsel %vm910, %v1048, 0.0
      %1116 = vadd.xlane.f32.xlu0 %v1115
      %v1117 = vpop.xlane.xlu0 %1116
      %v1118 = vsel %vm910, %v1050, 0.0
      %1119 = vadd.xlane.f32.xlu0 %v1118
      %v1120 = vpop.xlane.xlu0 %1119
      %v1121 = vsel %vm910, %v1052, 0.0
      %1122 = vadd.xlane.f32.xlu0 %v1121
      %v1123 = vpop.xlane.xlu0 %1122
      %v1124 = vsel %vm910, %v1054, 0.0
      %1125 = vadd.xlane.f32.xlu0 %v1124
      %v1126 = vpop.xlane.xlu0 %1125
      %v1127 = vsel %vm910, %v1056, 0.0
      %1128 = vadd.xlane.f32.xlu0 %v1127
      %v1129 = vpop.xlane.xlu0 %1128
      %v1130 = vsel %vm910, %v1058, 0.0
      %1131 = vadd.xlane.f32.xlu0 %v1130
      %v1132 = vpop.xlane.xlu0 %1131
      %v1133 = vsel %vm910, %v1060, 0.0
      %1134 = vadd.xlane.f32.xlu0 %v1133
      %v1135 = vpop.xlane.xlu0 %1134
      %v1136 = vsel %vm910, %v1062, 0.0
      %1137 = vadd.xlane.f32.xlu0 %v1136
      %v1138 = vpop.xlane.xlu0 %1137
      %v1139 = vsel %vm910, %v1064, 0.0
      %1140 = vadd.xlane.f32.xlu0 %v1139
      %v1141 = vpop.xlane.xlu0 %1140
      %v1142 = vsel %vm910, %v1066, 0.0
      %1143 = vadd.xlane.f32.xlu0 %v1142
      %v1144 = vpop.xlane.xlu0 %1143
      %v1145 = vsel %vm910, %v1068, 0.0
      %1146 = vadd.xlane.f32.xlu0 %v1145
      %v1147 = vpop.xlane.xlu0 %1146
      %v1148 = vsel %vm910, %v1070, 0.0
      %1149 = vadd.xlane.f32.xlu0 %v1148
      %v1150 = vpop.xlane.xlu0 %1149
      %v1151 = vsel %vm910, %v1072, 0.0
      %1152 = vadd.xlane.f32.xlu0 %v1151
      %v1153 = vpop.xlane.xlu0 %1152
      %v1154 = vsel %vm910, %v1074, 0.0
      %1155 = vadd.xlane.f32.xlu0 %v1154
      %v1156 = vpop.xlane.xlu0 %1155
      %v1157 = vsel %vm910, %v1076, 0.0
      %1158 = vadd.xlane.f32.xlu0 %v1157
      %v1159 = vpop.xlane.xlu0 %1158
      %v1160 = vsel %vm910, %v1078, 0.0
      %1161 = vadd.xlane.f32.xlu0 %v1160
      %v1162 = vpop.xlane.xlu0 %1161
      %v1163 = vsel %vm910, %v1080, 0.0
      %1164 = vadd.xlane.f32.xlu0 %v1163
      %v1165 = vpop.xlane.xlu0 %1164
      %v1166 = vsel %vm910, %v1082, 0.0
      %1167 = vadd.xlane.f32.xlu0 %v1166
      %v1168 = vpop.xlane.xlu0 %1167
      %v1169 = vsel %vm910, %v1084, 0.0
      %1170 = vadd.xlane.f32.xlu0 %v1169
      %v1171 = vpop.xlane.xlu0 %1170
      %v1172 = vsel %vm910, %v1086, 0.0
      %1173 = vadd.xlane.f32.xlu0 %v1172
      %v1174 = vpop.xlane.xlu0 %1173
      %v1175 = vsel %vm910, %v1088, 0.0
      %1176 = vadd.xlane.f32.xlu0 %v1175
      %v1177 = vpop.xlane.xlu0 %1176
      %v1178 = vsel %vm910, %v1090, 0.0
      %1179 = vadd.xlane.f32.xlu0 %v1178
      %v1180 = vpop.xlane.xlu0 %1179
      %v1181 = vsel %vm910, %v1092, 0.0
      %1182 = vadd.xlane.f32.xlu0 %v1181
      %v1183 = vpop.xlane.xlu0 %1182
      %v1184 = vsel %vm910, %v1094, 0.0
      %1185 = vadd.xlane.f32.xlu0 %v1184
      %v1186 = vpop.xlane.xlu0 %1185
      %v1187 = vsel %vm910, %v1096, 0.0
      %1188 = vadd.xlane.f32.xlu0 %v1187
      %v1189 = vpop.xlane.xlu0 %1188
      %v1190 = vsel %vm910, %v1098, 0.0
      %1191 = vadd.xlane.f32.xlu0 %v1190
      %v1192 = vpop.xlane.xlu0 %1191
      %v1193 = vsel %vm910, %v1100, 0.0
      %1194 = vadd.xlane.f32.xlu0 %v1193
      %v1195 = vpop.xlane.xlu0 %1194
      %v1196 = vsel %vm910, %v1102, 0.0
      %1197 = vadd.xlane.f32.xlu0 %v1196
      %v1198 = vpop.xlane.xlu0 %1197
      %v1199 = vrcp.pop %v1105
      %v1200 = vmul.f32 %v1105, %v1199
      %v1201 = vsub.f32 1.0, %v1200
      %v1202 = vmul.f32 %v1199, %v1201
      %v1203 = vadd.f32 %v1199, %v1202
      %vm1204 = vweird.f32 %v1105
      %vm1205 = vweird.f32 %v1199
      %vm1206 = vmor %vm1204, %vm1205
      %v1207 = vsel %vm1206, %v1199, %v1203
      %v1208 = vand.u32 2147483647, %v1105
      %vm1209 = vcmp.eq.f32.partialorder %v1208, 8.507059e+37
      %v1210 = vand.u32 %v1105, 2147483648
      %v1211 = vor.u32 1.1754944e-38, %v1210
      %v1212 = vsel %vm1209, %v1211, %v1207
      %v1213 = vmul.f32 1.0, %v1212
      %v1214 = vrcp.pop %v1108
      %v1215 = vmul.f32 %v1108, %v1214
      %v1216 = vsub.f32 1.0, %v1215
      %v1217 = vmul.f32 %v1214, %v1216
      %v1218 = vadd.f32 %v1214, %v1217
      %vm1219 = vweird.f32 %v1108
      %vm1220 = vweird.f32 %v1214
      %vm1221 = vmor %vm1219, %vm1220
      %v1222 = vsel %vm1221, %v1214, %v1218
      %v1223 = vand.u32 2147483647, %v1108
      %vm1224 = vcmp.eq.f32.partialorder %v1223, 8.507059e+37
      %v1225 = vand.u32 %v1108, 2147483648
      %v1226 = vor.u32 1.1754944e-38, %v1225
      %v1227 = vsel %vm1224, %v1226, %v1222
      %v1228 = vmul.f32 1.0, %v1227
      %v1229 = vrcp.pop %v1111
      %v1230 = vmul.f32 %v1111, %v1229
      %v1231 = vsub.f32 1.0, %v1230
      %v1232 = vmul.f32 %v1229, %v1231
      %v1233 = vadd.f32 %v1229, %v1232
      %vm1234 = vweird.f32 %v1111
      %vm1235 = vweird.f32 %v1229
      %vm1236 = vmor %vm1234, %vm1235
      %v1237 = vsel %vm1236, %v1229, %v1233
      %v1238 = vand.u32 2147483647, %v1111
      %vm1239 = vcmp.eq.f32.partialorder %v1238, 8.507059e+37
      %v1240 = vand.u32 %v1111, 2147483648
      %v1241 = vor.u32 1.1754944e-38, %v1240
      %v1242 = vsel %vm1239, %v1241, %v1237
      %v1243 = vmul.f32 1.0, %v1242
      %v1244 = vrcp.pop %v1114
      %v1245 = vmul.f32 %v1114, %v1244
      %v1246 = vsub.f32 1.0, %v1245
      %v1247 = vmul.f32 %v1244, %v1246
      %v1248 = vadd.f32 %v1244, %v1247
      %vm1249 = vweird.f32 %v1114
      %vm1250 = vweird.f32 %v1244
      %vm1251 = vmor %vm1249, %vm1250
      %v1252 = vsel %vm1251, %v1244, %v1248
      %v1253 = vand.u32 2147483647, %v1114
      %vm1254 = vcmp.eq.f32.partialorder %v1253, 8.507059e+37
      %v1255 = vand.u32 %v1114, 2147483648
      %v1256 = vor.u32 1.1754944e-38, %v1255
      %v1257 = vsel %vm1254, %v1256, %v1252
      %v1258 = vmul.f32 1.0, %v1257
      %v1259 = vrcp.pop %v1117
      %v1260 = vmul.f32 %v1117, %v1259
      %v1261 = vsub.f32 1.0, %v1260
      %v1262 = vmul.f32 %v1259, %v1261
      %v1263 = vadd.f32 %v1259, %v1262
      %vm1264 = vweird.f32 %v1117
      %vm1265 = vweird.f32 %v1259
      %vm1266 = vmor %vm1264, %vm1265
      %v1267 = vsel %vm1266, %v1259, %v1263
      %v1268 = vand.u32 2147483647, %v1117
      %vm1269 = vcmp.eq.f32.partialorder %v1268, 8.507059e+37
      %v1270 = vand.u32 %v1117, 2147483648
      %v1271 = vor.u32 1.1754944e-38, %v1270
      %v1272 = vsel %vm1269, %v1271, %v1267
      %v1273 = vmul.f32 1.0, %v1272
      %v1274 = vrcp.pop %v1120
      %v1275 = vmul.f32 %v1120, %v1274
      %v1276 = vsub.f32 1.0, %v1275
      %v1277 = vmul.f32 %v1274, %v1276
      %v1278 = vadd.f32 %v1274, %v1277
      %vm1279 = vweird.f32 %v1120
      %vm1280 = vweird.f32 %v1274
      %vm1281 = vmor %vm1279, %vm1280
      %v1282 = vsel %vm1281, %v1274, %v1278
      %v1283 = vand.u32 2147483647, %v1120
      %vm1284 = vcmp.eq.f32.partialorder %v1283, 8.507059e+37
      %v1285 = vand.u32 %v1120, 2147483648
      %v1286 = vor.u32 1.1754944e-38, %v1285
      %v1287 = vsel %vm1284, %v1286, %v1282
      %v1288 = vmul.f32 1.0, %v1287
      %v1289 = vrcp.pop %v1123
      %v1290 = vmul.f32 %v1123, %v1289
      %v1291 = vsub.f32 1.0, %v1290
      %v1292 = vmul.f32 %v1289, %v1291
      %v1293 = vadd.f32 %v1289, %v1292
      %vm1294 = vweird.f32 %v1123
      %vm1295 = vweird.f32 %v1289
      %vm1296 = vmor %vm1294, %vm1295
      %v1297 = vsel %vm1296, %v1289, %v1293
      %v1298 = vand.u32 2147483647, %v1123
      %vm1299 = vcmp.eq.f32.partialorder %v1298, 8.507059e+37
      %v1300 = vand.u32 %v1123, 2147483648
      %v1301 = vor.u32 1.1754944e-38, %v1300
      %v1302 = vsel %vm1299, %v1301, %v1297
      %v1303 = vmul.f32 1.0, %v1302
      %v1304 = vrcp.pop %v1126
      %v1305 = vmul.f32 %v1126, %v1304
      %v1306 = vsub.f32 1.0, %v1305
      %v1307 = vmul.f32 %v1304, %v1306
      %v1308 = vadd.f32 %v1304, %v1307
      %vm1309 = vweird.f32 %v1126
      %vm1310 = vweird.f32 %v1304
      %vm1311 = vmor %vm1309, %vm1310
      %v1312 = vsel %vm1311, %v1304, %v1308
      %v1313 = vand.u32 2147483647, %v1126
      %vm1314 = vcmp.eq.f32.partialorder %v1313, 8.507059e+37
      %v1315 = vand.u32 %v1126, 2147483648
      %v1316 = vor.u32 1.1754944e-38, %v1315
      %v1317 = vsel %vm1314, %v1316, %v1312
      %v1318 = vmul.f32 1.0, %v1317
      %v1319 = vrcp.pop %v1129
      %v1320 = vmul.f32 %v1129, %v1319
      %v1321 = vsub.f32 1.0, %v1320
      %v1322 = vmul.f32 %v1319, %v1321
      %v1323 = vadd.f32 %v1319, %v1322
      %vm1324 = vweird.f32 %v1129
      %vm1325 = vweird.f32 %v1319
      %vm1326 = vmor %vm1324, %vm1325
      %v1327 = vsel %vm1326, %v1319, %v1323
      %v1328 = vand.u32 2147483647, %v1129
      %vm1329 = vcmp.eq.f32.partialorder %v1328, 8.507059e+37
      %v1330 = vand.u32 %v1129, 2147483648
      %v1331 = vor.u32 1.1754944e-38, %v1330
      %v1332 = vsel %vm1329, %v1331, %v1327
      %v1333 = vmul.f32 1.0, %v1332
      %v1334 = vrcp.pop %v1132
      %v1335 = vmul.f32 %v1132, %v1334
      %v1336 = vsub.f32 1.0, %v1335
      %v1337 = vmul.f32 %v1334, %v1336
      %v1338 = vadd.f32 %v1334, %v1337
      %vm1339 = vweird.f32 %v1132
      %vm1340 = vweird.f32 %v1334
      %vm1341 = vmor %vm1339, %vm1340
      %v1342 = vsel %vm1341, %v1334, %v1338
      %v1343 = vand.u32 2147483647, %v1132
      %vm1344 = vcmp.eq.f32.partialorder %v1343, 8.507059e+37
      %v1345 = vand.u32 %v1132, 2147483648
      %v1346 = vor.u32 1.1754944e-38, %v1345
      %v1347 = vsel %vm1344, %v1346, %v1342
      %v1348 = vmul.f32 1.0, %v1347
      %v1349 = vrcp.pop %v1135
      %v1350 = vmul.f32 %v1135, %v1349
      %v1351 = vsub.f32 1.0, %v1350
      %v1352 = vmul.f32 %v1349, %v1351
      %v1353 = vadd.f32 %v1349, %v1352
      %vm1354 = vweird.f32 %v1135
      %vm1355 = vweird.f32 %v1349
      %vm1356 = vmor %vm1354, %vm1355
      %v1357 = vsel %vm1356, %v1349, %v1353
      %v1358 = vand.u32 2147483647, %v1135
      %vm1359 = vcmp.eq.f32.partialorder %v1358, 8.507059e+37
      %v1360 = vand.u32 %v1135, 2147483648
      %v1361 = vor.u32 1.1754944e-38, %v1360
      %v1362 = vsel %vm1359, %v1361, %v1357
      %v1363 = vmul.f32 1.0, %v1362
      %v1364 = vrcp.pop %v1138
      %v1365 = vmul.f32 %v1138, %v1364
      %v1366 = vsub.f32 1.0, %v1365
      %v1367 = vmul.f32 %v1364, %v1366
      %v1368 = vadd.f32 %v1364, %v1367
      %vm1369 = vweird.f32 %v1138
      %vm1370 = vweird.f32 %v1364
      %vm1371 = vmor %vm1369, %vm1370
      %v1372 = vsel %vm1371, %v1364, %v1368
      %v1373 = vand.u32 2147483647, %v1138
      %vm1374 = vcmp.eq.f32.partialorder %v1373, 8.507059e+37
      %v1375 = vand.u32 %v1138, 2147483648
      %v1376 = vor.u32 1.1754944e-38, %v1375
      %v1377 = vsel %vm1374, %v1376, %v1372
      %v1378 = vmul.f32 1.0, %v1377
      %v1379 = vrcp.pop %v1141
      %v1380 = vmul.f32 %v1141, %v1379
      %v1381 = vsub.f32 1.0, %v1380
      %v1382 = vmul.f32 %v1379, %v1381
      %v1383 = vadd.f32 %v1379, %v1382
      %vm1384 = vweird.f32 %v1141
      %vm1385 = vweird.f32 %v1379
      %vm1386 = vmor %vm1384, %vm1385
      %v1387 = vsel %vm1386, %v1379, %v1383
      %v1388 = vand.u32 2147483647, %v1141
      %vm1389 = vcmp.eq.f32.partialorder %v1388, 8.507059e+37
      %v1390 = vand.u32 %v1141, 2147483648
      %v1391 = vor.u32 1.1754944e-38, %v1390
      %v1392 = vsel %vm1389, %v1391, %v1387
      %v1393 = vmul.f32 1.0, %v1392
      %v1394 = vrcp.pop %v1144
      %v1395 = vmul.f32 %v1144, %v1394
      %v1396 = vsub.f32 1.0, %v1395
      %v1397 = vmul.f32 %v1394, %v1396
      %v1398 = vadd.f32 %v1394, %v1397
      %vm1399 = vweird.f32 %v1144
      %vm1400 = vweird.f32 %v1394
      %vm1401 = vmor %vm1399, %vm1400
      %v1402 = vsel %vm1401, %v1394, %v1398
      %v1403 = vand.u32 2147483647, %v1144
      %vm1404 = vcmp.eq.f32.partialorder %v1403, 8.507059e+37
      %v1405 = vand.u32 %v1144, 2147483648
      %v1406 = vor.u32 1.1754944e-38, %v1405
      %v1407 = vsel %vm1404, %v1406, %v1402
      %v1408 = vmul.f32 1.0, %v1407
      %v1409 = vrcp.pop %v1147
      %v1410 = vmul.f32 %v1147, %v1409
      %v1411 = vsub.f32 1.0, %v1410
      %v1412 = vmul.f32 %v1409, %v1411
      %v1413 = vadd.f32 %v1409, %v1412
      %vm1414 = vweird.f32 %v1147
      %vm1415 = vweird.f32 %v1409
      %vm1416 = vmor %vm1414, %vm1415
      %v1417 = vsel %vm1416, %v1409, %v1413
      %v1418 = vand.u32 2147483647, %v1147
      %vm1419 = vcmp.eq.f32.partialorder %v1418, 8.507059e+37
      %v1420 = vand.u32 %v1147, 2147483648
      %v1421 = vor.u32 1.1754944e-38, %v1420
      %v1422 = vsel %vm1419, %v1421, %v1417
      %v1423 = vmul.f32 1.0, %v1422
      %v1424 = vrcp.pop %v1150
      %v1425 = vmul.f32 %v1150, %v1424
      %v1426 = vsub.f32 1.0, %v1425
      %v1427 = vmul.f32 %v1424, %v1426
      %v1428 = vadd.f32 %v1424, %v1427
      %vm1429 = vweird.f32 %v1150
      %vm1430 = vweird.f32 %v1424
      %vm1431 = vmor %vm1429, %vm1430
      %v1432 = vsel %vm1431, %v1424, %v1428
      %v1433 = vand.u32 2147483647, %v1150
      %vm1434 = vcmp.eq.f32.partialorder %v1433, 8.507059e+37
      %v1435 = vand.u32 %v1150, 2147483648
      %v1436 = vor.u32 1.1754944e-38, %v1435
      %v1437 = vsel %vm1434, %v1436, %v1432
      %v1438 = vmul.f32 1.0, %v1437
      %v1439 = vrcp.pop %v1153
      %v1440 = vmul.f32 %v1153, %v1439
      %v1441 = vsub.f32 1.0, %v1440
      %v1442 = vmul.f32 %v1439, %v1441
      %v1443 = vadd.f32 %v1439, %v1442
      %vm1444 = vweird.f32 %v1153
      %vm1445 = vweird.f32 %v1439
      %vm1446 = vmor %vm1444, %vm1445
      %v1447 = vsel %vm1446, %v1439, %v1443
      %v1448 = vand.u32 2147483647, %v1153
      %vm1449 = vcmp.eq.f32.partialorder %v1448, 8.507059e+37
      %v1450 = vand.u32 %v1153, 2147483648
      %v1451 = vor.u32 1.1754944e-38, %v1450
      %v1452 = vsel %vm1449, %v1451, %v1447
      %v1453 = vmul.f32 1.0, %v1452
      %v1454 = vrcp.pop %v1156
      %v1455 = vmul.f32 %v1156, %v1454
      %v1456 = vsub.f32 1.0, %v1455
      %v1457 = vmul.f32 %v1454, %v1456
      %v1458 = vadd.f32 %v1454, %v1457
      %vm1459 = vweird.f32 %v1156
      %vm1460 = vweird.f32 %v1454
      %vm1461 = vmor %vm1459, %vm1460
      %v1462 = vsel %vm1461, %v1454, %v1458
      %v1463 = vand.u32 2147483647, %v1156
      %vm1464 = vcmp.eq.f32.partialorder %v1463, 8.507059e+37
      %v1465 = vand.u32 %v1156, 2147483648
      %v1466 = vor.u32 1.1754944e-38, %v1465
      %v1467 = vsel %vm1464, %v1466, %v1462
      %v1468 = vmul.f32 1.0, %v1467
      %v1469 = vrcp.pop %v1159
      %v1470 = vmul.f32 %v1159, %v1469
      %v1471 = vsub.f32 1.0, %v1470
      %v1472 = vmul.f32 %v1469, %v1471
      %v1473 = vadd.f32 %v1469, %v1472
      %vm1474 = vweird.f32 %v1159
      %vm1475 = vweird.f32 %v1469
      %vm1476 = vmor %vm1474, %vm1475
      %v1477 = vsel %vm1476, %v1469, %v1473
      %v1478 = vand.u32 2147483647, %v1159
      %vm1479 = vcmp.eq.f32.partialorder %v1478, 8.507059e+37
      %v1480 = vand.u32 %v1159, 2147483648
      %v1481 = vor.u32 1.1754944e-38, %v1480
      %v1482 = vsel %vm1479, %v1481, %v1477
      %v1483 = vmul.f32 1.0, %v1482
      %v1484 = vrcp.pop %v1162
      %v1485 = vmul.f32 %v1162, %v1484
      %v1486 = vsub.f32 1.0, %v1485
      %v1487 = vmul.f32 %v1484, %v1486
      %v1488 = vadd.f32 %v1484, %v1487
      %vm1489 = vweird.f32 %v1162
      %vm1490 = vweird.f32 %v1484
      %vm1491 = vmor %vm1489, %vm1490
      %v1492 = vsel %vm1491, %v1484, %v1488
      %v1493 = vand.u32 2147483647, %v1162
      %vm1494 = vcmp.eq.f32.partialorder %v1493, 8.507059e+37
      %v1495 = vand.u32 %v1162, 2147483648
      %v1496 = vor.u32 1.1754944e-38, %v1495
      %v1497 = vsel %vm1494, %v1496, %v1492
      %v1498 = vmul.f32 1.0, %v1497
      %v1499 = vrcp.pop %v1165
      %v1500 = vmul.f32 %v1165, %v1499
      %v1501 = vsub.f32 1.0, %v1500
      %v1502 = vmul.f32 %v1499, %v1501
      %v1503 = vadd.f32 %v1499, %v1502
      %vm1504 = vweird.f32 %v1165
      %vm1505 = vweird.f32 %v1499
      %vm1506 = vmor %vm1504, %vm1505
      %v1507 = vsel %vm1506, %v1499, %v1503
      %v1508 = vand.u32 2147483647, %v1165
      %vm1509 = vcmp.eq.f32.partialorder %v1508, 8.507059e+37
      %v1510 = vand.u32 %v1165, 2147483648
      %v1511 = vor.u32 1.1754944e-38, %v1510
      %v1512 = vsel %vm1509, %v1511, %v1507
      %v1513 = vmul.f32 1.0, %v1512
      %v1514 = vrcp.pop %v1168
      %v1515 = vmul.f32 %v1168, %v1514
      %v1516 = vsub.f32 1.0, %v1515
      %v1517 = vmul.f32 %v1514, %v1516
      %v1518 = vadd.f32 %v1514, %v1517
      %vm1519 = vweird.f32 %v1168
      %vm1520 = vweird.f32 %v1514
      %vm1521 = vmor %vm1519, %vm1520
      %v1522 = vsel %vm1521, %v1514, %v1518
      %v1523 = vand.u32 2147483647, %v1168
      %vm1524 = vcmp.eq.f32.partialorder %v1523, 8.507059e+37
      %v1525 = vand.u32 %v1168, 2147483648
      %v1526 = vor.u32 1.1754944e-38, %v1525
      %v1527 = vsel %vm1524, %v1526, %v1522
      %v1528 = vmul.f32 1.0, %v1527
      %v1529 = vrcp.pop %v1171
      %v1530 = vmul.f32 %v1171, %v1529
      %v1531 = vsub.f32 1.0, %v1530
      %v1532 = vmul.f32 %v1529, %v1531
      %v1533 = vadd.f32 %v1529, %v1532
      %vm1534 = vweird.f32 %v1171
      %vm1535 = vweird.f32 %v1529
      %vm1536 = vmor %vm1534, %vm1535
      %v1537 = vsel %vm1536, %v1529, %v1533
      %v1538 = vand.u32 2147483647, %v1171
      %vm1539 = vcmp.eq.f32.partialorder %v1538, 8.507059e+37
      %v1540 = vand.u32 %v1171, 2147483648
      %v1541 = vor.u32 1.1754944e-38, %v1540
      %v1542 = vsel %vm1539, %v1541, %v1537
      %v1543 = vmul.f32 1.0, %v1542
      %v1544 = vrcp.pop %v1174
      %v1545 = vmul.f32 %v1174, %v1544
      %v1546 = vsub.f32 1.0, %v1545
      %v1547 = vmul.f32 %v1544, %v1546
      %v1548 = vadd.f32 %v1544, %v1547
      %vm1549 = vweird.f32 %v1174
      %vm1550 = vweird.f32 %v1544
      %vm1551 = vmor %vm1549, %vm1550
      %v1552 = vsel %vm1551, %v1544, %v1548
      %v1553 = vand.u32 2147483647, %v1174
      %vm1554 = vcmp.eq.f32.partialorder %v1553, 8.507059e+37
      %v1555 = vand.u32 %v1174, 2147483648
      %v1556 = vor.u32 1.1754944e-38, %v1555
      %v1557 = vsel %vm1554, %v1556, %v1552
      %v1558 = vmul.f32 1.0, %v1557
      %v1559 = vrcp.pop %v1177
      %v1560 = vmul.f32 %v1177, %v1559
      %v1561 = vsub.f32 1.0, %v1560
      %v1562 = vmul.f32 %v1559, %v1561
      %v1563 = vadd.f32 %v1559, %v1562
      %vm1564 = vweird.f32 %v1177
      %vm1565 = vweird.f32 %v1559
      %vm1566 = vmor %vm1564, %vm1565
      %v1567 = vsel %vm1566, %v1559, %v1563
      %v1568 = vand.u32 2147483647, %v1177
      %vm1569 = vcmp.eq.f32.partialorder %v1568, 8.507059e+37
      %v1570 = vand.u32 %v1177, 2147483648
      %v1571 = vor.u32 1.1754944e-38, %v1570
      %v1572 = vsel %vm1569, %v1571, %v1567
      %v1573 = vmul.f32 1.0, %v1572
      %v1574 = vrcp.pop %v1180
      %v1575 = vmul.f32 %v1180, %v1574
      %v1576 = vsub.f32 1.0, %v1575
      %v1577 = vmul.f32 %v1574, %v1576
      %v1578 = vadd.f32 %v1574, %v1577
      %vm1579 = vweird.f32 %v1180
      %vm1580 = vweird.f32 %v1574
      %vm1581 = vmor %vm1579, %vm1580
      %v1582 = vsel %vm1581, %v1574, %v1578
      %v1583 = vand.u32 2147483647, %v1180
      %vm1584 = vcmp.eq.f32.partialorder %v1583, 8.507059e+37
      %v1585 = vand.u32 %v1180, 2147483648
      %v1586 = vor.u32 1.1754944e-38, %v1585
      %v1587 = vsel %vm1584, %v1586, %v1582
      %v1588 = vmul.f32 1.0, %v1587
      %v1589 = vrcp.pop %v1183
      %v1590 = vmul.f32 %v1183, %v1589
      %v1591 = vsub.f32 1.0, %v1590
      %v1592 = vmul.f32 %v1589, %v1591
      %v1593 = vadd.f32 %v1589, %v1592
      %vm1594 = vweird.f32 %v1183
      %vm1595 = vweird.f32 %v1589
      %vm1596 = vmor %vm1594, %vm1595
      %v1597 = vsel %vm1596, %v1589, %v1593
      %v1598 = vand.u32 2147483647, %v1183
      %vm1599 = vcmp.eq.f32.partialorder %v1598, 8.507059e+37
      %v1600 = vand.u32 %v1183, 2147483648
      %v1601 = vor.u32 1.1754944e-38, %v1600
      %v1602 = vsel %vm1599, %v1601, %v1597
      %v1603 = vmul.f32 1.0, %v1602
      %v1604 = vrcp.pop %v1186
      %v1605 = vmul.f32 %v1186, %v1604
      %v1606 = vsub.f32 1.0, %v1605
      %v1607 = vmul.f32 %v1604, %v1606
      %v1608 = vadd.f32 %v1604, %v1607
      %vm1609 = vweird.f32 %v1186
      %vm1610 = vweird.f32 %v1604
      %vm1611 = vmor %vm1609, %vm1610
      %v1612 = vsel %vm1611, %v1604, %v1608
      %v1613 = vand.u32 2147483647, %v1186
      %vm1614 = vcmp.eq.f32.partialorder %v1613, 8.507059e+37
      %v1615 = vand.u32 %v1186, 2147483648
      %v1616 = vor.u32 1.1754944e-38, %v1615
      %v1617 = vsel %vm1614, %v1616, %v1612
      %v1618 = vmul.f32 1.0, %v1617
      %v1619 = vrcp.pop %v1189
      %v1620 = vmul.f32 %v1189, %v1619
      %v1621 = vsub.f32 1.0, %v1620
      %v1622 = vmul.f32 %v1619, %v1621
      %v1623 = vadd.f32 %v1619, %v1622
      %vm1624 = vweird.f32 %v1189
      %vm1625 = vweird.f32 %v1619
      %vm1626 = vmor %vm1624, %vm1625
      %v1627 = vsel %vm1626, %v1619, %v1623
      %v1628 = vand.u32 2147483647, %v1189
      %vm1629 = vcmp.eq.f32.partialorder %v1628, 8.507059e+37
      %v1630 = vand.u32 %v1189, 2147483648
      %v1631 = vor.u32 1.1754944e-38, %v1630
      %v1632 = vsel %vm1629, %v1631, %v1627
      %v1633 = vmul.f32 1.0, %v1632
      %v1634 = vrcp.pop %v1192
      %v1635 = vmul.f32 %v1192, %v1634
      %v1636 = vsub.f32 1.0, %v1635
      %v1637 = vmul.f32 %v1634, %v1636
      %v1638 = vadd.f32 %v1634, %v1637
      %vm1639 = vweird.f32 %v1192
      %vm1640 = vweird.f32 %v1634
      %vm1641 = vmor %vm1639, %vm1640
      %v1642 = vsel %vm1641, %v1634, %v1638
      %v1643 = vand.u32 2147483647, %v1192
      %vm1644 = vcmp.eq.f32.partialorder %v1643, 8.507059e+37
      %v1645 = vand.u32 %v1192, 2147483648
      %v1646 = vor.u32 1.1754944e-38, %v1645
      %v1647 = vsel %vm1644, %v1646, %v1642
      %v1648 = vmul.f32 1.0, %v1647
      %v1649 = vrcp.pop %v1195
      %v1650 = vmul.f32 %v1195, %v1649
      %v1651 = vsub.f32 1.0, %v1650
      %v1652 = vmul.f32 %v1649, %v1651
      %v1653 = vadd.f32 %v1649, %v1652
      %vm1654 = vweird.f32 %v1195
      %vm1655 = vweird.f32 %v1649
      %vm1656 = vmor %vm1654, %vm1655
      %v1657 = vsel %vm1656, %v1649, %v1653
      %v1658 = vand.u32 2147483647, %v1195
      %vm1659 = vcmp.eq.f32.partialorder %v1658, 8.507059e+37
      %v1660 = vand.u32 %v1195, 2147483648
      %v1661 = vor.u32 1.1754944e-38, %v1660
      %v1662 = vsel %vm1659, %v1661, %v1657
      %v1663 = vmul.f32 1.0, %v1662
      %v1664 = vrcp.pop %v1198
      %v1665 = vmul.f32 %v1198, %v1664
      %v1666 = vsub.f32 1.0, %v1665
      %v1667 = vmul.f32 %v1664, %v1666
      %v1668 = vadd.f32 %v1664, %v1667
      %vm1669 = vweird.f32 %v1198
      %vm1670 = vweird.f32 %v1664
      %vm1671 = vmor %vm1669, %vm1670
      %v1672 = vsel %vm1671, %v1664, %v1668
      %v1673 = vand.u32 2147483647, %v1198
      %vm1674 = vcmp.eq.f32.partialorder %v1673, 8.507059e+37
      %v1675 = vand.u32 %v1198, 2147483648
      %v1676 = vor.u32 1.1754944e-38, %v1675
      %v1677 = vsel %vm1674, %v1676, %v1672
      %v1678 = vmul.f32 1.0, %v1677
      %v1679 = vmul.f32 %v1040, %v1213
      %v1680 = vmul.f32 %v1042, %v1228
      %v1681 = vmul.f32 %v1044, %v1243
      %v1682 = vmul.f32 %v1046, %v1258
      %v1683 = vmul.f32 %v1048, %v1273
      %v1684 = vmul.f32 %v1050, %v1288
      %v1685 = vmul.f32 %v1052, %v1303
      %v1686 = vmul.f32 %v1054, %v1318
      %v1687 = vmul.f32 %v1056, %v1333
      %v1688 = vmul.f32 %v1058, %v1348
      %v1689 = vmul.f32 %v1060, %v1363
      %v1690 = vmul.f32 %v1062, %v1378
      %v1691 = vmul.f32 %v1064, %v1393
      %v1692 = vmul.f32 %v1066, %v1408
      %v1693 = vmul.f32 %v1068, %v1423
      %v1694 = vmul.f32 %v1070, %v1438
      %v1695 = vmul.f32 %v1072, %v1453
      %v1696 = vmul.f32 %v1074, %v1468
      %v1697 = vmul.f32 %v1076, %v1483
      %v1698 = vmul.f32 %v1078, %v1498
      %v1699 = vmul.f32 %v1080, %v1513
      %v1700 = vmul.f32 %v1082, %v1528
      %v1701 = vmul.f32 %v1084, %v1543
      %v1702 = vmul.f32 %v1086, %v1558
      %v1703 = vmul.f32 %v1088, %v1573
      %v1704 = vmul.f32 %v1090, %v1588
      %v1705 = vmul.f32 %v1092, %v1603
      %v1706 = vmul.f32 %v1094, %v1618
      %v1707 = vmul.f32 %v1096, %v1633
      %v1708 = vmul.f32 %v1098, %v1648
      %v1709 = vmul.f32 %v1100, %v1663
      %v1710 = vmul.f32 %v1102, %v1678
      %v1711 = vpack.c.bf16 %v1679, %v1679
      %v1712 = vpack.c.bf16 %v1680, %v1680
      %v1713 = vpack.c.bf16 %v1681, %v1681
      %v1714 = vpack.c.bf16 %v1682, %v1682
      %v1715 = vpack.c.bf16 %v1683, %v1683
      %v1716 = vpack.c.bf16 %v1684, %v1684
      %v1717 = vpack.c.bf16 %v1685, %v1685
      %v1718 = vpack.c.bf16 %v1686, %v1686
      %v1719 = vpack.c.bf16 %v1687, %v1687
      %v1720 = vpack.c.bf16 %v1688, %v1688
      %v1721 = vpack.c.bf16 %v1689, %v1689
      %v1722 = vpack.c.bf16 %v1690, %v1690
      %v1723 = vpack.c.bf16 %v1691, %v1691
      %v1724 = vpack.c.bf16 %v1692, %v1692
      %v1725 = vpack.c.bf16 %v1693, %v1693
      %v1726 = vpack.c.bf16 %v1694, %v1694
      %v1727 = vpack.c.bf16 %v1695, %v1695
      %v1728 = vpack.c.bf16 %v1696, %v1696
      %v1729 = vpack.c.bf16 %v1697, %v1697
      %v1730 = vpack.c.bf16 %v1698, %v1698
      %v1731 = vpack.c.bf16 %v1699, %v1699
      %v1732 = vpack.c.bf16 %v1700, %v1700
      %v1733 = vpack.c.bf16 %v1701, %v1701
      %v1734 = vpack.c.bf16 %v1702, %v1702
      %v1735 = vpack.c.bf16 %v1703, %v1703
      %v1736 = vpack.c.bf16 %v1704, %v1704
      %v1737 = vpack.c.bf16 %v1705, %v1705
      %v1738 = vpack.c.bf16 %v1706, %v1706
      %v1739 = vpack.c.bf16 %v1707, %v1707
      %v1740 = vpack.c.bf16 %v1708, %v1708
      %v1741 = vpack.c.bf16 %v1709, %v1709
      %v1742 = vpack.c.bf16 %v1710, %v1710
      %v1745 = vunpack.c.l.b16 %v1711
      %v1746 = vunpack.c.l.b16 %v1712
      %v1747 = vpack.c.b16 %v1746, %v1745
      %1748 = vrot.lane.b32.xlu0 %v481, 64
      %v1749 = vpop.permute.xlu0 %1748
      %v1752 = vsel %vm910, %v1747, 0
      %1754 = vmatpush.bf16.msra.mxu0 0
      %1755 = vmatpush.bf16.msra.mxu0 0
      %1756 = vmatpush.bf16.msra.mxu0 0
      %1757 = vmatpush.bf16.msra.mxu0 0
      %1758 = vmatpush.bf16.msra.mxu0 0
      %1759 = vmatpush.bf16.msra.mxu0 0
      %1760 = vmatpush.bf16.msra.mxu0 0
      %1761 = vmatpush.bf16.msra.mxu0 %v1749
      %1762 = vmatmul.bf16.gmra.mxu0 %v1752
      %v1763 = vpop.f32.mrf.mxu0
      %v1764 = vadd.f32 0.0, %v1763
      %v1765 = vpop.f32.mrf.mxu0
      %v1766 = vadd.f32 0.0, %v1765
      %1767 = vdwg.mxu0
      %v1770 = vunpack.c.l.b16 %v1713
      %v1771 = vunpack.c.l.b16 %v1714
      %v1772 = vpack.c.b16 %v1771, %v1770
      %1773 = vrot.lane.b32.xlu0 %v509, 64
      %v1774 = vpop.permute.xlu0 %1773
      %v1777 = vsel %vm910, %v1772, 0
      %1779 = vmatpush.bf16.msra.mxu0 0
      %1780 = vmatpush.bf16.msra.mxu0 0
      %1781 = vmatpush.bf16.msra.mxu0 0
      %1782 = vmatpush.bf16.msra.mxu0 0
      %1783 = vmatpush.bf16.msra.mxu0 0
      %1784 = vmatpush.bf16.msra.mxu0 0
      %1785 = vmatpush.bf16.msra.mxu0 0
      %1786 = vmatpush.bf16.msra.mxu0 %v1774
      %1787 = vmatmul.bf16.gmra.mxu0 %v1777
      %v1788 = vpop.f32.mrf.mxu0
      %v1789 = vadd.f32 0.0, %v1788
      %v1790 = vpop.f32.mrf.mxu0
      %v1791 = vadd.f32 0.0, %v1790
      %1792 = vdwg.mxu0
      %v1795 = vunpack.c.l.b16 %v1715
      %v1796 = vunpack.c.l.b16 %v1716
      %v1797 = vpack.c.b16 %v1796, %v1795
      %1798 = vrot.lane.b32.xlu0 %v536, 64
      %v1799 = vpop.permute.xlu0 %1798
      %v1802 = vsel %vm910, %v1797, 0
      %1804 = vmatpush.bf16.msra.mxu0 0
      %1805 = vmatpush.bf16.msra.mxu0 0
      %1806 = vmatpush.bf16.msra.mxu0 0
      %1807 = vmatpush.bf16.msra.mxu0 0
      %1808 = vmatpush.bf16.msra.mxu0 0
      %1809 = vmatpush.bf16.msra.mxu0 0
      %1810 = vmatpush.bf16.msra.mxu0 0
      %1811 = vmatpush.bf16.msra.mxu0 %v1799
      %1812 = vmatmul.bf16.gmra.mxu0 %v1802
      %v1813 = vpop.f32.mrf.mxu0
      %v1814 = vadd.f32 0.0, %v1813
      %v1815 = vpop.f32.mrf.mxu0
      %v1816 = vadd.f32 0.0, %v1815
      %1817 = vdwg.mxu0
      %v1820 = vunpack.c.l.b16 %v1717
      %v1821 = vunpack.c.l.b16 %v1718
      %v1822 = vpack.c.b16 %v1821, %v1820
      %1823 = vrot.lane.b32.xlu0 %v563, 64
      %v1824 = vpop.permute.xlu0 %1823
      %v1827 = vsel %vm910, %v1822, 0
      %1829 = vmatpush.bf16.msra.mxu0 0
      %1830 = vmatpush.bf16.msra.mxu0 0
      %1831 = vmatpush.bf16.msra.mxu0 0
      %1832 = vmatpush.bf16.msra.mxu0 0
      %1833 = vmatpush.bf16.msra.mxu0 0
      %1834 = vmatpush.bf16.msra.mxu0 0
      %1835 = vmatpush.bf16.msra.mxu0 0
      %1836 = vmatpush.bf16.msra.mxu0 %v1824
      %1837 = vmatmul.bf16.gmra.mxu0 %v1827
      %v1838 = vpop.f32.mrf.mxu0
      %v1839 = vadd.f32 0.0, %v1838
      %v1840 = vpop.f32.mrf.mxu0
      %v1841 = vadd.f32 0.0, %v1840
      %1842 = vdwg.mxu0
      %v1845 = vunpack.c.l.b16 %v1719
      %v1846 = vunpack.c.l.b16 %v1720
      %v1847 = vpack.c.b16 %v1846, %v1845
      %1848 = vrot.lane.b32.xlu0 %v590, 64
      %v1849 = vpop.permute.xlu0 %1848
      %v1852 = vsel %vm910, %v1847, 0
      %1854 = vmatpush.bf16.msra.mxu0 0
      %1855 = vmatpush.bf16.msra.mxu0 0
      %1856 = vmatpush.bf16.msra.mxu0 0
      %1857 = vmatpush.bf16.msra.mxu0 0
      %1858 = vmatpush.bf16.msra.mxu0 0
      %1859 = vmatpush.bf16.msra.mxu0 0
      %1860 = vmatpush.bf16.msra.mxu0 0
      %1861 = vmatpush.bf16.msra.mxu0 %v1849
      %1862 = vmatmul.bf16.gmra.mxu0 %v1852
      %v1863 = vpop.f32.mrf.mxu0
      %v1864 = vadd.f32 0.0, %v1863
      %v1865 = vpop.f32.mrf.mxu0
      %v1866 = vadd.f32 0.0, %v1865
      %1867 = vdwg.mxu0
      %v1870 = vunpack.c.l.b16 %v1721
      %v1871 = vunpack.c.l.b16 %v1722
      %v1872 = vpack.c.b16 %v1871, %v1870
      %1873 = vrot.lane.b32.xlu0 %v617, 64
      %v1874 = vpop.permute.xlu0 %1873
      %v1877 = vsel %vm910, %v1872, 0
      %1879 = vmatpush.bf16.msra.mxu0 0
      %1880 = vmatpush.bf16.msra.mxu0 0
      %1881 = vmatpush.bf16.msra.mxu0 0
      %1882 = vmatpush.bf16.msra.mxu0 0
      %1883 = vmatpush.bf16.msra.mxu0 0
      %1884 = vmatpush.bf16.msra.mxu0 0
      %1885 = vmatpush.bf16.msra.mxu0 0
      %1886 = vmatpush.bf16.msra.mxu0 %v1874
      %1887 = vmatmul.bf16.gmra.mxu0 %v1877
      %v1888 = vpop.f32.mrf.mxu0
      %v1889 = vadd.f32 0.0, %v1888
      %v1890 = vpop.f32.mrf.mxu0
      %v1891 = vadd.f32 0.0, %v1890
      %1892 = vdwg.mxu0
      %v1895 = vunpack.c.l.b16 %v1723
      %v1896 = vunpack.c.l.b16 %v1724
      %v1897 = vpack.c.b16 %v1896, %v1895
      %1898 = vrot.lane.b32.xlu0 %v644, 64
      %v1899 = vpop.permute.xlu0 %1898
      %v1902 = vsel %vm910, %v1897, 0
      %1904 = vmatpush.bf16.msra.mxu0 0
      %1905 = vmatpush.bf16.msra.mxu0 0
      %1906 = vmatpush.bf16.msra.mxu0 0
      %1907 = vmatpush.bf16.msra.mxu0 0
      %1908 = vmatpush.bf16.msra.mxu0 0
      %1909 = vmatpush.bf16.msra.mxu0 0
      %1910 = vmatpush.bf16.msra.mxu0 0
      %1911 = vmatpush.bf16.msra.mxu0 %v1899
      %1912 = vmatmul.bf16.gmra.mxu0 %v1902
      %v1913 = vpop.f32.mrf.mxu0
      %v1914 = vadd.f32 0.0, %v1913
      %v1915 = vpop.f32.mrf.mxu0
      %v1916 = vadd.f32 0.0, %v1915
      %1917 = vdwg.mxu0
      %v1920 = vunpack.c.l.b16 %v1725
      %v1921 = vunpack.c.l.b16 %v1726
      %v1922 = vpack.c.b16 %v1921, %v1920
      %1923 = vrot.lane.b32.xlu0 %v671, 64
      %v1924 = vpop.permute.xlu0 %1923
      %v1927 = vsel %vm910, %v1922, 0
      %1929 = vmatpush.bf16.msra.mxu0 0
      %1930 = vmatpush.bf16.msra.mxu0 0
      %1931 = vmatpush.bf16.msra.mxu0 0
      %1932 = vmatpush.bf16.msra.mxu0 0
      %1933 = vmatpush.bf16.msra.mxu0 0
      %1934 = vmatpush.bf16.msra.mxu0 0
      %1935 = vmatpush.bf16.msra.mxu0 0
      %1936 = vmatpush.bf16.msra.mxu0 %v1924
      %1937 = vmatmul.bf16.gmra.mxu0 %v1927
      %v1938 = vpop.f32.mrf.mxu0
      %v1939 = vadd.f32 0.0, %v1938
      %v1940 = vpop.f32.mrf.mxu0
      %v1941 = vadd.f32 0.0, %v1940
      %1942 = vdwg.mxu0
      %v1945 = vunpack.c.l.b16 %v1727
      %v1946 = vunpack.c.l.b16 %v1728
      %v1947 = vpack.c.b16 %v1946, %v1945
      %1948 = vrot.lane.b32.xlu0 %v698, 64
      %v1949 = vpop.permute.xlu0 %1948
      %v1952 = vsel %vm910, %v1947, 0
      %1954 = vmatpush.bf16.msra.mxu0 0
      %1955 = vmatpush.bf16.msra.mxu0 0
      %1956 = vmatpush.bf16.msra.mxu0 0
      %1957 = vmatpush.bf16.msra.mxu0 0
      %1958 = vmatpush.bf16.msra.mxu0 0
      %1959 = vmatpush.bf16.msra.mxu0 0
      %1960 = vmatpush.bf16.msra.mxu0 0
      %1961 = vmatpush.bf16.msra.mxu0 %v1949
      %1962 = vmatmul.bf16.gmra.mxu0 %v1952
      %v1963 = vpop.f32.mrf.mxu0
      %v1964 = vadd.f32 0.0, %v1963
      %v1965 = vpop.f32.mrf.mxu0
      %v1966 = vadd.f32 0.0, %v1965
      %1967 = vdwg.mxu0
      %v1970 = vunpack.c.l.b16 %v1729
      %v1971 = vunpack.c.l.b16 %v1730
      %v1972 = vpack.c.b16 %v1971, %v1970
      %1973 = vrot.lane.b32.xlu0 %v725, 64
      %v1974 = vpop.permute.xlu0 %1973
      %v1977 = vsel %vm910, %v1972, 0
      %1979 = vmatpush.bf16.msra.mxu0 0
      %1980 = vmatpush.bf16.msra.mxu0 0
      %1981 = vmatpush.bf16.msra.mxu0 0
      %1982 = vmatpush.bf16.msra.mxu0 0
      %1983 = vmatpush.bf16.msra.mxu0 0
      %1984 = vmatpush.bf16.msra.mxu0 0
      %1985 = vmatpush.bf16.msra.mxu0 0
      %1986 = vmatpush.bf16.msra.mxu0 %v1974
      %1987 = vmatmul.bf16.gmra.mxu0 %v1977
      %v1988 = vpop.f32.mrf.mxu0
      %v1989 = vadd.f32 0.0, %v1988
      %v1990 = vpop.f32.mrf.mxu0
      %v1991 = vadd.f32 0.0, %v1990
      %1992 = vdwg.mxu0
      %v1995 = vunpack.c.l.b16 %v1731
      %v1996 = vunpack.c.l.b16 %v1732
      %v1997 = vpack.c.b16 %v1996, %v1995
      %1998 = vrot.lane.b32.xlu0 %v752, 64
      %v1999 = vpop.permute.xlu0 %1998
      %v2002 = vsel %vm910, %v1997, 0
      %2004 = vmatpush.bf16.msra.mxu0 0
      %2005 = vmatpush.bf16.msra.mxu0 0
      %2006 = vmatpush.bf16.msra.mxu0 0
      %2007 = vmatpush.bf16.msra.mxu0 0
      %2008 = vmatpush.bf16.msra.mxu0 0
      %2009 = vmatpush.bf16.msra.mxu0 0
      %2010 = vmatpush.bf16.msra.mxu0 0
      %2011 = vmatpush.bf16.msra.mxu0 %v1999
      %2012 = vmatmul.bf16.gmra.mxu0 %v2002
      %v2013 = vpop.f32.mrf.mxu0
      %v2014 = vadd.f32 0.0, %v2013
      %v2015 = vpop.f32.mrf.mxu0
      %v2016 = vadd.f32 0.0, %v2015
      %2017 = vdwg.mxu0
      %v2020 = vunpack.c.l.b16 %v1733
      %v2021 = vunpack.c.l.b16 %v1734
      %v2022 = vpack.c.b16 %v2021, %v2020
      %2023 = vrot.lane.b32.xlu0 %v779, 64
      %v2024 = vpop.permute.xlu0 %2023
      %v2027 = vsel %vm910, %v2022, 0
      %2029 = vmatpush.bf16.msra.mxu0 0
      %2030 = vmatpush.bf16.msra.mxu0 0
      %2031 = vmatpush.bf16.msra.mxu0 0
      %2032 = vmatpush.bf16.msra.mxu0 0
      %2033 = vmatpush.bf16.msra.mxu0 0
      %2034 = vmatpush.bf16.msra.mxu0 0
      %2035 = vmatpush.bf16.msra.mxu0 0
      %2036 = vmatpush.bf16.msra.mxu0 %v2024
      %2037 = vmatmul.bf16.gmra.mxu0 %v2027
      %v2038 = vpop.f32.mrf.mxu0
      %v2039 = vadd.f32 0.0, %v2038
      %v2040 = vpop.f32.mrf.mxu0
      %v2041 = vadd.f32 0.0, %v2040
      %2042 = vdwg.mxu0
      %v2045 = vunpack.c.l.b16 %v1735
      %v2046 = vunpack.c.l.b16 %v1736
      %v2047 = vpack.c.b16 %v2046, %v2045
      %2048 = vrot.lane.b32.xlu0 %v806, 64
      %v2049 = vpop.permute.xlu0 %2048
      %v2052 = vsel %vm910, %v2047, 0
      %2054 = vmatpush.bf16.msra.mxu0 0
      %2055 = vmatpush.bf16.msra.mxu0 0
      %2056 = vmatpush.bf16.msra.mxu0 0
      %2057 = vmatpush.bf16.msra.mxu0 0
      %2058 = vmatpush.bf16.msra.mxu0 0
      %2059 = vmatpush.bf16.msra.mxu0 0
      %2060 = vmatpush.bf16.msra.mxu0 0
      %2061 = vmatpush.bf16.msra.mxu0 %v2049
      %2062 = vmatmul.bf16.gmra.mxu0 %v2052
      %v2063 = vpop.f32.mrf.mxu0
      %v2064 = vadd.f32 0.0, %v2063
      %v2065 = vpop.f32.mrf.mxu0
      %v2066 = vadd.f32 0.0, %v2065
      %2067 = vdwg.mxu0
      %v2070 = vunpack.c.l.b16 %v1737
      %v2071 = vunpack.c.l.b16 %v1738
      %v2072 = vpack.c.b16 %v2071, %v2070
      %2073 = vrot.lane.b32.xlu0 %v833, 64
      %v2074 = vpop.permute.xlu0 %2073
      %v2077 = vsel %vm910, %v2072, 0
      %2079 = vmatpush.bf16.msra.mxu0 0
      %2080 = vmatpush.bf16.msra.mxu0 0
      %2081 = vmatpush.bf16.msra.mxu0 0
      %2082 = vmatpush.bf16.msra.mxu0 0
      %2083 = vmatpush.bf16.msra.mxu0 0
      %2084 = vmatpush.bf16.msra.mxu0 0
      %2085 = vmatpush.bf16.msra.mxu0 0
      %2086 = vmatpush.bf16.msra.mxu0 %v2074
      %2087 = vmatmul.bf16.gmra.mxu0 %v2077
      %v2088 = vpop.f32.mrf.mxu0
      %v2089 = vadd.f32 0.0, %v2088
      %v2090 = vpop.f32.mrf.mxu0
      %v2091 = vadd.f32 0.0, %v2090
      %2092 = vdwg.mxu0
      %v2095 = vunpack.c.l.b16 %v1739
      %v2096 = vunpack.c.l.b16 %v1740
      %v2097 = vpack.c.b16 %v2096, %v2095
      %2098 = vrot.lane.b32.xlu0 %v860, 64
      %v2099 = vpop.permute.xlu0 %2098
      %v2102 = vsel %vm910, %v2097, 0
      %2104 = vmatpush.bf16.msra.mxu0 0
      %2105 = vmatpush.bf16.msra.mxu0 0
      %2106 = vmatpush.bf16.msra.mxu0 0
      %2107 = vmatpush.bf16.msra.mxu0 0
      %2108 = vmatpush.bf16.msra.mxu0 0
      %2109 = vmatpush.bf16.msra.mxu0 0
      %2110 = vmatpush.bf16.msra.mxu0 0
      %2111 = vmatpush.bf16.msra.mxu0 %v2099
      %2112 = vmatmul.bf16.gmra.mxu0 %v2102
      %v2113 = vpop.f32.mrf.mxu0
      %v2114 = vadd.f32 0.0, %v2113
      %v2115 = vpop.f32.mrf.mxu0
      %v2116 = vadd.f32 0.0, %v2115
      %2117 = vdwg.mxu0
      %v2120 = vunpack.c.l.b16 %v1741
      %v2121 = vunpack.c.l.b16 %v1742
      %v2122 = vpack.c.b16 %v2121, %v2120
      %2123 = vrot.lane.b32.xlu0 %v887, 64
      %v2124 = vpop.permute.xlu0 %2123
      %v2127 = vsel %vm910, %v2122, 0
      %2129 = vmatpush.bf16.msra.mxu0 0
      %2130 = vmatpush.bf16.msra.mxu0 0
      %2131 = vmatpush.bf16.msra.mxu0 0
      %2132 = vmatpush.bf16.msra.mxu0 0
      %2133 = vmatpush.bf16.msra.mxu0 0
      %2134 = vmatpush.bf16.msra.mxu0 0
      %2135 = vmatpush.bf16.msra.mxu0 0
      %2136 = vmatpush.bf16.msra.mxu0 %v2124
      %2137 = vmatmul.bf16.gmra.mxu0 %v2127
      %v2138 = vpop.f32.mrf.mxu0
      %v2139 = vadd.f32 0.0, %v2138
      %v2140 = vpop.f32.mrf.mxu0
      %v2141 = vadd.f32 0.0, %v2140
      %2142 = vdwg.mxu0
      %2143 = vrot.lane.b32.xlu0 %v481, 120
      %v2144 = vpop.permute.xlu0 %2143
      %2145 = vrot.lane.b32.xlu0 %v481, 88
      %v2146 = vpop.permute.xlu0 %2145
      %v2148 = vsel %vm484, %v2144, 0
      %v2151 = vsel %vm484, %v2146, 0
      %2153 = vmatpush.bf16.xpose.msra.mxu0 0
      %2154 = vmatpush.bf16.xpose.msra.mxu0 0
      %2155 = vmatpush.bf16.xpose.msra.mxu0 0
      %2156 = vmatpush.bf16.xpose.msra.mxu0 0
      %2157 = vmatpush.bf16.xpose.msra.mxu0 0
      %2158 = vmatpush.bf16.xpose.msra.mxu0 0
      %2159 = vmatpush.bf16.xpose.msra.mxu0 0
      %2160 = vmatpush.bf16.xpose.msra.mxu0 %v2151
      %2161 = vmatmul.bf16.gmra.mxu0 %v2148
      %v2162 = vpop.f32.mrf.mxu0
      %v2163 = vadd.f32 0.0, %v2162
      %v2164 = vpop.f32.mrf.mxu0
      %v2165 = vadd.f32 0.0, %v2164
      %2166 = vdwg.mxu0
      %2167 = vrot.lane.b32.xlu0 %v509, 120
      %v2168 = vpop.permute.xlu0 %2167
      %2169 = vrot.lane.b32.xlu0 %v509, 88
      %v2170 = vpop.permute.xlu0 %2169
      %v2172 = vsel %vm484, %v2168, 0
      %v2175 = vsel %vm484, %v2170, 0
      %2177 = vmatpush.bf16.xpose.msra.mxu0 0
      %2178 = vmatpush.bf16.xpose.msra.mxu0 0
      %2179 = vmatpush.bf16.xpose.msra.mxu0 0
      %2180 = vmatpush.bf16.xpose.msra.mxu0 0
      %2181 = vmatpush.bf16.xpose.msra.mxu0 0
      %2182 = vmatpush.bf16.xpose.msra.mxu0 0
      %2183 = vmatpush.bf16.xpose.msra.mxu0 0
      %2184 = vmatpush.bf16.xpose.msra.mxu0 %v2175
      %2185 = vmatmul.bf16.gmra.mxu0 %v2172
      %v2186 = vpop.f32.mrf.mxu0
      %v2187 = vadd.f32 0.0, %v2186
      %v2188 = vpop.f32.mrf.mxu0
      %v2189 = vadd.f32 0.0, %v2188
      %2190 = vdwg.mxu0
      %2191 = vrot.lane.b32.xlu0 %v536, 120
      %v2192 = vpop.permute.xlu0 %2191
      %2193 = vrot.lane.b32.xlu0 %v536, 88
      %v2194 = vpop.permute.xlu0 %2193
      %v2196 = vsel %vm484, %v2192, 0
      %v2199 = vsel %vm484, %v2194, 0
      %2201 = vmatpush.bf16.xpose.msra.mxu0 0
      %2202 = vmatpush.bf16.xpose.msra.mxu0 0
      %2203 = vmatpush.bf16.xpose.msra.mxu0 0
      %2204 = vmatpush.bf16.xpose.msra.mxu0 0
      %2205 = vmatpush.bf16.xpose.msra.mxu0 0
      %2206 = vmatpush.bf16.xpose.msra.mxu0 0
      %2207 = vmatpush.bf16.xpose.msra.mxu0 0
      %2208 = vmatpush.bf16.xpose.msra.mxu0 %v2199
      %2209 = vmatmul.bf16.gmra.mxu0 %v2196
      %v2210 = vpop.f32.mrf.mxu0
      %v2211 = vadd.f32 0.0, %v2210
      %v2212 = vpop.f32.mrf.mxu0
      %v2213 = vadd.f32 0.0, %v2212
      %2214 = vdwg.mxu0
      %2215 = vrot.lane.b32.xlu0 %v563, 120
      %v2216 = vpop.permute.xlu0 %2215
      %2217 = vrot.lane.b32.xlu0 %v563, 88
      %v2218 = vpop.permute.xlu0 %2217
      %v2220 = vsel %vm484, %v2216, 0
      %v2223 = vsel %vm484, %v2218, 0
      %2225 = vmatpush.bf16.xpose.msra.mxu0 0
      %2226 = vmatpush.bf16.xpose.msra.mxu0 0
      %2227 = vmatpush.bf16.xpose.msra.mxu0 0
      %2228 = vmatpush.bf16.xpose.msra.mxu0 0
      %2229 = vmatpush.bf16.xpose.msra.mxu0 0
      %2230 = vmatpush.bf16.xpose.msra.mxu0 0
      %2231 = vmatpush.bf16.xpose.msra.mxu0 0
      %2232 = vmatpush.bf16.xpose.msra.mxu0 %v2223
      %2233 = vmatmul.bf16.gmra.mxu0 %v2220
      %v2234 = vpop.f32.mrf.mxu0
      %v2235 = vadd.f32 0.0, %v2234
      %v2236 = vpop.f32.mrf.mxu0
      %v2237 = vadd.f32 0.0, %v2236
      %2238 = vdwg.mxu0
      %2239 = vrot.lane.b32.xlu0 %v590, 120
      %v2240 = vpop.permute.xlu0 %2239
      %2241 = vrot.lane.b32.xlu0 %v590, 88
      %v2242 = vpop.permute.xlu0 %2241
      %v2244 = vsel %vm484, %v2240, 0
      %v2247 = vsel %vm484, %v2242, 0
      %2249 = vmatpush.bf16.xpose.msra.mxu0 0
      %2250 = vmatpush.bf16.xpose.msra.mxu0 0
      %2251 = vmatpush.bf16.xpose.msra.mxu0 0
      %2252 = vmatpush.bf16.xpose.msra.mxu0 0
      %2253 = vmatpush.bf16.xpose.msra.mxu0 0
      %2254 = vmatpush.bf16.xpose.msra.mxu0 0
      %2255 = vmatpush.bf16.xpose.msra.mxu0 0
      %2256 = vmatpush.bf16.xpose.msra.mxu0 %v2247
      %2257 = vmatmul.bf16.gmra.mxu0 %v2244
      %v2258 = vpop.f32.mrf.mxu0
      %v2259 = vadd.f32 0.0, %v2258
      %v2260 = vpop.f32.mrf.mxu0
      %v2261 = vadd.f32 0.0, %v2260
      %2262 = vdwg.mxu0
      %2263 = vrot.lane.b32.xlu0 %v617, 120
      %v2264 = vpop.permute.xlu0 %2263
      %2265 = vrot.lane.b32.xlu0 %v617, 88
      %v2266 = vpop.permute.xlu0 %2265
      %v2268 = vsel %vm484, %v2264, 0
      %v2271 = vsel %vm484, %v2266, 0
      %2273 = vmatpush.bf16.xpose.msra.mxu0 0
      %2274 = vmatpush.bf16.xpose.msra.mxu0 0
      %2275 = vmatpush.bf16.xpose.msra.mxu0 0
      %2276 = vmatpush.bf16.xpose.msra.mxu0 0
      %2277 = vmatpush.bf16.xpose.msra.mxu0 0
      %2278 = vmatpush.bf16.xpose.msra.mxu0 0
      %2279 = vmatpush.bf16.xpose.msra.mxu0 0
      %2280 = vmatpush.bf16.xpose.msra.mxu0 %v2271
      %2281 = vmatmul.bf16.gmra.mxu0 %v2268
      %v2282 = vpop.f32.mrf.mxu0
      %v2283 = vadd.f32 0.0, %v2282
      %v2284 = vpop.f32.mrf.mxu0
      %v2285 = vadd.f32 0.0, %v2284
      %2286 = vdwg.mxu0
      %2287 = vrot.lane.b32.xlu0 %v644, 120
      %v2288 = vpop.permute.xlu0 %2287
      %2289 = vrot.lane.b32.xlu0 %v644, 88
      %v2290 = vpop.permute.xlu0 %2289
      %v2292 = vsel %vm484, %v2288, 0
      %v2295 = vsel %vm484, %v2290, 0
      %2297 = vmatpush.bf16.xpose.msra.mxu0 0
      %2298 = vmatpush.bf16.xpose.msra.mxu0 0
      %2299 = vmatpush.bf16.xpose.msra.mxu0 0
      %2300 = vmatpush.bf16.xpose.msra.mxu0 0
      %2301 = vmatpush.bf16.xpose.msra.mxu0 0
      %2302 = vmatpush.bf16.xpose.msra.mxu0 0
      %2303 = vmatpush.bf16.xpose.msra.mxu0 0
      %2304 = vmatpush.bf16.xpose.msra.mxu0 %v2295
      %2305 = vmatmul.bf16.gmra.mxu0 %v2292
      %v2306 = vpop.f32.mrf.mxu0
      %v2307 = vadd.f32 0.0, %v2306
      %v2308 = vpop.f32.mrf.mxu0
      %v2309 = vadd.f32 0.0, %v2308
      %2310 = vdwg.mxu0
      %2311 = vrot.lane.b32.xlu0 %v671, 120
      %v2312 = vpop.permute.xlu0 %2311
      %2313 = vrot.lane.b32.xlu0 %v671, 88
      %v2314 = vpop.permute.xlu0 %2313
      %v2316 = vsel %vm484, %v2312, 0
      %v2319 = vsel %vm484, %v2314, 0
      %2321 = vmatpush.bf16.xpose.msra.mxu0 0
      %2322 = vmatpush.bf16.xpose.msra.mxu0 0
      %2323 = vmatpush.bf16.xpose.msra.mxu0 0
      %2324 = vmatpush.bf16.xpose.msra.mxu0 0
      %2325 = vmatpush.bf16.xpose.msra.mxu0 0
      %2326 = vmatpush.bf16.xpose.msra.mxu0 0
      %2327 = vmatpush.bf16.xpose.msra.mxu0 0
      %2328 = vmatpush.bf16.xpose.msra.mxu0 %v2319
      %2329 = vmatmul.bf16.gmra.mxu0 %v2316
      %v2330 = vpop.f32.mrf.mxu0
      %v2331 = vadd.f32 0.0, %v2330
      %v2332 = vpop.f32.mrf.mxu0
      %v2333 = vadd.f32 0.0, %v2332
      %2334 = vdwg.mxu0
      %2335 = vrot.lane.b32.xlu0 %v698, 120
      %v2336 = vpop.permute.xlu0 %2335
      %2337 = vrot.lane.b32.xlu0 %v698, 88
      %v2338 = vpop.permute.xlu0 %2337
      %v2340 = vsel %vm484, %v2336, 0
      %v2343 = vsel %vm484, %v2338, 0
      %2345 = vmatpush.bf16.xpose.msra.mxu0 0
      %2346 = vmatpush.bf16.xpose.msra.mxu0 0
      %2347 = vmatpush.bf16.xpose.msra.mxu0 0
      %2348 = vmatpush.bf16.xpose.msra.mxu0 0
      %2349 = vmatpush.bf16.xpose.msra.mxu0 0
      %2350 = vmatpush.bf16.xpose.msra.mxu0 0
      %2351 = vmatpush.bf16.xpose.msra.mxu0 0
      %2352 = vmatpush.bf16.xpose.msra.mxu0 %v2343
      %2353 = vmatmul.bf16.gmra.mxu0 %v2340
      %v2354 = vpop.f32.mrf.mxu0
      %v2355 = vadd.f32 0.0, %v2354
      %v2356 = vpop.f32.mrf.mxu0
      %v2357 = vadd.f32 0.0, %v2356
      %2358 = vdwg.mxu0
      %2359 = vrot.lane.b32.xlu0 %v725, 120
      %v2360 = vpop.permute.xlu0 %2359
      %2361 = vrot.lane.b32.xlu0 %v725, 88
      %v2362 = vpop.permute.xlu0 %2361
      %v2364 = vsel %vm484, %v2360, 0
      %v2367 = vsel %vm484, %v2362, 0
      %2369 = vmatpush.bf16.xpose.msra.mxu0 0
      %2370 = vmatpush.bf16.xpose.msra.mxu0 0
      %2371 = vmatpush.bf16.xpose.msra.mxu0 0
      %2372 = vmatpush.bf16.xpose.msra.mxu0 0
      %2373 = vmatpush.bf16.xpose.msra.mxu0 0
      %2374 = vmatpush.bf16.xpose.msra.mxu0 0
      %2375 = vmatpush.bf16.xpose.msra.mxu0 0
      %2376 = vmatpush.bf16.xpose.msra.mxu0 %v2367
      %2377 = vmatmul.bf16.gmra.mxu0 %v2364
      %v2378 = vpop.f32.mrf.mxu0
      %v2379 = vadd.f32 0.0, %v2378
      %v2380 = vpop.f32.mrf.mxu0
      %v2381 = vadd.f32 0.0, %v2380
      %2382 = vdwg.mxu0
      %2383 = vrot.lane.b32.xlu0 %v752, 120
      %v2384 = vpop.permute.xlu0 %2383
      %2385 = vrot.lane.b32.xlu0 %v752, 88
      %v2386 = vpop.permute.xlu0 %2385
      %v2388 = vsel %vm484, %v2384, 0
      %v2391 = vsel %vm484, %v2386, 0
      %2393 = vmatpush.bf16.xpose.msra.mxu0 0
      %2394 = vmatpush.bf16.xpose.msra.mxu0 0
      %2395 = vmatpush.bf16.xpose.msra.mxu0 0
      %2396 = vmatpush.bf16.xpose.msra.mxu0 0
      %2397 = vmatpush.bf16.xpose.msra.mxu0 0
      %2398 = vmatpush.bf16.xpose.msra.mxu0 0
      %2399 = vmatpush.bf16.xpose.msra.mxu0 0
      %2400 = vmatpush.bf16.xpose.msra.mxu0 %v2391
      %2401 = vmatmul.bf16.gmra.mxu0 %v2388
      %v2402 = vpop.f32.mrf.mxu0
      %v2403 = vadd.f32 0.0, %v2402
      %v2404 = vpop.f32.mrf.mxu0
      %v2405 = vadd.f32 0.0, %v2404
      %2406 = vdwg.mxu0
      %2407 = vrot.lane.b32.xlu0 %v779, 120
      %v2408 = vpop.permute.xlu0 %2407
      %2409 = vrot.lane.b32.xlu0 %v779, 88
      %v2410 = vpop.permute.xlu0 %2409
      %v2412 = vsel %vm484, %v2408, 0
      %v2415 = vsel %vm484, %v2410, 0
      %2417 = vmatpush.bf16.xpose.msra.mxu0 0
      %2418 = vmatpush.bf16.xpose.msra.mxu0 0
      %2419 = vmatpush.bf16.xpose.msra.mxu0 0
      %2420 = vmatpush.bf16.xpose.msra.mxu0 0
      %2421 = vmatpush.bf16.xpose.msra.mxu0 0
      %2422 = vmatpush.bf16.xpose.msra.mxu0 0
      %2423 = vmatpush.bf16.xpose.msra.mxu0 0
      %2424 = vmatpush.bf16.xpose.msra.mxu0 %v2415
      %2425 = vmatmul.bf16.gmra.mxu0 %v2412
      %v2426 = vpop.f32.mrf.mxu0
      %v2427 = vadd.f32 0.0, %v2426
      %v2428 = vpop.f32.mrf.mxu0
      %v2429 = vadd.f32 0.0, %v2428
      %2430 = vdwg.mxu0
      %2431 = vrot.lane.b32.xlu0 %v806, 120
      %v2432 = vpop.permute.xlu0 %2431
      %2433 = vrot.lane.b32.xlu0 %v806, 88
      %v2434 = vpop.permute.xlu0 %2433
      %v2436 = vsel %vm484, %v2432, 0
      %v2439 = vsel %vm484, %v2434, 0
      %2441 = vmatpush.bf16.xpose.msra.mxu0 0
      %2442 = vmatpush.bf16.xpose.msra.mxu0 0
      %2443 = vmatpush.bf16.xpose.msra.mxu0 0
      %2444 = vmatpush.bf16.xpose.msra.mxu0 0
      %2445 = vmatpush.bf16.xpose.msra.mxu0 0
      %2446 = vmatpush.bf16.xpose.msra.mxu0 0
      %2447 = vmatpush.bf16.xpose.msra.mxu0 0
      %2448 = vmatpush.bf16.xpose.msra.mxu0 %v2439
      %2449 = vmatmul.bf16.gmra.mxu0 %v2436
      %v2450 = vpop.f32.mrf.mxu0
      %v2451 = vadd.f32 0.0, %v2450
      %v2452 = vpop.f32.mrf.mxu0
      %v2453 = vadd.f32 0.0, %v2452
      %2454 = vdwg.mxu0
      %2455 = vrot.lane.b32.xlu0 %v833, 120
      %v2456 = vpop.permute.xlu0 %2455
      %2457 = vrot.lane.b32.xlu0 %v833, 88
      %v2458 = vpop.permute.xlu0 %2457
      %v2460 = vsel %vm484, %v2456, 0
      %v2463 = vsel %vm484, %v2458, 0
      %2465 = vmatpush.bf16.xpose.msra.mxu0 0
      %2466 = vmatpush.bf16.xpose.msra.mxu0 0
      %2467 = vmatpush.bf16.xpose.msra.mxu0 0
      %2468 = vmatpush.bf16.xpose.msra.mxu0 0
      %2469 = vmatpush.bf16.xpose.msra.mxu0 0
      %2470 = vmatpush.bf16.xpose.msra.mxu0 0
      %2471 = vmatpush.bf16.xpose.msra.mxu0 0
      %2472 = vmatpush.bf16.xpose.msra.mxu0 %v2463
      %2473 = vmatmul.bf16.gmra.mxu0 %v2460
      %v2474 = vpop.f32.mrf.mxu0
      %v2475 = vadd.f32 0.0, %v2474
      %v2476 = vpop.f32.mrf.mxu0
      %v2477 = vadd.f32 0.0, %v2476
      %2478 = vdwg.mxu0
      %2479 = vrot.lane.b32.xlu0 %v860, 120
      %v2480 = vpop.permute.xlu0 %2479
      %2481 = vrot.lane.b32.xlu0 %v860, 88
      %v2482 = vpop.permute.xlu0 %2481
      %v2484 = vsel %vm484, %v2480, 0
      %v2487 = vsel %vm484, %v2482, 0
      %2489 = vmatpush.bf16.xpose.msra.mxu0 0
      %2490 = vmatpush.bf16.xpose.msra.mxu0 0
      %2491 = vmatpush.bf16.xpose.msra.mxu0 0
      %2492 = vmatpush.bf16.xpose.msra.mxu0 0
      %2493 = vmatpush.bf16.xpose.msra.mxu0 0
      %2494 = vmatpush.bf16.xpose.msra.mxu0 0
      %2495 = vmatpush.bf16.xpose.msra.mxu0 0
      %2496 = vmatpush.bf16.xpose.msra.mxu0 %v2487
      %2497 = vmatmul.bf16.gmra.mxu0 %v2484
      %v2498 = vpop.f32.mrf.mxu0
      %v2499 = vadd.f32 0.0, %v2498
      %v2500 = vpop.f32.mrf.mxu0
      %v2501 = vadd.f32 0.0, %v2500
      %2502 = vdwg.mxu0
      %2503 = vrot.lane.b32.xlu0 %v887, 120
      %v2504 = vpop.permute.xlu0 %2503
      %2505 = vrot.lane.b32.xlu0 %v887, 88
      %v2506 = vpop.permute.xlu0 %2505
      %v2508 = vsel %vm484, %v2504, 0
      %v2511 = vsel %vm484, %v2506, 0
      %2513 = vmatpush.bf16.xpose.msra.mxu0 0
      %2514 = vmatpush.bf16.xpose.msra.mxu0 0
      %2515 = vmatpush.bf16.xpose.msra.mxu0 0
      %2516 = vmatpush.bf16.xpose.msra.mxu0 0
      %2517 = vmatpush.bf16.xpose.msra.mxu0 0
      %2518 = vmatpush.bf16.xpose.msra.mxu0 0
      %2519 = vmatpush.bf16.xpose.msra.mxu0 0
      %2520 = vmatpush.bf16.xpose.msra.mxu0 %v2511
      %2521 = vmatmul.bf16.gmra.mxu0 %v2508
      %v2522 = vpop.f32.mrf.mxu0
      %v2523 = vadd.f32 0.0, %v2522
      %v2524 = vpop.f32.mrf.mxu0
      %v2525 = vadd.f32 0.0, %v2524
      %2526 = vdwg.mxu0
      %v2527 = vsel %vm910, %v2163, -inf
      %2528 = vmax.xlane.f32.xlu0 %v2527
      %v2529 = vpop.xlane.xlu0 %2528
      %v2530 = vsel %vm910, %v2165, -inf
      %2531 = vmax.xlane.f32.xlu0 %v2530
      %v2532 = vpop.xlane.xlu0 %2531
      %v2533 = vsel %vm910, %v2187, -inf
      %2534 = vmax.xlane.f32.xlu0 %v2533
      %v2535 = vpop.xlane.xlu0 %2534
      %v2536 = vsel %vm910, %v2189, -inf
      %2537 = vmax.xlane.f32.xlu0 %v2536
      %v2538 = vpop.xlane.xlu0 %2537
      %v2539 = vsel %vm910, %v2211, -inf
      %2540 = vmax.xlane.f32.xlu0 %v2539
      %v2541 = vpop.xlane.xlu0 %2540
      %v2542 = vsel %vm910, %v2213, -inf
      %2543 = vmax.xlane.f32.xlu0 %v2542
      %v2544 = vpop.xlane.xlu0 %2543
      %v2545 = vsel %vm910, %v2235, -inf
      %2546 = vmax.xlane.f32.xlu0 %v2545
      %v2547 = vpop.xlane.xlu0 %2546
      %v2548 = vsel %vm910, %v2237, -inf
      %2549 = vmax.xlane.f32.xlu0 %v2548
      %v2550 = vpop.xlane.xlu0 %2549
      %v2551 = vsel %vm910, %v2259, -inf
      %2552 = vmax.xlane.f32.xlu0 %v2551
      %v2553 = vpop.xlane.xlu0 %2552
      %v2554 = vsel %vm910, %v2261, -inf
      %2555 = vmax.xlane.f32.xlu0 %v2554
      %v2556 = vpop.xlane.xlu0 %2555
      %v2557 = vsel %vm910, %v2283, -inf
      %2558 = vmax.xlane.f32.xlu0 %v2557
      %v2559 = vpop.xlane.xlu0 %2558
      %v2560 = vsel %vm910, %v2285, -inf
      %2561 = vmax.xlane.f32.xlu0 %v2560
      %v2562 = vpop.xlane.xlu0 %2561
      %v2563 = vsel %vm910, %v2307, -inf
      %2564 = vmax.xlane.f32.xlu0 %v2563
      %v2565 = vpop.xlane.xlu0 %2564
      %v2566 = vsel %vm910, %v2309, -inf
      %2567 = vmax.xlane.f32.xlu0 %v2566
      %v2568 = vpop.xlane.xlu0 %2567
      %v2569 = vsel %vm910, %v2331, -inf
      %2570 = vmax.xlane.f32.xlu0 %v2569
      %v2571 = vpop.xlane.xlu0 %2570
      %v2572 = vsel %vm910, %v2333, -inf
      %2573 = vmax.xlane.f32.xlu0 %v2572
      %v2574 = vpop.xlane.xlu0 %2573
      %v2575 = vsel %vm910, %v2355, -inf
      %2576 = vmax.xlane.f32.xlu0 %v2575
      %v2577 = vpop.xlane.xlu0 %2576
      %v2578 = vsel %vm910, %v2357, -inf
      %2579 = vmax.xlane.f32.xlu0 %v2578
      %v2580 = vpop.xlane.xlu0 %2579
      %v2581 = vsel %vm910, %v2379, -inf
      %2582 = vmax.xlane.f32.xlu0 %v2581
      %v2583 = vpop.xlane.xlu0 %2582
      %v2584 = vsel %vm910, %v2381, -inf
      %2585 = vmax.xlane.f32.xlu0 %v2584
      %v2586 = vpop.xlane.xlu0 %2585
      %v2587 = vsel %vm910, %v2403, -inf
      %2588 = vmax.xlane.f32.xlu0 %v2587
      %v2589 = vpop.xlane.xlu0 %2588
      %v2590 = vsel %vm910, %v2405, -inf
      %2591 = vmax.xlane.f32.xlu0 %v2590
      %v2592 = vpop.xlane.xlu0 %2591
      %v2593 = vsel %vm910, %v2427, -inf
      %2594 = vmax.xlane.f32.xlu0 %v2593
      %v2595 = vpop.xlane.xlu0 %2594
      %v2596 = vsel %vm910, %v2429, -inf
      %2597 = vmax.xlane.f32.xlu0 %v2596
      %v2598 = vpop.xlane.xlu0 %2597
      %v2599 = vsel %vm910, %v2451, -inf
      %2600 = vmax.xlane.f32.xlu0 %v2599
      %v2601 = vpop.xlane.xlu0 %2600
      %v2602 = vsel %vm910, %v2453, -inf
      %2603 = vmax.xlane.f32.xlu0 %v2602
      %v2604 = vpop.xlane.xlu0 %2603
      %v2605 = vsel %vm910, %v2475, -inf
      %2606 = vmax.xlane.f32.xlu0 %v2605
      %v2607 = vpop.xlane.xlu0 %2606
      %v2608 = vsel %vm910, %v2477, -inf
      %2609 = vmax.xlane.f32.xlu0 %v2608
      %v2610 = vpop.xlane.xlu0 %2609
      %v2611 = vsel %vm910, %v2499, -inf
      %2612 = vmax.xlane.f32.xlu0 %v2611
      %v2613 = vpop.xlane.xlu0 %2612
      %v2614 = vsel %vm910, %v2501, -inf
      %2615 = vmax.xlane.f32.xlu0 %v2614
      %v2616 = vpop.xlane.xlu0 %2615
      %v2617 = vsel %vm910, %v2523, -inf
      %2618 = vmax.xlane.f32.xlu0 %v2617
      %v2619 = vpop.xlane.xlu0 %2618
      %v2620 = vsel %vm910, %v2525, -inf
      %2621 = vmax.xlane.f32.xlu0 %v2620
      %v2622 = vpop.xlane.xlu0 %2621
      %v2623 = vsub.f32 %v2163, %v2529
      %v2624 = vsub.f32 %v2165, %v2532
      %v2625 = vsub.f32 %v2187, %v2535
      %v2626 = vsub.f32 %v2189, %v2538
      %v2627 = vsub.f32 %v2211, %v2541
      %v2628 = vsub.f32 %v2213, %v2544
      %v2629 = vsub.f32 %v2235, %v2547
      %v2630 = vsub.f32 %v2237, %v2550
      %v2631 = vsub.f32 %v2259, %v2553
      %v2632 = vsub.f32 %v2261, %v2556
      %v2633 = vsub.f32 %v2283, %v2559
      %v2634 = vsub.f32 %v2285, %v2562
      %v2635 = vsub.f32 %v2307, %v2565
      %v2636 = vsub.f32 %v2309, %v2568
      %v2637 = vsub.f32 %v2331, %v2571
      %v2638 = vsub.f32 %v2333, %v2574
      %v2639 = vsub.f32 %v2355, %v2577
      %v2640 = vsub.f32 %v2357, %v2580
      %v2641 = vsub.f32 %v2379, %v2583
      %v2642 = vsub.f32 %v2381, %v2586
      %v2643 = vsub.f32 %v2403, %v2589
      %v2644 = vsub.f32 %v2405, %v2592
      %v2645 = vsub.f32 %v2427, %v2595
      %v2646 = vsub.f32 %v2429, %v2598
      %v2647 = vsub.f32 %v2451, %v2601
      %v2648 = vsub.f32 %v2453, %v2604
      %v2649 = vsub.f32 %v2475, %v2607
      %v2650 = vsub.f32 %v2477, %v2610
      %v2651 = vsub.f32 %v2499, %v2613
      %v2652 = vsub.f32 %v2501, %v2616
      %v2653 = vsub.f32 %v2523, %v2619
      %v2654 = vsub.f32 %v2525, %v2622
      %v2655 = vmul.f32 %v2623, 1.442695
      %v2656 = vpow.pop %v2655
      %v2657 = vmul.f32 %v2624, 1.442695
      %v2658 = vpow.pop %v2657
      %v2659 = vmul.f32 %v2625, 1.442695
      %v2660 = vpow.pop %v2659
      %v2661 = vmul.f32 %v2626, 1.442695
      %v2662 = vpow.pop %v2661
      %v2663 = vmul.f32 %v2627, 1.442695
      %v2664 = vpow.pop %v2663
      %v2665 = vmul.f32 %v2628, 1.442695
      %v2666 = vpow.pop %v2665
      %v2667 = vmul.f32 %v2629, 1.442695
      %v2668 = vpow.pop %v2667
      %v2669 = vmul.f32 %v2630, 1.442695
      %v2670 = vpow.pop %v2669
      %v2671 = vmul.f32 %v2631, 1.442695
      %v2672 = vpow.pop %v2671
      %v2673 = vmul.f32 %v2632, 1.442695
      %v2674 = vpow.pop %v2673
      %v2675 = vmul.f32 %v2633, 1.442695
      %v2676 = vpow.pop %v2675
      %v2677 = vmul.f32 %v2634, 1.442695
      %v2678 = vpow.pop %v2677
      %v2679 = vmul.f32 %v2635, 1.442695
      %v2680 = vpow.pop %v2679
      %v2681 = vmul.f32 %v2636, 1.442695
      %v2682 = vpow.pop %v2681
      %v2683 = vmul.f32 %v2637, 1.442695
      %v2684 = vpow.pop %v2683
      %v2685 = vmul.f32 %v2638, 1.442695
      %v2686 = vpow.pop %v2685
      %v2687 = vmul.f32 %v2639, 1.442695
      %v2688 = vpow.pop %v2687
      %v2689 = vmul.f32 %v2640, 1.442695
      %v2690 = vpow.pop %v2689
      %v2691 = vmul.f32 %v2641, 1.442695
      %v2692 = vpow.pop %v2691
      %v2693 = vmul.f32 %v2642, 1.442695
      %v2694 = vpow.pop %v2693
      %v2695 = vmul.f32 %v2643, 1.442695
      %v2696 = vpow.pop %v2695
      %v2697 = vmul.f32 %v2644, 1.442695
      %v2698 = vpow.pop %v2697
      %v2699 = vmul.f32 %v2645, 1.442695
      %v2700 = vpow.pop %v2699
      %v2701 = vmul.f32 %v2646, 1.442695
      %v2702 = vpow.pop %v2701
      %v2703 = vmul.f32 %v2647, 1.442695
      %v2704 = vpow.pop %v2703
      %v2705 = vmul.f32 %v2648, 1.442695
      %v2706 = vpow.pop %v2705
      %v2707 = vmul.f32 %v2649, 1.442695
      %v2708 = vpow.pop %v2707
      %v2709 = vmul.f32 %v2650, 1.442695
      %v2710 = vpow.pop %v2709
      %v2711 = vmul.f32 %v2651, 1.442695
      %v2712 = vpow.pop %v2711
      %v2713 = vmul.f32 %v2652, 1.442695
      %v2714 = vpow.pop %v2713
      %v2715 = vmul.f32 %v2653, 1.442695
      %v2716 = vpow.pop %v2715
      %v2717 = vmul.f32 %v2654, 1.442695
      %v2718 = vpow.pop %v2717
      %v2719 = vsel %vm910, %v2656, 0.0
      %2720 = vadd.xlane.f32.xlu0 %v2719
      %v2721 = vpop.xlane.xlu0 %2720
      %v2722 = vsel %vm910, %v2658, 0.0
      %2723 = vadd.xlane.f32.xlu0 %v2722
      %v2724 = vpop.xlane.xlu0 %2723
      %v2725 = vsel %vm910, %v2660, 0.0
      %2726 = vadd.xlane.f32.xlu0 %v2725
      %v2727 = vpop.xlane.xlu0 %2726
      %v2728 = vsel %vm910, %v2662, 0.0
      %2729 = vadd.xlane.f32.xlu0 %v2728
      %v2730 = vpop.xlane.xlu0 %2729
      %v2731 = vsel %vm910, %v2664, 0.0
      %2732 = vadd.xlane.f32.xlu0 %v2731
      %v2733 = vpop.xlane.xlu0 %2732
      %v2734 = vsel %vm910, %v2666, 0.0
      %2735 = vadd.xlane.f32.xlu0 %v2734
      %v2736 = vpop.xlane.xlu0 %2735
      %v2737 = vsel %vm910, %v2668, 0.0
      %2738 = vadd.xlane.f32.xlu0 %v2737
      %v2739 = vpop.xlane.xlu0 %2738
      %v2740 = vsel %vm910, %v2670, 0.0
      %2741 = vadd.xlane.f32.xlu0 %v2740
      %v2742 = vpop.xlane.xlu0 %2741
      %v2743 = vsel %vm910, %v2672, 0.0
      %2744 = vadd.xlane.f32.xlu0 %v2743
      %v2745 = vpop.xlane.xlu0 %2744
      %v2746 = vsel %vm910, %v2674, 0.0
      %2747 = vadd.xlane.f32.xlu0 %v2746
      %v2748 = vpop.xlane.xlu0 %2747
      %v2749 = vsel %vm910, %v2676, 0.0
      %2750 = vadd.xlane.f32.xlu0 %v2749
      %v2751 = vpop.xlane.xlu0 %2750
      %v2752 = vsel %vm910, %v2678, 0.0
      %2753 = vadd.xlane.f32.xlu0 %v2752
      %v2754 = vpop.xlane.xlu0 %2753
      %v2755 = vsel %vm910, %v2680, 0.0
      %2756 = vadd.xlane.f32.xlu0 %v2755
      %v2757 = vpop.xlane.xlu0 %2756
      %v2758 = vsel %vm910, %v2682, 0.0
      %2759 = vadd.xlane.f32.xlu0 %v2758
      %v2760 = vpop.xlane.xlu0 %2759
      %v2761 = vsel %vm910, %v2684, 0.0
      %2762 = vadd.xlane.f32.xlu0 %v2761
      %v2763 = vpop.xlane.xlu0 %2762
      %v2764 = vsel %vm910, %v2686, 0.0
      %2765 = vadd.xlane.f32.xlu0 %v2764
      %v2766 = vpop.xlane.xlu0 %2765
      %v2767 = vsel %vm910, %v2688, 0.0
      %2768 = vadd.xlane.f32.xlu0 %v2767
      %v2769 = vpop.xlane.xlu0 %2768
      %v2770 = vsel %vm910, %v2690, 0.0
      %2771 = vadd.xlane.f32.xlu0 %v2770
      %v2772 = vpop.xlane.xlu0 %2771
      %v2773 = vsel %vm910, %v2692, 0.0
      %2774 = vadd.xlane.f32.xlu0 %v2773
      %v2775 = vpop.xlane.xlu0 %2774
      %v2776 = vsel %vm910, %v2694, 0.0
      %2777 = vadd.xlane.f32.xlu0 %v2776
      %v2778 = vpop.xlane.xlu0 %2777
      %v2779 = vsel %vm910, %v2696, 0.0
      %2780 = vadd.xlane.f32.xlu0 %v2779
      %v2781 = vpop.xlane.xlu0 %2780
      %v2782 = vsel %vm910, %v2698, 0.0
      %2783 = vadd.xlane.f32.xlu0 %v2782
      %v2784 = vpop.xlane.xlu0 %2783
      %v2785 = vsel %vm910, %v2700, 0.0
      %2786 = vadd.xlane.f32.xlu0 %v2785
      %v2787 = vpop.xlane.xlu0 %2786
      %v2788 = vsel %vm910, %v2702, 0.0
      %2789 = vadd.xlane.f32.xlu0 %v2788
      %v2790 = vpop.xlane.xlu0 %2789
      %v2791 = vsel %vm910, %v2704, 0.0
      %2792 = vadd.xlane.f32.xlu0 %v2791
      %v2793 = vpop.xlane.xlu0 %2792
      %v2794 = vsel %vm910, %v2706, 0.0
      %2795 = vadd.xlane.f32.xlu0 %v2794
      %v2796 = vpop.xlane.xlu0 %2795
      %v2797 = vsel %vm910, %v2708, 0.0
      %2798 = vadd.xlane.f32.xlu0 %v2797
      %v2799 = vpop.xlane.xlu0 %2798
      %v2800 = vsel %vm910, %v2710, 0.0
      %2801 = vadd.xlane.f32.xlu0 %v2800
      %v2802 = vpop.xlane.xlu0 %2801
      %v2803 = vsel %vm910, %v2712, 0.0
      %2804 = vadd.xlane.f32.xlu0 %v2803
      %v2805 = vpop.xlane.xlu0 %2804
      %v2806 = vsel %vm910, %v2714, 0.0
      %2807 = vadd.xlane.f32.xlu0 %v2806
      %v2808 = vpop.xlane.xlu0 %2807
      %v2809 = vsel %vm910, %v2716, 0.0
      %2810 = vadd.xlane.f32.xlu0 %v2809
      %v2811 = vpop.xlane.xlu0 %2810
      %v2812 = vsel %vm910, %v2718, 0.0
      %2813 = vadd.xlane.f32.xlu0 %v2812
      %v2814 = vpop.xlane.xlu0 %2813
      %v2815 = vrcp.pop %v2721
      %v2816 = vmul.f32 %v2721, %v2815
      %v2817 = vsub.f32 1.0, %v2816
      %v2818 = vmul.f32 %v2815, %v2817
      %v2819 = vadd.f32 %v2815, %v2818
      %vm2820 = vweird.f32 %v2721
      %vm2821 = vweird.f32 %v2815
      %vm2822 = vmor %vm2820, %vm2821
      %v2823 = vsel %vm2822, %v2815, %v2819
      %v2824 = vand.u32 2147483647, %v2721
      %vm2825 = vcmp.eq.f32.partialorder %v2824, 8.507059e+37
      %v2826 = vand.u32 %v2721, 2147483648
      %v2827 = vor.u32 1.1754944e-38, %v2826
      %v2828 = vsel %vm2825, %v2827, %v2823
      %v2829 = vmul.f32 1.0, %v2828
      %v2830 = vrcp.pop %v2724
      %v2831 = vmul.f32 %v2724, %v2830
      %v2832 = vsub.f32 1.0, %v2831
      %v2833 = vmul.f32 %v2830, %v2832
      %v2834 = vadd.f32 %v2830, %v2833
      %vm2835 = vweird.f32 %v2724
      %vm2836 = vweird.f32 %v2830
      %vm2837 = vmor %vm2835, %vm2836
      %v2838 = vsel %vm2837, %v2830, %v2834
      %v2839 = vand.u32 2147483647, %v2724
      %vm2840 = vcmp.eq.f32.partialorder %v2839, 8.507059e+37
      %v2841 = vand.u32 %v2724, 2147483648
      %v2842 = vor.u32 1.1754944e-38, %v2841
      %v2843 = vsel %vm2840, %v2842, %v2838
      %v2844 = vmul.f32 1.0, %v2843
      %v2845 = vrcp.pop %v2727
      %v2846 = vmul.f32 %v2727, %v2845
      %v2847 = vsub.f32 1.0, %v2846
      %v2848 = vmul.f32 %v2845, %v2847
      %v2849 = vadd.f32 %v2845, %v2848
      %vm2850 = vweird.f32 %v2727
      %vm2851 = vweird.f32 %v2845
      %vm2852 = vmor %vm2850, %vm2851
      %v2853 = vsel %vm2852, %v2845, %v2849
      %v2854 = vand.u32 2147483647, %v2727
      %vm2855 = vcmp.eq.f32.partialorder %v2854, 8.507059e+37
      %v2856 = vand.u32 %v2727, 2147483648
      %v2857 = vor.u32 1.1754944e-38, %v2856
      %v2858 = vsel %vm2855, %v2857, %v2853
      %v2859 = vmul.f32 1.0, %v2858
      %v2860 = vrcp.pop %v2730
      %v2861 = vmul.f32 %v2730, %v2860
      %v2862 = vsub.f32 1.0, %v2861
      %v2863 = vmul.f32 %v2860, %v2862
      %v2864 = vadd.f32 %v2860, %v2863
      %vm2865 = vweird.f32 %v2730
      %vm2866 = vweird.f32 %v2860
      %vm2867 = vmor %vm2865, %vm2866
      %v2868 = vsel %vm2867, %v2860, %v2864
      %v2869 = vand.u32 2147483647, %v2730
      %vm2870 = vcmp.eq.f32.partialorder %v2869, 8.507059e+37
      %v2871 = vand.u32 %v2730, 2147483648
      %v2872 = vor.u32 1.1754944e-38, %v2871
      %v2873 = vsel %vm2870, %v2872, %v2868
      %v2874 = vmul.f32 1.0, %v2873
      %v2875 = vrcp.pop %v2733
      %v2876 = vmul.f32 %v2733, %v2875
      %v2877 = vsub.f32 1.0, %v2876
      %v2878 = vmul.f32 %v2875, %v2877
      %v2879 = vadd.f32 %v2875, %v2878
      %vm2880 = vweird.f32 %v2733
      %vm2881 = vweird.f32 %v2875
      %vm2882 = vmor %vm2880, %vm2881
      %v2883 = vsel %vm2882, %v2875, %v2879
      %v2884 = vand.u32 2147483647, %v2733
      %vm2885 = vcmp.eq.f32.partialorder %v2884, 8.507059e+37
      %v2886 = vand.u32 %v2733, 2147483648
      %v2887 = vor.u32 1.1754944e-38, %v2886
      %v2888 = vsel %vm2885, %v2887, %v2883
      %v2889 = vmul.f32 1.0, %v2888
      %v2890 = vrcp.pop %v2736
      %v2891 = vmul.f32 %v2736, %v2890
      %v2892 = vsub.f32 1.0, %v2891
      %v2893 = vmul.f32 %v2890, %v2892
      %v2894 = vadd.f32 %v2890, %v2893
      %vm2895 = vweird.f32 %v2736
      %vm2896 = vweird.f32 %v2890
      %vm2897 = vmor %vm2895, %vm2896
      %v2898 = vsel %vm2897, %v2890, %v2894
      %v2899 = vand.u32 2147483647, %v2736
      %vm2900 = vcmp.eq.f32.partialorder %v2899, 8.507059e+37
      %v2901 = vand.u32 %v2736, 2147483648
      %v2902 = vor.u32 1.1754944e-38, %v2901
      %v2903 = vsel %vm2900, %v2902, %v2898
      %v2904 = vmul.f32 1.0, %v2903
      %v2905 = vrcp.pop %v2739
      %v2906 = vmul.f32 %v2739, %v2905
      %v2907 = vsub.f32 1.0, %v2906
      %v2908 = vmul.f32 %v2905, %v2907
      %v2909 = vadd.f32 %v2905, %v2908
      %vm2910 = vweird.f32 %v2739
      %vm2911 = vweird.f32 %v2905
      %vm2912 = vmor %vm2910, %vm2911
      %v2913 = vsel %vm2912, %v2905, %v2909
      %v2914 = vand.u32 2147483647, %v2739
      %vm2915 = vcmp.eq.f32.partialorder %v2914, 8.507059e+37
      %v2916 = vand.u32 %v2739, 2147483648
      %v2917 = vor.u32 1.1754944e-38, %v2916
      %v2918 = vsel %vm2915, %v2917, %v2913
      %v2919 = vmul.f32 1.0, %v2918
      %v2920 = vrcp.pop %v2742
      %v2921 = vmul.f32 %v2742, %v2920
      %v2922 = vsub.f32 1.0, %v2921
      %v2923 = vmul.f32 %v2920, %v2922
      %v2924 = vadd.f32 %v2920, %v2923
      %vm2925 = vweird.f32 %v2742
      %vm2926 = vweird.f32 %v2920
      %vm2927 = vmor %vm2925, %vm2926
      %v2928 = vsel %vm2927, %v2920, %v2924
      %v2929 = vand.u32 2147483647, %v2742
      %vm2930 = vcmp.eq.f32.partialorder %v2929, 8.507059e+37
      %v2931 = vand.u32 %v2742, 2147483648
      %v2932 = vor.u32 1.1754944e-38, %v2931
      %v2933 = vsel %vm2930, %v2932, %v2928
      %v2934 = vmul.f32 1.0, %v2933
      %v2935 = vrcp.pop %v2745
      %v2936 = vmul.f32 %v2745, %v2935
      %v2937 = vsub.f32 1.0, %v2936
      %v2938 = vmul.f32 %v2935, %v2937
      %v2939 = vadd.f32 %v2935, %v2938
      %vm2940 = vweird.f32 %v2745
      %vm2941 = vweird.f32 %v2935
      %vm2942 = vmor %vm2940, %vm2941
      %v2943 = vsel %vm2942, %v2935, %v2939
      %v2944 = vand.u32 2147483647, %v2745
      %vm2945 = vcmp.eq.f32.partialorder %v2944, 8.507059e+37
      %v2946 = vand.u32 %v2745, 2147483648
      %v2947 = vor.u32 1.1754944e-38, %v2946
      %v2948 = vsel %vm2945, %v2947, %v2943
      %v2949 = vmul.f32 1.0, %v2948
      %v2950 = vrcp.pop %v2748
      %v2951 = vmul.f32 %v2748, %v2950
      %v2952 = vsub.f32 1.0, %v2951
      %v2953 = vmul.f32 %v2950, %v2952
      %v2954 = vadd.f32 %v2950, %v2953
      %vm2955 = vweird.f32 %v2748
      %vm2956 = vweird.f32 %v2950
      %vm2957 = vmor %vm2955, %vm2956
      %v2958 = vsel %vm2957, %v2950, %v2954
      %v2959 = vand.u32 2147483647, %v2748
      %vm2960 = vcmp.eq.f32.partialorder %v2959, 8.507059e+37
      %v2961 = vand.u32 %v2748, 2147483648
      %v2962 = vor.u32 1.1754944e-38, %v2961
      %v2963 = vsel %vm2960, %v2962, %v2958
      %v2964 = vmul.f32 1.0, %v2963
      %v2965 = vrcp.pop %v2751
      %v2966 = vmul.f32 %v2751, %v2965
      %v2967 = vsub.f32 1.0, %v2966
      %v2968 = vmul.f32 %v2965, %v2967
      %v2969 = vadd.f32 %v2965, %v2968
      %vm2970 = vweird.f32 %v2751
      %vm2971 = vweird.f32 %v2965
      %vm2972 = vmor %vm2970, %vm2971
      %v2973 = vsel %vm2972, %v2965, %v2969
      %v2974 = vand.u32 2147483647, %v2751
      %vm2975 = vcmp.eq.f32.partialorder %v2974, 8.507059e+37
      %v2976 = vand.u32 %v2751, 2147483648
      %v2977 = vor.u32 1.1754944e-38, %v2976
      %v2978 = vsel %vm2975, %v2977, %v2973
      %v2979 = vmul.f32 1.0, %v2978
      %v2980 = vrcp.pop %v2754
      %v2981 = vmul.f32 %v2754, %v2980
      %v2982 = vsub.f32 1.0, %v2981
      %v2983 = vmul.f32 %v2980, %v2982
      %v2984 = vadd.f32 %v2980, %v2983
      %vm2985 = vweird.f32 %v2754
      %vm2986 = vweird.f32 %v2980
      %vm2987 = vmor %vm2985, %vm2986
      %v2988 = vsel %vm2987, %v2980, %v2984
      %v2989 = vand.u32 2147483647, %v2754
      %vm2990 = vcmp.eq.f32.partialorder %v2989, 8.507059e+37
      %v2991 = vand.u32 %v2754, 2147483648
      %v2992 = vor.u32 1.1754944e-38, %v2991
      %v2993 = vsel %vm2990, %v2992, %v2988
      %v2994 = vmul.f32 1.0, %v2993
      %v2995 = vrcp.pop %v2757
      %v2996 = vmul.f32 %v2757, %v2995
      %v2997 = vsub.f32 1.0, %v2996
      %v2998 = vmul.f32 %v2995, %v2997
      %v2999 = vadd.f32 %v2995, %v2998
      %vm3000 = vweird.f32 %v2757
      %vm3001 = vweird.f32 %v2995
      %vm3002 = vmor %vm3000, %vm3001
      %v3003 = vsel %vm3002, %v2995, %v2999
      %v3004 = vand.u32 2147483647, %v2757
      %vm3005 = vcmp.eq.f32.partialorder %v3004, 8.507059e+37
      %v3006 = vand.u32 %v2757, 2147483648
      %v3007 = vor.u32 1.1754944e-38, %v3006
      %v3008 = vsel %vm3005, %v3007, %v3003
      %v3009 = vmul.f32 1.0, %v3008
      %v3010 = vrcp.pop %v2760
      %v3011 = vmul.f32 %v2760, %v3010
      %v3012 = vsub.f32 1.0, %v3011
      %v3013 = vmul.f32 %v3010, %v3012
      %v3014 = vadd.f32 %v3010, %v3013
      %vm3015 = vweird.f32 %v2760
      %vm3016 = vweird.f32 %v3010
      %vm3017 = vmor %vm3015, %vm3016
      %v3018 = vsel %vm3017, %v3010, %v3014
      %v3019 = vand.u32 2147483647, %v2760
      %vm3020 = vcmp.eq.f32.partialorder %v3019, 8.507059e+37
      %v3021 = vand.u32 %v2760, 2147483648
      %v3022 = vor.u32 1.1754944e-38, %v3021
      %v3023 = vsel %vm3020, %v3022, %v3018
      %v3024 = vmul.f32 1.0, %v3023
      %v3025 = vrcp.pop %v2763
      %v3026 = vmul.f32 %v2763, %v3025
      %v3027 = vsub.f32 1.0, %v3026
      %v3028 = vmul.f32 %v3025, %v3027
      %v3029 = vadd.f32 %v3025, %v3028
      %vm3030 = vweird.f32 %v2763
      %vm3031 = vweird.f32 %v3025
      %vm3032 = vmor %vm3030, %vm3031
      %v3033 = vsel %vm3032, %v3025, %v3029
      %v3034 = vand.u32 2147483647, %v2763
      %vm3035 = vcmp.eq.f32.partialorder %v3034, 8.507059e+37
      %v3036 = vand.u32 %v2763, 2147483648
      %v3037 = vor.u32 1.1754944e-38, %v3036
      %v3038 = vsel %vm3035, %v3037, %v3033
      %v3039 = vmul.f32 1.0, %v3038
      %v3040 = vrcp.pop %v2766
      %v3041 = vmul.f32 %v2766, %v3040
      %v3042 = vsub.f32 1.0, %v3041
      %v3043 = vmul.f32 %v3040, %v3042
      %v3044 = vadd.f32 %v3040, %v3043
      %vm3045 = vweird.f32 %v2766
      %vm3046 = vweird.f32 %v3040
      %vm3047 = vmor %vm3045, %vm3046
      %v3048 = vsel %vm3047, %v3040, %v3044
      %v3049 = vand.u32 2147483647, %v2766
      %vm3050 = vcmp.eq.f32.partialorder %v3049, 8.507059e+37
      %v3051 = vand.u32 %v2766, 2147483648
      %v3052 = vor.u32 1.1754944e-38, %v3051
      %v3053 = vsel %vm3050, %v3052, %v3048
      %v3054 = vmul.f32 1.0, %v3053
      %v3055 = vrcp.pop %v2769
      %v3056 = vmul.f32 %v2769, %v3055
      %v3057 = vsub.f32 1.0, %v3056
      %v3058 = vmul.f32 %v3055, %v3057
      %v3059 = vadd.f32 %v3055, %v3058
      %vm3060 = vweird.f32 %v2769
      %vm3061 = vweird.f32 %v3055
      %vm3062 = vmor %vm3060, %vm3061
      %v3063 = vsel %vm3062, %v3055, %v3059
      %v3064 = vand.u32 2147483647, %v2769
      %vm3065 = vcmp.eq.f32.partialorder %v3064, 8.507059e+37
      %v3066 = vand.u32 %v2769, 2147483648
      %v3067 = vor.u32 1.1754944e-38, %v3066
      %v3068 = vsel %vm3065, %v3067, %v3063
      %v3069 = vmul.f32 1.0, %v3068
      %v3070 = vrcp.pop %v2772
      %v3071 = vmul.f32 %v2772, %v3070
      %v3072 = vsub.f32 1.0, %v3071
      %v3073 = vmul.f32 %v3070, %v3072
      %v3074 = vadd.f32 %v3070, %v3073
      %vm3075 = vweird.f32 %v2772
      %vm3076 = vweird.f32 %v3070
      %vm3077 = vmor %vm3075, %vm3076
      %v3078 = vsel %vm3077, %v3070, %v3074
      %v3079 = vand.u32 2147483647, %v2772
      %vm3080 = vcmp.eq.f32.partialorder %v3079, 8.507059e+37
      %v3081 = vand.u32 %v2772, 2147483648
      %v3082 = vor.u32 1.1754944e-38, %v3081
      %v3083 = vsel %vm3080, %v3082, %v3078
      %v3084 = vmul.f32 1.0, %v3083
      %v3085 = vrcp.pop %v2775
      %v3086 = vmul.f32 %v2775, %v3085
      %v3087 = vsub.f32 1.0, %v3086
      %v3088 = vmul.f32 %v3085, %v3087
      %v3089 = vadd.f32 %v3085, %v3088
      %vm3090 = vweird.f32 %v2775
      %vm3091 = vweird.f32 %v3085
      %vm3092 = vmor %vm3090, %vm3091
      %v3093 = vsel %vm3092, %v3085, %v3089
      %v3094 = vand.u32 2147483647, %v2775
      %vm3095 = vcmp.eq.f32.partialorder %v3094, 8.507059e+37
      %v3096 = vand.u32 %v2775, 2147483648
      %v3097 = vor.u32 1.1754944e-38, %v3096
      %v3098 = vsel %vm3095, %v3097, %v3093
      %v3099 = vmul.f32 1.0, %v3098
      %v3100 = vrcp.pop %v2778
      %v3101 = vmul.f32 %v2778, %v3100
      %v3102 = vsub.f32 1.0, %v3101
      %v3103 = vmul.f32 %v3100, %v3102
      %v3104 = vadd.f32 %v3100, %v3103
      %vm3105 = vweird.f32 %v2778
      %vm3106 = vweird.f32 %v3100
      %vm3107 = vmor %vm3105, %vm3106
      %v3108 = vsel %vm3107, %v3100, %v3104
      %v3109 = vand.u32 2147483647, %v2778
      %vm3110 = vcmp.eq.f32.partialorder %v3109, 8.507059e+37
      %v3111 = vand.u32 %v2778, 2147483648
      %v3112 = vor.u32 1.1754944e-38, %v3111
      %v3113 = vsel %vm3110, %v3112, %v3108
      %v3114 = vmul.f32 1.0, %v3113
      %v3115 = vrcp.pop %v2781
      %v3116 = vmul.f32 %v2781, %v3115
      %v3117 = vsub.f32 1.0, %v3116
      %v3118 = vmul.f32 %v3115, %v3117
      %v3119 = vadd.f32 %v3115, %v3118
      %vm3120 = vweird.f32 %v2781
      %vm3121 = vweird.f32 %v3115
      %vm3122 = vmor %vm3120, %vm3121
      %v3123 = vsel %vm3122, %v3115, %v3119
      %v3124 = vand.u32 2147483647, %v2781
      %vm3125 = vcmp.eq.f32.partialorder %v3124, 8.507059e+37
      %v3126 = vand.u32 %v2781, 2147483648
      %v3127 = vor.u32 1.1754944e-38, %v3126
      %v3128 = vsel %vm3125, %v3127, %v3123
      %v3129 = vmul.f32 1.0, %v3128
      %v3130 = vrcp.pop %v2784
      %v3131 = vmul.f32 %v2784, %v3130
      %v3132 = vsub.f32 1.0, %v3131
      %v3133 = vmul.f32 %v3130, %v3132
      %v3134 = vadd.f32 %v3130, %v3133
      %vm3135 = vweird.f32 %v2784
      %vm3136 = vweird.f32 %v3130
      %vm3137 = vmor %vm3135, %vm3136
      %v3138 = vsel %vm3137, %v3130, %v3134
      %v3139 = vand.u32 2147483647, %v2784
      %vm3140 = vcmp.eq.f32.partialorder %v3139, 8.507059e+37
      %v3141 = vand.u32 %v2784, 2147483648
      %v3142 = vor.u32 1.1754944e-38, %v3141
      %v3143 = vsel %vm3140, %v3142, %v3138
      %v3144 = vmul.f32 1.0, %v3143
      %v3145 = vrcp.pop %v2787
      %v3146 = vmul.f32 %v2787, %v3145
      %v3147 = vsub.f32 1.0, %v3146
      %v3148 = vmul.f32 %v3145, %v3147
      %v3149 = vadd.f32 %v3145, %v3148
      %vm3150 = vweird.f32 %v2787
      %vm3151 = vweird.f32 %v3145
      %vm3152 = vmor %vm3150, %vm3151
      %v3153 = vsel %vm3152, %v3145, %v3149
      %v3154 = vand.u32 2147483647, %v2787
      %vm3155 = vcmp.eq.f32.partialorder %v3154, 8.507059e+37
      %v3156 = vand.u32 %v2787, 2147483648
      %v3157 = vor.u32 1.1754944e-38, %v3156
      %v3158 = vsel %vm3155, %v3157, %v3153
      %v3159 = vmul.f32 1.0, %v3158
      %v3160 = vrcp.pop %v2790
      %v3161 = vmul.f32 %v2790, %v3160
      %v3162 = vsub.f32 1.0, %v3161
      %v3163 = vmul.f32 %v3160, %v3162
      %v3164 = vadd.f32 %v3160, %v3163
      %vm3165 = vweird.f32 %v2790
      %vm3166 = vweird.f32 %v3160
      %vm3167 = vmor %vm3165, %vm3166
      %v3168 = vsel %vm3167, %v3160, %v3164
      %v3169 = vand.u32 2147483647, %v2790
      %vm3170 = vcmp.eq.f32.partialorder %v3169, 8.507059e+37
      %v3171 = vand.u32 %v2790, 2147483648
      %v3172 = vor.u32 1.1754944e-38, %v3171
      %v3173 = vsel %vm3170, %v3172, %v3168
      %v3174 = vmul.f32 1.0, %v3173
      %v3175 = vrcp.pop %v2793
      %v3176 = vmul.f32 %v2793, %v3175
      %v3177 = vsub.f32 1.0, %v3176
      %v3178 = vmul.f32 %v3175, %v3177
      %v3179 = vadd.f32 %v3175, %v3178
      %vm3180 = vweird.f32 %v2793
      %vm3181 = vweird.f32 %v3175
      %vm3182 = vmor %vm3180, %vm3181
      %v3183 = vsel %vm3182, %v3175, %v3179
      %v3184 = vand.u32 2147483647, %v2793
      %vm3185 = vcmp.eq.f32.partialorder %v3184, 8.507059e+37
      %v3186 = vand.u32 %v2793, 2147483648
      %v3187 = vor.u32 1.1754944e-38, %v3186
      %v3188 = vsel %vm3185, %v3187, %v3183
      %v3189 = vmul.f32 1.0, %v3188
      %v3190 = vrcp.pop %v2796
      %v3191 = vmul.f32 %v2796, %v3190
      %v3192 = vsub.f32 1.0, %v3191
      %v3193 = vmul.f32 %v3190, %v3192
      %v3194 = vadd.f32 %v3190, %v3193
      %vm3195 = vweird.f32 %v2796
      %vm3196 = vweird.f32 %v3190
      %vm3197 = vmor %vm3195, %vm3196
      %v3198 = vsel %vm3197, %v3190, %v3194
      %v3199 = vand.u32 2147483647, %v2796
      %vm3200 = vcmp.eq.f32.partialorder %v3199, 8.507059e+37
      %v3201 = vand.u32 %v2796, 2147483648
      %v3202 = vor.u32 1.1754944e-38, %v3201
      %v3203 = vsel %vm3200, %v3202, %v3198
      %v3204 = vmul.f32 1.0, %v3203
      %v3205 = vrcp.pop %v2799
      %v3206 = vmul.f32 %v2799, %v3205
      %v3207 = vsub.f32 1.0, %v3206
      %v3208 = vmul.f32 %v3205, %v3207
      %v3209 = vadd.f32 %v3205, %v3208
      %vm3210 = vweird.f32 %v2799
      %vm3211 = vweird.f32 %v3205
      %vm3212 = vmor %vm3210, %vm3211
      %v3213 = vsel %vm3212, %v3205, %v3209
      %v3214 = vand.u32 2147483647, %v2799
      %vm3215 = vcmp.eq.f32.partialorder %v3214, 8.507059e+37
      %v3216 = vand.u32 %v2799, 2147483648
      %v3217 = vor.u32 1.1754944e-38, %v3216
      %v3218 = vsel %vm3215, %v3217, %v3213
      %v3219 = vmul.f32 1.0, %v3218
      %v3220 = vrcp.pop %v2802
      %v3221 = vmul.f32 %v2802, %v3220
      %v3222 = vsub.f32 1.0, %v3221
      %v3223 = vmul.f32 %v3220, %v3222
      %v3224 = vadd.f32 %v3220, %v3223
      %vm3225 = vweird.f32 %v2802
      %vm3226 = vweird.f32 %v3220
      %vm3227 = vmor %vm3225, %vm3226
      %v3228 = vsel %vm3227, %v3220, %v3224
      %v3229 = vand.u32 2147483647, %v2802
      %vm3230 = vcmp.eq.f32.partialorder %v3229, 8.507059e+37
      %v3231 = vand.u32 %v2802, 2147483648
      %v3232 = vor.u32 1.1754944e-38, %v3231
      %v3233 = vsel %vm3230, %v3232, %v3228
      %v3234 = vmul.f32 1.0, %v3233
      %v3235 = vrcp.pop %v2805
      %v3236 = vmul.f32 %v2805, %v3235
      %v3237 = vsub.f32 1.0, %v3236
      %v3238 = vmul.f32 %v3235, %v3237
      %v3239 = vadd.f32 %v3235, %v3238
      %vm3240 = vweird.f32 %v2805
      %vm3241 = vweird.f32 %v3235
      %vm3242 = vmor %vm3240, %vm3241
      %v3243 = vsel %vm3242, %v3235, %v3239
      %v3244 = vand.u32 2147483647, %v2805
      %vm3245 = vcmp.eq.f32.partialorder %v3244, 8.507059e+37
      %v3246 = vand.u32 %v2805, 2147483648
      %v3247 = vor.u32 1.1754944e-38, %v3246
      %v3248 = vsel %vm3245, %v3247, %v3243
      %v3249 = vmul.f32 1.0, %v3248
      %v3250 = vrcp.pop %v2808
      %v3251 = vmul.f32 %v2808, %v3250
      %v3252 = vsub.f32 1.0, %v3251
      %v3253 = vmul.f32 %v3250, %v3252
      %v3254 = vadd.f32 %v3250, %v3253
      %vm3255 = vweird.f32 %v2808
      %vm3256 = vweird.f32 %v3250
      %vm3257 = vmor %vm3255, %vm3256
      %v3258 = vsel %vm3257, %v3250, %v3254
      %v3259 = vand.u32 2147483647, %v2808
      %vm3260 = vcmp.eq.f32.partialorder %v3259, 8.507059e+37
      %v3261 = vand.u32 %v2808, 2147483648
      %v3262 = vor.u32 1.1754944e-38, %v3261
      %v3263 = vsel %vm3260, %v3262, %v3258
      %v3264 = vmul.f32 1.0, %v3263
      %v3265 = vrcp.pop %v2811
      %v3266 = vmul.f32 %v2811, %v3265
      %v3267 = vsub.f32 1.0, %v3266
      %v3268 = vmul.f32 %v3265, %v3267
      %v3269 = vadd.f32 %v3265, %v3268
      %vm3270 = vweird.f32 %v2811
      %vm3271 = vweird.f32 %v3265
      %vm3272 = vmor %vm3270, %vm3271
      %v3273 = vsel %vm3272, %v3265, %v3269
      %v3274 = vand.u32 2147483647, %v2811
      %vm3275 = vcmp.eq.f32.partialorder %v3274, 8.507059e+37
      %v3276 = vand.u32 %v2811, 2147483648
      %v3277 = vor.u32 1.1754944e-38, %v3276
      %v3278 = vsel %vm3275, %v3277, %v3273
      %v3279 = vmul.f32 1.0, %v3278
      %v3280 = vrcp.pop %v2814
      %v3281 = vmul.f32 %v2814, %v3280
      %v3282 = vsub.f32 1.0, %v3281
      %v3283 = vmul.f32 %v3280, %v3282
      %v3284 = vadd.f32 %v3280, %v3283
      %vm3285 = vweird.f32 %v2814
      %vm3286 = vweird.f32 %v3280
      %vm3287 = vmor %vm3285, %vm3286
      %v3288 = vsel %vm3287, %v3280, %v3284
      %v3289 = vand.u32 2147483647, %v2814
      %vm3290 = vcmp.eq.f32.partialorder %v3289, 8.507059e+37
      %v3291 = vand.u32 %v2814, 2147483648
      %v3292 = vor.u32 1.1754944e-38, %v3291
      %v3293 = vsel %vm3290, %v3292, %v3288
      %v3294 = vmul.f32 1.0, %v3293
      %v3295 = vmul.f32 %v2656, %v2829
      %v3296 = vmul.f32 %v2658, %v2844
      %v3297 = vmul.f32 %v2660, %v2859
      %v3298 = vmul.f32 %v2662, %v2874
      %v3299 = vmul.f32 %v2664, %v2889
      %v3300 = vmul.f32 %v2666, %v2904
      %v3301 = vmul.f32 %v2668, %v2919
      %v3302 = vmul.f32 %v2670, %v2934
      %v3303 = vmul.f32 %v2672, %v2949
      %v3304 = vmul.f32 %v2674, %v2964
      %v3305 = vmul.f32 %v2676, %v2979
      %v3306 = vmul.f32 %v2678, %v2994
      %v3307 = vmul.f32 %v2680, %v3009
      %v3308 = vmul.f32 %v2682, %v3024
      %v3309 = vmul.f32 %v2684, %v3039
      %v3310 = vmul.f32 %v2686, %v3054
      %v3311 = vmul.f32 %v2688, %v3069
      %v3312 = vmul.f32 %v2690, %v3084
      %v3313 = vmul.f32 %v2692, %v3099
      %v3314 = vmul.f32 %v2694, %v3114
      %v3315 = vmul.f32 %v2696, %v3129
      %v3316 = vmul.f32 %v2698, %v3144
      %v3317 = vmul.f32 %v2700, %v3159
      %v3318 = vmul.f32 %v2702, %v3174
      %v3319 = vmul.f32 %v2704, %v3189
      %v3320 = vmul.f32 %v2706, %v3204
      %v3321 = vmul.f32 %v2708, %v3219
      %v3322 = vmul.f32 %v2710, %v3234
      %v3323 = vmul.f32 %v2712, %v3249
      %v3324 = vmul.f32 %v2714, %v3264
      %v3325 = vmul.f32 %v2716, %v3279
      %v3326 = vmul.f32 %v2718, %v3294
      %v3327 = vpack.c.bf16 %v3295, %v3295
      %v3328 = vpack.c.bf16 %v3296, %v3296
      %v3329 = vpack.c.bf16 %v3297, %v3297
      %v3330 = vpack.c.bf16 %v3298, %v3298
      %v3331 = vpack.c.bf16 %v3299, %v3299
      %v3332 = vpack.c.bf16 %v3300, %v3300
      %v3333 = vpack.c.bf16 %v3301, %v3301
      %v3334 = vpack.c.bf16 %v3302, %v3302
      %v3335 = vpack.c.bf16 %v3303, %v3303
      %v3336 = vpack.c.bf16 %v3304, %v3304
      %v3337 = vpack.c.bf16 %v3305, %v3305
      %v3338 = vpack.c.bf16 %v3306, %v3306
      %v3339 = vpack.c.bf16 %v3307, %v3307
      %v3340 = vpack.c.bf16 %v3308, %v3308
      %v3341 = vpack.c.bf16 %v3309, %v3309
      %v3342 = vpack.c.bf16 %v3310, %v3310
      %v3343 = vpack.c.bf16 %v3311, %v3311
      %v3344 = vpack.c.bf16 %v3312, %v3312
      %v3345 = vpack.c.bf16 %v3313, %v3313
      %v3346 = vpack.c.bf16 %v3314, %v3314
      %v3347 = vpack.c.bf16 %v3315, %v3315
      %v3348 = vpack.c.bf16 %v3316, %v3316
      %v3349 = vpack.c.bf16 %v3317, %v3317
      %v3350 = vpack.c.bf16 %v3318, %v3318
      %v3351 = vpack.c.bf16 %v3319, %v3319
      %v3352 = vpack.c.bf16 %v3320, %v3320
      %v3353 = vpack.c.bf16 %v3321, %v3321
      %v3354 = vpack.c.bf16 %v3322, %v3322
      %v3355 = vpack.c.bf16 %v3323, %v3323
      %v3356 = vpack.c.bf16 %v3324, %v3324
      %v3357 = vpack.c.bf16 %v3325, %v3325
      %v3358 = vpack.c.bf16 %v3326, %v3326
      %v3361 = vunpack.c.l.b16 %v3327
      %v3362 = vunpack.c.l.b16 %v3328
      %v3363 = vpack.c.b16 %v3362, %v3361
      %3364 = vrot.lane.b32.xlu0 %v481, 56
      %v3365 = vpop.permute.xlu0 %3364
      %v3368 = vsel %vm910, %v3363, 0
      %3370 = vmatpush.bf16.msra.mxu0 0
      %3371 = vmatpush.bf16.msra.mxu0 0
      %3372 = vmatpush.bf16.msra.mxu0 0
      %3373 = vmatpush.bf16.msra.mxu0 0
      %3374 = vmatpush.bf16.msra.mxu0 0
      %3375 = vmatpush.bf16.msra.mxu0 0
      %3376 = vmatpush.bf16.msra.mxu0 0
      %3377 = vmatpush.bf16.msra.mxu0 %v3365
      %3378 = vmatmul.bf16.gmra.mxu0 %v3368
      %v3379 = vpop.f32.mrf.mxu0
      %v3380 = vadd.f32 0.0, %v3379
      %v3381 = vpop.f32.mrf.mxu0
      %v3382 = vadd.f32 0.0, %v3381
      %3383 = vdwg.mxu0
      %v3386 = vunpack.c.l.b16 %v3329
      %v3387 = vunpack.c.l.b16 %v3330
      %v3388 = vpack.c.b16 %v3387, %v3386
      %3389 = vrot.lane.b32.xlu0 %v509, 56
      %v3390 = vpop.permute.xlu0 %3389
      %v3393 = vsel %vm910, %v3388, 0
      %3395 = vmatpush.bf16.msra.mxu0 0
      %3396 = vmatpush.bf16.msra.mxu0 0
      %3397 = vmatpush.bf16.msra.mxu0 0
      %3398 = vmatpush.bf16.msra.mxu0 0
      %3399 = vmatpush.bf16.msra.mxu0 0
      %3400 = vmatpush.bf16.msra.mxu0 0
      %3401 = vmatpush.bf16.msra.mxu0 0
      %3402 = vmatpush.bf16.msra.mxu0 %v3390
      %3403 = vmatmul.bf16.gmra.mxu0 %v3393
      %v3404 = vpop.f32.mrf.mxu0
      %v3405 = vadd.f32 0.0, %v3404
      %v3406 = vpop.f32.mrf.mxu0
      %v3407 = vadd.f32 0.0, %v3406
      %3408 = vdwg.mxu0
      %v3411 = vunpack.c.l.b16 %v3331
      %v3412 = vunpack.c.l.b16 %v3332
      %v3413 = vpack.c.b16 %v3412, %v3411
      %3414 = vrot.lane.b32.xlu0 %v536, 56
      %v3415 = vpop.permute.xlu0 %3414
      %v3418 = vsel %vm910, %v3413, 0
      %3420 = vmatpush.bf16.msra.mxu0 0
      %3421 = vmatpush.bf16.msra.mxu0 0
      %3422 = vmatpush.bf16.msra.mxu0 0
      %3423 = vmatpush.bf16.msra.mxu0 0
      %3424 = vmatpush.bf16.msra.mxu0 0
      %3425 = vmatpush.bf16.msra.mxu0 0
      %3426 = vmatpush.bf16.msra.mxu0 0
      %3427 = vmatpush.bf16.msra.mxu0 %v3415
      %3428 = vmatmul.bf16.gmra.mxu0 %v3418
      %v3429 = vpop.f32.mrf.mxu0
      %v3430 = vadd.f32 0.0, %v3429
      %v3431 = vpop.f32.mrf.mxu0
      %v3432 = vadd.f32 0.0, %v3431
      %3433 = vdwg.mxu0
      %v3436 = vunpack.c.l.b16 %v3333
      %v3437 = vunpack.c.l.b16 %v3334
      %v3438 = vpack.c.b16 %v3437, %v3436
      %3439 = vrot.lane.b32.xlu0 %v563, 56
      %v3440 = vpop.permute.xlu0 %3439
      %v3443 = vsel %vm910, %v3438, 0
      %3445 = vmatpush.bf16.msra.mxu0 0
      %3446 = vmatpush.bf16.msra.mxu0 0
      %3447 = vmatpush.bf16.msra.mxu0 0
      %3448 = vmatpush.bf16.msra.mxu0 0
      %3449 = vmatpush.bf16.msra.mxu0 0
      %3450 = vmatpush.bf16.msra.mxu0 0
      %3451 = vmatpush.bf16.msra.mxu0 0
      %3452 = vmatpush.bf16.msra.mxu0 %v3440
      %3453 = vmatmul.bf16.gmra.mxu0 %v3443
      %v3454 = vpop.f32.mrf.mxu0
      %v3455 = vadd.f32 0.0, %v3454
      %v3456 = vpop.f32.mrf.mxu0
      %v3457 = vadd.f32 0.0, %v3456
      %3458 = vdwg.mxu0
      %v3461 = vunpack.c.l.b16 %v3335
      %v3462 = vunpack.c.l.b16 %v3336
      %v3463 = vpack.c.b16 %v3462, %v3461
      %3464 = vrot.lane.b32.xlu0 %v590, 56
      %v3465 = vpop.permute.xlu0 %3464
      %v3468 = vsel %vm910, %v3463, 0
      %3470 = vmatpush.bf16.msra.mxu0 0
      %3471 = vmatpush.bf16.msra.mxu0 0
      %3472 = vmatpush.bf16.msra.mxu0 0
      %3473 = vmatpush.bf16.msra.mxu0 0
      %3474 = vmatpush.bf16.msra.mxu0 0
      %3475 = vmatpush.bf16.msra.mxu0 0
      %3476 = vmatpush.bf16.msra.mxu0 0
      %3477 = vmatpush.bf16.msra.mxu0 %v3465
      %3478 = vmatmul.bf16.gmra.mxu0 %v3468
      %v3479 = vpop.f32.mrf.mxu0
      %v3480 = vadd.f32 0.0, %v3479
      %v3481 = vpop.f32.mrf.mxu0
      %v3482 = vadd.f32 0.0, %v3481
      %3483 = vdwg.mxu0
      %v3486 = vunpack.c.l.b16 %v3337
      %v3487 = vunpack.c.l.b16 %v3338
      %v3488 = vpack.c.b16 %v3487, %v3486
      %3489 = vrot.lane.b32.xlu0 %v617, 56
      %v3490 = vpop.permute.xlu0 %3489
      %v3493 = vsel %vm910, %v3488, 0
      %3495 = vmatpush.bf16.msra.mxu0 0
      %3496 = vmatpush.bf16.msra.mxu0 0
      %3497 = vmatpush.bf16.msra.mxu0 0
      %3498 = vmatpush.bf16.msra.mxu0 0
      %3499 = vmatpush.bf16.msra.mxu0 0
      %3500 = vmatpush.bf16.msra.mxu0 0
      %3501 = vmatpush.bf16.msra.mxu0 0
      %3502 = vmatpush.bf16.msra.mxu0 %v3490
      %3503 = vmatmul.bf16.gmra.mxu0 %v3493
      %v3504 = vpop.f32.mrf.mxu0
      %v3505 = vadd.f32 0.0, %v3504
      %v3506 = vpop.f32.mrf.mxu0
      %v3507 = vadd.f32 0.0, %v3506
      %3508 = vdwg.mxu0
      %v3511 = vunpack.c.l.b16 %v3339
      %v3512 = vunpack.c.l.b16 %v3340
      %v3513 = vpack.c.b16 %v3512, %v3511
      %3514 = vrot.lane.b32.xlu0 %v644, 56
      %v3515 = vpop.permute.xlu0 %3514
      %v3518 = vsel %vm910, %v3513, 0
      %3520 = vmatpush.bf16.msra.mxu0 0
      %3521 = vmatpush.bf16.msra.mxu0 0
      %3522 = vmatpush.bf16.msra.mxu0 0
      %3523 = vmatpush.bf16.msra.mxu0 0
      %3524 = vmatpush.bf16.msra.mxu0 0
      %3525 = vmatpush.bf16.msra.mxu0 0
      %3526 = vmatpush.bf16.msra.mxu0 0
      %3527 = vmatpush.bf16.msra.mxu0 %v3515
      %3528 = vmatmul.bf16.gmra.mxu0 %v3518
      %v3529 = vpop.f32.mrf.mxu0
      %v3530 = vadd.f32 0.0, %v3529
      %v3531 = vpop.f32.mrf.mxu0
      %v3532 = vadd.f32 0.0, %v3531
      %3533 = vdwg.mxu0
      %v3536 = vunpack.c.l.b16 %v3341
      %v3537 = vunpack.c.l.b16 %v3342
      %v3538 = vpack.c.b16 %v3537, %v3536
      %3539 = vrot.lane.b32.xlu0 %v671, 56
      %v3540 = vpop.permute.xlu0 %3539
      %v3543 = vsel %vm910, %v3538, 0
      %3545 = vmatpush.bf16.msra.mxu0 0
      %3546 = vmatpush.bf16.msra.mxu0 0
      %3547 = vmatpush.bf16.msra.mxu0 0
      %3548 = vmatpush.bf16.msra.mxu0 0
      %3549 = vmatpush.bf16.msra.mxu0 0
      %3550 = vmatpush.bf16.msra.mxu0 0
      %3551 = vmatpush.bf16.msra.mxu0 0
      %3552 = vmatpush.bf16.msra.mxu0 %v3540
      %3553 = vmatmul.bf16.gmra.mxu0 %v3543
      %v3554 = vpop.f32.mrf.mxu0
      %v3555 = vadd.f32 0.0, %v3554
      %v3556 = vpop.f32.mrf.mxu0
      %v3557 = vadd.f32 0.0, %v3556
      %3558 = vdwg.mxu0
      %v3561 = vunpack.c.l.b16 %v3343
      %v3562 = vunpack.c.l.b16 %v3344
      %v3563 = vpack.c.b16 %v3562, %v3561
      %3564 = vrot.lane.b32.xlu0 %v698, 56
      %v3565 = vpop.permute.xlu0 %3564
      %v3568 = vsel %vm910, %v3563, 0
      %3570 = vmatpush.bf16.msra.mxu0 0
      %3571 = vmatpush.bf16.msra.mxu0 0
      %3572 = vmatpush.bf16.msra.mxu0 0
      %3573 = vmatpush.bf16.msra.mxu0 0
      %3574 = vmatpush.bf16.msra.mxu0 0
      %3575 = vmatpush.bf16.msra.mxu0 0
      %3576 = vmatpush.bf16.msra.mxu0 0
      %3577 = vmatpush.bf16.msra.mxu0 %v3565
      %3578 = vmatmul.bf16.gmra.mxu0 %v3568
      %v3579 = vpop.f32.mrf.mxu0
      %v3580 = vadd.f32 0.0, %v3579
      %v3581 = vpop.f32.mrf.mxu0
      %v3582 = vadd.f32 0.0, %v3581
      %3583 = vdwg.mxu0
      %v3586 = vunpack.c.l.b16 %v3345
      %v3587 = vunpack.c.l.b16 %v3346
      %v3588 = vpack.c.b16 %v3587, %v3586
      %3589 = vrot.lane.b32.xlu0 %v725, 56
      %v3590 = vpop.permute.xlu0 %3589
      %v3593 = vsel %vm910, %v3588, 0
      %3595 = vmatpush.bf16.msra.mxu0 0
      %3596 = vmatpush.bf16.msra.mxu0 0
      %3597 = vmatpush.bf16.msra.mxu0 0
      %3598 = vmatpush.bf16.msra.mxu0 0
      %3599 = vmatpush.bf16.msra.mxu0 0
      %3600 = vmatpush.bf16.msra.mxu0 0
      %3601 = vmatpush.bf16.msra.mxu0 0
      %3602 = vmatpush.bf16.msra.mxu0 %v3590
      %3603 = vmatmul.bf16.gmra.mxu0 %v3593
      %v3604 = vpop.f32.mrf.mxu0
      %v3605 = vadd.f32 0.0, %v3604
      %v3606 = vpop.f32.mrf.mxu0
      %v3607 = vadd.f32 0.0, %v3606
      %3608 = vdwg.mxu0
      %v3611 = vunpack.c.l.b16 %v3347
      %v3612 = vunpack.c.l.b16 %v3348
      %v3613 = vpack.c.b16 %v3612, %v3611
      %3614 = vrot.lane.b32.xlu0 %v752, 56
      %v3615 = vpop.permute.xlu0 %3614
      %v3618 = vsel %vm910, %v3613, 0
      %3620 = vmatpush.bf16.msra.mxu0 0
      %3621 = vmatpush.bf16.msra.mxu0 0
      %3622 = vmatpush.bf16.msra.mxu0 0
      %3623 = vmatpush.bf16.msra.mxu0 0
      %3624 = vmatpush.bf16.msra.mxu0 0
      %3625 = vmatpush.bf16.msra.mxu0 0
      %3626 = vmatpush.bf16.msra.mxu0 0
      %3627 = vmatpush.bf16.msra.mxu0 %v3615
      %3628 = vmatmul.bf16.gmra.mxu0 %v3618
      %v3629 = vpop.f32.mrf.mxu0
      %v3630 = vadd.f32 0.0, %v3629
      %v3631 = vpop.f32.mrf.mxu0
      %v3632 = vadd.f32 0.0, %v3631
      %3633 = vdwg.mxu0
      %v3636 = vunpack.c.l.b16 %v3349
      %v3637 = vunpack.c.l.b16 %v3350
      %v3638 = vpack.c.b16 %v3637, %v3636
      %3639 = vrot.lane.b32.xlu0 %v779, 56
      %v3640 = vpop.permute.xlu0 %3639
      %v3643 = vsel %vm910, %v3638, 0
      %3645 = vmatpush.bf16.msra.mxu0 0
      %3646 = vmatpush.bf16.msra.mxu0 0
      %3647 = vmatpush.bf16.msra.mxu0 0
      %3648 = vmatpush.bf16.msra.mxu0 0
      %3649 = vmatpush.bf16.msra.mxu0 0
      %3650 = vmatpush.bf16.msra.mxu0 0
      %3651 = vmatpush.bf16.msra.mxu0 0
      %3652 = vmatpush.bf16.msra.mxu0 %v3640
      %3653 = vmatmul.bf16.gmra.mxu0 %v3643
      %v3654 = vpop.f32.mrf.mxu0
      %v3655 = vadd.f32 0.0, %v3654
      %v3656 = vpop.f32.mrf.mxu0
      %v3657 = vadd.f32 0.0, %v3656
      %3658 = vdwg.mxu0
      %v3661 = vunpack.c.l.b16 %v3351
      %v3662 = vunpack.c.l.b16 %v3352
      %v3663 = vpack.c.b16 %v3662, %v3661
      %3664 = vrot.lane.b32.xlu0 %v806, 56
      %v3665 = vpop.permute.xlu0 %3664
      %v3668 = vsel %vm910, %v3663, 0
      %3670 = vmatpush.bf16.msra.mxu0 0
      %3671 = vmatpush.bf16.msra.mxu0 0
      %3672 = vmatpush.bf16.msra.mxu0 0
      %3673 = vmatpush.bf16.msra.mxu0 0
      %3674 = vmatpush.bf16.msra.mxu0 0
      %3675 = vmatpush.bf16.msra.mxu0 0
      %3676 = vmatpush.bf16.msra.mxu0 0
      %3677 = vmatpush.bf16.msra.mxu0 %v3665
      %3678 = vmatmul.bf16.gmra.mxu0 %v3668
      %v3679 = vpop.f32.mrf.mxu0
      %v3680 = vadd.f32 0.0, %v3679
      %v3681 = vpop.f32.mrf.mxu0
      %v3682 = vadd.f32 0.0, %v3681
      %3683 = vdwg.mxu0
      %v3686 = vunpack.c.l.b16 %v3353
      %v3687 = vunpack.c.l.b16 %v3354
      %v3688 = vpack.c.b16 %v3687, %v3686
      %3689 = vrot.lane.b32.xlu0 %v833, 56
      %v3690 = vpop.permute.xlu0 %3689
      %v3693 = vsel %vm910, %v3688, 0
      %3695 = vmatpush.bf16.msra.mxu0 0
      %3696 = vmatpush.bf16.msra.mxu0 0
      %3697 = vmatpush.bf16.msra.mxu0 0
      %3698 = vmatpush.bf16.msra.mxu0 0
      %3699 = vmatpush.bf16.msra.mxu0 0
      %3700 = vmatpush.bf16.msra.mxu0 0
      %3701 = vmatpush.bf16.msra.mxu0 0
      %3702 = vmatpush.bf16.msra.mxu0 %v3690
      %3703 = vmatmul.bf16.gmra.mxu0 %v3693
      %v3704 = vpop.f32.mrf.mxu0
      %v3705 = vadd.f32 0.0, %v3704
      %v3706 = vpop.f32.mrf.mxu0
      %v3707 = vadd.f32 0.0, %v3706
      %3708 = vdwg.mxu0
      %v3711 = vunpack.c.l.b16 %v3355
      %v3712 = vunpack.c.l.b16 %v3356
      %v3713 = vpack.c.b16 %v3712, %v3711
      %3714 = vrot.lane.b32.xlu0 %v860, 56
      %v3715 = vpop.permute.xlu0 %3714
      %v3718 = vsel %vm910, %v3713, 0
      %3720 = vmatpush.bf16.msra.mxu0 0
      %3721 = vmatpush.bf16.msra.mxu0 0
      %3722 = vmatpush.bf16.msra.mxu0 0
      %3723 = vmatpush.bf16.msra.mxu0 0
      %3724 = vmatpush.bf16.msra.mxu0 0
      %3725 = vmatpush.bf16.msra.mxu0 0
      %3726 = vmatpush.bf16.msra.mxu0 0
      %3727 = vmatpush.bf16.msra.mxu0 %v3715
      %3728 = vmatmul.bf16.gmra.mxu0 %v3718
      %v3729 = vpop.f32.mrf.mxu0
      %v3730 = vadd.f32 0.0, %v3729
      %v3731 = vpop.f32.mrf.mxu0
      %v3732 = vadd.f32 0.0, %v3731
      %3733 = vdwg.mxu0
      %v3736 = vunpack.c.l.b16 %v3357
      %v3737 = vunpack.c.l.b16 %v3358
      %v3738 = vpack.c.b16 %v3737, %v3736
      %3739 = vrot.lane.b32.xlu0 %v887, 56
      %v3740 = vpop.permute.xlu0 %3739
      %v3743 = vsel %vm910, %v3738, 0
      %3745 = vmatpush.bf16.msra.mxu0 0
      %3746 = vmatpush.bf16.msra.mxu0 0
      %3747 = vmatpush.bf16.msra.mxu0 0
      %3748 = vmatpush.bf16.msra.mxu0 0
      %3749 = vmatpush.bf16.msra.mxu0 0
      %3750 = vmatpush.bf16.msra.mxu0 0
      %3751 = vmatpush.bf16.msra.mxu0 0
      %3752 = vmatpush.bf16.msra.mxu0 %v3740
      %3753 = vmatmul.bf16.gmra.mxu0 %v3743
      %v3754 = vpop.f32.mrf.mxu0
      %v3755 = vadd.f32 0.0, %v3754
      %v3756 = vpop.f32.mrf.mxu0
      %v3757 = vadd.f32 0.0, %v3756
      %3758 = vdwg.mxu0
      %3759 = vrot.lane.b32.xlu0 %v481, 112
      %v3760 = vpop.permute.xlu0 %3759
      %3761 = vrot.lane.b32.xlu0 %v481, 80
      %v3762 = vpop.permute.xlu0 %3761
      %v3764 = vsel %vm484, %v3760, 0
      %v3767 = vsel %vm484, %v3762, 0
      %3769 = vmatpush.bf16.xpose.msra.mxu0 0
      %3770 = vmatpush.bf16.xpose.msra.mxu0 0
      %3771 = vmatpush.bf16.xpose.msra.mxu0 0
      %3772 = vmatpush.bf16.xpose.msra.mxu0 0
      %3773 = vmatpush.bf16.xpose.msra.mxu0 0
      %3774 = vmatpush.bf16.xpose.msra.mxu0 0
      %3775 = vmatpush.bf16.xpose.msra.mxu0 0
      %3776 = vmatpush.bf16.xpose.msra.mxu0 %v3767
      %3777 = vmatmul.bf16.gmra.mxu0 %v3764
      %v3778 = vpop.f32.mrf.mxu0
      %v3779 = vadd.f32 0.0, %v3778
      %v3780 = vpop.f32.mrf.mxu0
      %v3781 = vadd.f32 0.0, %v3780
      %3782 = vdwg.mxu0
      %3783 = vrot.lane.b32.xlu0 %v509, 112
      %v3784 = vpop.permute.xlu0 %3783
      %3785 = vrot.lane.b32.xlu0 %v509, 80
      %v3786 = vpop.permute.xlu0 %3785
      %v3788 = vsel %vm484, %v3784, 0
      %v3791 = vsel %vm484, %v3786, 0
      %3793 = vmatpush.bf16.xpose.msra.mxu0 0
      %3794 = vmatpush.bf16.xpose.msra.mxu0 0
      %3795 = vmatpush.bf16.xpose.msra.mxu0 0
      %3796 = vmatpush.bf16.xpose.msra.mxu0 0
      %3797 = vmatpush.bf16.xpose.msra.mxu0 0
      %3798 = vmatpush.bf16.xpose.msra.mxu0 0
      %3799 = vmatpush.bf16.xpose.msra.mxu0 0
      %3800 = vmatpush.bf16.xpose.msra.mxu0 %v3791
      %3801 = vmatmul.bf16.gmra.mxu0 %v3788
      %v3802 = vpop.f32.mrf.mxu0
      %v3803 = vadd.f32 0.0, %v3802
      %v3804 = vpop.f32.mrf.mxu0
      %v3805 = vadd.f32 0.0, %v3804
      %3806 = vdwg.mxu0
      %3807 = vrot.lane.b32.xlu0 %v536, 112
      %v3808 = vpop.permute.xlu0 %3807
      %3809 = vrot.lane.b32.xlu0 %v536, 80
      %v3810 = vpop.permute.xlu0 %3809
      %v3812 = vsel %vm484, %v3808, 0
      %v3815 = vsel %vm484, %v3810, 0
      %3817 = vmatpush.bf16.xpose.msra.mxu0 0
      %3818 = vmatpush.bf16.xpose.msra.mxu0 0
      %3819 = vmatpush.bf16.xpose.msra.mxu0 0
      %3820 = vmatpush.bf16.xpose.msra.mxu0 0
      %3821 = vmatpush.bf16.xpose.msra.mxu0 0
      %3822 = vmatpush.bf16.xpose.msra.mxu0 0
      %3823 = vmatpush.bf16.xpose.msra.mxu0 0
      %3824 = vmatpush.bf16.xpose.msra.mxu0 %v3815
      %3825 = vmatmul.bf16.gmra.mxu0 %v3812
      %v3826 = vpop.f32.mrf.mxu0
      %v3827 = vadd.f32 0.0, %v3826
      %v3828 = vpop.f32.mrf.mxu0
      %v3829 = vadd.f32 0.0, %v3828
      %3830 = vdwg.mxu0
      %3831 = vrot.lane.b32.xlu0 %v563, 112
      %v3832 = vpop.permute.xlu0 %3831
      %3833 = vrot.lane.b32.xlu0 %v563, 80
      %v3834 = vpop.permute.xlu0 %3833
      %v3836 = vsel %vm484, %v3832, 0
      %v3839 = vsel %vm484, %v3834, 0
      %3841 = vmatpush.bf16.xpose.msra.mxu0 0
      %3842 = vmatpush.bf16.xpose.msra.mxu0 0
      %3843 = vmatpush.bf16.xpose.msra.mxu0 0
      %3844 = vmatpush.bf16.xpose.msra.mxu0 0
      %3845 = vmatpush.bf16.xpose.msra.mxu0 0
      %3846 = vmatpush.bf16.xpose.msra.mxu0 0
      %3847 = vmatpush.bf16.xpose.msra.mxu0 0
      %3848 = vmatpush.bf16.xpose.msra.mxu0 %v3839
      %3849 = vmatmul.bf16.gmra.mxu0 %v3836
      %v3850 = vpop.f32.mrf.mxu0
      %v3851 = vadd.f32 0.0, %v3850
      %v3852 = vpop.f32.mrf.mxu0
      %v3853 = vadd.f32 0.0, %v3852
      %3854 = vdwg.mxu0
      %3855 = vrot.lane.b32.xlu0 %v590, 112
      %v3856 = vpop.permute.xlu0 %3855
      %3857 = vrot.lane.b32.xlu0 %v590, 80
      %v3858 = vpop.permute.xlu0 %3857
      %v3860 = vsel %vm484, %v3856, 0
      %v3863 = vsel %vm484, %v3858, 0
      %3865 = vmatpush.bf16.xpose.msra.mxu0 0
      %3866 = vmatpush.bf16.xpose.msra.mxu0 0
      %3867 = vmatpush.bf16.xpose.msra.mxu0 0
      %3868 = vmatpush.bf16.xpose.msra.mxu0 0
      %3869 = vmatpush.bf16.xpose.msra.mxu0 0
      %3870 = vmatpush.bf16.xpose.msra.mxu0 0
      %3871 = vmatpush.bf16.xpose.msra.mxu0 0
      %3872 = vmatpush.bf16.xpose.msra.mxu0 %v3863
      %3873 = vmatmul.bf16.gmra.mxu0 %v3860
      %v3874 = vpop.f32.mrf.mxu0
      %v3875 = vadd.f32 0.0, %v3874
      %v3876 = vpop.f32.mrf.mxu0
      %v3877 = vadd.f32 0.0, %v3876
      %3878 = vdwg.mxu0
      %3879 = vrot.lane.b32.xlu0 %v617, 112
      %v3880 = vpop.permute.xlu0 %3879
      %3881 = vrot.lane.b32.xlu0 %v617, 80
      %v3882 = vpop.permute.xlu0 %3881
      %v3884 = vsel %vm484, %v3880, 0
      %v3887 = vsel %vm484, %v3882, 0
      %3889 = vmatpush.bf16.xpose.msra.mxu0 0
      %3890 = vmatpush.bf16.xpose.msra.mxu0 0
      %3891 = vmatpush.bf16.xpose.msra.mxu0 0
      %3892 = vmatpush.bf16.xpose.msra.mxu0 0
      %3893 = vmatpush.bf16.xpose.msra.mxu0 0
      %3894 = vmatpush.bf16.xpose.msra.mxu0 0
      %3895 = vmatpush.bf16.xpose.msra.mxu0 0
      %3896 = vmatpush.bf16.xpose.msra.mxu0 %v3887
      %3897 = vmatmul.bf16.gmra.mxu0 %v3884
      %v3898 = vpop.f32.mrf.mxu0
      %v3899 = vadd.f32 0.0, %v3898
      %v3900 = vpop.f32.mrf.mxu0
      %v3901 = vadd.f32 0.0, %v3900
      %3902 = vdwg.mxu0
      %3903 = vrot.lane.b32.xlu0 %v644, 112
      %v3904 = vpop.permute.xlu0 %3903
      %3905 = vrot.lane.b32.xlu0 %v644, 80
      %v3906 = vpop.permute.xlu0 %3905
      %v3908 = vsel %vm484, %v3904, 0
      %v3911 = vsel %vm484, %v3906, 0
      %3913 = vmatpush.bf16.xpose.msra.mxu0 0
      %3914 = vmatpush.bf16.xpose.msra.mxu0 0
      %3915 = vmatpush.bf16.xpose.msra.mxu0 0
      %3916 = vmatpush.bf16.xpose.msra.mxu0 0
      %3917 = vmatpush.bf16.xpose.msra.mxu0 0
      %3918 = vmatpush.bf16.xpose.msra.mxu0 0
      %3919 = vmatpush.bf16.xpose.msra.mxu0 0
      %3920 = vmatpush.bf16.xpose.msra.mxu0 %v3911
      %3921 = vmatmul.bf16.gmra.mxu0 %v3908
      %v3922 = vpop.f32.mrf.mxu0
      %v3923 = vadd.f32 0.0, %v3922
      %v3924 = vpop.f32.mrf.mxu0
      %v3925 = vadd.f32 0.0, %v3924
      %3926 = vdwg.mxu0
      %3927 = vrot.lane.b32.xlu0 %v671, 112
      %v3928 = vpop.permute.xlu0 %3927
      %3929 = vrot.lane.b32.xlu0 %v671, 80
      %v3930 = vpop.permute.xlu0 %3929
      %v3932 = vsel %vm484, %v3928, 0
      %v3935 = vsel %vm484, %v3930, 0
      %3937 = vmatpush.bf16.xpose.msra.mxu0 0
      %3938 = vmatpush.bf16.xpose.msra.mxu0 0
      %3939 = vmatpush.bf16.xpose.msra.mxu0 0
      %3940 = vmatpush.bf16.xpose.msra.mxu0 0
      %3941 = vmatpush.bf16.xpose.msra.mxu0 0
      %3942 = vmatpush.bf16.xpose.msra.mxu0 0
      %3943 = vmatpush.bf16.xpose.msra.mxu0 0
      %3944 = vmatpush.bf16.xpose.msra.mxu0 %v3935
      %3945 = vmatmul.bf16.gmra.mxu0 %v3932
      %v3946 = vpop.f32.mrf.mxu0
      %v3947 = vadd.f32 0.0, %v3946
      %v3948 = vpop.f32.mrf.mxu0
      %v3949 = vadd.f32 0.0, %v3948
      %3950 = vdwg.mxu0
      %3951 = vrot.lane.b32.xlu0 %v698, 112
      %v3952 = vpop.permute.xlu0 %3951
      %3953 = vrot.lane.b32.xlu0 %v698, 80
      %v3954 = vpop.permute.xlu0 %3953
      %v3956 = vsel %vm484, %v3952, 0
      %v3959 = vsel %vm484, %v3954, 0
      %3961 = vmatpush.bf16.xpose.msra.mxu0 0
      %3962 = vmatpush.bf16.xpose.msra.mxu0 0
      %3963 = vmatpush.bf16.xpose.msra.mxu0 0
      %3964 = vmatpush.bf16.xpose.msra.mxu0 0
      %3965 = vmatpush.bf16.xpose.msra.mxu0 0
      %3966 = vmatpush.bf16.xpose.msra.mxu0 0
      %3967 = vmatpush.bf16.xpose.msra.mxu0 0
      %3968 = vmatpush.bf16.xpose.msra.mxu0 %v3959
      %3969 = vmatmul.bf16.gmra.mxu0 %v3956
      %v3970 = vpop.f32.mrf.mxu0
      %v3971 = vadd.f32 0.0, %v3970
      %v3972 = vpop.f32.mrf.mxu0
      %v3973 = vadd.f32 0.0, %v3972
      %3974 = vdwg.mxu0
      %3975 = vrot.lane.b32.xlu0 %v725, 112
      %v3976 = vpop.permute.xlu0 %3975
      %3977 = vrot.lane.b32.xlu0 %v725, 80
      %v3978 = vpop.permute.xlu0 %3977
      %v3980 = vsel %vm484, %v3976, 0
      %v3983 = vsel %vm484, %v3978, 0
      %3985 = vmatpush.bf16.xpose.msra.mxu0 0
      %3986 = vmatpush.bf16.xpose.msra.mxu0 0
      %3987 = vmatpush.bf16.xpose.msra.mxu0 0
      %3988 = vmatpush.bf16.xpose.msra.mxu0 0
      %3989 = vmatpush.bf16.xpose.msra.mxu0 0
      %3990 = vmatpush.bf16.xpose.msra.mxu0 0
      %3991 = vmatpush.bf16.xpose.msra.mxu0 0
      %3992 = vmatpush.bf16.xpose.msra.mxu0 %v3983
      %3993 = vmatmul.bf16.gmra.mxu0 %v3980
      %v3994 = vpop.f32.mrf.mxu0
      %v3995 = vadd.f32 0.0, %v3994
      %v3996 = vpop.f32.mrf.mxu0
      %v3997 = vadd.f32 0.0, %v3996
      %3998 = vdwg.mxu0
      %3999 = vrot.lane.b32.xlu0 %v752, 112
      %v4000 = vpop.permute.xlu0 %3999
      %4001 = vrot.lane.b32.xlu0 %v752, 80
      %v4002 = vpop.permute.xlu0 %4001
      %v4004 = vsel %vm484, %v4000, 0
      %v4007 = vsel %vm484, %v4002, 0
      %4009 = vmatpush.bf16.xpose.msra.mxu0 0
      %4010 = vmatpush.bf16.xpose.msra.mxu0 0
      %4011 = vmatpush.bf16.xpose.msra.mxu0 0
      %4012 = vmatpush.bf16.xpose.msra.mxu0 0
      %4013 = vmatpush.bf16.xpose.msra.mxu0 0
      %4014 = vmatpush.bf16.xpose.msra.mxu0 0
      %4015 = vmatpush.bf16.xpose.msra.mxu0 0
      %4016 = vmatpush.bf16.xpose.msra.mxu0 %v4007
      %4017 = vmatmul.bf16.gmra.mxu0 %v4004
      %v4018 = vpop.f32.mrf.mxu0
      %v4019 = vadd.f32 0.0, %v4018
      %v4020 = vpop.f32.mrf.mxu0
      %v4021 = vadd.f32 0.0, %v4020
      %4022 = vdwg.mxu0
      %4023 = vrot.lane.b32.xlu0 %v779, 112
      %v4024 = vpop.permute.xlu0 %4023
      %4025 = vrot.lane.b32.xlu0 %v779, 80
      %v4026 = vpop.permute.xlu0 %4025
      %v4028 = vsel %vm484, %v4024, 0
      %v4031 = vsel %vm484, %v4026, 0
      %4033 = vmatpush.bf16.xpose.msra.mxu0 0
      %4034 = vmatpush.bf16.xpose.msra.mxu0 0
      %4035 = vmatpush.bf16.xpose.msra.mxu0 0
      %4036 = vmatpush.bf16.xpose.msra.mxu0 0
      %4037 = vmatpush.bf16.xpose.msra.mxu0 0
      %4038 = vmatpush.bf16.xpose.msra.mxu0 0
      %4039 = vmatpush.bf16.xpose.msra.mxu0 0
      %4040 = vmatpush.bf16.xpose.msra.mxu0 %v4031
      %4041 = vmatmul.bf16.gmra.mxu0 %v4028
      %v4042 = vpop.f32.mrf.mxu0
      %v4043 = vadd.f32 0.0, %v4042
      %v4044 = vpop.f32.mrf.mxu0
      %v4045 = vadd.f32 0.0, %v4044
      %4046 = vdwg.mxu0
      %4047 = vrot.lane.b32.xlu0 %v806, 112
      %v4048 = vpop.permute.xlu0 %4047
      %4049 = vrot.lane.b32.xlu0 %v806, 80
      %v4050 = vpop.permute.xlu0 %4049
      %v4052 = vsel %vm484, %v4048, 0
      %v4055 = vsel %vm484, %v4050, 0
      %4057 = vmatpush.bf16.xpose.msra.mxu0 0
      %4058 = vmatpush.bf16.xpose.msra.mxu0 0
      %4059 = vmatpush.bf16.xpose.msra.mxu0 0
      %4060 = vmatpush.bf16.xpose.msra.mxu0 0
      %4061 = vmatpush.bf16.xpose.msra.mxu0 0
      %4062 = vmatpush.bf16.xpose.msra.mxu0 0
      %4063 = vmatpush.bf16.xpose.msra.mxu0 0
      %4064 = vmatpush.bf16.xpose.msra.mxu0 %v4055
      %4065 = vmatmul.bf16.gmra.mxu0 %v4052
      %v4066 = vpop.f32.mrf.mxu0
      %v4067 = vadd.f32 0.0, %v4066
      %v4068 = vpop.f32.mrf.mxu0
      %v4069 = vadd.f32 0.0, %v4068
      %4070 = vdwg.mxu0
      %4071 = vrot.lane.b32.xlu0 %v833, 112
      %v4072 = vpop.permute.xlu0 %4071
      %4073 = vrot.lane.b32.xlu0 %v833, 80
      %v4074 = vpop.permute.xlu0 %4073
      %v4076 = vsel %vm484, %v4072, 0
      %v4079 = vsel %vm484, %v4074, 0
      %4081 = vmatpush.bf16.xpose.msra.mxu0 0
      %4082 = vmatpush.bf16.xpose.msra.mxu0 0
      %4083 = vmatpush.bf16.xpose.msra.mxu0 0
      %4084 = vmatpush.bf16.xpose.msra.mxu0 0
      %4085 = vmatpush.bf16.xpose.msra.mxu0 0
      %4086 = vmatpush.bf16.xpose.msra.mxu0 0
      %4087 = vmatpush.bf16.xpose.msra.mxu0 0
      %4088 = vmatpush.bf16.xpose.msra.mxu0 %v4079
      %4089 = vmatmul.bf16.gmra.mxu0 %v4076
      %v4090 = vpop.f32.mrf.mxu0
      %v4091 = vadd.f32 0.0, %v4090
      %v4092 = vpop.f32.mrf.mxu0
      %v4093 = vadd.f32 0.0, %v4092
      %4094 = vdwg.mxu0
      %4095 = vrot.lane.b32.xlu0 %v860, 112
      %v4096 = vpop.permute.xlu0 %4095
      %4097 = vrot.lane.b32.xlu0 %v860, 80
      %v4098 = vpop.permute.xlu0 %4097
      %v4100 = vsel %vm484, %v4096, 0
      %v4103 = vsel %vm484, %v4098, 0
      %4105 = vmatpush.bf16.xpose.msra.mxu0 0
      %4106 = vmatpush.bf16.xpose.msra.mxu0 0
      %4107 = vmatpush.bf16.xpose.msra.mxu0 0
      %4108 = vmatpush.bf16.xpose.msra.mxu0 0
      %4109 = vmatpush.bf16.xpose.msra.mxu0 0
      %4110 = vmatpush.bf16.xpose.msra.mxu0 0
      %4111 = vmatpush.bf16.xpose.msra.mxu0 0
      %4112 = vmatpush.bf16.xpose.msra.mxu0 %v4103
      %4113 = vmatmul.bf16.gmra.mxu0 %v4100
      %v4114 = vpop.f32.mrf.mxu0
      %v4115 = vadd.f32 0.0, %v4114
      %v4116 = vpop.f32.mrf.mxu0
      %v4117 = vadd.f32 0.0, %v4116
      %4118 = vdwg.mxu0
      %4119 = vrot.lane.b32.xlu0 %v887, 112
      %v4120 = vpop.permute.xlu0 %4119
      %4121 = vrot.lane.b32.xlu0 %v887, 80
      %v4122 = vpop.permute.xlu0 %4121
      %v4124 = vsel %vm484, %v4120, 0
      %v4127 = vsel %vm484, %v4122, 0
      %4129 = vmatpush.bf16.xpose.msra.mxu0 0
      %4130 = vmatpush.bf16.xpose.msra.mxu0 0
      %4131 = vmatpush.bf16.xpose.msra.mxu0 0
      %4132 = vmatpush.bf16.xpose.msra.mxu0 0
      %4133 = vmatpush.bf16.xpose.msra.mxu0 0
      %4134 = vmatpush.bf16.xpose.msra.mxu0 0
      %4135 = vmatpush.bf16.xpose.msra.mxu0 0
      %4136 = vmatpush.bf16.xpose.msra.mxu0 %v4127
      %4137 = vmatmul.bf16.gmra.mxu0 %v4124
      %v4138 = vpop.f32.mrf.mxu0
      %v4139 = vadd.f32 0.0, %v4138
      %v4140 = vpop.f32.mrf.mxu0
      %v4141 = vadd.f32 0.0, %v4140
      %4142 = vdwg.mxu0
      %v4143 = vsel %vm910, %v3779, -inf
      %4144 = vmax.xlane.f32.xlu0 %v4143
      %v4145 = vpop.xlane.xlu0 %4144
      %v4146 = vsel %vm910, %v3781, -inf
      %4147 = vmax.xlane.f32.xlu0 %v4146
      %v4148 = vpop.xlane.xlu0 %4147
      %v4149 = vsel %vm910, %v3803, -inf
      %4150 = vmax.xlane.f32.xlu0 %v4149
      %v4151 = vpop.xlane.xlu0 %4150
      %v4152 = vsel %vm910, %v3805, -inf
      %4153 = vmax.xlane.f32.xlu0 %v4152
      %v4154 = vpop.xlane.xlu0 %4153
      %v4155 = vsel %vm910, %v3827, -inf
      %4156 = vmax.xlane.f32.xlu0 %v4155
      %v4157 = vpop.xlane.xlu0 %4156
      %v4158 = vsel %vm910, %v3829, -inf
      %4159 = vmax.xlane.f32.xlu0 %v4158
      %v4160 = vpop.xlane.xlu0 %4159
      %v4161 = vsel %vm910, %v3851, -inf
      %4162 = vmax.xlane.f32.xlu0 %v4161
      %v4163 = vpop.xlane.xlu0 %4162
      %v4164 = vsel %vm910, %v3853, -inf
      %4165 = vmax.xlane.f32.xlu0 %v4164
      %v4166 = vpop.xlane.xlu0 %4165
      %v4167 = vsel %vm910, %v3875, -inf
      %4168 = vmax.xlane.f32.xlu0 %v4167
      %v4169 = vpop.xlane.xlu0 %4168
      %v4170 = vsel %vm910, %v3877, -inf
      %4171 = vmax.xlane.f32.xlu0 %v4170
      %v4172 = vpop.xlane.xlu0 %4171
      %v4173 = vsel %vm910, %v3899, -inf
      %4174 = vmax.xlane.f32.xlu0 %v4173
      %v4175 = vpop.xlane.xlu0 %4174
      %v4176 = vsel %vm910, %v3901, -inf
      %4177 = vmax.xlane.f32.xlu0 %v4176
      %v4178 = vpop.xlane.xlu0 %4177
      %v4179 = vsel %vm910, %v3923, -inf
      %4180 = vmax.xlane.f32.xlu0 %v4179
      %v4181 = vpop.xlane.xlu0 %4180
      %v4182 = vsel %vm910, %v3925, -inf
      %4183 = vmax.xlane.f32.xlu0 %v4182
      %v4184 = vpop.xlane.xlu0 %4183
      %v4185 = vsel %vm910, %v3947, -inf
      %4186 = vmax.xlane.f32.xlu0 %v4185
      %v4187 = vpop.xlane.xlu0 %4186
      %v4188 = vsel %vm910, %v3949, -inf
      %4189 = vmax.xlane.f32.xlu0 %v4188
      %v4190 = vpop.xlane.xlu0 %4189
      %v4191 = vsel %vm910, %v3971, -inf
      %4192 = vmax.xlane.f32.xlu0 %v4191
      %v4193 = vpop.xlane.xlu0 %4192
      %v4194 = vsel %vm910, %v3973, -inf
      %4195 = vmax.xlane.f32.xlu0 %v4194
      %v4196 = vpop.xlane.xlu0 %4195
      %v4197 = vsel %vm910, %v3995, -inf
      %4198 = vmax.xlane.f32.xlu0 %v4197
      %v4199 = vpop.xlane.xlu0 %4198
      %v4200 = vsel %vm910, %v3997, -inf
      %4201 = vmax.xlane.f32.xlu0 %v4200
      %v4202 = vpop.xlane.xlu0 %4201
      %v4203 = vsel %vm910, %v4019, -inf
      %4204 = vmax.xlane.f32.xlu0 %v4203
      %v4205 = vpop.xlane.xlu0 %4204
      %v4206 = vsel %vm910, %v4021, -inf
      %4207 = vmax.xlane.f32.xlu0 %v4206
      %v4208 = vpop.xlane.xlu0 %4207
      %v4209 = vsel %vm910, %v4043, -inf
      %4210 = vmax.xlane.f32.xlu0 %v4209
      %v4211 = vpop.xlane.xlu0 %4210
      %v4212 = vsel %vm910, %v4045, -inf
      %4213 = vmax.xlane.f32.xlu0 %v4212
      %v4214 = vpop.xlane.xlu0 %4213
      %v4215 = vsel %vm910, %v4067, -inf
      %4216 = vmax.xlane.f32.xlu0 %v4215
      %v4217 = vpop.xlane.xlu0 %4216
      %v4218 = vsel %vm910, %v4069, -inf
      %4219 = vmax.xlane.f32.xlu0 %v4218
      %v4220 = vpop.xlane.xlu0 %4219
      %v4221 = vsel %vm910, %v4091, -inf
      %4222 = vmax.xlane.f32.xlu0 %v4221
      %v4223 = vpop.xlane.xlu0 %4222
      %v4224 = vsel %vm910, %v4093, -inf
      %4225 = vmax.xlane.f32.xlu0 %v4224
      %v4226 = vpop.xlane.xlu0 %4225
      %v4227 = vsel %vm910, %v4115, -inf
      %4228 = vmax.xlane.f32.xlu0 %v4227
      %v4229 = vpop.xlane.xlu0 %4228
      %v4230 = vsel %vm910, %v4117, -inf
      %4231 = vmax.xlane.f32.xlu0 %v4230
      %v4232 = vpop.xlane.xlu0 %4231
      %v4233 = vsel %vm910, %v4139, -inf
      %4234 = vmax.xlane.f32.xlu0 %v4233
      %v4235 = vpop.xlane.xlu0 %4234
      %v4236 = vsel %vm910, %v4141, -inf
      %4237 = vmax.xlane.f32.xlu0 %v4236
      %v4238 = vpop.xlane.xlu0 %4237
      %v4239 = vsub.f32 %v3779, %v4145
      %v4240 = vsub.f32 %v3781, %v4148
      %v4241 = vsub.f32 %v3803, %v4151
      %v4242 = vsub.f32 %v3805, %v4154
      %v4243 = vsub.f32 %v3827, %v4157
      %v4244 = vsub.f32 %v3829, %v4160
      %v4245 = vsub.f32 %v3851, %v4163
      %v4246 = vsub.f32 %v3853, %v4166
      %v4247 = vsub.f32 %v3875, %v4169
      %v4248 = vsub.f32 %v3877, %v4172
      %v4249 = vsub.f32 %v3899, %v4175
      %v4250 = vsub.f32 %v3901, %v4178
      %v4251 = vsub.f32 %v3923, %v4181
      %v4252 = vsub.f32 %v3925, %v4184
      %v4253 = vsub.f32 %v3947, %v4187
      %v4254 = vsub.f32 %v3949, %v4190
      %v4255 = vsub.f32 %v3971, %v4193
      %v4256 = vsub.f32 %v3973, %v4196
      %v4257 = vsub.f32 %v3995, %v4199
      %v4258 = vsub.f32 %v3997, %v4202
      %v4259 = vsub.f32 %v4019, %v4205
      %v4260 = vsub.f32 %v4021, %v4208
      %v4261 = vsub.f32 %v4043, %v4211
      %v4262 = vsub.f32 %v4045, %v4214
      %v4263 = vsub.f32 %v4067, %v4217
      %v4264 = vsub.f32 %v4069, %v4220
      %v4265 = vsub.f32 %v4091, %v4223
      %v4266 = vsub.f32 %v4093, %v4226
      %v4267 = vsub.f32 %v4115, %v4229
      %v4268 = vsub.f32 %v4117, %v4232
      %v4269 = vsub.f32 %v4139, %v4235
      %v4270 = vsub.f32 %v4141, %v4238
      %v4271 = vmul.f32 %v4239, 1.442695
      %v4272 = vpow.pop %v4271
      %v4273 = vmul.f32 %v4240, 1.442695
      %v4274 = vpow.pop %v4273
      %v4275 = vmul.f32 %v4241, 1.442695
      %v4276 = vpow.pop %v4275
      %v4277 = vmul.f32 %v4242, 1.442695
      %v4278 = vpow.pop %v4277
      %v4279 = vmul.f32 %v4243, 1.442695
      %v4280 = vpow.pop %v4279
      %v4281 = vmul.f32 %v4244, 1.442695
      %v4282 = vpow.pop %v4281
      %v4283 = vmul.f32 %v4245, 1.442695
      %v4284 = vpow.pop %v4283
      %v4285 = vmul.f32 %v4246, 1.442695
      %v4286 = vpow.pop %v4285
      %v4287 = vmul.f32 %v4247, 1.442695
      %v4288 = vpow.pop %v4287
      %v4289 = vmul.f32 %v4248, 1.442695
      %v4290 = vpow.pop %v4289
      %v4291 = vmul.f32 %v4249, 1.442695
      %v4292 = vpow.pop %v4291
      %v4293 = vmul.f32 %v4250, 1.442695
      %v4294 = vpow.pop %v4293
      %v4295 = vmul.f32 %v4251, 1.442695
      %v4296 = vpow.pop %v4295
      %v4297 = vmul.f32 %v4252, 1.442695
      %v4298 = vpow.pop %v4297
      %v4299 = vmul.f32 %v4253, 1.442695
      %v4300 = vpow.pop %v4299
      %v4301 = vmul.f32 %v4254, 1.442695
      %v4302 = vpow.pop %v4301
      %v4303 = vmul.f32 %v4255, 1.442695
      %v4304 = vpow.pop %v4303
      %v4305 = vmul.f32 %v4256, 1.442695
      %v4306 = vpow.pop %v4305
      %v4307 = vmul.f32 %v4257, 1.442695
      %v4308 = vpow.pop %v4307
      %v4309 = vmul.f32 %v4258, 1.442695
      %v4310 = vpow.pop %v4309
      %v4311 = vmul.f32 %v4259, 1.442695
      %v4312 = vpow.pop %v4311
      %v4313 = vmul.f32 %v4260, 1.442695
      %v4314 = vpow.pop %v4313
      %v4315 = vmul.f32 %v4261, 1.442695
      %v4316 = vpow.pop %v4315
      %v4317 = vmul.f32 %v4262, 1.442695
      %v4318 = vpow.pop %v4317
      %v4319 = vmul.f32 %v4263, 1.442695
      %v4320 = vpow.pop %v4319
      %v4321 = vmul.f32 %v4264, 1.442695
      %v4322 = vpow.pop %v4321
      %v4323 = vmul.f32 %v4265, 1.442695
      %v4324 = vpow.pop %v4323
      %v4325 = vmul.f32 %v4266, 1.442695
      %v4326 = vpow.pop %v4325
      %v4327 = vmul.f32 %v4267, 1.442695
      %v4328 = vpow.pop %v4327
      %v4329 = vmul.f32 %v4268, 1.442695
      %v4330 = vpow.pop %v4329
      %v4331 = vmul.f32 %v4269, 1.442695
      %v4332 = vpow.pop %v4331
      %v4333 = vmul.f32 %v4270, 1.442695
      %v4334 = vpow.pop %v4333
      %v4335 = vsel %vm910, %v4272, 0.0
      %4336 = vadd.xlane.f32.xlu0 %v4335
      %v4337 = vpop.xlane.xlu0 %4336
      %v4338 = vsel %vm910, %v4274, 0.0
      %4339 = vadd.xlane.f32.xlu0 %v4338
      %v4340 = vpop.xlane.xlu0 %4339
      %v4341 = vsel %vm910, %v4276, 0.0
      %4342 = vadd.xlane.f32.xlu0 %v4341
      %v4343 = vpop.xlane.xlu0 %4342
      %v4344 = vsel %vm910, %v4278, 0.0
      %4345 = vadd.xlane.f32.xlu0 %v4344
      %v4346 = vpop.xlane.xlu0 %4345
      %v4347 = vsel %vm910, %v4280, 0.0
      %4348 = vadd.xlane.f32.xlu0 %v4347
      %v4349 = vpop.xlane.xlu0 %4348
      %v4350 = vsel %vm910, %v4282, 0.0
      %4351 = vadd.xlane.f32.xlu0 %v4350
      %v4352 = vpop.xlane.xlu0 %4351
      %v4353 = vsel %vm910, %v4284, 0.0
      %4354 = vadd.xlane.f32.xlu0 %v4353
      %v4355 = vpop.xlane.xlu0 %4354
      %v4356 = vsel %vm910, %v4286, 0.0
      %4357 = vadd.xlane.f32.xlu0 %v4356
      %v4358 = vpop.xlane.xlu0 %4357
      %v4359 = vsel %vm910, %v4288, 0.0
      %4360 = vadd.xlane.f32.xlu0 %v4359
      %v4361 = vpop.xlane.xlu0 %4360
      %v4362 = vsel %vm910, %v4290, 0.0
      %4363 = vadd.xlane.f32.xlu0 %v4362
      %v4364 = vpop.xlane.xlu0 %4363
      %v4365 = vsel %vm910, %v4292, 0.0
      %4366 = vadd.xlane.f32.xlu0 %v4365
      %v4367 = vpop.xlane.xlu0 %4366
      %v4368 = vsel %vm910, %v4294, 0.0
      %4369 = vadd.xlane.f32.xlu0 %v4368
      %v4370 = vpop.xlane.xlu0 %4369
      %v4371 = vsel %vm910, %v4296, 0.0
      %4372 = vadd.xlane.f32.xlu0 %v4371
      %v4373 = vpop.xlane.xlu0 %4372
      %v4374 = vsel %vm910, %v4298, 0.0
      %4375 = vadd.xlane.f32.xlu0 %v4374
      %v4376 = vpop.xlane.xlu0 %4375
      %v4377 = vsel %vm910, %v4300, 0.0
      %4378 = vadd.xlane.f32.xlu0 %v4377
      %v4379 = vpop.xlane.xlu0 %4378
      %v4380 = vsel %vm910, %v4302, 0.0
      %4381 = vadd.xlane.f32.xlu0 %v4380
      %v4382 = vpop.xlane.xlu0 %4381
      %v4383 = vsel %vm910, %v4304, 0.0
      %4384 = vadd.xlane.f32.xlu0 %v4383
      %v4385 = vpop.xlane.xlu0 %4384
      %v4386 = vsel %vm910, %v4306, 0.0
      %4387 = vadd.xlane.f32.xlu0 %v4386
      %v4388 = vpop.xlane.xlu0 %4387
      %v4389 = vsel %vm910, %v4308, 0.0
      %4390 = vadd.xlane.f32.xlu0 %v4389
      %v4391 = vpop.xlane.xlu0 %4390
      %v4392 = vsel %vm910, %v4310, 0.0
      %4393 = vadd.xlane.f32.xlu0 %v4392
      %v4394 = vpop.xlane.xlu0 %4393
      %v4395 = vsel %vm910, %v4312, 0.0
      %4396 = vadd.xlane.f32.xlu0 %v4395
      %v4397 = vpop.xlane.xlu0 %4396
      %v4398 = vsel %vm910, %v4314, 0.0
      %4399 = vadd.xlane.f32.xlu0 %v4398
      %v4400 = vpop.xlane.xlu0 %4399
      %v4401 = vsel %vm910, %v4316, 0.0
      %4402 = vadd.xlane.f32.xlu0 %v4401
      %v4403 = vpop.xlane.xlu0 %4402
      %v4404 = vsel %vm910, %v4318, 0.0
      %4405 = vadd.xlane.f32.xlu0 %v4404
      %v4406 = vpop.xlane.xlu0 %4405
      %v4407 = vsel %vm910, %v4320, 0.0
      %4408 = vadd.xlane.f32.xlu0 %v4407
      %v4409 = vpop.xlane.xlu0 %4408
      %v4410 = vsel %vm910, %v4322, 0.0
      %4411 = vadd.xlane.f32.xlu0 %v4410
      %v4412 = vpop.xlane.xlu0 %4411
      %v4413 = vsel %vm910, %v4324, 0.0
      %4414 = vadd.xlane.f32.xlu0 %v4413
      %v4415 = vpop.xlane.xlu0 %4414
      %v4416 = vsel %vm910, %v4326, 0.0
      %4417 = vadd.xlane.f32.xlu0 %v4416
      %v4418 = vpop.xlane.xlu0 %4417
      %v4419 = vsel %vm910, %v4328, 0.0
      %4420 = vadd.xlane.f32.xlu0 %v4419
      %v4421 = vpop.xlane.xlu0 %4420
      %v4422 = vsel %vm910, %v4330, 0.0
      %4423 = vadd.xlane.f32.xlu0 %v4422
      %v4424 = vpop.xlane.xlu0 %4423
      %v4425 = vsel %vm910, %v4332, 0.0
      %4426 = vadd.xlane.f32.xlu0 %v4425
      %v4427 = vpop.xlane.xlu0 %4426
      %v4428 = vsel %vm910, %v4334, 0.0
      %4429 = vadd.xlane.f32.xlu0 %v4428
      %v4430 = vpop.xlane.xlu0 %4429
      %v4431 = vrcp.pop %v4337
      %v4432 = vmul.f32 %v4337, %v4431
      %v4433 = vsub.f32 1.0, %v4432
      %v4434 = vmul.f32 %v4431, %v4433
      %v4435 = vadd.f32 %v4431, %v4434
      %vm4436 = vweird.f32 %v4337
      %vm4437 = vweird.f32 %v4431
      %vm4438 = vmor %vm4436, %vm4437
      %v4439 = vsel %vm4438, %v4431, %v4435
      %v4440 = vand.u32 2147483647, %v4337
      %vm4441 = vcmp.eq.f32.partialorder %v4440, 8.507059e+37
      %v4442 = vand.u32 %v4337, 2147483648
      %v4443 = vor.u32 1.1754944e-38, %v4442
      %v4444 = vsel %vm4441, %v4443, %v4439
      %v4445 = vmul.f32 1.0, %v4444
      %v4446 = vrcp.pop %v4340
      %v4447 = vmul.f32 %v4340, %v4446
      %v4448 = vsub.f32 1.0, %v4447
      %v4449 = vmul.f32 %v4446, %v4448
      %v4450 = vadd.f32 %v4446, %v4449
      %vm4451 = vweird.f32 %v4340
      %vm4452 = vweird.f32 %v4446
      %vm4453 = vmor %vm4451, %vm4452
      %v4454 = vsel %vm4453, %v4446, %v4450
      %v4455 = vand.u32 2147483647, %v4340
      %vm4456 = vcmp.eq.f32.partialorder %v4455, 8.507059e+37
      %v4457 = vand.u32 %v4340, 2147483648
      %v4458 = vor.u32 1.1754944e-38, %v4457
      %v4459 = vsel %vm4456, %v4458, %v4454
      %v4460 = vmul.f32 1.0, %v4459
      %v4461 = vrcp.pop %v4343
      %v4462 = vmul.f32 %v4343, %v4461
      %v4463 = vsub.f32 1.0, %v4462
      %v4464 = vmul.f32 %v4461, %v4463
      %v4465 = vadd.f32 %v4461, %v4464
      %vm4466 = vweird.f32 %v4343
      %vm4467 = vweird.f32 %v4461
      %vm4468 = vmor %vm4466, %vm4467
      %v4469 = vsel %vm4468, %v4461, %v4465
      %v4470 = vand.u32 2147483647, %v4343
      %vm4471 = vcmp.eq.f32.partialorder %v4470, 8.507059e+37
      %v4472 = vand.u32 %v4343, 2147483648
      %v4473 = vor.u32 1.1754944e-38, %v4472
      %v4474 = vsel %vm4471, %v4473, %v4469
      %v4475 = vmul.f32 1.0, %v4474
      %v4476 = vrcp.pop %v4346
      %v4477 = vmul.f32 %v4346, %v4476
      %v4478 = vsub.f32 1.0, %v4477
      %v4479 = vmul.f32 %v4476, %v4478
      %v4480 = vadd.f32 %v4476, %v4479
      %vm4481 = vweird.f32 %v4346
      %vm4482 = vweird.f32 %v4476
      %vm4483 = vmor %vm4481, %vm4482
      %v4484 = vsel %vm4483, %v4476, %v4480
      %v4485 = vand.u32 2147483647, %v4346
      %vm4486 = vcmp.eq.f32.partialorder %v4485, 8.507059e+37
      %v4487 = vand.u32 %v4346, 2147483648
      %v4488 = vor.u32 1.1754944e-38, %v4487
      %v4489 = vsel %vm4486, %v4488, %v4484
      %v4490 = vmul.f32 1.0, %v4489
      %v4491 = vrcp.pop %v4349
      %v4492 = vmul.f32 %v4349, %v4491
      %v4493 = vsub.f32 1.0, %v4492
      %v4494 = vmul.f32 %v4491, %v4493
      %v4495 = vadd.f32 %v4491, %v4494
      %vm4496 = vweird.f32 %v4349
      %vm4497 = vweird.f32 %v4491
      %vm4498 = vmor %vm4496, %vm4497
      %v4499 = vsel %vm4498, %v4491, %v4495
      %v4500 = vand.u32 2147483647, %v4349
      %vm4501 = vcmp.eq.f32.partialorder %v4500, 8.507059e+37
      %v4502 = vand.u32 %v4349, 2147483648
      %v4503 = vor.u32 1.1754944e-38, %v4502
      %v4504 = vsel %vm4501, %v4503, %v4499
      %v4505 = vmul.f32 1.0, %v4504
      %v4506 = vrcp.pop %v4352
      %v4507 = vmul.f32 %v4352, %v4506
      %v4508 = vsub.f32 1.0, %v4507
      %v4509 = vmul.f32 %v4506, %v4508
      %v4510 = vadd.f32 %v4506, %v4509
      %vm4511 = vweird.f32 %v4352
      %vm4512 = vweird.f32 %v4506
      %vm4513 = vmor %vm4511, %vm4512
      %v4514 = vsel %vm4513, %v4506, %v4510
      %v4515 = vand.u32 2147483647, %v4352
      %vm4516 = vcmp.eq.f32.partialorder %v4515, 8.507059e+37
      %v4517 = vand.u32 %v4352, 2147483648
      %v4518 = vor.u32 1.1754944e-38, %v4517
      %v4519 = vsel %vm4516, %v4518, %v4514
      %v4520 = vmul.f32 1.0, %v4519
      %v4521 = vrcp.pop %v4355
      %v4522 = vmul.f32 %v4355, %v4521
      %v4523 = vsub.f32 1.0, %v4522
      %v4524 = vmul.f32 %v4521, %v4523
      %v4525 = vadd.f32 %v4521, %v4524
      %vm4526 = vweird.f32 %v4355
      %vm4527 = vweird.f32 %v4521
      %vm4528 = vmor %vm4526, %vm4527
      %v4529 = vsel %vm4528, %v4521, %v4525
      %v4530 = vand.u32 2147483647, %v4355
      %vm4531 = vcmp.eq.f32.partialorder %v4530, 8.507059e+37
      %v4532 = vand.u32 %v4355, 2147483648
      %v4533 = vor.u32 1.1754944e-38, %v4532
      %v4534 = vsel %vm4531, %v4533, %v4529
      %v4535 = vmul.f32 1.0, %v4534
      %v4536 = vrcp.pop %v4358
      %v4537 = vmul.f32 %v4358, %v4536
      %v4538 = vsub.f32 1.0, %v4537
      %v4539 = vmul.f32 %v4536, %v4538
      %v4540 = vadd.f32 %v4536, %v4539
      %vm4541 = vweird.f32 %v4358
      %vm4542 = vweird.f32 %v4536
      %vm4543 = vmor %vm4541, %vm4542
      %v4544 = vsel %vm4543, %v4536, %v4540
      %v4545 = vand.u32 2147483647, %v4358
      %vm4546 = vcmp.eq.f32.partialorder %v4545, 8.507059e+37
      %v4547 = vand.u32 %v4358, 2147483648
      %v4548 = vor.u32 1.1754944e-38, %v4547
      %v4549 = vsel %vm4546, %v4548, %v4544
      %v4550 = vmul.f32 1.0, %v4549
      %v4551 = vrcp.pop %v4361
      %v4552 = vmul.f32 %v4361, %v4551
      %v4553 = vsub.f32 1.0, %v4552
      %v4554 = vmul.f32 %v4551, %v4553
      %v4555 = vadd.f32 %v4551, %v4554
      %vm4556 = vweird.f32 %v4361
      %vm4557 = vweird.f32 %v4551
      %vm4558 = vmor %vm4556, %vm4557
      %v4559 = vsel %vm4558, %v4551, %v4555
      %v4560 = vand.u32 2147483647, %v4361
      %vm4561 = vcmp.eq.f32.partialorder %v4560, 8.507059e+37
      %v4562 = vand.u32 %v4361, 2147483648
      %v4563 = vor.u32 1.1754944e-38, %v4562
      %v4564 = vsel %vm4561, %v4563, %v4559
      %v4565 = vmul.f32 1.0, %v4564
      %v4566 = vrcp.pop %v4364
      %v4567 = vmul.f32 %v4364, %v4566
      %v4568 = vsub.f32 1.0, %v4567
      %v4569 = vmul.f32 %v4566, %v4568
      %v4570 = vadd.f32 %v4566, %v4569
      %vm4571 = vweird.f32 %v4364
      %vm4572 = vweird.f32 %v4566
      %vm4573 = vmor %vm4571, %vm4572
      %v4574 = vsel %vm4573, %v4566, %v4570
      %v4575 = vand.u32 2147483647, %v4364
      %vm4576 = vcmp.eq.f32.partialorder %v4575, 8.507059e+37
      %v4577 = vand.u32 %v4364, 2147483648
      %v4578 = vor.u32 1.1754944e-38, %v4577
      %v4579 = vsel %vm4576, %v4578, %v4574
      %v4580 = vmul.f32 1.0, %v4579
      %v4581 = vrcp.pop %v4367
      %v4582 = vmul.f32 %v4367, %v4581
      %v4583 = vsub.f32 1.0, %v4582
      %v4584 = vmul.f32 %v4581, %v4583
      %v4585 = vadd.f32 %v4581, %v4584
      %vm4586 = vweird.f32 %v4367
      %vm4587 = vweird.f32 %v4581
      %vm4588 = vmor %vm4586, %vm4587
      %v4589 = vsel %vm4588, %v4581, %v4585
      %v4590 = vand.u32 2147483647, %v4367
      %vm4591 = vcmp.eq.f32.partialorder %v4590, 8.507059e+37
      %v4592 = vand.u32 %v4367, 2147483648
      %v4593 = vor.u32 1.1754944e-38, %v4592
      %v4594 = vsel %vm4591, %v4593, %v4589
      %v4595 = vmul.f32 1.0, %v4594
      %v4596 = vrcp.pop %v4370
      %v4597 = vmul.f32 %v4370, %v4596
      %v4598 = vsub.f32 1.0, %v4597
      %v4599 = vmul.f32 %v4596, %v4598
      %v4600 = vadd.f32 %v4596, %v4599
      %vm4601 = vweird.f32 %v4370
      %vm4602 = vweird.f32 %v4596
      %vm4603 = vmor %vm4601, %vm4602
      %v4604 = vsel %vm4603, %v4596, %v4600
      %v4605 = vand.u32 2147483647, %v4370
      %vm4606 = vcmp.eq.f32.partialorder %v4605, 8.507059e+37
      %v4607 = vand.u32 %v4370, 2147483648
      %v4608 = vor.u32 1.1754944e-38, %v4607
      %v4609 = vsel %vm4606, %v4608, %v4604
      %v4610 = vmul.f32 1.0, %v4609
      %v4611 = vrcp.pop %v4373
      %v4612 = vmul.f32 %v4373, %v4611
      %v4613 = vsub.f32 1.0, %v4612
      %v4614 = vmul.f32 %v4611, %v4613
      %v4615 = vadd.f32 %v4611, %v4614
      %vm4616 = vweird.f32 %v4373
      %vm4617 = vweird.f32 %v4611
      %vm4618 = vmor %vm4616, %vm4617
      %v4619 = vsel %vm4618, %v4611, %v4615
      %v4620 = vand.u32 2147483647, %v4373
      %vm4621 = vcmp.eq.f32.partialorder %v4620, 8.507059e+37
      %v4622 = vand.u32 %v4373, 2147483648
      %v4623 = vor.u32 1.1754944e-38, %v4622
      %v4624 = vsel %vm4621, %v4623, %v4619
      %v4625 = vmul.f32 1.0, %v4624
      %v4626 = vrcp.pop %v4376
      %v4627 = vmul.f32 %v4376, %v4626
      %v4628 = vsub.f32 1.0, %v4627
      %v4629 = vmul.f32 %v4626, %v4628
      %v4630 = vadd.f32 %v4626, %v4629
      %vm4631 = vweird.f32 %v4376
      %vm4632 = vweird.f32 %v4626
      %vm4633 = vmor %vm4631, %vm4632
      %v4634 = vsel %vm4633, %v4626, %v4630
      %v4635 = vand.u32 2147483647, %v4376
      %vm4636 = vcmp.eq.f32.partialorder %v4635, 8.507059e+37
      %v4637 = vand.u32 %v4376, 2147483648
      %v4638 = vor.u32 1.1754944e-38, %v4637
      %v4639 = vsel %vm4636, %v4638, %v4634
      %v4640 = vmul.f32 1.0, %v4639
      %v4641 = vrcp.pop %v4379
      %v4642 = vmul.f32 %v4379, %v4641
      %v4643 = vsub.f32 1.0, %v4642
      %v4644 = vmul.f32 %v4641, %v4643
      %v4645 = vadd.f32 %v4641, %v4644
      %vm4646 = vweird.f32 %v4379
      %vm4647 = vweird.f32 %v4641
      %vm4648 = vmor %vm4646, %vm4647
      %v4649 = vsel %vm4648, %v4641, %v4645
      %v4650 = vand.u32 2147483647, %v4379
      %vm4651 = vcmp.eq.f32.partialorder %v4650, 8.507059e+37
      %v4652 = vand.u32 %v4379, 2147483648
      %v4653 = vor.u32 1.1754944e-38, %v4652
      %v4654 = vsel %vm4651, %v4653, %v4649
      %v4655 = vmul.f32 1.0, %v4654
      %v4656 = vrcp.pop %v4382
      %v4657 = vmul.f32 %v4382, %v4656
      %v4658 = vsub.f32 1.0, %v4657
      %v4659 = vmul.f32 %v4656, %v4658
      %v4660 = vadd.f32 %v4656, %v4659
      %vm4661 = vweird.f32 %v4382
      %vm4662 = vweird.f32 %v4656
      %vm4663 = vmor %vm4661, %vm4662
      %v4664 = vsel %vm4663, %v4656, %v4660
      %v4665 = vand.u32 2147483647, %v4382
      %vm4666 = vcmp.eq.f32.partialorder %v4665, 8.507059e+37
      %v4667 = vand.u32 %v4382, 2147483648
      %v4668 = vor.u32 1.1754944e-38, %v4667
      %v4669 = vsel %vm4666, %v4668, %v4664
      %v4670 = vmul.f32 1.0, %v4669
      %v4671 = vrcp.pop %v4385
      %v4672 = vmul.f32 %v4385, %v4671
      %v4673 = vsub.f32 1.0, %v4672
      %v4674 = vmul.f32 %v4671, %v4673
      %v4675 = vadd.f32 %v4671, %v4674
      %vm4676 = vweird.f32 %v4385
      %vm4677 = vweird.f32 %v4671
      %vm4678 = vmor %vm4676, %vm4677
      %v4679 = vsel %vm4678, %v4671, %v4675
      %v4680 = vand.u32 2147483647, %v4385
      %vm4681 = vcmp.eq.f32.partialorder %v4680, 8.507059e+37
      %v4682 = vand.u32 %v4385, 2147483648
      %v4683 = vor.u32 1.1754944e-38, %v4682
      %v4684 = vsel %vm4681, %v4683, %v4679
      %v4685 = vmul.f32 1.0, %v4684
      %v4686 = vrcp.pop %v4388
      %v4687 = vmul.f32 %v4388, %v4686
      %v4688 = vsub.f32 1.0, %v4687
      %v4689 = vmul.f32 %v4686, %v4688
      %v4690 = vadd.f32 %v4686, %v4689
      %vm4691 = vweird.f32 %v4388
      %vm4692 = vweird.f32 %v4686
      %vm4693 = vmor %vm4691, %vm4692
      %v4694 = vsel %vm4693, %v4686, %v4690
      %v4695 = vand.u32 2147483647, %v4388
      %vm4696 = vcmp.eq.f32.partialorder %v4695, 8.507059e+37
      %v4697 = vand.u32 %v4388, 2147483648
      %v4698 = vor.u32 1.1754944e-38, %v4697
      %v4699 = vsel %vm4696, %v4698, %v4694
      %v4700 = vmul.f32 1.0, %v4699
      %v4701 = vrcp.pop %v4391
      %v4702 = vmul.f32 %v4391, %v4701
      %v4703 = vsub.f32 1.0, %v4702
      %v4704 = vmul.f32 %v4701, %v4703
      %v4705 = vadd.f32 %v4701, %v4704
      %vm4706 = vweird.f32 %v4391
      %vm4707 = vweird.f32 %v4701
      %vm4708 = vmor %vm4706, %vm4707
      %v4709 = vsel %vm4708, %v4701, %v4705
      %v4710 = vand.u32 2147483647, %v4391
      %vm4711 = vcmp.eq.f32.partialorder %v4710, 8.507059e+37
      %v4712 = vand.u32 %v4391, 2147483648
      %v4713 = vor.u32 1.1754944e-38, %v4712
      %v4714 = vsel %vm4711, %v4713, %v4709
      %v4715 = vmul.f32 1.0, %v4714
      %v4716 = vrcp.pop %v4394
      %v4717 = vmul.f32 %v4394, %v4716
      %v4718 = vsub.f32 1.0, %v4717
      %v4719 = vmul.f32 %v4716, %v4718
      %v4720 = vadd.f32 %v4716, %v4719
      %vm4721 = vweird.f32 %v4394
      %vm4722 = vweird.f32 %v4716
      %vm4723 = vmor %vm4721, %vm4722
      %v4724 = vsel %vm4723, %v4716, %v4720
      %v4725 = vand.u32 2147483647, %v4394
      %vm4726 = vcmp.eq.f32.partialorder %v4725, 8.507059e+37
      %v4727 = vand.u32 %v4394, 2147483648
      %v4728 = vor.u32 1.1754944e-38, %v4727
      %v4729 = vsel %vm4726, %v4728, %v4724
      %v4730 = vmul.f32 1.0, %v4729
      %v4731 = vrcp.pop %v4397
      %v4732 = vmul.f32 %v4397, %v4731
      %v4733 = vsub.f32 1.0, %v4732
      %v4734 = vmul.f32 %v4731, %v4733
      %v4735 = vadd.f32 %v4731, %v4734
      %vm4736 = vweird.f32 %v4397
      %vm4737 = vweird.f32 %v4731
      %vm4738 = vmor %vm4736, %vm4737
      %v4739 = vsel %vm4738, %v4731, %v4735
      %v4740 = vand.u32 2147483647, %v4397
      %vm4741 = vcmp.eq.f32.partialorder %v4740, 8.507059e+37
      %v4742 = vand.u32 %v4397, 2147483648
      %v4743 = vor.u32 1.1754944e-38, %v4742
      %v4744 = vsel %vm4741, %v4743, %v4739
      %v4745 = vmul.f32 1.0, %v4744
      %v4746 = vrcp.pop %v4400
      %v4747 = vmul.f32 %v4400, %v4746
      %v4748 = vsub.f32 1.0, %v4747
      %v4749 = vmul.f32 %v4746, %v4748
      %v4750 = vadd.f32 %v4746, %v4749
      %vm4751 = vweird.f32 %v4400
      %vm4752 = vweird.f32 %v4746
      %vm4753 = vmor %vm4751, %vm4752
      %v4754 = vsel %vm4753, %v4746, %v4750
      %v4755 = vand.u32 2147483647, %v4400
      %vm4756 = vcmp.eq.f32.partialorder %v4755, 8.507059e+37
      %v4757 = vand.u32 %v4400, 2147483648
      %v4758 = vor.u32 1.1754944e-38, %v4757
      %v4759 = vsel %vm4756, %v4758, %v4754
      %v4760 = vmul.f32 1.0, %v4759
      %v4761 = vrcp.pop %v4403
      %v4762 = vmul.f32 %v4403, %v4761
      %v4763 = vsub.f32 1.0, %v4762
      %v4764 = vmul.f32 %v4761, %v4763
      %v4765 = vadd.f32 %v4761, %v4764
      %vm4766 = vweird.f32 %v4403
      %vm4767 = vweird.f32 %v4761
      %vm4768 = vmor %vm4766, %vm4767
      %v4769 = vsel %vm4768, %v4761, %v4765
      %v4770 = vand.u32 2147483647, %v4403
      %vm4771 = vcmp.eq.f32.partialorder %v4770, 8.507059e+37
      %v4772 = vand.u32 %v4403, 2147483648
      %v4773 = vor.u32 1.1754944e-38, %v4772
      %v4774 = vsel %vm4771, %v4773, %v4769
      %v4775 = vmul.f32 1.0, %v4774
      %v4776 = vrcp.pop %v4406
      %v4777 = vmul.f32 %v4406, %v4776
      %v4778 = vsub.f32 1.0, %v4777
      %v4779 = vmul.f32 %v4776, %v4778
      %v4780 = vadd.f32 %v4776, %v4779
      %vm4781 = vweird.f32 %v4406
      %vm4782 = vweird.f32 %v4776
      %vm4783 = vmor %vm4781, %vm4782
      %v4784 = vsel %vm4783, %v4776, %v4780
      %v4785 = vand.u32 2147483647, %v4406
      %vm4786 = vcmp.eq.f32.partialorder %v4785, 8.507059e+37
      %v4787 = vand.u32 %v4406, 2147483648
      %v4788 = vor.u32 1.1754944e-38, %v4787
      %v4789 = vsel %vm4786, %v4788, %v4784
      %v4790 = vmul.f32 1.0, %v4789
      %v4791 = vrcp.pop %v4409
      %v4792 = vmul.f32 %v4409, %v4791
      %v4793 = vsub.f32 1.0, %v4792
      %v4794 = vmul.f32 %v4791, %v4793
      %v4795 = vadd.f32 %v4791, %v4794
      %vm4796 = vweird.f32 %v4409
      %vm4797 = vweird.f32 %v4791
      %vm4798 = vmor %vm4796, %vm4797
      %v4799 = vsel %vm4798, %v4791, %v4795
      %v4800 = vand.u32 2147483647, %v4409
      %vm4801 = vcmp.eq.f32.partialorder %v4800, 8.507059e+37
      %v4802 = vand.u32 %v4409, 2147483648
      %v4803 = vor.u32 1.1754944e-38, %v4802
      %v4804 = vsel %vm4801, %v4803, %v4799
      %v4805 = vmul.f32 1.0, %v4804
      %v4806 = vrcp.pop %v4412
      %v4807 = vmul.f32 %v4412, %v4806
      %v4808 = vsub.f32 1.0, %v4807
      %v4809 = vmul.f32 %v4806, %v4808
      %v4810 = vadd.f32 %v4806, %v4809
      %vm4811 = vweird.f32 %v4412
      %vm4812 = vweird.f32 %v4806
      %vm4813 = vmor %vm4811, %vm4812
      %v4814 = vsel %vm4813, %v4806, %v4810
      %v4815 = vand.u32 2147483647, %v4412
      %vm4816 = vcmp.eq.f32.partialorder %v4815, 8.507059e+37
      %v4817 = vand.u32 %v4412, 2147483648
      %v4818 = vor.u32 1.1754944e-38, %v4817
      %v4819 = vsel %vm4816, %v4818, %v4814
      %v4820 = vmul.f32 1.0, %v4819
      %v4821 = vrcp.pop %v4415
      %v4822 = vmul.f32 %v4415, %v4821
      %v4823 = vsub.f32 1.0, %v4822
      %v4824 = vmul.f32 %v4821, %v4823
      %v4825 = vadd.f32 %v4821, %v4824
      %vm4826 = vweird.f32 %v4415
      %vm4827 = vweird.f32 %v4821
      %vm4828 = vmor %vm4826, %vm4827
      %v4829 = vsel %vm4828, %v4821, %v4825
      %v4830 = vand.u32 2147483647, %v4415
      %vm4831 = vcmp.eq.f32.partialorder %v4830, 8.507059e+37
      %v4832 = vand.u32 %v4415, 2147483648
      %v4833 = vor.u32 1.1754944e-38, %v4832
      %v4834 = vsel %vm4831, %v4833, %v4829
      %v4835 = vmul.f32 1.0, %v4834
      %v4836 = vrcp.pop %v4418
      %v4837 = vmul.f32 %v4418, %v4836
      %v4838 = vsub.f32 1.0, %v4837
      %v4839 = vmul.f32 %v4836, %v4838
      %v4840 = vadd.f32 %v4836, %v4839
      %vm4841 = vweird.f32 %v4418
      %vm4842 = vweird.f32 %v4836
      %vm4843 = vmor %vm4841, %vm4842
      %v4844 = vsel %vm4843, %v4836, %v4840
      %v4845 = vand.u32 2147483647, %v4418
      %vm4846 = vcmp.eq.f32.partialorder %v4845, 8.507059e+37
      %v4847 = vand.u32 %v4418, 2147483648
      %v4848 = vor.u32 1.1754944e-38, %v4847
      %v4849 = vsel %vm4846, %v4848, %v4844
      %v4850 = vmul.f32 1.0, %v4849
      %v4851 = vrcp.pop %v4421
      %v4852 = vmul.f32 %v4421, %v4851
      %v4853 = vsub.f32 1.0, %v4852
      %v4854 = vmul.f32 %v4851, %v4853
      %v4855 = vadd.f32 %v4851, %v4854
      %vm4856 = vweird.f32 %v4421
      %vm4857 = vweird.f32 %v4851
      %vm4858 = vmor %vm4856, %vm4857
      %v4859 = vsel %vm4858, %v4851, %v4855
      %v4860 = vand.u32 2147483647, %v4421
      %vm4861 = vcmp.eq.f32.partialorder %v4860, 8.507059e+37
      %v4862 = vand.u32 %v4421, 2147483648
      %v4863 = vor.u32 1.1754944e-38, %v4862
      %v4864 = vsel %vm4861, %v4863, %v4859
      %v4865 = vmul.f32 1.0, %v4864
      %v4866 = vrcp.pop %v4424
      %v4867 = vmul.f32 %v4424, %v4866
      %v4868 = vsub.f32 1.0, %v4867
      %v4869 = vmul.f32 %v4866, %v4868
      %v4870 = vadd.f32 %v4866, %v4869
      %vm4871 = vweird.f32 %v4424
      %vm4872 = vweird.f32 %v4866
      %vm4873 = vmor %vm4871, %vm4872
      %v4874 = vsel %vm4873, %v4866, %v4870
      %v4875 = vand.u32 2147483647, %v4424
      %vm4876 = vcmp.eq.f32.partialorder %v4875, 8.507059e+37
      %v4877 = vand.u32 %v4424, 2147483648
      %v4878 = vor.u32 1.1754944e-38, %v4877
      %v4879 = vsel %vm4876, %v4878, %v4874
      %v4880 = vmul.f32 1.0, %v4879
      %v4881 = vrcp.pop %v4427
      %v4882 = vmul.f32 %v4427, %v4881
      %v4883 = vsub.f32 1.0, %v4882
      %v4884 = vmul.f32 %v4881, %v4883
      %v4885 = vadd.f32 %v4881, %v4884
      %vm4886 = vweird.f32 %v4427
      %vm4887 = vweird.f32 %v4881
      %vm4888 = vmor %vm4886, %vm4887
      %v4889 = vsel %vm4888, %v4881, %v4885
      %v4890 = vand.u32 2147483647, %v4427
      %vm4891 = vcmp.eq.f32.partialorder %v4890, 8.507059e+37
      %v4892 = vand.u32 %v4427, 2147483648
      %v4893 = vor.u32 1.1754944e-38, %v4892
      %v4894 = vsel %vm4891, %v4893, %v4889
      %v4895 = vmul.f32 1.0, %v4894
      %v4896 = vrcp.pop %v4430
      %v4897 = vmul.f32 %v4430, %v4896
      %v4898 = vsub.f32 1.0, %v4897
      %v4899 = vmul.f32 %v4896, %v4898
      %v4900 = vadd.f32 %v4896, %v4899
      %vm4901 = vweird.f32 %v4430
      %vm4902 = vweird.f32 %v4896
      %vm4903 = vmor %vm4901, %vm4902
      %v4904 = vsel %vm4903, %v4896, %v4900
      %v4905 = vand.u32 2147483647, %v4430
      %vm4906 = vcmp.eq.f32.partialorder %v4905, 8.507059e+37
      %v4907 = vand.u32 %v4430, 2147483648
      %v4908 = vor.u32 1.1754944e-38, %v4907
      %v4909 = vsel %vm4906, %v4908, %v4904
      %v4910 = vmul.f32 1.0, %v4909
      %v4911 = vmul.f32 %v4272, %v4445
      %v4912 = vmul.f32 %v4274, %v4460
      %v4913 = vmul.f32 %v4276, %v4475
      %v4914 = vmul.f32 %v4278, %v4490
      %v4915 = vmul.f32 %v4280, %v4505
      %v4916 = vmul.f32 %v4282, %v4520
      %v4917 = vmul.f32 %v4284, %v4535
      %v4918 = vmul.f32 %v4286, %v4550
      %v4919 = vmul.f32 %v4288, %v4565
      %v4920 = vmul.f32 %v4290, %v4580
      %v4921 = vmul.f32 %v4292, %v4595
      %v4922 = vmul.f32 %v4294, %v4610
      %v4923 = vmul.f32 %v4296, %v4625
      %v4924 = vmul.f32 %v4298, %v4640
      %v4925 = vmul.f32 %v4300, %v4655
      %v4926 = vmul.f32 %v4302, %v4670
      %v4927 = vmul.f32 %v4304, %v4685
      %v4928 = vmul.f32 %v4306, %v4700
      %v4929 = vmul.f32 %v4308, %v4715
      %v4930 = vmul.f32 %v4310, %v4730
      %v4931 = vmul.f32 %v4312, %v4745
      %v4932 = vmul.f32 %v4314, %v4760
      %v4933 = vmul.f32 %v4316, %v4775
      %v4934 = vmul.f32 %v4318, %v4790
      %v4935 = vmul.f32 %v4320, %v4805
      %v4936 = vmul.f32 %v4322, %v4820
      %v4937 = vmul.f32 %v4324, %v4835
      %v4938 = vmul.f32 %v4326, %v4850
      %v4939 = vmul.f32 %v4328, %v4865
      %v4940 = vmul.f32 %v4330, %v4880
      %v4941 = vmul.f32 %v4332, %v4895
      %v4942 = vmul.f32 %v4334, %v4910
      %v4943 = vpack.c.bf16 %v4911, %v4911
      %v4944 = vpack.c.bf16 %v4912, %v4912
      %v4945 = vpack.c.bf16 %v4913, %v4913
      %v4946 = vpack.c.bf16 %v4914, %v4914
      %v4947 = vpack.c.bf16 %v4915, %v4915
      %v4948 = vpack.c.bf16 %v4916, %v4916
      %v4949 = vpack.c.bf16 %v4917, %v4917
      %v4950 = vpack.c.bf16 %v4918, %v4918
      %v4951 = vpack.c.bf16 %v4919, %v4919
      %v4952 = vpack.c.bf16 %v4920, %v4920
      %v4953 = vpack.c.bf16 %v4921, %v4921
      %v4954 = vpack.c.bf16 %v4922, %v4922
      %v4955 = vpack.c.bf16 %v4923, %v4923
      %v4956 = vpack.c.bf16 %v4924, %v4924
      %v4957 = vpack.c.bf16 %v4925, %v4925
      %v4958 = vpack.c.bf16 %v4926, %v4926
      %v4959 = vpack.c.bf16 %v4927, %v4927
      %v4960 = vpack.c.bf16 %v4928, %v4928
      %v4961 = vpack.c.bf16 %v4929, %v4929
      %v4962 = vpack.c.bf16 %v4930, %v4930
      %v4963 = vpack.c.bf16 %v4931, %v4931
      %v4964 = vpack.c.bf16 %v4932, %v4932
      %v4965 = vpack.c.bf16 %v4933, %v4933
      %v4966 = vpack.c.bf16 %v4934, %v4934
      %v4967 = vpack.c.bf16 %v4935, %v4935
      %v4968 = vpack.c.bf16 %v4936, %v4936
      %v4969 = vpack.c.bf16 %v4937, %v4937
      %v4970 = vpack.c.bf16 %v4938, %v4938
      %v4971 = vpack.c.bf16 %v4939, %v4939
      %v4972 = vpack.c.bf16 %v4940, %v4940
      %v4973 = vpack.c.bf16 %v4941, %v4941
      %v4974 = vpack.c.bf16 %v4942, %v4942
      %v4977 = vunpack.c.l.b16 %v4943
      %v4978 = vunpack.c.l.b16 %v4944
      %v4979 = vpack.c.b16 %v4978, %v4977
      %4980 = vrot.lane.b32.xlu0 %v481, 48
      %v4981 = vpop.permute.xlu0 %4980
      %v4984 = vsel %vm910, %v4979, 0
      %4986 = vmatpush.bf16.msra.mxu0 0
      %4987 = vmatpush.bf16.msra.mxu0 0
      %4988 = vmatpush.bf16.msra.mxu0 0
      %4989 = vmatpush.bf16.msra.mxu0 0
      %4990 = vmatpush.bf16.msra.mxu0 0
      %4991 = vmatpush.bf16.msra.mxu0 0
      %4992 = vmatpush.bf16.msra.mxu0 0
      %4993 = vmatpush.bf16.msra.mxu0 %v4981
      %4994 = vmatmul.bf16.gmra.mxu0 %v4984
      %v4995 = vpop.f32.mrf.mxu0
      %v4996 = vadd.f32 0.0, %v4995
      %v4997 = vpop.f32.mrf.mxu0
      %v4998 = vadd.f32 0.0, %v4997
      %4999 = vdwg.mxu0
      %v5002 = vunpack.c.l.b16 %v4945
      %v5003 = vunpack.c.l.b16 %v4946
      %v5004 = vpack.c.b16 %v5003, %v5002
      %5005 = vrot.lane.b32.xlu0 %v509, 48
      %v5006 = vpop.permute.xlu0 %5005
      %v5009 = vsel %vm910, %v5004, 0
      %5011 = vmatpush.bf16.msra.mxu0 0
      %5012 = vmatpush.bf16.msra.mxu0 0
      %5013 = vmatpush.bf16.msra.mxu0 0
      %5014 = vmatpush.bf16.msra.mxu0 0
      %5015 = vmatpush.bf16.msra.mxu0 0
      %5016 = vmatpush.bf16.msra.mxu0 0
      %5017 = vmatpush.bf16.msra.mxu0 0
      %5018 = vmatpush.bf16.msra.mxu0 %v5006
      %5019 = vmatmul.bf16.gmra.mxu0 %v5009
      %v5020 = vpop.f32.mrf.mxu0
      %v5021 = vadd.f32 0.0, %v5020
      %v5022 = vpop.f32.mrf.mxu0
      %v5023 = vadd.f32 0.0, %v5022
      %5024 = vdwg.mxu0
      %v5027 = vunpack.c.l.b16 %v4947
      %v5028 = vunpack.c.l.b16 %v4948
      %v5029 = vpack.c.b16 %v5028, %v5027
      %5030 = vrot.lane.b32.xlu0 %v536, 48
      %v5031 = vpop.permute.xlu0 %5030
      %v5034 = vsel %vm910, %v5029, 0
      %5036 = vmatpush.bf16.msra.mxu0 0
      %5037 = vmatpush.bf16.msra.mxu0 0
      %5038 = vmatpush.bf16.msra.mxu0 0
      %5039 = vmatpush.bf16.msra.mxu0 0
      %5040 = vmatpush.bf16.msra.mxu0 0
      %5041 = vmatpush.bf16.msra.mxu0 0
      %5042 = vmatpush.bf16.msra.mxu0 0
      %5043 = vmatpush.bf16.msra.mxu0 %v5031
      %5044 = vmatmul.bf16.gmra.mxu0 %v5034
      %v5045 = vpop.f32.mrf.mxu0
      %v5046 = vadd.f32 0.0, %v5045
      %v5047 = vpop.f32.mrf.mxu0
      %v5048 = vadd.f32 0.0, %v5047
      %5049 = vdwg.mxu0
      %v5052 = vunpack.c.l.b16 %v4949
      %v5053 = vunpack.c.l.b16 %v4950
      %v5054 = vpack.c.b16 %v5053, %v5052
      %5055 = vrot.lane.b32.xlu0 %v563, 48
      %v5056 = vpop.permute.xlu0 %5055
      %v5059 = vsel %vm910, %v5054, 0
      %5061 = vmatpush.bf16.msra.mxu0 0
      %5062 = vmatpush.bf16.msra.mxu0 0
      %5063 = vmatpush.bf16.msra.mxu0 0
      %5064 = vmatpush.bf16.msra.mxu0 0
      %5065 = vmatpush.bf16.msra.mxu0 0
      %5066 = vmatpush.bf16.msra.mxu0 0
      %5067 = vmatpush.bf16.msra.mxu0 0
      %5068 = vmatpush.bf16.msra.mxu0 %v5056
      %5069 = vmatmul.bf16.gmra.mxu0 %v5059
      %v5070 = vpop.f32.mrf.mxu0
      %v5071 = vadd.f32 0.0, %v5070
      %v5072 = vpop.f32.mrf.mxu0
      %v5073 = vadd.f32 0.0, %v5072
      %5074 = vdwg.mxu0
      %v5077 = vunpack.c.l.b16 %v4951
      %v5078 = vunpack.c.l.b16 %v4952
      %v5079 = vpack.c.b16 %v5078, %v5077
      %5080 = vrot.lane.b32.xlu0 %v590, 48
      %v5081 = vpop.permute.xlu0 %5080
      %v5084 = vsel %vm910, %v5079, 0
      %5086 = vmatpush.bf16.msra.mxu0 0
      %5087 = vmatpush.bf16.msra.mxu0 0
      %5088 = vmatpush.bf16.msra.mxu0 0
      %5089 = vmatpush.bf16.msra.mxu0 0
      %5090 = vmatpush.bf16.msra.mxu0 0
      %5091 = vmatpush.bf16.msra.mxu0 0
      %5092 = vmatpush.bf16.msra.mxu0 0
      %5093 = vmatpush.bf16.msra.mxu0 %v5081
      %5094 = vmatmul.bf16.gmra.mxu0 %v5084
      %v5095 = vpop.f32.mrf.mxu0
      %v5096 = vadd.f32 0.0, %v5095
      %v5097 = vpop.f32.mrf.mxu0
      %v5098 = vadd.f32 0.0, %v5097
      %5099 = vdwg.mxu0
      %v5102 = vunpack.c.l.b16 %v4953
      %v5103 = vunpack.c.l.b16 %v4954
      %v5104 = vpack.c.b16 %v5103, %v5102
      %5105 = vrot.lane.b32.xlu0 %v617, 48
      %v5106 = vpop.permute.xlu0 %5105
      %v5109 = vsel %vm910, %v5104, 0
      %5111 = vmatpush.bf16.msra.mxu0 0
      %5112 = vmatpush.bf16.msra.mxu0 0
      %5113 = vmatpush.bf16.msra.mxu0 0
      %5114 = vmatpush.bf16.msra.mxu0 0
      %5115 = vmatpush.bf16.msra.mxu0 0
      %5116 = vmatpush.bf16.msra.mxu0 0
      %5117 = vmatpush.bf16.msra.mxu0 0
      %5118 = vmatpush.bf16.msra.mxu0 %v5106
      %5119 = vmatmul.bf16.gmra.mxu0 %v5109
      %v5120 = vpop.f32.mrf.mxu0
      %v5121 = vadd.f32 0.0, %v5120
      %v5122 = vpop.f32.mrf.mxu0
      %v5123 = vadd.f32 0.0, %v5122
      %5124 = vdwg.mxu0
      %v5127 = vunpack.c.l.b16 %v4955
      %v5128 = vunpack.c.l.b16 %v4956
      %v5129 = vpack.c.b16 %v5128, %v5127
      %5130 = vrot.lane.b32.xlu0 %v644, 48
      %v5131 = vpop.permute.xlu0 %5130
      %v5134 = vsel %vm910, %v5129, 0
      %5136 = vmatpush.bf16.msra.mxu0 0
      %5137 = vmatpush.bf16.msra.mxu0 0
      %5138 = vmatpush.bf16.msra.mxu0 0
      %5139 = vmatpush.bf16.msra.mxu0 0
      %5140 = vmatpush.bf16.msra.mxu0 0
      %5141 = vmatpush.bf16.msra.mxu0 0
      %5142 = vmatpush.bf16.msra.mxu0 0
      %5143 = vmatpush.bf16.msra.mxu0 %v5131
      %5144 = vmatmul.bf16.gmra.mxu0 %v5134
      %v5145 = vpop.f32.mrf.mxu0
      %v5146 = vadd.f32 0.0, %v5145
      %v5147 = vpop.f32.mrf.mxu0
      %v5148 = vadd.f32 0.0, %v5147
      %5149 = vdwg.mxu0
      %v5152 = vunpack.c.l.b16 %v4957
      %v5153 = vunpack.c.l.b16 %v4958
      %v5154 = vpack.c.b16 %v5153, %v5152
      %5155 = vrot.lane.b32.xlu0 %v671, 48
      %v5156 = vpop.permute.xlu0 %5155
      %v5159 = vsel %vm910, %v5154, 0
      %5161 = vmatpush.bf16.msra.mxu0 0
      %5162 = vmatpush.bf16.msra.mxu0 0
      %5163 = vmatpush.bf16.msra.mxu0 0
      %5164 = vmatpush.bf16.msra.mxu0 0
      %5165 = vmatpush.bf16.msra.mxu0 0
      %5166 = vmatpush.bf16.msra.mxu0 0
      %5167 = vmatpush.bf16.msra.mxu0 0
      %5168 = vmatpush.bf16.msra.mxu0 %v5156
      %5169 = vmatmul.bf16.gmra.mxu0 %v5159
      %v5170 = vpop.f32.mrf.mxu0
      %v5171 = vadd.f32 0.0, %v5170
      %v5172 = vpop.f32.mrf.mxu0
      %v5173 = vadd.f32 0.0, %v5172
      %5174 = vdwg.mxu0
      %v5177 = vunpack.c.l.b16 %v4959
      %v5178 = vunpack.c.l.b16 %v4960
      %v5179 = vpack.c.b16 %v5178, %v5177
      %5180 = vrot.lane.b32.xlu0 %v698, 48
      %v5181 = vpop.permute.xlu0 %5180
      %v5184 = vsel %vm910, %v5179, 0
      %5186 = vmatpush.bf16.msra.mxu0 0
      %5187 = vmatpush.bf16.msra.mxu0 0
      %5188 = vmatpush.bf16.msra.mxu0 0
      %5189 = vmatpush.bf16.msra.mxu0 0
      %5190 = vmatpush.bf16.msra.mxu0 0
      %5191 = vmatpush.bf16.msra.mxu0 0
      %5192 = vmatpush.bf16.msra.mxu0 0
      %5193 = vmatpush.bf16.msra.mxu0 %v5181
      %5194 = vmatmul.bf16.gmra.mxu0 %v5184
      %v5195 = vpop.f32.mrf.mxu0
      %v5196 = vadd.f32 0.0, %v5195
      %v5197 = vpop.f32.mrf.mxu0
      %v5198 = vadd.f32 0.0, %v5197
      %5199 = vdwg.mxu0
      %v5202 = vunpack.c.l.b16 %v4961
      %v5203 = vunpack.c.l.b16 %v4962
      %v5204 = vpack.c.b16 %v5203, %v5202
      %5205 = vrot.lane.b32.xlu0 %v725, 48
      %v5206 = vpop.permute.xlu0 %5205
      %v5209 = vsel %vm910, %v5204, 0
      %5211 = vmatpush.bf16.msra.mxu0 0
      %5212 = vmatpush.bf16.msra.mxu0 0
      %5213 = vmatpush.bf16.msra.mxu0 0
      %5214 = vmatpush.bf16.msra.mxu0 0
      %5215 = vmatpush.bf16.msra.mxu0 0
      %5216 = vmatpush.bf16.msra.mxu0 0
      %5217 = vmatpush.bf16.msra.mxu0 0
      %5218 = vmatpush.bf16.msra.mxu0 %v5206
      %5219 = vmatmul.bf16.gmra.mxu0 %v5209
      %v5220 = vpop.f32.mrf.mxu0
      %v5221 = vadd.f32 0.0, %v5220
      %v5222 = vpop.f32.mrf.mxu0
      %v5223 = vadd.f32 0.0, %v5222
      %5224 = vdwg.mxu0
      %v5227 = vunpack.c.l.b16 %v4963
      %v5228 = vunpack.c.l.b16 %v4964
      %v5229 = vpack.c.b16 %v5228, %v5227
      %5230 = vrot.lane.b32.xlu0 %v752, 48
      %v5231 = vpop.permute.xlu0 %5230
      %v5234 = vsel %vm910, %v5229, 0
      %5236 = vmatpush.bf16.msra.mxu0 0
      %5237 = vmatpush.bf16.msra.mxu0 0
      %5238 = vmatpush.bf16.msra.mxu0 0
      %5239 = vmatpush.bf16.msra.mxu0 0
      %5240 = vmatpush.bf16.msra.mxu0 0
      %5241 = vmatpush.bf16.msra.mxu0 0
      %5242 = vmatpush.bf16.msra.mxu0 0
      %5243 = vmatpush.bf16.msra.mxu0 %v5231
      %5244 = vmatmul.bf16.gmra.mxu0 %v5234
      %v5245 = vpop.f32.mrf.mxu0
      %v5246 = vadd.f32 0.0, %v5245
      %v5247 = vpop.f32.mrf.mxu0
      %v5248 = vadd.f32 0.0, %v5247
      %5249 = vdwg.mxu0
      %v5252 = vunpack.c.l.b16 %v4965
      %v5253 = vunpack.c.l.b16 %v4966
      %v5254 = vpack.c.b16 %v5253, %v5252
      %5255 = vrot.lane.b32.xlu0 %v779, 48
      %v5256 = vpop.permute.xlu0 %5255
      %v5259 = vsel %vm910, %v5254, 0
      %5261 = vmatpush.bf16.msra.mxu0 0
      %5262 = vmatpush.bf16.msra.mxu0 0
      %5263 = vmatpush.bf16.msra.mxu0 0
      %5264 = vmatpush.bf16.msra.mxu0 0
      %5265 = vmatpush.bf16.msra.mxu0 0
      %5266 = vmatpush.bf16.msra.mxu0 0
      %5267 = vmatpush.bf16.msra.mxu0 0
      %5268 = vmatpush.bf16.msra.mxu0 %v5256
      %5269 = vmatmul.bf16.gmra.mxu0 %v5259
      %v5270 = vpop.f32.mrf.mxu0
      %v5271 = vadd.f32 0.0, %v5270
      %v5272 = vpop.f32.mrf.mxu0
      %v5273 = vadd.f32 0.0, %v5272
      %5274 = vdwg.mxu0
      %v5277 = vunpack.c.l.b16 %v4967
      %v5278 = vunpack.c.l.b16 %v4968
      %v5279 = vpack.c.b16 %v5278, %v5277
      %5280 = vrot.lane.b32.xlu0 %v806, 48
      %v5281 = vpop.permute.xlu0 %5280
      %v5284 = vsel %vm910, %v5279, 0
      %5286 = vmatpush.bf16.msra.mxu0 0
      %5287 = vmatpush.bf16.msra.mxu0 0
      %5288 = vmatpush.bf16.msra.mxu0 0
      %5289 = vmatpush.bf16.msra.mxu0 0
      %5290 = vmatpush.bf16.msra.mxu0 0
      %5291 = vmatpush.bf16.msra.mxu0 0
      %5292 = vmatpush.bf16.msra.mxu0 0
      %5293 = vmatpush.bf16.msra.mxu0 %v5281
      %5294 = vmatmul.bf16.gmra.mxu0 %v5284
      %v5295 = vpop.f32.mrf.mxu0
      %v5296 = vadd.f32 0.0, %v5295
      %v5297 = vpop.f32.mrf.mxu0
      %v5298 = vadd.f32 0.0, %v5297
      %5299 = vdwg.mxu0
      %v5302 = vunpack.c.l.b16 %v4969
      %v5303 = vunpack.c.l.b16 %v4970
      %v5304 = vpack.c.b16 %v5303, %v5302
      %5305 = vrot.lane.b32.xlu0 %v833, 48
      %v5306 = vpop.permute.xlu0 %5305
      %v5309 = vsel %vm910, %v5304, 0
      %5311 = vmatpush.bf16.msra.mxu0 0
      %5312 = vmatpush.bf16.msra.mxu0 0
      %5313 = vmatpush.bf16.msra.mxu0 0
      %5314 = vmatpush.bf16.msra.mxu0 0
      %5315 = vmatpush.bf16.msra.mxu0 0
      %5316 = vmatpush.bf16.msra.mxu0 0
      %5317 = vmatpush.bf16.msra.mxu0 0
      %5318 = vmatpush.bf16.msra.mxu0 %v5306
      %5319 = vmatmul.bf16.gmra.mxu0 %v5309
      %v5320 = vpop.f32.mrf.mxu0
      %v5321 = vadd.f32 0.0, %v5320
      %v5322 = vpop.f32.mrf.mxu0
      %v5323 = vadd.f32 0.0, %v5322
      %5324 = vdwg.mxu0
      %v5327 = vunpack.c.l.b16 %v4971
      %v5328 = vunpack.c.l.b16 %v4972
      %v5329 = vpack.c.b16 %v5328, %v5327
      %5330 = vrot.lane.b32.xlu0 %v860, 48
      %v5331 = vpop.permute.xlu0 %5330
      %v5334 = vsel %vm910, %v5329, 0
      %5336 = vmatpush.bf16.msra.mxu0 0
      %5337 = vmatpush.bf16.msra.mxu0 0
      %5338 = vmatpush.bf16.msra.mxu0 0
      %5339 = vmatpush.bf16.msra.mxu0 0
      %5340 = vmatpush.bf16.msra.mxu0 0
      %5341 = vmatpush.bf16.msra.mxu0 0
      %5342 = vmatpush.bf16.msra.mxu0 0
      %5343 = vmatpush.bf16.msra.mxu0 %v5331
      %5344 = vmatmul.bf16.gmra.mxu0 %v5334
      %v5345 = vpop.f32.mrf.mxu0
      %v5346 = vadd.f32 0.0, %v5345
      %v5347 = vpop.f32.mrf.mxu0
      %v5348 = vadd.f32 0.0, %v5347
      %5349 = vdwg.mxu0
      %v5352 = vunpack.c.l.b16 %v4973
      %v5353 = vunpack.c.l.b16 %v4974
      %v5354 = vpack.c.b16 %v5353, %v5352
      %5355 = vrot.lane.b32.xlu0 %v887, 48
      %v5356 = vpop.permute.xlu0 %5355
      %v5359 = vsel %vm910, %v5354, 0
      %5361 = vmatpush.bf16.msra.mxu0 0
      %5362 = vmatpush.bf16.msra.mxu0 0
      %5363 = vmatpush.bf16.msra.mxu0 0
      %5364 = vmatpush.bf16.msra.mxu0 0
      %5365 = vmatpush.bf16.msra.mxu0 0
      %5366 = vmatpush.bf16.msra.mxu0 0
      %5367 = vmatpush.bf16.msra.mxu0 0
      %5368 = vmatpush.bf16.msra.mxu0 %v5356
      %5369 = vmatmul.bf16.gmra.mxu0 %v5359
      %v5370 = vpop.f32.mrf.mxu0
      %v5371 = vadd.f32 0.0, %v5370
      %v5372 = vpop.f32.mrf.mxu0
      %v5373 = vadd.f32 0.0, %v5372
      %5374 = vdwg.mxu0
      %5375 = vrot.lane.b32.xlu0 %v481, 104
      %v5376 = vpop.permute.xlu0 %5375
      %5377 = vrot.lane.b32.xlu0 %v481, 72
      %v5378 = vpop.permute.xlu0 %5377
      %v5380 = vsel %vm484, %v5376, 0
      %v5383 = vsel %vm484, %v5378, 0
      %5385 = vmatpush.bf16.xpose.msra.mxu0 0
      %5386 = vmatpush.bf16.xpose.msra.mxu0 0
      %5387 = vmatpush.bf16.xpose.msra.mxu0 0
      %5388 = vmatpush.bf16.xpose.msra.mxu0 0
      %5389 = vmatpush.bf16.xpose.msra.mxu0 0
      %5390 = vmatpush.bf16.xpose.msra.mxu0 0
      %5391 = vmatpush.bf16.xpose.msra.mxu0 0
      %5392 = vmatpush.bf16.xpose.msra.mxu0 %v5383
      %5393 = vmatmul.bf16.gmra.mxu0 %v5380
      %v5394 = vpop.f32.mrf.mxu0
      %v5395 = vadd.f32 0.0, %v5394
      %v5396 = vpop.f32.mrf.mxu0
      %v5397 = vadd.f32 0.0, %v5396
      %5398 = vdwg.mxu0
      %5399 = vrot.lane.b32.xlu0 %v509, 104
      %v5400 = vpop.permute.xlu0 %5399
      %5401 = vrot.lane.b32.xlu0 %v509, 72
      %v5402 = vpop.permute.xlu0 %5401
      %v5404 = vsel %vm484, %v5400, 0
      %v5407 = vsel %vm484, %v5402, 0
      %5409 = vmatpush.bf16.xpose.msra.mxu0 0
      %5410 = vmatpush.bf16.xpose.msra.mxu0 0
      %5411 = vmatpush.bf16.xpose.msra.mxu0 0
      %5412 = vmatpush.bf16.xpose.msra.mxu0 0
      %5413 = vmatpush.bf16.xpose.msra.mxu0 0
      %5414 = vmatpush.bf16.xpose.msra.mxu0 0
      %5415 = vmatpush.bf16.xpose.msra.mxu0 0
      %5416 = vmatpush.bf16.xpose.msra.mxu0 %v5407
      %5417 = vmatmul.bf16.gmra.mxu0 %v5404
      %v5418 = vpop.f32.mrf.mxu0
      %v5419 = vadd.f32 0.0, %v5418
      %v5420 = vpop.f32.mrf.mxu0
      %v5421 = vadd.f32 0.0, %v5420
      %5422 = vdwg.mxu0
      %5423 = vrot.lane.b32.xlu0 %v536, 104
      %v5424 = vpop.permute.xlu0 %5423
      %5425 = vrot.lane.b32.xlu0 %v536, 72
      %v5426 = vpop.permute.xlu0 %5425
      %v5428 = vsel %vm484, %v5424, 0
      %v5431 = vsel %vm484, %v5426, 0
      %5433 = vmatpush.bf16.xpose.msra.mxu0 0
      %5434 = vmatpush.bf16.xpose.msra.mxu0 0
      %5435 = vmatpush.bf16.xpose.msra.mxu0 0
      %5436 = vmatpush.bf16.xpose.msra.mxu0 0
      %5437 = vmatpush.bf16.xpose.msra.mxu0 0
      %5438 = vmatpush.bf16.xpose.msra.mxu0 0
      %5439 = vmatpush.bf16.xpose.msra.mxu0 0
      %5440 = vmatpush.bf16.xpose.msra.mxu0 %v5431
      %5441 = vmatmul.bf16.gmra.mxu0 %v5428
      %v5442 = vpop.f32.mrf.mxu0
      %v5443 = vadd.f32 0.0, %v5442
      %v5444 = vpop.f32.mrf.mxu0
      %v5445 = vadd.f32 0.0, %v5444
      %5446 = vdwg.mxu0
      %5447 = vrot.lane.b32.xlu0 %v563, 104
      %v5448 = vpop.permute.xlu0 %5447
      %5449 = vrot.lane.b32.xlu0 %v563, 72
      %v5450 = vpop.permute.xlu0 %5449
      %v5452 = vsel %vm484, %v5448, 0
      %v5455 = vsel %vm484, %v5450, 0
      %5457 = vmatpush.bf16.xpose.msra.mxu0 0
      %5458 = vmatpush.bf16.xpose.msra.mxu0 0
      %5459 = vmatpush.bf16.xpose.msra.mxu0 0
      %5460 = vmatpush.bf16.xpose.msra.mxu0 0
      %5461 = vmatpush.bf16.xpose.msra.mxu0 0
      %5462 = vmatpush.bf16.xpose.msra.mxu0 0
      %5463 = vmatpush.bf16.xpose.msra.mxu0 0
      %5464 = vmatpush.bf16.xpose.msra.mxu0 %v5455
      %5465 = vmatmul.bf16.gmra.mxu0 %v5452
      %v5466 = vpop.f32.mrf.mxu0
      %v5467 = vadd.f32 0.0, %v5466
      %v5468 = vpop.f32.mrf.mxu0
      %v5469 = vadd.f32 0.0, %v5468
      %5470 = vdwg.mxu0
      %5471 = vrot.lane.b32.xlu0 %v590, 104
      %v5472 = vpop.permute.xlu0 %5471
      %5473 = vrot.lane.b32.xlu0 %v590, 72
      %v5474 = vpop.permute.xlu0 %5473
      %v5476 = vsel %vm484, %v5472, 0
      %v5479 = vsel %vm484, %v5474, 0
      %5481 = vmatpush.bf16.xpose.msra.mxu0 0
      %5482 = vmatpush.bf16.xpose.msra.mxu0 0
      %5483 = vmatpush.bf16.xpose.msra.mxu0 0
      %5484 = vmatpush.bf16.xpose.msra.mxu0 0
      %5485 = vmatpush.bf16.xpose.msra.mxu0 0
      %5486 = vmatpush.bf16.xpose.msra.mxu0 0
      %5487 = vmatpush.bf16.xpose.msra.mxu0 0
      %5488 = vmatpush.bf16.xpose.msra.mxu0 %v5479
      %5489 = vmatmul.bf16.gmra.mxu0 %v5476
      %v5490 = vpop.f32.mrf.mxu0
      %v5491 = vadd.f32 0.0, %v5490
      %v5492 = vpop.f32.mrf.mxu0
      %v5493 = vadd.f32 0.0, %v5492
      %5494 = vdwg.mxu0
      %5495 = vrot.lane.b32.xlu0 %v617, 104
      %v5496 = vpop.permute.xlu0 %5495
      %5497 = vrot.lane.b32.xlu0 %v617, 72
      %v5498 = vpop.permute.xlu0 %5497
      %v5500 = vsel %vm484, %v5496, 0
      %v5503 = vsel %vm484, %v5498, 0
      %5505 = vmatpush.bf16.xpose.msra.mxu0 0
      %5506 = vmatpush.bf16.xpose.msra.mxu0 0
      %5507 = vmatpush.bf16.xpose.msra.mxu0 0
      %5508 = vmatpush.bf16.xpose.msra.mxu0 0
      %5509 = vmatpush.bf16.xpose.msra.mxu0 0
      %5510 = vmatpush.bf16.xpose.msra.mxu0 0
      %5511 = vmatpush.bf16.xpose.msra.mxu0 0
      %5512 = vmatpush.bf16.xpose.msra.mxu0 %v5503
      %5513 = vmatmul.bf16.gmra.mxu0 %v5500
      %v5514 = vpop.f32.mrf.mxu0
      %v5515 = vadd.f32 0.0, %v5514
      %v5516 = vpop.f32.mrf.mxu0
      %v5517 = vadd.f32 0.0, %v5516
      %5518 = vdwg.mxu0
      %5519 = vrot.lane.b32.xlu0 %v644, 104
      %v5520 = vpop.permute.xlu0 %5519
      %5521 = vrot.lane.b32.xlu0 %v644, 72
      %v5522 = vpop.permute.xlu0 %5521
      %v5524 = vsel %vm484, %v5520, 0
      %v5527 = vsel %vm484, %v5522, 0
      %5529 = vmatpush.bf16.xpose.msra.mxu0 0
      %5530 = vmatpush.bf16.xpose.msra.mxu0 0
      %5531 = vmatpush.bf16.xpose.msra.mxu0 0
      %5532 = vmatpush.bf16.xpose.msra.mxu0 0
      %5533 = vmatpush.bf16.xpose.msra.mxu0 0
      %5534 = vmatpush.bf16.xpose.msra.mxu0 0
      %5535 = vmatpush.bf16.xpose.msra.mxu0 0
      %5536 = vmatpush.bf16.xpose.msra.mxu0 %v5527
      %5537 = vmatmul.bf16.gmra.mxu0 %v5524
      %v5538 = vpop.f32.mrf.mxu0
      %v5539 = vadd.f32 0.0, %v5538
      %v5540 = vpop.f32.mrf.mxu0
      %v5541 = vadd.f32 0.0, %v5540
      %5542 = vdwg.mxu0
      %5543 = vrot.lane.b32.xlu0 %v671, 104
      %v5544 = vpop.permute.xlu0 %5543
      %5545 = vrot.lane.b32.xlu0 %v671, 72
      %v5546 = vpop.permute.xlu0 %5545
      %v5548 = vsel %vm484, %v5544, 0
      %v5551 = vsel %vm484, %v5546, 0
      %5553 = vmatpush.bf16.xpose.msra.mxu0 0
      %5554 = vmatpush.bf16.xpose.msra.mxu0 0
      %5555 = vmatpush.bf16.xpose.msra.mxu0 0
      %5556 = vmatpush.bf16.xpose.msra.mxu0 0
      %5557 = vmatpush.bf16.xpose.msra.mxu0 0
      %5558 = vmatpush.bf16.xpose.msra.mxu0 0
      %5559 = vmatpush.bf16.xpose.msra.mxu0 0
      %5560 = vmatpush.bf16.xpose.msra.mxu0 %v5551
      %5561 = vmatmul.bf16.gmra.mxu0 %v5548
      %v5562 = vpop.f32.mrf.mxu0
      %v5563 = vadd.f32 0.0, %v5562
      %v5564 = vpop.f32.mrf.mxu0
      %v5565 = vadd.f32 0.0, %v5564
      %5566 = vdwg.mxu0
      %5567 = vrot.lane.b32.xlu0 %v698, 104
      %v5568 = vpop.permute.xlu0 %5567
      %5569 = vrot.lane.b32.xlu0 %v698, 72
      %v5570 = vpop.permute.xlu0 %5569
      %v5572 = vsel %vm484, %v5568, 0
      %v5575 = vsel %vm484, %v5570, 0
      %5577 = vmatpush.bf16.xpose.msra.mxu0 0
      %5578 = vmatpush.bf16.xpose.msra.mxu0 0
      %5579 = vmatpush.bf16.xpose.msra.mxu0 0
      %5580 = vmatpush.bf16.xpose.msra.mxu0 0
      %5581 = vmatpush.bf16.xpose.msra.mxu0 0
      %5582 = vmatpush.bf16.xpose.msra.mxu0 0
      %5583 = vmatpush.bf16.xpose.msra.mxu0 0
      %5584 = vmatpush.bf16.xpose.msra.mxu0 %v5575
      %5585 = vmatmul.bf16.gmra.mxu0 %v5572
      %v5586 = vpop.f32.mrf.mxu0
      %v5587 = vadd.f32 0.0, %v5586
      %v5588 = vpop.f32.mrf.mxu0
      %v5589 = vadd.f32 0.0, %v5588
      %5590 = vdwg.mxu0
      %5591 = vrot.lane.b32.xlu0 %v725, 104
      %v5592 = vpop.permute.xlu0 %5591
      %5593 = vrot.lane.b32.xlu0 %v725, 72
      %v5594 = vpop.permute.xlu0 %5593
      %v5596 = vsel %vm484, %v5592, 0
      %v5599 = vsel %vm484, %v5594, 0
      %5601 = vmatpush.bf16.xpose.msra.mxu0 0
      %5602 = vmatpush.bf16.xpose.msra.mxu0 0
      %5603 = vmatpush.bf16.xpose.msra.mxu0 0
      %5604 = vmatpush.bf16.xpose.msra.mxu0 0
      %5605 = vmatpush.bf16.xpose.msra.mxu0 0
      %5606 = vmatpush.bf16.xpose.msra.mxu0 0
      %5607 = vmatpush.bf16.xpose.msra.mxu0 0
      %5608 = vmatpush.bf16.xpose.msra.mxu0 %v5599
      %5609 = vmatmul.bf16.gmra.mxu0 %v5596
      %v5610 = vpop.f32.mrf.mxu0
      %v5611 = vadd.f32 0.0, %v5610
      %v5612 = vpop.f32.mrf.mxu0
      %v5613 = vadd.f32 0.0, %v5612
      %5614 = vdwg.mxu0
      %5615 = vrot.lane.b32.xlu0 %v752, 104
      %v5616 = vpop.permute.xlu0 %5615
      %5617 = vrot.lane.b32.xlu0 %v752, 72
      %v5618 = vpop.permute.xlu0 %5617
      %v5620 = vsel %vm484, %v5616, 0
      %v5623 = vsel %vm484, %v5618, 0
      %5625 = vmatpush.bf16.xpose.msra.mxu0 0
      %5626 = vmatpush.bf16.xpose.msra.mxu0 0
      %5627 = vmatpush.bf16.xpose.msra.mxu0 0
      %5628 = vmatpush.bf16.xpose.msra.mxu0 0
      %5629 = vmatpush.bf16.xpose.msra.mxu0 0
      %5630 = vmatpush.bf16.xpose.msra.mxu0 0
      %5631 = vmatpush.bf16.xpose.msra.mxu0 0
      %5632 = vmatpush.bf16.xpose.msra.mxu0 %v5623
      %5633 = vmatmul.bf16.gmra.mxu0 %v5620
      %v5634 = vpop.f32.mrf.mxu0
      %v5635 = vadd.f32 0.0, %v5634
      %v5636 = vpop.f32.mrf.mxu0
      %v5637 = vadd.f32 0.0, %v5636
      %5638 = vdwg.mxu0
      %5639 = vrot.lane.b32.xlu0 %v779, 104
      %v5640 = vpop.permute.xlu0 %5639
      %5641 = vrot.lane.b32.xlu0 %v779, 72
      %v5642 = vpop.permute.xlu0 %5641
      %v5644 = vsel %vm484, %v5640, 0
      %v5647 = vsel %vm484, %v5642, 0
      %5649 = vmatpush.bf16.xpose.msra.mxu0 0
      %5650 = vmatpush.bf16.xpose.msra.mxu0 0
      %5651 = vmatpush.bf16.xpose.msra.mxu0 0
      %5652 = vmatpush.bf16.xpose.msra.mxu0 0
      %5653 = vmatpush.bf16.xpose.msra.mxu0 0
      %5654 = vmatpush.bf16.xpose.msra.mxu0 0
      %5655 = vmatpush.bf16.xpose.msra.mxu0 0
      %5656 = vmatpush.bf16.xpose.msra.mxu0 %v5647
      %5657 = vmatmul.bf16.gmra.mxu0 %v5644
      %v5658 = vpop.f32.mrf.mxu0
      %v5659 = vadd.f32 0.0, %v5658
      %v5660 = vpop.f32.mrf.mxu0
      %v5661 = vadd.f32 0.0, %v5660
      %5662 = vdwg.mxu0
      %5663 = vrot.lane.b32.xlu0 %v806, 104
      %v5664 = vpop.permute.xlu0 %5663
      %5665 = vrot.lane.b32.xlu0 %v806, 72
      %v5666 = vpop.permute.xlu0 %5665
      %v5668 = vsel %vm484, %v5664, 0
      %v5671 = vsel %vm484, %v5666, 0
      %5673 = vmatpush.bf16.xpose.msra.mxu0 0
      %5674 = vmatpush.bf16.xpose.msra.mxu0 0
      %5675 = vmatpush.bf16.xpose.msra.mxu0 0
      %5676 = vmatpush.bf16.xpose.msra.mxu0 0
      %5677 = vmatpush.bf16.xpose.msra.mxu0 0
      %5678 = vmatpush.bf16.xpose.msra.mxu0 0
      %5679 = vmatpush.bf16.xpose.msra.mxu0 0
      %5680 = vmatpush.bf16.xpose.msra.mxu0 %v5671
      %5681 = vmatmul.bf16.gmra.mxu0 %v5668
      %v5682 = vpop.f32.mrf.mxu0
      %v5683 = vadd.f32 0.0, %v5682
      %v5684 = vpop.f32.mrf.mxu0
      %v5685 = vadd.f32 0.0, %v5684
      %5686 = vdwg.mxu0
      %5687 = vrot.lane.b32.xlu0 %v833, 104
      %v5688 = vpop.permute.xlu0 %5687
      %5689 = vrot.lane.b32.xlu0 %v833, 72
      %v5690 = vpop.permute.xlu0 %5689
      %v5692 = vsel %vm484, %v5688, 0
      %v5695 = vsel %vm484, %v5690, 0
      %5697 = vmatpush.bf16.xpose.msra.mxu0 0
      %5698 = vmatpush.bf16.xpose.msra.mxu0 0
      %5699 = vmatpush.bf16.xpose.msra.mxu0 0
      %5700 = vmatpush.bf16.xpose.msra.mxu0 0
      %5701 = vmatpush.bf16.xpose.msra.mxu0 0
      %5702 = vmatpush.bf16.xpose.msra.mxu0 0
      %5703 = vmatpush.bf16.xpose.msra.mxu0 0
      %5704 = vmatpush.bf16.xpose.msra.mxu0 %v5695
      %5705 = vmatmul.bf16.gmra.mxu0 %v5692
      %v5706 = vpop.f32.mrf.mxu0
      %v5707 = vadd.f32 0.0, %v5706
      %v5708 = vpop.f32.mrf.mxu0
      %v5709 = vadd.f32 0.0, %v5708
      %5710 = vdwg.mxu0
      %5711 = vrot.lane.b32.xlu0 %v860, 104
      %v5712 = vpop.permute.xlu0 %5711
      %5713 = vrot.lane.b32.xlu0 %v860, 72
      %v5714 = vpop.permute.xlu0 %5713
      %v5716 = vsel %vm484, %v5712, 0
      %v5719 = vsel %vm484, %v5714, 0
      %5721 = vmatpush.bf16.xpose.msra.mxu0 0
      %5722 = vmatpush.bf16.xpose.msra.mxu0 0
      %5723 = vmatpush.bf16.xpose.msra.mxu0 0
      %5724 = vmatpush.bf16.xpose.msra.mxu0 0
      %5725 = vmatpush.bf16.xpose.msra.mxu0 0
      %5726 = vmatpush.bf16.xpose.msra.mxu0 0
      %5727 = vmatpush.bf16.xpose.msra.mxu0 0
      %5728 = vmatpush.bf16.xpose.msra.mxu0 %v5719
      %5729 = vmatmul.bf16.gmra.mxu0 %v5716
      %v5730 = vpop.f32.mrf.mxu0
      %v5731 = vadd.f32 0.0, %v5730
      %v5732 = vpop.f32.mrf.mxu0
      %v5733 = vadd.f32 0.0, %v5732
      %5734 = vdwg.mxu0
      %5735 = vrot.lane.b32.xlu0 %v887, 104
      %v5736 = vpop.permute.xlu0 %5735
      %5737 = vrot.lane.b32.xlu0 %v887, 72
      %v5738 = vpop.permute.xlu0 %5737
      %v5740 = vsel %vm484, %v5736, 0
      %v5743 = vsel %vm484, %v5738, 0
      %5745 = vmatpush.bf16.xpose.msra.mxu0 0
      %5746 = vmatpush.bf16.xpose.msra.mxu0 0
      %5747 = vmatpush.bf16.xpose.msra.mxu0 0
      %5748 = vmatpush.bf16.xpose.msra.mxu0 0
      %5749 = vmatpush.bf16.xpose.msra.mxu0 0
      %5750 = vmatpush.bf16.xpose.msra.mxu0 0
      %5751 = vmatpush.bf16.xpose.msra.mxu0 0
      %5752 = vmatpush.bf16.xpose.msra.mxu0 %v5743
      %5753 = vmatmul.bf16.gmra.mxu0 %v5740
      %v5754 = vpop.f32.mrf.mxu0
      %v5755 = vadd.f32 0.0, %v5754
      %v5756 = vpop.f32.mrf.mxu0
      %v5757 = vadd.f32 0.0, %v5756
      %5758 = vdwg.mxu0
      %v5759 = vsel %vm910, %v5395, -inf
      %5760 = vmax.xlane.f32.xlu0 %v5759
      %v5761 = vpop.xlane.xlu0 %5760
      %v5762 = vsel %vm910, %v5397, -inf
      %5763 = vmax.xlane.f32.xlu0 %v5762
      %v5764 = vpop.xlane.xlu0 %5763
      %v5765 = vsel %vm910, %v5419, -inf
      %5766 = vmax.xlane.f32.xlu0 %v5765
      %v5767 = vpop.xlane.xlu0 %5766
      %v5768 = vsel %vm910, %v5421, -inf
      %5769 = vmax.xlane.f32.xlu0 %v5768
      %v5770 = vpop.xlane.xlu0 %5769
      %v5771 = vsel %vm910, %v5443, -inf
      %5772 = vmax.xlane.f32.xlu0 %v5771
      %v5773 = vpop.xlane.xlu0 %5772
      %v5774 = vsel %vm910, %v5445, -inf
      %5775 = vmax.xlane.f32.xlu0 %v5774
      %v5776 = vpop.xlane.xlu0 %5775
      %v5777 = vsel %vm910, %v5467, -inf
      %5778 = vmax.xlane.f32.xlu0 %v5777
      %v5779 = vpop.xlane.xlu0 %5778
      %v5780 = vsel %vm910, %v5469, -inf
      %5781 = vmax.xlane.f32.xlu0 %v5780
      %v5782 = vpop.xlane.xlu0 %5781
      %v5783 = vsel %vm910, %v5491, -inf
      %5784 = vmax.xlane.f32.xlu0 %v5783
      %v5785 = vpop.xlane.xlu0 %5784
      %v5786 = vsel %vm910, %v5493, -inf
      %5787 = vmax.xlane.f32.xlu0 %v5786
      %v5788 = vpop.xlane.xlu0 %5787
      %v5789 = vsel %vm910, %v5515, -inf
      %5790 = vmax.xlane.f32.xlu0 %v5789
      %v5791 = vpop.xlane.xlu0 %5790
      %v5792 = vsel %vm910, %v5517, -inf
      %5793 = vmax.xlane.f32.xlu0 %v5792
      %v5794 = vpop.xlane.xlu0 %5793
      %v5795 = vsel %vm910, %v5539, -inf
      %5796 = vmax.xlane.f32.xlu0 %v5795
      %v5797 = vpop.xlane.xlu0 %5796
      %v5798 = vsel %vm910, %v5541, -inf
      %5799 = vmax.xlane.f32.xlu0 %v5798
      %v5800 = vpop.xlane.xlu0 %5799
      %v5801 = vsel %vm910, %v5563, -inf
      %5802 = vmax.xlane.f32.xlu0 %v5801
      %v5803 = vpop.xlane.xlu0 %5802
      %v5804 = vsel %vm910, %v5565, -inf
      %5805 = vmax.xlane.f32.xlu0 %v5804
      %v5806 = vpop.xlane.xlu0 %5805
      %v5807 = vsel %vm910, %v5587, -inf
      %5808 = vmax.xlane.f32.xlu0 %v5807
      %v5809 = vpop.xlane.xlu0 %5808
      %v5810 = vsel %vm910, %v5589, -inf
      %5811 = vmax.xlane.f32.xlu0 %v5810
      %v5812 = vpop.xlane.xlu0 %5811
      %v5813 = vsel %vm910, %v5611, -inf
      %5814 = vmax.xlane.f32.xlu0 %v5813
      %v5815 = vpop.xlane.xlu0 %5814
      %v5816 = vsel %vm910, %v5613, -inf
      %5817 = vmax.xlane.f32.xlu0 %v5816
      %v5818 = vpop.xlane.xlu0 %5817
      %v5819 = vsel %vm910, %v5635, -inf
      %5820 = vmax.xlane.f32.xlu0 %v5819
      %v5821 = vpop.xlane.xlu0 %5820
      %v5822 = vsel %vm910, %v5637, -inf
      %5823 = vmax.xlane.f32.xlu0 %v5822
      %v5824 = vpop.xlane.xlu0 %5823
      %v5825 = vsel %vm910, %v5659, -inf
      %5826 = vmax.xlane.f32.xlu0 %v5825
      %v5827 = vpop.xlane.xlu0 %5826
      %v5828 = vsel %vm910, %v5661, -inf
      %5829 = vmax.xlane.f32.xlu0 %v5828
      %v5830 = vpop.xlane.xlu0 %5829
      %v5831 = vsel %vm910, %v5683, -inf
      %5832 = vmax.xlane.f32.xlu0 %v5831
      %v5833 = vpop.xlane.xlu0 %5832
      %v5834 = vsel %vm910, %v5685, -inf
      %5835 = vmax.xlane.f32.xlu0 %v5834
      %v5836 = vpop.xlane.xlu0 %5835
      %v5837 = vsel %vm910, %v5707, -inf
      %5838 = vmax.xlane.f32.xlu0 %v5837
      %v5839 = vpop.xlane.xlu0 %5838
      %v5840 = vsel %vm910, %v5709, -inf
      %5841 = vmax.xlane.f32.xlu0 %v5840
      %v5842 = vpop.xlane.xlu0 %5841
      %v5843 = vsel %vm910, %v5731, -inf
      %5844 = vmax.xlane.f32.xlu0 %v5843
      %v5845 = vpop.xlane.xlu0 %5844
      %v5846 = vsel %vm910, %v5733, -inf
      %5847 = vmax.xlane.f32.xlu0 %v5846
      %v5848 = vpop.xlane.xlu0 %5847
      %v5849 = vsel %vm910, %v5755, -inf
      %5850 = vmax.xlane.f32.xlu0 %v5849
      %v5851 = vpop.xlane.xlu0 %5850
      %v5852 = vsel %vm910, %v5757, -inf
      %5853 = vmax.xlane.f32.xlu0 %v5852
      %v5854 = vpop.xlane.xlu0 %5853
      %v5855 = vsub.f32 %v5395, %v5761
      %v5856 = vsub.f32 %v5397, %v5764
      %v5857 = vsub.f32 %v5419, %v5767
      %v5858 = vsub.f32 %v5421, %v5770
      %v5859 = vsub.f32 %v5443, %v5773
      %v5860 = vsub.f32 %v5445, %v5776
      %v5861 = vsub.f32 %v5467, %v5779
      %v5862 = vsub.f32 %v5469, %v5782
      %v5863 = vsub.f32 %v5491, %v5785
      %v5864 = vsub.f32 %v5493, %v5788
      %v5865 = vsub.f32 %v5515, %v5791
      %v5866 = vsub.f32 %v5517, %v5794
      %v5867 = vsub.f32 %v5539, %v5797
      %v5868 = vsub.f32 %v5541, %v5800
      %v5869 = vsub.f32 %v5563, %v5803
      %v5870 = vsub.f32 %v5565, %v5806
      %v5871 = vsub.f32 %v5587, %v5809
      %v5872 = vsub.f32 %v5589, %v5812
      %v5873 = vsub.f32 %v5611, %v5815
      %v5874 = vsub.f32 %v5613, %v5818
      %v5875 = vsub.f32 %v5635, %v5821
      %v5876 = vsub.f32 %v5637, %v5824
      %v5877 = vsub.f32 %v5659, %v5827
      %v5878 = vsub.f32 %v5661, %v5830
      %v5879 = vsub.f32 %v5683, %v5833
      %v5880 = vsub.f32 %v5685, %v5836
      %v5881 = vsub.f32 %v5707, %v5839
      %v5882 = vsub.f32 %v5709, %v5842
      %v5883 = vsub.f32 %v5731, %v5845
      %v5884 = vsub.f32 %v5733, %v5848
      %v5885 = vsub.f32 %v5755, %v5851
      %v5886 = vsub.f32 %v5757, %v5854
      %v5887 = vmul.f32 %v5855, 1.442695
      %v5888 = vpow.pop %v5887
      %v5889 = vmul.f32 %v5856, 1.442695
      %v5890 = vpow.pop %v5889
      %v5891 = vmul.f32 %v5857, 1.442695
      %v5892 = vpow.pop %v5891
      %v5893 = vmul.f32 %v5858, 1.442695
      %v5894 = vpow.pop %v5893
      %v5895 = vmul.f32 %v5859, 1.442695
      %v5896 = vpow.pop %v5895
      %v5897 = vmul.f32 %v5860, 1.442695
      %v5898 = vpow.pop %v5897
      %v5899 = vmul.f32 %v5861, 1.442695
      %v5900 = vpow.pop %v5899
      %v5901 = vmul.f32 %v5862, 1.442695
      %v5902 = vpow.pop %v5901
      %v5903 = vmul.f32 %v5863, 1.442695
      %v5904 = vpow.pop %v5903
      %v5905 = vmul.f32 %v5864, 1.442695
      %v5906 = vpow.pop %v5905
      %v5907 = vmul.f32 %v5865, 1.442695
      %v5908 = vpow.pop %v5907
      %v5909 = vmul.f32 %v5866, 1.442695
      %v5910 = vpow.pop %v5909
      %v5911 = vmul.f32 %v5867, 1.442695
      %v5912 = vpow.pop %v5911
      %v5913 = vmul.f32 %v5868, 1.442695
      %v5914 = vpow.pop %v5913
      %v5915 = vmul.f32 %v5869, 1.442695
      %v5916 = vpow.pop %v5915
      %v5917 = vmul.f32 %v5870, 1.442695
      %v5918 = vpow.pop %v5917
      %v5919 = vmul.f32 %v5871, 1.442695
      %v5920 = vpow.pop %v5919
      %v5921 = vmul.f32 %v5872, 1.442695
      %v5922 = vpow.pop %v5921
      %v5923 = vmul.f32 %v5873, 1.442695
      %v5924 = vpow.pop %v5923
      %v5925 = vmul.f32 %v5874, 1.442695
      %v5926 = vpow.pop %v5925
      %v5927 = vmul.f32 %v5875, 1.442695
      %v5928 = vpow.pop %v5927
      %v5929 = vmul.f32 %v5876, 1.442695
      %v5930 = vpow.pop %v5929
      %v5931 = vmul.f32 %v5877, 1.442695
      %v5932 = vpow.pop %v5931
      %v5933 = vmul.f32 %v5878, 1.442695
      %v5934 = vpow.pop %v5933
      %v5935 = vmul.f32 %v5879, 1.442695
      %v5936 = vpow.pop %v5935
      %v5937 = vmul.f32 %v5880, 1.442695
      %v5938 = vpow.pop %v5937
      %v5939 = vmul.f32 %v5881, 1.442695
      %v5940 = vpow.pop %v5939
      %v5941 = vmul.f32 %v5882, 1.442695
      %v5942 = vpow.pop %v5941
      %v5943 = vmul.f32 %v5883, 1.442695
      %v5944 = vpow.pop %v5943
      %v5945 = vmul.f32 %v5884, 1.442695
      %v5946 = vpow.pop %v5945
      %v5947 = vmul.f32 %v5885, 1.442695
      %v5948 = vpow.pop %v5947
      %v5949 = vmul.f32 %v5886, 1.442695
      %v5950 = vpow.pop %v5949
      %v5951 = vsel %vm910, %v5888, 0.0
      %5952 = vadd.xlane.f32.xlu0 %v5951
      %v5953 = vpop.xlane.xlu0 %5952
      %v5954 = vsel %vm910, %v5890, 0.0
      %5955 = vadd.xlane.f32.xlu0 %v5954
      %v5956 = vpop.xlane.xlu0 %5955
      %v5957 = vsel %vm910, %v5892, 0.0
      %5958 = vadd.xlane.f32.xlu0 %v5957
      %v5959 = vpop.xlane.xlu0 %5958
      %v5960 = vsel %vm910, %v5894, 0.0
      %5961 = vadd.xlane.f32.xlu0 %v5960
      %v5962 = vpop.xlane.xlu0 %5961
      %v5963 = vsel %vm910, %v5896, 0.0
      %5964 = vadd.xlane.f32.xlu0 %v5963
      %v5965 = vpop.xlane.xlu0 %5964
      %v5966 = vsel %vm910, %v5898, 0.0
      %5967 = vadd.xlane.f32.xlu0 %v5966
      %v5968 = vpop.xlane.xlu0 %5967
      %v5969 = vsel %vm910, %v5900, 0.0
      %5970 = vadd.xlane.f32.xlu0 %v5969
      %v5971 = vpop.xlane.xlu0 %5970
      %v5972 = vsel %vm910, %v5902, 0.0
      %5973 = vadd.xlane.f32.xlu0 %v5972
      %v5974 = vpop.xlane.xlu0 %5973
      %v5975 = vsel %vm910, %v5904, 0.0
      %5976 = vadd.xlane.f32.xlu0 %v5975
      %v5977 = vpop.xlane.xlu0 %5976
      %v5978 = vsel %vm910, %v5906, 0.0
      %5979 = vadd.xlane.f32.xlu0 %v5978
      %v5980 = vpop.xlane.xlu0 %5979
      %v5981 = vsel %vm910, %v5908, 0.0
      %5982 = vadd.xlane.f32.xlu0 %v5981
      %v5983 = vpop.xlane.xlu0 %5982
      %v5984 = vsel %vm910, %v5910, 0.0
      %5985 = vadd.xlane.f32.xlu0 %v5984
      %v5986 = vpop.xlane.xlu0 %5985
      %v5987 = vsel %vm910, %v5912, 0.0
      %5988 = vadd.xlane.f32.xlu0 %v5987
      %v5989 = vpop.xlane.xlu0 %5988
      %v5990 = vsel %vm910, %v5914, 0.0
      %5991 = vadd.xlane.f32.xlu0 %v5990
      %v5992 = vpop.xlane.xlu0 %5991
      %v5993 = vsel %vm910, %v5916, 0.0
      %5994 = vadd.xlane.f32.xlu0 %v5993
      %v5995 = vpop.xlane.xlu0 %5994
      %v5996 = vsel %vm910, %v5918, 0.0
      %5997 = vadd.xlane.f32.xlu0 %v5996
      %v5998 = vpop.xlane.xlu0 %5997
      %v5999 = vsel %vm910, %v5920, 0.0
      %6000 = vadd.xlane.f32.xlu0 %v5999
      %v6001 = vpop.xlane.xlu0 %6000
      %v6002 = vsel %vm910, %v5922, 0.0
      %6003 = vadd.xlane.f32.xlu0 %v6002
      %v6004 = vpop.xlane.xlu0 %6003
      %v6005 = vsel %vm910, %v5924, 0.0
      %6006 = vadd.xlane.f32.xlu0 %v6005
      %v6007 = vpop.xlane.xlu0 %6006
      %v6008 = vsel %vm910, %v5926, 0.0
      %6009 = vadd.xlane.f32.xlu0 %v6008
      %v6010 = vpop.xlane.xlu0 %6009
      %v6011 = vsel %vm910, %v5928, 0.0
      %6012 = vadd.xlane.f32.xlu0 %v6011
      %v6013 = vpop.xlane.xlu0 %6012
      %v6014 = vsel %vm910, %v5930, 0.0
      %6015 = vadd.xlane.f32.xlu0 %v6014
      %v6016 = vpop.xlane.xlu0 %6015
      %v6017 = vsel %vm910, %v5932, 0.0
      %6018 = vadd.xlane.f32.xlu0 %v6017
      %v6019 = vpop.xlane.xlu0 %6018
      %v6020 = vsel %vm910, %v5934, 0.0
      %6021 = vadd.xlane.f32.xlu0 %v6020
      %v6022 = vpop.xlane.xlu0 %6021
      %v6023 = vsel %vm910, %v5936, 0.0
      %6024 = vadd.xlane.f32.xlu0 %v6023
      %v6025 = vpop.xlane.xlu0 %6024
      %v6026 = vsel %vm910, %v5938, 0.0
      %6027 = vadd.xlane.f32.xlu0 %v6026
      %v6028 = vpop.xlane.xlu0 %6027
      %v6029 = vsel %vm910, %v5940, 0.0
      %6030 = vadd.xlane.f32.xlu0 %v6029
      %v6031 = vpop.xlane.xlu0 %6030
      %v6032 = vsel %vm910, %v5942, 0.0
      %6033 = vadd.xlane.f32.xlu0 %v6032
      %v6034 = vpop.xlane.xlu0 %6033
      %v6035 = vsel %vm910, %v5944, 0.0
      %6036 = vadd.xlane.f32.xlu0 %v6035
      %v6037 = vpop.xlane.xlu0 %6036
      %v6038 = vsel %vm910, %v5946, 0.0
      %6039 = vadd.xlane.f32.xlu0 %v6038
      %v6040 = vpop.xlane.xlu0 %6039
      %v6041 = vsel %vm910, %v5948, 0.0
      %6042 = vadd.xlane.f32.xlu0 %v6041
      %v6043 = vpop.xlane.xlu0 %6042
      %v6044 = vsel %vm910, %v5950, 0.0
      %6045 = vadd.xlane.f32.xlu0 %v6044
      %v6046 = vpop.xlane.xlu0 %6045
      %v6047 = vrcp.pop %v5953
      %v6048 = vmul.f32 %v5953, %v6047
      %v6049 = vsub.f32 1.0, %v6048
      %v6050 = vmul.f32 %v6047, %v6049
      %v6051 = vadd.f32 %v6047, %v6050
      %vm6052 = vweird.f32 %v5953
      %vm6053 = vweird.f32 %v6047
      %vm6054 = vmor %vm6052, %vm6053
      %v6055 = vsel %vm6054, %v6047, %v6051
      %v6056 = vand.u32 2147483647, %v5953
      %vm6057 = vcmp.eq.f32.partialorder %v6056, 8.507059e+37
      %v6058 = vand.u32 %v5953, 2147483648
      %v6059 = vor.u32 1.1754944e-38, %v6058
      %v6060 = vsel %vm6057, %v6059, %v6055
      %v6061 = vmul.f32 1.0, %v6060
      %v6062 = vrcp.pop %v5956
      %v6063 = vmul.f32 %v5956, %v6062
      %v6064 = vsub.f32 1.0, %v6063
      %v6065 = vmul.f32 %v6062, %v6064
      %v6066 = vadd.f32 %v6062, %v6065
      %vm6067 = vweird.f32 %v5956
      %vm6068 = vweird.f32 %v6062
      %vm6069 = vmor %vm6067, %vm6068
      %v6070 = vsel %vm6069, %v6062, %v6066
      %v6071 = vand.u32 2147483647, %v5956
      %vm6072 = vcmp.eq.f32.partialorder %v6071, 8.507059e+37
      %v6073 = vand.u32 %v5956, 2147483648
      %v6074 = vor.u32 1.1754944e-38, %v6073
      %v6075 = vsel %vm6072, %v6074, %v6070
      %v6076 = vmul.f32 1.0, %v6075
      %v6077 = vrcp.pop %v5959
      %v6078 = vmul.f32 %v5959, %v6077
      %v6079 = vsub.f32 1.0, %v6078
      %v6080 = vmul.f32 %v6077, %v6079
      %v6081 = vadd.f32 %v6077, %v6080
      %vm6082 = vweird.f32 %v5959
      %vm6083 = vweird.f32 %v6077
      %vm6084 = vmor %vm6082, %vm6083
      %v6085 = vsel %vm6084, %v6077, %v6081
      %v6086 = vand.u32 2147483647, %v5959
      %vm6087 = vcmp.eq.f32.partialorder %v6086, 8.507059e+37
      %v6088 = vand.u32 %v5959, 2147483648
      %v6089 = vor.u32 1.1754944e-38, %v6088
      %v6090 = vsel %vm6087, %v6089, %v6085
      %v6091 = vmul.f32 1.0, %v6090
      %v6092 = vrcp.pop %v5962
      %v6093 = vmul.f32 %v5962, %v6092
      %v6094 = vsub.f32 1.0, %v6093
      %v6095 = vmul.f32 %v6092, %v6094
      %v6096 = vadd.f32 %v6092, %v6095
      %vm6097 = vweird.f32 %v5962
      %vm6098 = vweird.f32 %v6092
      %vm6099 = vmor %vm6097, %vm6098
      %v6100 = vsel %vm6099, %v6092, %v6096
      %v6101 = vand.u32 2147483647, %v5962
      %vm6102 = vcmp.eq.f32.partialorder %v6101, 8.507059e+37
      %v6103 = vand.u32 %v5962, 2147483648
      %v6104 = vor.u32 1.1754944e-38, %v6103
      %v6105 = vsel %vm6102, %v6104, %v6100
      %v6106 = vmul.f32 1.0, %v6105
      %v6107 = vrcp.pop %v5965
      %v6108 = vmul.f32 %v5965, %v6107
      %v6109 = vsub.f32 1.0, %v6108
      %v6110 = vmul.f32 %v6107, %v6109
      %v6111 = vadd.f32 %v6107, %v6110
      %vm6112 = vweird.f32 %v5965
      %vm6113 = vweird.f32 %v6107
      %vm6114 = vmor %vm6112, %vm6113
      %v6115 = vsel %vm6114, %v6107, %v6111
      %v6116 = vand.u32 2147483647, %v5965
      %vm6117 = vcmp.eq.f32.partialorder %v6116, 8.507059e+37
      %v6118 = vand.u32 %v5965, 2147483648
      %v6119 = vor.u32 1.1754944e-38, %v6118
      %v6120 = vsel %vm6117, %v6119, %v6115
      %v6121 = vmul.f32 1.0, %v6120
      %v6122 = vrcp.pop %v5968
      %v6123 = vmul.f32 %v5968, %v6122
      %v6124 = vsub.f32 1.0, %v6123
      %v6125 = vmul.f32 %v6122, %v6124
      %v6126 = vadd.f32 %v6122, %v6125
      %vm6127 = vweird.f32 %v5968
      %vm6128 = vweird.f32 %v6122
      %vm6129 = vmor %vm6127, %vm6128
      %v6130 = vsel %vm6129, %v6122, %v6126
      %v6131 = vand.u32 2147483647, %v5968
      %vm6132 = vcmp.eq.f32.partialorder %v6131, 8.507059e+37
      %v6133 = vand.u32 %v5968, 2147483648
      %v6134 = vor.u32 1.1754944e-38, %v6133
      %v6135 = vsel %vm6132, %v6134, %v6130
      %v6136 = vmul.f32 1.0, %v6135
      %v6137 = vrcp.pop %v5971
      %v6138 = vmul.f32 %v5971, %v6137
      %v6139 = vsub.f32 1.0, %v6138
      %v6140 = vmul.f32 %v6137, %v6139
      %v6141 = vadd.f32 %v6137, %v6140
      %vm6142 = vweird.f32 %v5971
      %vm6143 = vweird.f32 %v6137
      %vm6144 = vmor %vm6142, %vm6143
      %v6145 = vsel %vm6144, %v6137, %v6141
      %v6146 = vand.u32 2147483647, %v5971
      %vm6147 = vcmp.eq.f32.partialorder %v6146, 8.507059e+37
      %v6148 = vand.u32 %v5971, 2147483648
      %v6149 = vor.u32 1.1754944e-38, %v6148
      %v6150 = vsel %vm6147, %v6149, %v6145
      %v6151 = vmul.f32 1.0, %v6150
      %v6152 = vrcp.pop %v5974
      %v6153 = vmul.f32 %v5974, %v6152
      %v6154 = vsub.f32 1.0, %v6153
      %v6155 = vmul.f32 %v6152, %v6154
      %v6156 = vadd.f32 %v6152, %v6155
      %vm6157 = vweird.f32 %v5974
      %vm6158 = vweird.f32 %v6152
      %vm6159 = vmor %vm6157, %vm6158
      %v6160 = vsel %vm6159, %v6152, %v6156
      %v6161 = vand.u32 2147483647, %v5974
      %vm6162 = vcmp.eq.f32.partialorder %v6161, 8.507059e+37
      %v6163 = vand.u32 %v5974, 2147483648
      %v6164 = vor.u32 1.1754944e-38, %v6163
      %v6165 = vsel %vm6162, %v6164, %v6160
      %v6166 = vmul.f32 1.0, %v6165
      %v6167 = vrcp.pop %v5977
      %v6168 = vmul.f32 %v5977, %v6167
      %v6169 = vsub.f32 1.0, %v6168
      %v6170 = vmul.f32 %v6167, %v6169
      %v6171 = vadd.f32 %v6167, %v6170
      %vm6172 = vweird.f32 %v5977
      %vm6173 = vweird.f32 %v6167
      %vm6174 = vmor %vm6172, %vm6173
      %v6175 = vsel %vm6174, %v6167, %v6171
      %v6176 = vand.u32 2147483647, %v5977
      %vm6177 = vcmp.eq.f32.partialorder %v6176, 8.507059e+37
      %v6178 = vand.u32 %v5977, 2147483648
      %v6179 = vor.u32 1.1754944e-38, %v6178
      %v6180 = vsel %vm6177, %v6179, %v6175
      %v6181 = vmul.f32 1.0, %v6180
      %v6182 = vrcp.pop %v5980
      %v6183 = vmul.f32 %v5980, %v6182
      %v6184 = vsub.f32 1.0, %v6183
      %v6185 = vmul.f32 %v6182, %v6184
      %v6186 = vadd.f32 %v6182, %v6185
      %vm6187 = vweird.f32 %v5980
      %vm6188 = vweird.f32 %v6182
      %vm6189 = vmor %vm6187, %vm6188
      %v6190 = vsel %vm6189, %v6182, %v6186
      %v6191 = vand.u32 2147483647, %v5980
      %vm6192 = vcmp.eq.f32.partialorder %v6191, 8.507059e+37
      %v6193 = vand.u32 %v5980, 2147483648
      %v6194 = vor.u32 1.1754944e-38, %v6193
      %v6195 = vsel %vm6192, %v6194, %v6190
      %v6196 = vmul.f32 1.0, %v6195
      %v6197 = vrcp.pop %v5983
      %v6198 = vmul.f32 %v5983, %v6197
      %v6199 = vsub.f32 1.0, %v6198
      %v6200 = vmul.f32 %v6197, %v6199
      %v6201 = vadd.f32 %v6197, %v6200
      %vm6202 = vweird.f32 %v5983
      %vm6203 = vweird.f32 %v6197
      %vm6204 = vmor %vm6202, %vm6203
      %v6205 = vsel %vm6204, %v6197, %v6201
      %v6206 = vand.u32 2147483647, %v5983
      %vm6207 = vcmp.eq.f32.partialorder %v6206, 8.507059e+37
      %v6208 = vand.u32 %v5983, 2147483648
      %v6209 = vor.u32 1.1754944e-38, %v6208
      %v6210 = vsel %vm6207, %v6209, %v6205
      %v6211 = vmul.f32 1.0, %v6210
      %v6212 = vrcp.pop %v5986
      %v6213 = vmul.f32 %v5986, %v6212
      %v6214 = vsub.f32 1.0, %v6213
      %v6215 = vmul.f32 %v6212, %v6214
      %v6216 = vadd.f32 %v6212, %v6215
      %vm6217 = vweird.f32 %v5986
      %vm6218 = vweird.f32 %v6212
      %vm6219 = vmor %vm6217, %vm6218
      %v6220 = vsel %vm6219, %v6212, %v6216
      %v6221 = vand.u32 2147483647, %v5986
      %vm6222 = vcmp.eq.f32.partialorder %v6221, 8.507059e+37
      %v6223 = vand.u32 %v5986, 2147483648
      %v6224 = vor.u32 1.1754944e-38, %v6223
      %v6225 = vsel %vm6222, %v6224, %v6220
      %v6226 = vmul.f32 1.0, %v6225
      %v6227 = vrcp.pop %v5989
      %v6228 = vmul.f32 %v5989, %v6227
      %v6229 = vsub.f32 1.0, %v6228
      %v6230 = vmul.f32 %v6227, %v6229
      %v6231 = vadd.f32 %v6227, %v6230
      %vm6232 = vweird.f32 %v5989
      %vm6233 = vweird.f32 %v6227
      %vm6234 = vmor %vm6232, %vm6233
      %v6235 = vsel %vm6234, %v6227, %v6231
      %v6236 = vand.u32 2147483647, %v5989
      %vm6237 = vcmp.eq.f32.partialorder %v6236, 8.507059e+37
      %v6238 = vand.u32 %v5989, 2147483648
      %v6239 = vor.u32 1.1754944e-38, %v6238
      %v6240 = vsel %vm6237, %v6239, %v6235
      %v6241 = vmul.f32 1.0, %v6240
      %v6242 = vrcp.pop %v5992
      %v6243 = vmul.f32 %v5992, %v6242
      %v6244 = vsub.f32 1.0, %v6243
      %v6245 = vmul.f32 %v6242, %v6244
      %v6246 = vadd.f32 %v6242, %v6245
      %vm6247 = vweird.f32 %v5992
      %vm6248 = vweird.f32 %v6242
      %vm6249 = vmor %vm6247, %vm6248
      %v6250 = vsel %vm6249, %v6242, %v6246
      %v6251 = vand.u32 2147483647, %v5992
      %vm6252 = vcmp.eq.f32.partialorder %v6251, 8.507059e+37
      %v6253 = vand.u32 %v5992, 2147483648
      %v6254 = vor.u32 1.1754944e-38, %v6253
      %v6255 = vsel %vm6252, %v6254, %v6250
      %v6256 = vmul.f32 1.0, %v6255
      %v6257 = vrcp.pop %v5995
      %v6258 = vmul.f32 %v5995, %v6257
      %v6259 = vsub.f32 1.0, %v6258
      %v6260 = vmul.f32 %v6257, %v6259
      %v6261 = vadd.f32 %v6257, %v6260
      %vm6262 = vweird.f32 %v5995
      %vm6263 = vweird.f32 %v6257
      %vm6264 = vmor %vm6262, %vm6263
      %v6265 = vsel %vm6264, %v6257, %v6261
      %v6266 = vand.u32 2147483647, %v5995
      %vm6267 = vcmp.eq.f32.partialorder %v6266, 8.507059e+37
      %v6268 = vand.u32 %v5995, 2147483648
      %v6269 = vor.u32 1.1754944e-38, %v6268
      %v6270 = vsel %vm6267, %v6269, %v6265
      %v6271 = vmul.f32 1.0, %v6270
      %v6272 = vrcp.pop %v5998
      %v6273 = vmul.f32 %v5998, %v6272
      %v6274 = vsub.f32 1.0, %v6273
      %v6275 = vmul.f32 %v6272, %v6274
      %v6276 = vadd.f32 %v6272, %v6275
      %vm6277 = vweird.f32 %v5998
      %vm6278 = vweird.f32 %v6272
      %vm6279 = vmor %vm6277, %vm6278
      %v6280 = vsel %vm6279, %v6272, %v6276
      %v6281 = vand.u32 2147483647, %v5998
      %vm6282 = vcmp.eq.f32.partialorder %v6281, 8.507059e+37
      %v6283 = vand.u32 %v5998, 2147483648
      %v6284 = vor.u32 1.1754944e-38, %v6283
      %v6285 = vsel %vm6282, %v6284, %v6280
      %v6286 = vmul.f32 1.0, %v6285
      %v6287 = vrcp.pop %v6001
      %v6288 = vmul.f32 %v6001, %v6287
      %v6289 = vsub.f32 1.0, %v6288
      %v6290 = vmul.f32 %v6287, %v6289
      %v6291 = vadd.f32 %v6287, %v6290
      %vm6292 = vweird.f32 %v6001
      %vm6293 = vweird.f32 %v6287
      %vm6294 = vmor %vm6292, %vm6293
      %v6295 = vsel %vm6294, %v6287, %v6291
      %v6296 = vand.u32 2147483647, %v6001
      %vm6297 = vcmp.eq.f32.partialorder %v6296, 8.507059e+37
      %v6298 = vand.u32 %v6001, 2147483648
      %v6299 = vor.u32 1.1754944e-38, %v6298
      %v6300 = vsel %vm6297, %v6299, %v6295
      %v6301 = vmul.f32 1.0, %v6300
      %v6302 = vrcp.pop %v6004
      %v6303 = vmul.f32 %v6004, %v6302
      %v6304 = vsub.f32 1.0, %v6303
      %v6305 = vmul.f32 %v6302, %v6304
      %v6306 = vadd.f32 %v6302, %v6305
      %vm6307 = vweird.f32 %v6004
      %vm6308 = vweird.f32 %v6302
      %vm6309 = vmor %vm6307, %vm6308
      %v6310 = vsel %vm6309, %v6302, %v6306
      %v6311 = vand.u32 2147483647, %v6004
      %vm6312 = vcmp.eq.f32.partialorder %v6311, 8.507059e+37
      %v6313 = vand.u32 %v6004, 2147483648
      %v6314 = vor.u32 1.1754944e-38, %v6313
      %v6315 = vsel %vm6312, %v6314, %v6310
      %v6316 = vmul.f32 1.0, %v6315
      %v6317 = vrcp.pop %v6007
      %v6318 = vmul.f32 %v6007, %v6317
      %v6319 = vsub.f32 1.0, %v6318
      %v6320 = vmul.f32 %v6317, %v6319
      %v6321 = vadd.f32 %v6317, %v6320
      %vm6322 = vweird.f32 %v6007
      %vm6323 = vweird.f32 %v6317
      %vm6324 = vmor %vm6322, %vm6323
      %v6325 = vsel %vm6324, %v6317, %v6321
      %v6326 = vand.u32 2147483647, %v6007
      %vm6327 = vcmp.eq.f32.partialorder %v6326, 8.507059e+37
      %v6328 = vand.u32 %v6007, 2147483648
      %v6329 = vor.u32 1.1754944e-38, %v6328
      %v6330 = vsel %vm6327, %v6329, %v6325
      %v6331 = vmul.f32 1.0, %v6330
      %v6332 = vrcp.pop %v6010
      %v6333 = vmul.f32 %v6010, %v6332
      %v6334 = vsub.f32 1.0, %v6333
      %v6335 = vmul.f32 %v6332, %v6334
      %v6336 = vadd.f32 %v6332, %v6335
      %vm6337 = vweird.f32 %v6010
      %vm6338 = vweird.f32 %v6332
      %vm6339 = vmor %vm6337, %vm6338
      %v6340 = vsel %vm6339, %v6332, %v6336
      %v6341 = vand.u32 2147483647, %v6010
      %vm6342 = vcmp.eq.f32.partialorder %v6341, 8.507059e+37
      %v6343 = vand.u32 %v6010, 2147483648
      %v6344 = vor.u32 1.1754944e-38, %v6343
      %v6345 = vsel %vm6342, %v6344, %v6340
      %v6346 = vmul.f32 1.0, %v6345
      %v6347 = vrcp.pop %v6013
      %v6348 = vmul.f32 %v6013, %v6347
      %v6349 = vsub.f32 1.0, %v6348
      %v6350 = vmul.f32 %v6347, %v6349
      %v6351 = vadd.f32 %v6347, %v6350
      %vm6352 = vweird.f32 %v6013
      %vm6353 = vweird.f32 %v6347
      %vm6354 = vmor %vm6352, %vm6353
      %v6355 = vsel %vm6354, %v6347, %v6351
      %v6356 = vand.u32 2147483647, %v6013
      %vm6357 = vcmp.eq.f32.partialorder %v6356, 8.507059e+37
      %v6358 = vand.u32 %v6013, 2147483648
      %v6359 = vor.u32 1.1754944e-38, %v6358
      %v6360 = vsel %vm6357, %v6359, %v6355
      %v6361 = vmul.f32 1.0, %v6360
      %v6362 = vrcp.pop %v6016
      %v6363 = vmul.f32 %v6016, %v6362
      %v6364 = vsub.f32 1.0, %v6363
      %v6365 = vmul.f32 %v6362, %v6364
      %v6366 = vadd.f32 %v6362, %v6365
      %vm6367 = vweird.f32 %v6016
      %vm6368 = vweird.f32 %v6362
      %vm6369 = vmor %vm6367, %vm6368
      %v6370 = vsel %vm6369, %v6362, %v6366
      %v6371 = vand.u32 2147483647, %v6016
      %vm6372 = vcmp.eq.f32.partialorder %v6371, 8.507059e+37
      %v6373 = vand.u32 %v6016, 2147483648
      %v6374 = vor.u32 1.1754944e-38, %v6373
      %v6375 = vsel %vm6372, %v6374, %v6370
      %v6376 = vmul.f32 1.0, %v6375
      %v6377 = vrcp.pop %v6019
      %v6378 = vmul.f32 %v6019, %v6377
      %v6379 = vsub.f32 1.0, %v6378
      %v6380 = vmul.f32 %v6377, %v6379
      %v6381 = vadd.f32 %v6377, %v6380
      %vm6382 = vweird.f32 %v6019
      %vm6383 = vweird.f32 %v6377
      %vm6384 = vmor %vm6382, %vm6383
      %v6385 = vsel %vm6384, %v6377, %v6381
      %v6386 = vand.u32 2147483647, %v6019
      %vm6387 = vcmp.eq.f32.partialorder %v6386, 8.507059e+37
      %v6388 = vand.u32 %v6019, 2147483648
      %v6389 = vor.u32 1.1754944e-38, %v6388
      %v6390 = vsel %vm6387, %v6389, %v6385
      %v6391 = vmul.f32 1.0, %v6390
      %v6392 = vrcp.pop %v6022
      %v6393 = vmul.f32 %v6022, %v6392
      %v6394 = vsub.f32 1.0, %v6393
      %v6395 = vmul.f32 %v6392, %v6394
      %v6396 = vadd.f32 %v6392, %v6395
      %vm6397 = vweird.f32 %v6022
      %vm6398 = vweird.f32 %v6392
      %vm6399 = vmor %vm6397, %vm6398
      %v6400 = vsel %vm6399, %v6392, %v6396
      %v6401 = vand.u32 2147483647, %v6022
      %vm6402 = vcmp.eq.f32.partialorder %v6401, 8.507059e+37
      %v6403 = vand.u32 %v6022, 2147483648
      %v6404 = vor.u32 1.1754944e-38, %v6403
      %v6405 = vsel %vm6402, %v6404, %v6400
      %v6406 = vmul.f32 1.0, %v6405
      %v6407 = vrcp.pop %v6025
      %v6408 = vmul.f32 %v6025, %v6407
      %v6409 = vsub.f32 1.0, %v6408
      %v6410 = vmul.f32 %v6407, %v6409
      %v6411 = vadd.f32 %v6407, %v6410
      %vm6412 = vweird.f32 %v6025
      %vm6413 = vweird.f32 %v6407
      %vm6414 = vmor %vm6412, %vm6413
      %v6415 = vsel %vm6414, %v6407, %v6411
      %v6416 = vand.u32 2147483647, %v6025
      %vm6417 = vcmp.eq.f32.partialorder %v6416, 8.507059e+37
      %v6418 = vand.u32 %v6025, 2147483648
      %v6419 = vor.u32 1.1754944e-38, %v6418
      %v6420 = vsel %vm6417, %v6419, %v6415
      %v6421 = vmul.f32 1.0, %v6420
      %v6422 = vrcp.pop %v6028
      %v6423 = vmul.f32 %v6028, %v6422
      %v6424 = vsub.f32 1.0, %v6423
      %v6425 = vmul.f32 %v6422, %v6424
      %v6426 = vadd.f32 %v6422, %v6425
      %vm6427 = vweird.f32 %v6028
      %vm6428 = vweird.f32 %v6422
      %vm6429 = vmor %vm6427, %vm6428
      %v6430 = vsel %vm6429, %v6422, %v6426
      %v6431 = vand.u32 2147483647, %v6028
      %vm6432 = vcmp.eq.f32.partialorder %v6431, 8.507059e+37
      %v6433 = vand.u32 %v6028, 2147483648
      %v6434 = vor.u32 1.1754944e-38, %v6433
      %v6435 = vsel %vm6432, %v6434, %v6430
      %v6436 = vmul.f32 1.0, %v6435
      %v6437 = vrcp.pop %v6031
      %v6438 = vmul.f32 %v6031, %v6437
      %v6439 = vsub.f32 1.0, %v6438
      %v6440 = vmul.f32 %v6437, %v6439
      %v6441 = vadd.f32 %v6437, %v6440
      %vm6442 = vweird.f32 %v6031
      %vm6443 = vweird.f32 %v6437
      %vm6444 = vmor %vm6442, %vm6443
      %v6445 = vsel %vm6444, %v6437, %v6441
      %v6446 = vand.u32 2147483647, %v6031
      %vm6447 = vcmp.eq.f32.partialorder %v6446, 8.507059e+37
      %v6448 = vand.u32 %v6031, 2147483648
      %v6449 = vor.u32 1.1754944e-38, %v6448
      %v6450 = vsel %vm6447, %v6449, %v6445
      %v6451 = vmul.f32 1.0, %v6450
      %v6452 = vrcp.pop %v6034
      %v6453 = vmul.f32 %v6034, %v6452
      %v6454 = vsub.f32 1.0, %v6453
      %v6455 = vmul.f32 %v6452, %v6454
      %v6456 = vadd.f32 %v6452, %v6455
      %vm6457 = vweird.f32 %v6034
      %vm6458 = vweird.f32 %v6452
      %vm6459 = vmor %vm6457, %vm6458
      %v6460 = vsel %vm6459, %v6452, %v6456
      %v6461 = vand.u32 2147483647, %v6034
      %vm6462 = vcmp.eq.f32.partialorder %v6461, 8.507059e+37
      %v6463 = vand.u32 %v6034, 2147483648
      %v6464 = vor.u32 1.1754944e-38, %v6463
      %v6465 = vsel %vm6462, %v6464, %v6460
      %v6466 = vmul.f32 1.0, %v6465
      %v6467 = vrcp.pop %v6037
      %v6468 = vmul.f32 %v6037, %v6467
      %v6469 = vsub.f32 1.0, %v6468
      %v6470 = vmul.f32 %v6467, %v6469
      %v6471 = vadd.f32 %v6467, %v6470
      %vm6472 = vweird.f32 %v6037
      %vm6473 = vweird.f32 %v6467
      %vm6474 = vmor %vm6472, %vm6473
      %v6475 = vsel %vm6474, %v6467, %v6471
      %v6476 = vand.u32 2147483647, %v6037
      %vm6477 = vcmp.eq.f32.partialorder %v6476, 8.507059e+37
      %v6478 = vand.u32 %v6037, 2147483648
      %v6479 = vor.u32 1.1754944e-38, %v6478
      %v6480 = vsel %vm6477, %v6479, %v6475
      %v6481 = vmul.f32 1.0, %v6480
      %v6482 = vrcp.pop %v6040
      %v6483 = vmul.f32 %v6040, %v6482
      %v6484 = vsub.f32 1.0, %v6483
      %v6485 = vmul.f32 %v6482, %v6484
      %v6486 = vadd.f32 %v6482, %v6485
      %vm6487 = vweird.f32 %v6040
      %vm6488 = vweird.f32 %v6482
      %vm6489 = vmor %vm6487, %vm6488
      %v6490 = vsel %vm6489, %v6482, %v6486
      %v6491 = vand.u32 2147483647, %v6040
      %vm6492 = vcmp.eq.f32.partialorder %v6491, 8.507059e+37
      %v6493 = vand.u32 %v6040, 2147483648
      %v6494 = vor.u32 1.1754944e-38, %v6493
      %v6495 = vsel %vm6492, %v6494, %v6490
      %v6496 = vmul.f32 1.0, %v6495
      %v6497 = vrcp.pop %v6043
      %v6498 = vmul.f32 %v6043, %v6497
      %v6499 = vsub.f32 1.0, %v6498
      %v6500 = vmul.f32 %v6497, %v6499
      %v6501 = vadd.f32 %v6497, %v6500
      %vm6502 = vweird.f32 %v6043
      %vm6503 = vweird.f32 %v6497
      %vm6504 = vmor %vm6502, %vm6503
      %v6505 = vsel %vm6504, %v6497, %v6501
      %v6506 = vand.u32 2147483647, %v6043
      %vm6507 = vcmp.eq.f32.partialorder %v6506, 8.507059e+37
      %v6508 = vand.u32 %v6043, 2147483648
      %v6509 = vor.u32 1.1754944e-38, %v6508
      %v6510 = vsel %vm6507, %v6509, %v6505
      %v6511 = vmul.f32 1.0, %v6510
      %v6512 = vrcp.pop %v6046
      %v6513 = vmul.f32 %v6046, %v6512
      %v6514 = vsub.f32 1.0, %v6513
      %v6515 = vmul.f32 %v6512, %v6514
      %v6516 = vadd.f32 %v6512, %v6515
      %vm6517 = vweird.f32 %v6046
      %vm6518 = vweird.f32 %v6512
      %vm6519 = vmor %vm6517, %vm6518
      %v6520 = vsel %vm6519, %v6512, %v6516
      %v6521 = vand.u32 2147483647, %v6046
      %vm6522 = vcmp.eq.f32.partialorder %v6521, 8.507059e+37
      %v6523 = vand.u32 %v6046, 2147483648
      %v6524 = vor.u32 1.1754944e-38, %v6523
      %v6525 = vsel %vm6522, %v6524, %v6520
      %v6526 = vmul.f32 1.0, %v6525
      %v6527 = vmul.f32 %v5888, %v6061
      %v6528 = vmul.f32 %v5890, %v6076
      %v6529 = vmul.f32 %v5892, %v6091
      %v6530 = vmul.f32 %v5894, %v6106
      %v6531 = vmul.f32 %v5896, %v6121
      %v6532 = vmul.f32 %v5898, %v6136
      %v6533 = vmul.f32 %v5900, %v6151
      %v6534 = vmul.f32 %v5902, %v6166
      %v6535 = vmul.f32 %v5904, %v6181
      %v6536 = vmul.f32 %v5906, %v6196
      %v6537 = vmul.f32 %v5908, %v6211
      %v6538 = vmul.f32 %v5910, %v6226
      %v6539 = vmul.f32 %v5912, %v6241
      %v6540 = vmul.f32 %v5914, %v6256
      %v6541 = vmul.f32 %v5916, %v6271
      %v6542 = vmul.f32 %v5918, %v6286
      %v6543 = vmul.f32 %v5920, %v6301
      %v6544 = vmul.f32 %v5922, %v6316
      %v6545 = vmul.f32 %v5924, %v6331
      %v6546 = vmul.f32 %v5926, %v6346
      %v6547 = vmul.f32 %v5928, %v6361
      %v6548 = vmul.f32 %v5930, %v6376
      %v6549 = vmul.f32 %v5932, %v6391
      %v6550 = vmul.f32 %v5934, %v6406
      %v6551 = vmul.f32 %v5936, %v6421
      %v6552 = vmul.f32 %v5938, %v6436
      %v6553 = vmul.f32 %v5940, %v6451
      %v6554 = vmul.f32 %v5942, %v6466
      %v6555 = vmul.f32 %v5944, %v6481
      %v6556 = vmul.f32 %v5946, %v6496
      %v6557 = vmul.f32 %v5948, %v6511
      %v6558 = vmul.f32 %v5950, %v6526
      %v6559 = vpack.c.bf16 %v6527, %v6527
      %v6560 = vpack.c.bf16 %v6528, %v6528
      %v6561 = vpack.c.bf16 %v6529, %v6529
      %v6562 = vpack.c.bf16 %v6530, %v6530
      %v6563 = vpack.c.bf16 %v6531, %v6531
      %v6564 = vpack.c.bf16 %v6532, %v6532
      %v6565 = vpack.c.bf16 %v6533, %v6533
      %v6566 = vpack.c.bf16 %v6534, %v6534
      %v6567 = vpack.c.bf16 %v6535, %v6535
      %v6568 = vpack.c.bf16 %v6536, %v6536
      %v6569 = vpack.c.bf16 %v6537, %v6537
      %v6570 = vpack.c.bf16 %v6538, %v6538
      %v6571 = vpack.c.bf16 %v6539, %v6539
      %v6572 = vpack.c.bf16 %v6540, %v6540
      %v6573 = vpack.c.bf16 %v6541, %v6541
      %v6574 = vpack.c.bf16 %v6542, %v6542
      %v6575 = vpack.c.bf16 %v6543, %v6543
      %v6576 = vpack.c.bf16 %v6544, %v6544
      %v6577 = vpack.c.bf16 %v6545, %v6545
      %v6578 = vpack.c.bf16 %v6546, %v6546
      %v6579 = vpack.c.bf16 %v6547, %v6547
      %v6580 = vpack.c.bf16 %v6548, %v6548
      %v6581 = vpack.c.bf16 %v6549, %v6549
      %v6582 = vpack.c.bf16 %v6550, %v6550
      %v6583 = vpack.c.bf16 %v6551, %v6551
      %v6584 = vpack.c.bf16 %v6552, %v6552
      %v6585 = vpack.c.bf16 %v6553, %v6553
      %v6586 = vpack.c.bf16 %v6554, %v6554
      %v6587 = vpack.c.bf16 %v6555, %v6555
      %v6588 = vpack.c.bf16 %v6556, %v6556
      %v6589 = vpack.c.bf16 %v6557, %v6557
      %v6590 = vpack.c.bf16 %v6558, %v6558
      %v6593 = vunpack.c.l.b16 %v6559
      %v6594 = vunpack.c.l.b16 %v6560
      %v6595 = vpack.c.b16 %v6594, %v6593
      %6596 = vrot.lane.b32.xlu0 %v481, 40
      %v6597 = vpop.permute.xlu0 %6596
      %v6600 = vsel %vm910, %v6595, 0
      %6602 = vmatpush.bf16.msra.mxu0 0
      %6603 = vmatpush.bf16.msra.mxu0 0
      %6604 = vmatpush.bf16.msra.mxu0 0
      %6605 = vmatpush.bf16.msra.mxu0 0
      %6606 = vmatpush.bf16.msra.mxu0 0
      %6607 = vmatpush.bf16.msra.mxu0 0
      %6608 = vmatpush.bf16.msra.mxu0 0
      %6609 = vmatpush.bf16.msra.mxu0 %v6597
      %6610 = vmatmul.bf16.gmra.mxu0 %v6600
      %v6611 = vpop.f32.mrf.mxu0
      %v6612 = vadd.f32 0.0, %v6611
      %v6613 = vpop.f32.mrf.mxu0
      %v6614 = vadd.f32 0.0, %v6613
      %6615 = vdwg.mxu0
      %v6618 = vunpack.c.l.b16 %v6561
      %v6619 = vunpack.c.l.b16 %v6562
      %v6620 = vpack.c.b16 %v6619, %v6618
      %6621 = vrot.lane.b32.xlu0 %v509, 40
      %v6622 = vpop.permute.xlu0 %6621
      %v6625 = vsel %vm910, %v6620, 0
      %6627 = vmatpush.bf16.msra.mxu0 0
      %6628 = vmatpush.bf16.msra.mxu0 0
      %6629 = vmatpush.bf16.msra.mxu0 0
      %6630 = vmatpush.bf16.msra.mxu0 0
      %6631 = vmatpush.bf16.msra.mxu0 0
      %6632 = vmatpush.bf16.msra.mxu0 0
      %6633 = vmatpush.bf16.msra.mxu0 0
      %6634 = vmatpush.bf16.msra.mxu0 %v6622
      %6635 = vmatmul.bf16.gmra.mxu0 %v6625
      %v6636 = vpop.f32.mrf.mxu0
      %v6637 = vadd.f32 0.0, %v6636
      %v6638 = vpop.f32.mrf.mxu0
      %v6639 = vadd.f32 0.0, %v6638
      %6640 = vdwg.mxu0
      %v6643 = vunpack.c.l.b16 %v6563
      %v6644 = vunpack.c.l.b16 %v6564
      %v6645 = vpack.c.b16 %v6644, %v6643
      %6646 = vrot.lane.b32.xlu0 %v536, 40
      %v6647 = vpop.permute.xlu0 %6646
      %v6650 = vsel %vm910, %v6645, 0
      %6652 = vmatpush.bf16.msra.mxu0 0
      %6653 = vmatpush.bf16.msra.mxu0 0
      %6654 = vmatpush.bf16.msra.mxu0 0
      %6655 = vmatpush.bf16.msra.mxu0 0
      %6656 = vmatpush.bf16.msra.mxu0 0
      %6657 = vmatpush.bf16.msra.mxu0 0
      %6658 = vmatpush.bf16.msra.mxu0 0
      %6659 = vmatpush.bf16.msra.mxu0 %v6647
      %6660 = vmatmul.bf16.gmra.mxu0 %v6650
      %v6661 = vpop.f32.mrf.mxu0
      %v6662 = vadd.f32 0.0, %v6661
      %v6663 = vpop.f32.mrf.mxu0
      %v6664 = vadd.f32 0.0, %v6663
      %6665 = vdwg.mxu0
      %v6668 = vunpack.c.l.b16 %v6565
      %v6669 = vunpack.c.l.b16 %v6566
      %v6670 = vpack.c.b16 %v6669, %v6668
      %6671 = vrot.lane.b32.xlu0 %v563, 40
      %v6672 = vpop.permute.xlu0 %6671
      %v6675 = vsel %vm910, %v6670, 0
      %6677 = vmatpush.bf16.msra.mxu0 0
      %6678 = vmatpush.bf16.msra.mxu0 0
      %6679 = vmatpush.bf16.msra.mxu0 0
      %6680 = vmatpush.bf16.msra.mxu0 0
      %6681 = vmatpush.bf16.msra.mxu0 0
      %6682 = vmatpush.bf16.msra.mxu0 0
      %6683 = vmatpush.bf16.msra.mxu0 0
      %6684 = vmatpush.bf16.msra.mxu0 %v6672
      %6685 = vmatmul.bf16.gmra.mxu0 %v6675
      %v6686 = vpop.f32.mrf.mxu0
      %v6687 = vadd.f32 0.0, %v6686
      %v6688 = vpop.f32.mrf.mxu0
      %v6689 = vadd.f32 0.0, %v6688
      %6690 = vdwg.mxu0
      %v6693 = vunpack.c.l.b16 %v6567
      %v6694 = vunpack.c.l.b16 %v6568
      %v6695 = vpack.c.b16 %v6694, %v6693
      %6696 = vrot.lane.b32.xlu0 %v590, 40
      %v6697 = vpop.permute.xlu0 %6696
      %v6700 = vsel %vm910, %v6695, 0
      %6702 = vmatpush.bf16.msra.mxu0 0
      %6703 = vmatpush.bf16.msra.mxu0 0
      %6704 = vmatpush.bf16.msra.mxu0 0
      %6705 = vmatpush.bf16.msra.mxu0 0
      %6706 = vmatpush.bf16.msra.mxu0 0
      %6707 = vmatpush.bf16.msra.mxu0 0
      %6708 = vmatpush.bf16.msra.mxu0 0
      %6709 = vmatpush.bf16.msra.mxu0 %v6697
      %6710 = vmatmul.bf16.gmra.mxu0 %v6700
      %v6711 = vpop.f32.mrf.mxu0
      %v6712 = vadd.f32 0.0, %v6711
      %v6713 = vpop.f32.mrf.mxu0
      %v6714 = vadd.f32 0.0, %v6713
      %6715 = vdwg.mxu0
      %v6718 = vunpack.c.l.b16 %v6569
      %v6719 = vunpack.c.l.b16 %v6570
      %v6720 = vpack.c.b16 %v6719, %v6718
      %6721 = vrot.lane.b32.xlu0 %v617, 40
      %v6722 = vpop.permute.xlu0 %6721
      %v6725 = vsel %vm910, %v6720, 0
      %6727 = vmatpush.bf16.msra.mxu0 0
      %6728 = vmatpush.bf16.msra.mxu0 0
      %6729 = vmatpush.bf16.msra.mxu0 0
      %6730 = vmatpush.bf16.msra.mxu0 0
      %6731 = vmatpush.bf16.msra.mxu0 0
      %6732 = vmatpush.bf16.msra.mxu0 0
      %6733 = vmatpush.bf16.msra.mxu0 0
      %6734 = vmatpush.bf16.msra.mxu0 %v6722
      %6735 = vmatmul.bf16.gmra.mxu0 %v6725
      %v6736 = vpop.f32.mrf.mxu0
      %v6737 = vadd.f32 0.0, %v6736
      %v6738 = vpop.f32.mrf.mxu0
      %v6739 = vadd.f32 0.0, %v6738
      %6740 = vdwg.mxu0
      %v6743 = vunpack.c.l.b16 %v6571
      %v6744 = vunpack.c.l.b16 %v6572
      %v6745 = vpack.c.b16 %v6744, %v6743
      %6746 = vrot.lane.b32.xlu0 %v644, 40
      %v6747 = vpop.permute.xlu0 %6746
      %v6750 = vsel %vm910, %v6745, 0
      %6752 = vmatpush.bf16.msra.mxu0 0
      %6753 = vmatpush.bf16.msra.mxu0 0
      %6754 = vmatpush.bf16.msra.mxu0 0
      %6755 = vmatpush.bf16.msra.mxu0 0
      %6756 = vmatpush.bf16.msra.mxu0 0
      %6757 = vmatpush.bf16.msra.mxu0 0
      %6758 = vmatpush.bf16.msra.mxu0 0
      %6759 = vmatpush.bf16.msra.mxu0 %v6747
      %6760 = vmatmul.bf16.gmra.mxu0 %v6750
      %v6761 = vpop.f32.mrf.mxu0
      %v6762 = vadd.f32 0.0, %v6761
      %v6763 = vpop.f32.mrf.mxu0
      %v6764 = vadd.f32 0.0, %v6763
      %6765 = vdwg.mxu0
      %v6768 = vunpack.c.l.b16 %v6573
      %v6769 = vunpack.c.l.b16 %v6574
      %v6770 = vpack.c.b16 %v6769, %v6768
      %6771 = vrot.lane.b32.xlu0 %v671, 40
      %v6772 = vpop.permute.xlu0 %6771
      %v6775 = vsel %vm910, %v6770, 0
      %6777 = vmatpush.bf16.msra.mxu0 0
      %6778 = vmatpush.bf16.msra.mxu0 0
      %6779 = vmatpush.bf16.msra.mxu0 0
      %6780 = vmatpush.bf16.msra.mxu0 0
      %6781 = vmatpush.bf16.msra.mxu0 0
      %6782 = vmatpush.bf16.msra.mxu0 0
      %6783 = vmatpush.bf16.msra.mxu0 0
      %6784 = vmatpush.bf16.msra.mxu0 %v6772
      %6785 = vmatmul.bf16.gmra.mxu0 %v6775
      %v6786 = vpop.f32.mrf.mxu0
      %v6787 = vadd.f32 0.0, %v6786
      %v6788 = vpop.f32.mrf.mxu0
      %v6789 = vadd.f32 0.0, %v6788
      %6790 = vdwg.mxu0
      %v6793 = vunpack.c.l.b16 %v6575
      %v6794 = vunpack.c.l.b16 %v6576
      %v6795 = vpack.c.b16 %v6794, %v6793
      %6796 = vrot.lane.b32.xlu0 %v698, 40
      %v6797 = vpop.permute.xlu0 %6796
      %v6800 = vsel %vm910, %v6795, 0
      %6802 = vmatpush.bf16.msra.mxu0 0
      %6803 = vmatpush.bf16.msra.mxu0 0
      %6804 = vmatpush.bf16.msra.mxu0 0
      %6805 = vmatpush.bf16.msra.mxu0 0
      %6806 = vmatpush.bf16.msra.mxu0 0
      %6807 = vmatpush.bf16.msra.mxu0 0
      %6808 = vmatpush.bf16.msra.mxu0 0
      %6809 = vmatpush.bf16.msra.mxu0 %v6797
      %6810 = vmatmul.bf16.gmra.mxu0 %v6800
      %v6811 = vpop.f32.mrf.mxu0
      %v6812 = vadd.f32 0.0, %v6811
      %v6813 = vpop.f32.mrf.mxu0
      %v6814 = vadd.f32 0.0, %v6813
      %6815 = vdwg.mxu0
      %v6818 = vunpack.c.l.b16 %v6577
      %v6819 = vunpack.c.l.b16 %v6578
      %v6820 = vpack.c.b16 %v6819, %v6818
      %6821 = vrot.lane.b32.xlu0 %v725, 40
      %v6822 = vpop.permute.xlu0 %6821
      %v6825 = vsel %vm910, %v6820, 0
      %6827 = vmatpush.bf16.msra.mxu0 0
      %6828 = vmatpush.bf16.msra.mxu0 0
      %6829 = vmatpush.bf16.msra.mxu0 0
      %6830 = vmatpush.bf16.msra.mxu0 0
      %6831 = vmatpush.bf16.msra.mxu0 0
      %6832 = vmatpush.bf16.msra.mxu0 0
      %6833 = vmatpush.bf16.msra.mxu0 0
      %6834 = vmatpush.bf16.msra.mxu0 %v6822
      %6835 = vmatmul.bf16.gmra.mxu0 %v6825
      %v6836 = vpop.f32.mrf.mxu0
      %v6837 = vadd.f32 0.0, %v6836
      %v6838 = vpop.f32.mrf.mxu0
      %v6839 = vadd.f32 0.0, %v6838
      %6840 = vdwg.mxu0
      %v6843 = vunpack.c.l.b16 %v6579
      %v6844 = vunpack.c.l.b16 %v6580
      %v6845 = vpack.c.b16 %v6844, %v6843
      %6846 = vrot.lane.b32.xlu0 %v752, 40
      %v6847 = vpop.permute.xlu0 %6846
      %v6850 = vsel %vm910, %v6845, 0
      %6852 = vmatpush.bf16.msra.mxu0 0
      %6853 = vmatpush.bf16.msra.mxu0 0
      %6854 = vmatpush.bf16.msra.mxu0 0
      %6855 = vmatpush.bf16.msra.mxu0 0
      %6856 = vmatpush.bf16.msra.mxu0 0
      %6857 = vmatpush.bf16.msra.mxu0 0
      %6858 = vmatpush.bf16.msra.mxu0 0
      %6859 = vmatpush.bf16.msra.mxu0 %v6847
      %6860 = vmatmul.bf16.gmra.mxu0 %v6850
      %v6861 = vpop.f32.mrf.mxu0
      %v6862 = vadd.f32 0.0, %v6861
      %v6863 = vpop.f32.mrf.mxu0
      %v6864 = vadd.f32 0.0, %v6863
      %6865 = vdwg.mxu0
      %v6868 = vunpack.c.l.b16 %v6581
      %v6869 = vunpack.c.l.b16 %v6582
      %v6870 = vpack.c.b16 %v6869, %v6868
      %6871 = vrot.lane.b32.xlu0 %v779, 40
      %v6872 = vpop.permute.xlu0 %6871
      %v6875 = vsel %vm910, %v6870, 0
      %6877 = vmatpush.bf16.msra.mxu0 0
      %6878 = vmatpush.bf16.msra.mxu0 0
      %6879 = vmatpush.bf16.msra.mxu0 0
      %6880 = vmatpush.bf16.msra.mxu0 0
      %6881 = vmatpush.bf16.msra.mxu0 0
      %6882 = vmatpush.bf16.msra.mxu0 0
      %6883 = vmatpush.bf16.msra.mxu0 0
      %6884 = vmatpush.bf16.msra.mxu0 %v6872
      %6885 = vmatmul.bf16.gmra.mxu0 %v6875
      %v6886 = vpop.f32.mrf.mxu0
      %v6887 = vadd.f32 0.0, %v6886
      %v6888 = vpop.f32.mrf.mxu0
      %v6889 = vadd.f32 0.0, %v6888
      %6890 = vdwg.mxu0
      %v6893 = vunpack.c.l.b16 %v6583
      %v6894 = vunpack.c.l.b16 %v6584
      %v6895 = vpack.c.b16 %v6894, %v6893
      %6896 = vrot.lane.b32.xlu0 %v806, 40
      %v6897 = vpop.permute.xlu0 %6896
      %v6900 = vsel %vm910, %v6895, 0
      %6902 = vmatpush.bf16.msra.mxu0 0
      %6903 = vmatpush.bf16.msra.mxu0 0
      %6904 = vmatpush.bf16.msra.mxu0 0
      %6905 = vmatpush.bf16.msra.mxu0 0
      %6906 = vmatpush.bf16.msra.mxu0 0
      %6907 = vmatpush.bf16.msra.mxu0 0
      %6908 = vmatpush.bf16.msra.mxu0 0
      %6909 = vmatpush.bf16.msra.mxu0 %v6897
      %6910 = vmatmul.bf16.gmra.mxu0 %v6900
      %v6911 = vpop.f32.mrf.mxu0
      %v6912 = vadd.f32 0.0, %v6911
      %v6913 = vpop.f32.mrf.mxu0
      %v6914 = vadd.f32 0.0, %v6913
      %6915 = vdwg.mxu0
      %v6918 = vunpack.c.l.b16 %v6585
      %v6919 = vunpack.c.l.b16 %v6586
      %v6920 = vpack.c.b16 %v6919, %v6918
      %6921 = vrot.lane.b32.xlu0 %v833, 40
      %v6922 = vpop.permute.xlu0 %6921
      %v6925 = vsel %vm910, %v6920, 0
      %6927 = vmatpush.bf16.msra.mxu0 0
      %6928 = vmatpush.bf16.msra.mxu0 0
      %6929 = vmatpush.bf16.msra.mxu0 0
      %6930 = vmatpush.bf16.msra.mxu0 0
      %6931 = vmatpush.bf16.msra.mxu0 0
      %6932 = vmatpush.bf16.msra.mxu0 0
      %6933 = vmatpush.bf16.msra.mxu0 0
      %6934 = vmatpush.bf16.msra.mxu0 %v6922
      %6935 = vmatmul.bf16.gmra.mxu0 %v6925
      %v6936 = vpop.f32.mrf.mxu0
      %v6937 = vadd.f32 0.0, %v6936
      %v6938 = vpop.f32.mrf.mxu0
      %v6939 = vadd.f32 0.0, %v6938
      %6940 = vdwg.mxu0
      %v6943 = vunpack.c.l.b16 %v6587
      %v6944 = vunpack.c.l.b16 %v6588
      %v6945 = vpack.c.b16 %v6944, %v6943
      %6946 = vrot.lane.b32.xlu0 %v860, 40
      %v6947 = vpop.permute.xlu0 %6946
      %v6950 = vsel %vm910, %v6945, 0
      %6952 = vmatpush.bf16.msra.mxu0 0
      %6953 = vmatpush.bf16.msra.mxu0 0
      %6954 = vmatpush.bf16.msra.mxu0 0
      %6955 = vmatpush.bf16.msra.mxu0 0
      %6956 = vmatpush.bf16.msra.mxu0 0
      %6957 = vmatpush.bf16.msra.mxu0 0
      %6958 = vmatpush.bf16.msra.mxu0 0
      %6959 = vmatpush.bf16.msra.mxu0 %v6947
      %6960 = vmatmul.bf16.gmra.mxu0 %v6950
      %v6961 = vpop.f32.mrf.mxu0
      %v6962 = vadd.f32 0.0, %v6961
      %v6963 = vpop.f32.mrf.mxu0
      %v6964 = vadd.f32 0.0, %v6963
      %6965 = vdwg.mxu0
      %v6968 = vunpack.c.l.b16 %v6589
      %v6969 = vunpack.c.l.b16 %v6590
      %v6970 = vpack.c.b16 %v6969, %v6968
      %6971 = vrot.lane.b32.xlu0 %v887, 40
      %v6972 = vpop.permute.xlu0 %6971
      %v6975 = vsel %vm910, %v6970, 0
      %6977 = vmatpush.bf16.msra.mxu0 0
      %6978 = vmatpush.bf16.msra.mxu0 0
      %6979 = vmatpush.bf16.msra.mxu0 0
      %6980 = vmatpush.bf16.msra.mxu0 0
      %6981 = vmatpush.bf16.msra.mxu0 0
      %6982 = vmatpush.bf16.msra.mxu0 0
      %6983 = vmatpush.bf16.msra.mxu0 0
      %6984 = vmatpush.bf16.msra.mxu0 %v6972
      %6985 = vmatmul.bf16.gmra.mxu0 %v6975
      %v6986 = vpop.f32.mrf.mxu0
      %v6987 = vadd.f32 0.0, %v6986
      %v6988 = vpop.f32.mrf.mxu0
      %v6989 = vadd.f32 0.0, %v6988
      %6990 = vdwg.mxu0
      %7023 = vrot.lane.b32.xlu0 %v3380, 8
      %v7024 = vpop.permute.xlu0 %7023
      %7025 = vrot.lane.b32.xlu0 %v3382, 8
      %v7026 = vpop.permute.xlu0 %7025
      %7027 = vrot.lane.b32.xlu0 %v3405, 8
      %v7028 = vpop.permute.xlu0 %7027
      %7029 = vrot.lane.b32.xlu0 %v3407, 8
      %v7030 = vpop.permute.xlu0 %7029
      %7031 = vrot.lane.b32.xlu0 %v3430, 8
      %v7032 = vpop.permute.xlu0 %7031
      %7033 = vrot.lane.b32.xlu0 %v3432, 8
      %v7034 = vpop.permute.xlu0 %7033
      %7035 = vrot.lane.b32.xlu0 %v3455, 8
      %v7036 = vpop.permute.xlu0 %7035
      %7037 = vrot.lane.b32.xlu0 %v3457, 8
      %v7038 = vpop.permute.xlu0 %7037
      %7039 = vrot.lane.b32.xlu0 %v3480, 8
      %v7040 = vpop.permute.xlu0 %7039
      %7041 = vrot.lane.b32.xlu0 %v3482, 8
      %v7042 = vpop.permute.xlu0 %7041
      %7043 = vrot.lane.b32.xlu0 %v3505, 8
      %v7044 = vpop.permute.xlu0 %7043
      %7045 = vrot.lane.b32.xlu0 %v3507, 8
      %v7046 = vpop.permute.xlu0 %7045
      %7047 = vrot.lane.b32.xlu0 %v3530, 8
      %v7048 = vpop.permute.xlu0 %7047
      %7049 = vrot.lane.b32.xlu0 %v3532, 8
      %v7050 = vpop.permute.xlu0 %7049
      %7051 = vrot.lane.b32.xlu0 %v3555, 8
      %v7052 = vpop.permute.xlu0 %7051
      %7053 = vrot.lane.b32.xlu0 %v3557, 8
      %v7054 = vpop.permute.xlu0 %7053
      %7055 = vrot.lane.b32.xlu0 %v3580, 8
      %v7056 = vpop.permute.xlu0 %7055
      %7057 = vrot.lane.b32.xlu0 %v3582, 8
      %v7058 = vpop.permute.xlu0 %7057
      %7059 = vrot.lane.b32.xlu0 %v3605, 8
      %v7060 = vpop.permute.xlu0 %7059
      %7061 = vrot.lane.b32.xlu0 %v3607, 8
      %v7062 = vpop.permute.xlu0 %7061
      %7063 = vrot.lane.b32.xlu0 %v3630, 8
      %v7064 = vpop.permute.xlu0 %7063
      %7065 = vrot.lane.b32.xlu0 %v3632, 8
      %v7066 = vpop.permute.xlu0 %7065
      %7067 = vrot.lane.b32.xlu0 %v3655, 8
      %v7068 = vpop.permute.xlu0 %7067
      %7069 = vrot.lane.b32.xlu0 %v3657, 8
      %v7070 = vpop.permute.xlu0 %7069
      %7071 = vrot.lane.b32.xlu0 %v3680, 8
      %v7072 = vpop.permute.xlu0 %7071
      %7073 = vrot.lane.b32.xlu0 %v3682, 8
      %v7074 = vpop.permute.xlu0 %7073
      %7075 = vrot.lane.b32.xlu0 %v3705, 8
      %v7076 = vpop.permute.xlu0 %7075
      %7077 = vrot.lane.b32.xlu0 %v3707, 8
      %v7078 = vpop.permute.xlu0 %7077
      %7079 = vrot.lane.b32.xlu0 %v3730, 8
      %v7080 = vpop.permute.xlu0 %7079
      %7081 = vrot.lane.b32.xlu0 %v3732, 8
      %v7082 = vpop.permute.xlu0 %7081
      %7083 = vrot.lane.b32.xlu0 %v3755, 8
      %v7084 = vpop.permute.xlu0 %7083
      %7085 = vrot.lane.b32.xlu0 %v3757, 8
      %v7086 = vpop.permute.xlu0 %7085
      %7151 = vrot.lane.b32.xlu0 %v4996, 16
      %v7152 = vpop.permute.xlu0 %7151
      %7153 = vrot.lane.b32.xlu0 %v4998, 16
      %v7154 = vpop.permute.xlu0 %7153
      %7155 = vrot.lane.b32.xlu0 %v5021, 16
      %v7156 = vpop.permute.xlu0 %7155
      %7157 = vrot.lane.b32.xlu0 %v5023, 16
      %v7158 = vpop.permute.xlu0 %7157
      %7159 = vrot.lane.b32.xlu0 %v5046, 16
      %v7160 = vpop.permute.xlu0 %7159
      %7161 = vrot.lane.b32.xlu0 %v5048, 16
      %v7162 = vpop.permute.xlu0 %7161
      %7163 = vrot.lane.b32.xlu0 %v5071, 16
      %v7164 = vpop.permute.xlu0 %7163
      %7165 = vrot.lane.b32.xlu0 %v5073, 16
      %v7166 = vpop.permute.xlu0 %7165
      %7167 = vrot.lane.b32.xlu0 %v5096, 16
      %v7168 = vpop.permute.xlu0 %7167
      %7169 = vrot.lane.b32.xlu0 %v5098, 16
      %v7170 = vpop.permute.xlu0 %7169
      %7171 = vrot.lane.b32.xlu0 %v5121, 16
      %v7172 = vpop.permute.xlu0 %7171
      %7173 = vrot.lane.b32.xlu0 %v5123, 16
      %v7174 = vpop.permute.xlu0 %7173
      %7175 = vrot.lane.b32.xlu0 %v5146, 16
      %v7176 = vpop.permute.xlu0 %7175
      %7177 = vrot.lane.b32.xlu0 %v5148, 16
      %v7178 = vpop.permute.xlu0 %7177
      %7179 = vrot.lane.b32.xlu0 %v5171, 16
      %v7180 = vpop.permute.xlu0 %7179
      %7181 = vrot.lane.b32.xlu0 %v5173, 16
      %v7182 = vpop.permute.xlu0 %7181
      %7183 = vrot.lane.b32.xlu0 %v5196, 16
      %v7184 = vpop.permute.xlu0 %7183
      %7185 = vrot.lane.b32.xlu0 %v5198, 16
      %v7186 = vpop.permute.xlu0 %7185
      %7187 = vrot.lane.b32.xlu0 %v5221, 16
      %v7188 = vpop.permute.xlu0 %7187
      %7189 = vrot.lane.b32.xlu0 %v5223, 16
      %v7190 = vpop.permute.xlu0 %7189
      %7191 = vrot.lane.b32.xlu0 %v5246, 16
      %v7192 = vpop.permute.xlu0 %7191
      %7193 = vrot.lane.b32.xlu0 %v5248, 16
      %v7194 = vpop.permute.xlu0 %7193
      %7195 = vrot.lane.b32.xlu0 %v5271, 16
      %v7196 = vpop.permute.xlu0 %7195
      %7197 = vrot.lane.b32.xlu0 %v5273, 16
      %v7198 = vpop.permute.xlu0 %7197
      %7199 = vrot.lane.b32.xlu0 %v5296, 16
      %v7200 = vpop.permute.xlu0 %7199
      %7201 = vrot.lane.b32.xlu0 %v5298, 16
      %v7202 = vpop.permute.xlu0 %7201
      %7203 = vrot.lane.b32.xlu0 %v5321, 16
      %v7204 = vpop.permute.xlu0 %7203
      %7205 = vrot.lane.b32.xlu0 %v5323, 16
      %v7206 = vpop.permute.xlu0 %7205
      %7207 = vrot.lane.b32.xlu0 %v5346, 16
      %v7208 = vpop.permute.xlu0 %7207
      %7209 = vrot.lane.b32.xlu0 %v5348, 16
      %v7210 = vpop.permute.xlu0 %7209
      %7211 = vrot.lane.b32.xlu0 %v5371, 16
      %v7212 = vpop.permute.xlu0 %7211
      %7213 = vrot.lane.b32.xlu0 %v5373, 16
      %v7214 = vpop.permute.xlu0 %7213
      %7279 = vrot.lane.b32.xlu0 %v6612, 24
      %v7280 = vpop.permute.xlu0 %7279
      %7281 = vrot.lane.b32.xlu0 %v6614, 24
      %v7282 = vpop.permute.xlu0 %7281
      %7283 = vrot.lane.b32.xlu0 %v6637, 24
      %v7284 = vpop.permute.xlu0 %7283
      %7285 = vrot.lane.b32.xlu0 %v6639, 24
      %v7286 = vpop.permute.xlu0 %7285
      %7287 = vrot.lane.b32.xlu0 %v6662, 24
      %v7288 = vpop.permute.xlu0 %7287
      %7289 = vrot.lane.b32.xlu0 %v6664, 24
      %v7290 = vpop.permute.xlu0 %7289
      %7291 = vrot.lane.b32.xlu0 %v6687, 24
      %v7292 = vpop.permute.xlu0 %7291
      %7293 = vrot.lane.b32.xlu0 %v6689, 24
      %v7294 = vpop.permute.xlu0 %7293
      %7295 = vrot.lane.b32.xlu0 %v6712, 24
      %v7296 = vpop.permute.xlu0 %7295
      %7297 = vrot.lane.b32.xlu0 %v6714, 24
      %v7298 = vpop.permute.xlu0 %7297
      %7299 = vrot.lane.b32.xlu0 %v6737, 24
      %v7300 = vpop.permute.xlu0 %7299
      %7301 = vrot.lane.b32.xlu0 %v6739, 24
      %v7302 = vpop.permute.xlu0 %7301
      %7303 = vrot.lane.b32.xlu0 %v6762, 24
      %v7304 = vpop.permute.xlu0 %7303
      %7305 = vrot.lane.b32.xlu0 %v6764, 24
      %v7306 = vpop.permute.xlu0 %7305
      %7307 = vrot.lane.b32.xlu0 %v6787, 24
      %v7308 = vpop.permute.xlu0 %7307
      %7309 = vrot.lane.b32.xlu0 %v6789, 24
      %v7310 = vpop.permute.xlu0 %7309
      %7311 = vrot.lane.b32.xlu0 %v6812, 24
      %v7312 = vpop.permute.xlu0 %7311
      %7313 = vrot.lane.b32.xlu0 %v6814, 24
      %v7314 = vpop.permute.xlu0 %7313
      %7315 = vrot.lane.b32.xlu0 %v6837, 24
      %v7316 = vpop.permute.xlu0 %7315
      %7317 = vrot.lane.b32.xlu0 %v6839, 24
      %v7318 = vpop.permute.xlu0 %7317
      %7319 = vrot.lane.b32.xlu0 %v6862, 24
      %v7320 = vpop.permute.xlu0 %7319
      %7321 = vrot.lane.b32.xlu0 %v6864, 24
      %v7322 = vpop.permute.xlu0 %7321
      %7323 = vrot.lane.b32.xlu0 %v6887, 24
      %v7324 = vpop.permute.xlu0 %7323
      %7325 = vrot.lane.b32.xlu0 %v6889, 24
      %v7326 = vpop.permute.xlu0 %7325
      %7327 = vrot.lane.b32.xlu0 %v6912, 24
      %v7328 = vpop.permute.xlu0 %7327
      %7329 = vrot.lane.b32.xlu0 %v6914, 24
      %v7330 = vpop.permute.xlu0 %7329
      %7331 = vrot.lane.b32.xlu0 %v6937, 24
      %v7332 = vpop.permute.xlu0 %7331
      %7333 = vrot.lane.b32.xlu0 %v6939, 24
      %v7334 = vpop.permute.xlu0 %7333
      %7335 = vrot.lane.b32.xlu0 %v6962, 24
      %v7336 = vpop.permute.xlu0 %7335
      %7337 = vrot.lane.b32.xlu0 %v6964, 24
      %v7338 = vpop.permute.xlu0 %7337
      %7339 = vrot.lane.b32.xlu0 %v6987, 24
      %v7340 = vpop.permute.xlu0 %7339
      %7341 = vrot.lane.b32.xlu0 %v6989, 24
      %v7342 = vpop.permute.xlu0 %7341
      %v7375 = vsel %vm484, %v1764, %v7024
      %v7376 = vsel %vm484, %v1766, %v7026
      %v7377 = vsel %vm484, %v1789, %v7028
      %v7378 = vsel %vm484, %v1791, %v7030
      %v7379 = vsel %vm484, %v1814, %v7032
      %v7380 = vsel %vm484, %v1816, %v7034
      %v7381 = vsel %vm484, %v1839, %v7036
      %v7382 = vsel %vm484, %v1841, %v7038
      %v7383 = vsel %vm484, %v1864, %v7040
      %v7384 = vsel %vm484, %v1866, %v7042
      %v7385 = vsel %vm484, %v1889, %v7044
      %v7386 = vsel %vm484, %v1891, %v7046
      %v7387 = vsel %vm484, %v1914, %v7048
      %v7388 = vsel %vm484, %v1916, %v7050
      %v7389 = vsel %vm484, %v1939, %v7052
      %v7390 = vsel %vm484, %v1941, %v7054
      %v7391 = vsel %vm484, %v1964, %v7056
      %v7392 = vsel %vm484, %v1966, %v7058
      %v7393 = vsel %vm484, %v1989, %v7060
      %v7394 = vsel %vm484, %v1991, %v7062
      %v7395 = vsel %vm484, %v2014, %v7064
      %v7396 = vsel %vm484, %v2016, %v7066
      %v7397 = vsel %vm484, %v2039, %v7068
      %v7398 = vsel %vm484, %v2041, %v7070
      %v7399 = vsel %vm484, %v2064, %v7072
      %v7400 = vsel %vm484, %v2066, %v7074
      %v7401 = vsel %vm484, %v2089, %v7076
      %v7402 = vsel %vm484, %v2091, %v7078
      %v7403 = vsel %vm484, %v2114, %v7080
      %v7404 = vsel %vm484, %v2116, %v7082
      %v7405 = vsel %vm484, %v2139, %v7084
      %v7406 = vsel %vm484, %v2141, %v7086
      %v7407 = vsel %vm910, %v7375, %v7152
      %v7408 = vsel %vm910, %v7376, %v7154
      %v7409 = vsel %vm910, %v7377, %v7156
      %v7410 = vsel %vm910, %v7378, %v7158
      %v7411 = vsel %vm910, %v7379, %v7160
      %v7412 = vsel %vm910, %v7380, %v7162
      %v7413 = vsel %vm910, %v7381, %v7164
      %v7414 = vsel %vm910, %v7382, %v7166
      %v7415 = vsel %vm910, %v7383, %v7168
      %v7416 = vsel %vm910, %v7384, %v7170
      %v7417 = vsel %vm910, %v7385, %v7172
      %v7418 = vsel %vm910, %v7386, %v7174
      %v7419 = vsel %vm910, %v7387, %v7176
      %v7420 = vsel %vm910, %v7388, %v7178
      %v7421 = vsel %vm910, %v7389, %v7180
      %v7422 = vsel %vm910, %v7390, %v7182
      %v7423 = vsel %vm910, %v7391, %v7184
      %v7424 = vsel %vm910, %v7392, %v7186
      %v7425 = vsel %vm910, %v7393, %v7188
      %v7426 = vsel %vm910, %v7394, %v7190
      %v7427 = vsel %vm910, %v7395, %v7192
      %v7428 = vsel %vm910, %v7396, %v7194
      %v7429 = vsel %vm910, %v7397, %v7196
      %v7430 = vsel %vm910, %v7398, %v7198
      %v7431 = vsel %vm910, %v7399, %v7200
      %v7432 = vsel %vm910, %v7400, %v7202
      %v7433 = vsel %vm910, %v7401, %v7204
      %v7434 = vsel %vm910, %v7402, %v7206
      %v7435 = vsel %vm910, %v7403, %v7208
      %v7436 = vsel %vm910, %v7404, %v7210
      %v7437 = vsel %vm910, %v7405, %v7212
      %v7438 = vsel %vm910, %v7406, %v7214
      %vm7439 = vcmask 195584
      %v7440 = vsel %vm7439, %v7407, %v7280
      %v7441 = vsel %vm7439, %v7408, %v7282
      %v7442 = vsel %vm7439, %v7409, %v7284
      %v7443 = vsel %vm7439, %v7410, %v7286
      %v7444 = vsel %vm7439, %v7411, %v7288
      %v7445 = vsel %vm7439, %v7412, %v7290
      %v7446 = vsel %vm7439, %v7413, %v7292
      %v7447 = vsel %vm7439, %v7414, %v7294
      %v7448 = vsel %vm7439, %v7415, %v7296
      %v7449 = vsel %vm7439, %v7416, %v7298
      %v7450 = vsel %vm7439, %v7417, %v7300
      %v7451 = vsel %vm7439, %v7418, %v7302
      %v7452 = vsel %vm7439, %v7419, %v7304
      %v7453 = vsel %vm7439, %v7420, %v7306
      %v7454 = vsel %vm7439, %v7421, %v7308
      %v7455 = vsel %vm7439, %v7422, %v7310
      %v7456 = vsel %vm7439, %v7423, %v7312
      %v7457 = vsel %vm7439, %v7424, %v7314
      %v7458 = vsel %vm7439, %v7425, %v7316
      %v7459 = vsel %vm7439, %v7426, %v7318
      %v7460 = vsel %vm7439, %v7427, %v7320
      %v7461 = vsel %vm7439, %v7428, %v7322
      %v7462 = vsel %vm7439, %v7429, %v7324
      %v7463 = vsel %vm7439, %v7430, %v7326
      %v7464 = vsel %vm7439, %v7431, %v7328
      %v7465 = vsel %vm7439, %v7432, %v7330
      %v7466 = vsel %vm7439, %v7433, %v7332
      %v7467 = vsel %vm7439, %v7434, %v7334
      %v7468 = vsel %vm7439, %v7435, %v7336
      %v7469 = vsel %vm7439, %v7436, %v7338
      %v7470 = vsel %vm7439, %v7437, %v7340
      %v7471 = vsel %vm7439, %v7438, %v7342
      %7472 = vst.msk [vmem:[%s172] sm:$0xff] %vm307, %v7440
      %7473 = vst.msk [vmem:[%s172 + $0x8] sm:$0xff] %vm307, %v7441
      %7474 = vst.msk [vmem:[%s172 + $0x10] sm:$0xff] %vm307, %v7442
      %7475 = vst.msk [vmem:[%s172 + $0x18] sm:$0xff] %vm307, %v7443
      %7476 = vst.msk [vmem:[%s172 + $0x20] sm:$0xff] %vm307, %v7444
      %7477 = vst.msk [vmem:[%s172 + $0x28] sm:$0xff] %vm307, %v7445
      %7478 = vst.msk [vmem:[%s172 + $0x30] sm:$0xff] %vm307, %v7446
      %7479 = vst.msk [vmem:[%s172 + $0x38] sm:$0xff] %vm307, %v7447
      %7480 = vst.msk [vmem:[%s172 + $0x40] sm:$0xff] %vm307, %v7448
      %7481 = vst.msk [vmem:[%s172 + $0x48] sm:$0xff] %vm307, %v7449
      %7482 = vst.msk [vmem:[%s172 + $0x50] sm:$0xff] %vm307, %v7450
      %7483 = vst.msk [vmem:[%s172 + $0x58] sm:$0xff] %vm307, %v7451
      %7484 = vst.msk [vmem:[%s172 + $0x60] sm:$0xff] %vm307, %v7452
      %7485 = vst.msk [vmem:[%s172 + $0x68] sm:$0xff] %vm307, %v7453
      %7486 = vst.msk [vmem:[%s172 + $0x70] sm:$0xff] %vm307, %v7454
      %7487 = vst.msk [vmem:[%s172 + $0x78] sm:$0xff] %vm307, %v7455
      %7488 = vst.msk [vmem:[%s172 + $0x80] sm:$0xff] %vm307, %v7456
      %7489 = vst.msk [vmem:[%s172 + $0x88] sm:$0xff] %vm307, %v7457
      %7490 = vst.msk [vmem:[%s172 + $0x90] sm:$0xff] %vm307, %v7458
      %7491 = vst.msk [vmem:[%s172 + $0x98] sm:$0xff] %vm307, %v7459
      %7492 = vst.msk [vmem:[%s172 + $0xa0] sm:$0xff] %vm307, %v7460
      %7493 = vst.msk [vmem:[%s172 + $0xa8] sm:$0xff] %vm307, %v7461
      %7494 = vst.msk [vmem:[%s172 + $0xb0] sm:$0xff] %vm307, %v7462
      %7495 = vst.msk [vmem:[%s172 + $0xb8] sm:$0xff] %vm307, %v7463
      %7496 = vst.msk [vmem:[%s172 + $0xc0] sm:$0xff] %vm307, %v7464
      %7497 = vst.msk [vmem:[%s172 + $0xc8] sm:$0xff] %vm307, %v7465
      %7498 = vst.msk [vmem:[%s172 + $0xd0] sm:$0xff] %vm307, %v7466
      %7499 = vst.msk [vmem:[%s172 + $0xd8] sm:$0xff] %vm307, %v7467
      %7500 = vst.msk [vmem:[%s172 + $0xe0] sm:$0xff] %vm307, %v7468
      %7501 = vst.msk [vmem:[%s172 + $0xe8] sm:$0xff] %vm307, %v7469
      %7502 = vst.msk [vmem:[%s172 + $0xf0] sm:$0xff] %vm307, %v7470
      %7503 = vst.msk [vmem:[%s172 + $0xf8] sm:$0xff] %vm307, %v7471
      %s7504 = smul.u32 32, %s14
      %p7505 = scmp.lt.s32.totalorder %s7504, 255
      %s7506 = scalar_select %p7505, %s7504, 255
      %s7507 = smul.addr %s7506, 8
      %s7508 = scalar_lea.vmem %s3, %s7507
      // Predicated region
      $region33: #{tpu_custom_call.1} parent=31 // pred_check
        %p7509 = pneg %p100
      $region34: #{tpu_custom_call.1} parent=31 // pred_check_branch
        %7511 = sbr.rel (%p7509) target = $region36
      $region35: #{tpu_custom_call.1} parent=31 // pred_region
        %s7512 = smul.u32 32, %s14
      $region36: #{tpu_custom_call.1} parent=31 // pred_fallthru
        _
    $region32: #{tpu_custom_call.1} parent=5 // pred_fallthru
      _
    %p7513 = scmp.le.s32.totalorder 2, %s9
    // Predicated region
    $region37: #{tpu_custom_call.1} parent=5 // pred_check
      %p7514 = pneg %p7513
    $region38: #{tpu_custom_call.1} parent=5 // pred_check_branch
      %7516 = sbr.rel (%p7514) target = $region40
    $region39: #{tpu_custom_call.1} parent=5 // pred_region
      %s7517 = ssub.s32 %s9, 2
      // Predicated region
      $region41: #{tpu_custom_call.1} parent=39 // pred_check
        %p7518 = pneg %p106
      $region42: #{tpu_custom_call.1} parent=39 // pred_check_branch
        %7520 = sbr.rel (%p7518) target = $region44
      $region43: #{tpu_custom_call.1} parent=39 // pred_region
        %s7521 = smul.u32 32, %s15
        %p7522 = scmp.lt.s32.totalorder %s7521, 255
        %s7523 = scalar_select %p7522, %s7521, 255
        %s7524 = smul.addr %s7523, 8
        %s7525 = scalar_lea.vmem %s3, %s7524
      $region44: #{tpu_custom_call.1} parent=39 // pred_fallthru
        _
    $region40: #{tpu_custom_call.1} parent=5 // pred_fallthru
      _
  $region6: #{tpu_custom_call.1} parent=0 // loop_footer
    %s13 = sadd.s32 1, %s9
  $region7: #{tpu_custom_call.1} parent=0 // loop_footer_branch
    %8 = sbr.rel target = $region3
  $region8: #{tpu_custom_call.1} parent=0 // loop_exit
    _

</llo_original>
